<compile_context>
chip_gen: v7x
topology: tpu7x:2x2x1
jax: 0.10.0
libtpu: 0.0.40
codegen_flags: <defaults>
</compile_context>

<pallas_src>
import functools
import math

import jax
import jax.numpy as jnp
from jax import lax
from jax.experimental import pallas as pl
from jax.experimental.pallas import tpu as pltpu


# ----------------------------------------------------------------------------
# Helpers
# ----------------------------------------------------------------------------
def _const_spec(shape):
    nd = len(shape)
    return pl.BlockSpec(shape, lambda *_: (0,) * nd)


@functools.lru_cache(maxsize=1)
def _vmem_limit():
    """Chip-aware VMEM limit: ~100 MiB on v5e/v6e (128 MiB phys), ~51 MiB on v7x."""
    try:
        cap = int(pltpu.get_tpu_info().vmem_capacity_bytes)
    except Exception:
        cap = 64 * 1024 * 1024
    return min(int(cap * 0.8), 100 * 1024 * 1024)


def _batch_tile(B):
    """Largest multiple-of-8 proper divisor of B (>=2 grid steps for v7x), else B."""
    best = None
    for t in range(8, B, 8):
        if B % t == 0:
            best = t
    return best if best is not None else B


def _seq_tile(T, B, Vpad):
    """Largest multiple-of-8 proper divisor of T whose double-buffered f32
    output tile fits ~1/3 of the VMEM budget; else the whole T.
    # TODO(synk): pad T + mask when T has no multiple-of-8 proper divisor."""
    budget = _vmem_limit() // 3
    best = None
    for t in range(8, T, 8):
        if T % t == 0 and 2 * B * t * Vpad * 4 <= budget:
            best = t
    return best if best is not None else T


def _recip(x):
    """EUP approx reciprocal + one Newton step (~f32 accurate, near free)."""
    r = pl.reciprocal(x, approx=True)
    return r * (2.0 - x * r)


# ----------------------------------------------------------------------------
# Kernel 1: fused encoder
#   LSTM (chunked hoisted input projection + fused gates) -> mu / log_var ->
#   reparameterize -> z_to_hidden.   x layout: (T, tb, H)  (time-major tile).
# ----------------------------------------------------------------------------
def _encoder_kernel(x_ref, wih_ref, whh_ref, bl_ref,
                    wmu_ref, bmu_ref, wlv_ref, blv_ref, wz_ref, bz_ref, eps_ref,
                    mu_ref, lv_ref, zh_ref, xp_ref):
    T, tb, H = x_ref.shape
    H3, H4 = 3 * H, 4 * H

    # Hoisted input projection (no recurrent dependency): big-M MXU matmuls in
    # timestep chunks so the f32 temporary stays bounded; stored as bf16.
    rows_per_chunk = max(1, 2048 // tb)
    CH = min(T, rows_per_chunk)
    for t0 in range(0, T, CH):
        te = min(t0 + CH, T)
        xc = x_ref[t0:te].reshape((te - t0) * tb, H).astype(jnp.bfloat16)
        xp = jnp.dot(xc, wih_ref[...], preferred_element_type=jnp.float32) + bl_ref[...]
        xp_ref[t0:te] = xp.reshape(te - t0, tb, H4).astype(jnp.bfloat16)

    whh = whh_ref[...]                     # bf16 (H, 4H), columns = [i | f | o | g]

    def step(t, carry):
        h, c = carry
        gates = xp_ref[t].astype(jnp.float32) + jnp.dot(
            h.astype(jnp.bfloat16), whh, preferred_element_type=jnp.float32)
        sig = jax.nn.sigmoid(gates[:, :H3])          # one contiguous (tb,3H) slice
        i_g = sig[:, 0:H]
        f_g = sig[:, H:2 * H]
        o_g = sig[:, 2 * H:H3]
        g_g = jnp.tanh(gates[:, H3:H4])
        c_new = f_g * c + i_g * g_g
        h_new = o_g * jnp.tanh(c_new)
        return h_new, c_new

    h0 = jnp.zeros((tb, H), jnp.float32)
    if T <= 16:                                      # full static unroll (toy / short T)
        h, c = h0, h0
        for t in range(T):
            h, c = step(t, (h, c))
        h_fin = h
    else:                                            # partially unrolled serial recurrence
        h_fin, _ = lax.fori_loop(0, T, step, (h0, h0), unroll=8)

    hb = h_fin.astype(jnp.bfloat16)
    mu = jnp.dot(hb, wmu_ref[...], preferred_element_type=jnp.float32) + bmu_ref[...]
    lv = jnp.dot(hb, wlv_ref[...], preferred_element_type=jnp.float32) + blv_ref[...]
    z = mu + eps_ref[...] * jnp.exp(0.5 * lv)
    zh = jnp.dot(z.astype(jnp.bfloat16), wz_ref[...],
                 preferred_element_type=jnp.float32) + bz_ref[...]

    mu_ref[...] = mu
    lv_ref[...] = lv
    zh_ref[...] = zh


def encoder_forward(emb_tbh, prep, eps):
    T, B, H = emb_tbh.shape
    L = prep['bmu'].shape[1]
    tb = _batch_tile(B)
    grid = (B // tb,)

    weight_args = (prep['wih'], prep['whh'], prep['blstm'],
                   prep['wmu'], prep['bmu'], prep['wlv'], prep['blv'],
                   prep['wz'], prep['bz'])
    in_specs = ([pl.BlockSpec((T, tb, H), lambda i: (0, i, 0))]
                + [_const_spec(w.shape) for w in weight_args]
                + [pl.BlockSpec((tb, L), lambda i: (i, 0))])

    return pl.pallas_call(
        _encoder_kernel,
        out_shape=(jax.ShapeDtypeStruct((B, L), jnp.float32),
                   jax.ShapeDtypeStruct((B, L), jnp.float32),
                   jax.ShapeDtypeStruct((B, H), jnp.float32)),
        grid=grid,
        in_specs=in_specs,
        out_specs=(pl.BlockSpec((tb, L), lambda i: (i, 0)),
                   pl.BlockSpec((tb, L), lambda i: (i, 0)),
                   pl.BlockSpec((tb, H), lambda i: (i, 0))),
        scratch_shapes=[pltpu.VMEM((T, tb, 4 * H), jnp.bfloat16)],
        compiler_params=pltpu.CompilerParams(
            dimension_semantics=("parallel",),
            vmem_limit_bytes=_vmem_limit()),
    )(emb_tbh, *weight_args, eps)


# ----------------------------------------------------------------------------
# Kernel 2: fully fused decoder layer + vocab projection + masked softmax
#   Internal layout: (n, l, e) = (attention batch = model T tile, attention
#   seq = model B, embed = H).  Gridded over n-tiles ("parallel").
# ----------------------------------------------------------------------------
def _decoder_kernel(zh_ref, pos_ref,
                    sa_wq_ref, sa_bq_ref, sa_wkv_ref, sa_bkv_ref, sa_wo_ref, sa_bo_ref,
                    ca_wq_ref, ca_bq_ref, ca_wkv_ref, ca_bkv_ref, ca_wo_ref, ca_bo_ref,
                    ln_g_ref, ln_b_ref,
                    w1_ref, b1_ref, w2_ref, b2_ref,
                    wd_ref, bd_ref,
                    out_ref, *, nhead, vocab):
    B, tn, Vpad = out_ref.shape
    H = zh_ref.shape[1]
    hd = H // nhead
    scale = 1.0 / math.sqrt(hd)

    # decoder input tile: z3[n, l, :] = zh[l] + pos[n]
    z3 = zh_ref[...][None, :, :] + pos_ref[...]            # (tn, B, H) via broadcast

    def mha(q_in, kv_in, wq_ref, bq_ref, wkv_ref, bkv_ref, wo_ref, bo_ref):
        qf = q_in.reshape(tn * B, H).astype(jnp.bfloat16)
        kf = kv_in.reshape(tn * B, H).astype(jnp.bfloat16)
        # fused, lane-dense projections (one (M,H)x(H,H) + one (M,H)x(H,2H))
        q = jnp.dot(qf, wq_ref[...], preferred_element_type=jnp.float32) + bq_ref[...]
        kv = jnp.dot(kf, wkv_ref[...], preferred_element_type=jnp.float32) + bkv_ref[...]
        # per-head score / softmax / PV (tiny K=hd contractions; overhead-only)
        outs = []
        for h in range(nhead):                             # static unroll
            qh = q[:, h * hd:(h + 1) * hd].reshape(tn, B, hd)
            kh = kv[:, h * hd:(h + 1) * hd].reshape(tn, B, hd)
            vh = kv[:, H + h * hd:H + (h + 1) * hd].reshape(tn, B, hd)
            s = jnp.einsum('nld,nsd->nls',
                           qh.astype(jnp.bfloat16), kh.astype(jnp.bfloat16),
                           preferred_element_type=jnp.float32) * scale
            m = jnp.max(s, axis=-1, keepdims=True)
            e = jnp.exp(s - m)
            p = e * _recip(jnp.sum(e, axis=-1, keepdims=True))
            outs.append(jnp.einsum('nls,nsd->nld',
                                   p.astype(jnp.bfloat16), vh.astype(jnp.bfloat16),
                                   preferred_element_type=jnp.float32))
        o = jnp.concatenate(outs, axis=-1)                 # (tn, B, H), head-major lanes
        # single fused output projection
        out = jnp.dot(o.reshape(tn * B, H).astype(jnp.bfloat16), wo_ref[...],
                      preferred_element_type=jnp.float32) + bo_ref[...]
        return out.reshape(tn, B, H)

    def add_ln(x, y, idx):                                 # residual add + LayerNorm (f32)
        hsum = x + y
        mean = jnp.mean(hsum, axis=-1, keepdims=True)
        cen = hsum - mean
        var = jnp.mean(cen * cen, axis=-1, keepdims=True)
        return cen * lax.rsqrt(var + 1e-5) * ln_g_ref[idx] + ln_b_ref[idx]

    sa = mha(z3, z3, sa_wq_ref, sa_bq_ref, sa_wkv_ref, sa_bkv_ref, sa_wo_ref, sa_bo_ref)
    t1 = add_ln(z3, sa, 0)
    ca = mha(t1, z3, ca_wq_ref, ca_bq_ref, ca_wkv_ref, ca_bkv_ref, ca_wo_ref, ca_bo_ref)
    t2 = add_ln(t1, ca, 1)

    t2f = t2.reshape(tn * B, H).astype(jnp.bfloat16)
    ff = jnp.maximum(jnp.dot(t2f, w1_ref[...],
                             preferred_element_type=jnp.float32) + b1_ref[...], 0.0)
    ff = jnp.dot(ff.astype(jnp.bfloat16), w2_ref[...],
                 preferred_element_type=jnp.float32) + b2_ref[...]
    t3 = add_ln(t2, ff.reshape(tn, B, H), 2)

    # vocab projection + masked softmax (lane-dense Vpad = k*128, bf16 weight)
    logits = jnp.dot(t3.reshape(tn * B, H).astype(jnp.bfloat16), wd_ref[...],
                     preferred_element_type=jnp.float32) + bd_ref[...]
    lane = lax.broadcasted_iota(jnp.int32, logits.shape, 1)
    valid = lane < vocab
    m = jnp.max(jnp.where(valid, logits, -1e30), axis=-1, keepdims=True)
    e = jnp.where(valid, jnp.exp(logits - m), 0.0)
    probs = (e * _recip(jnp.sum(e, axis=-1, keepdims=True))).reshape(tn, B, Vpad)

    # fold the (T,B)->(B,T) permute into the stores (lane axis untouched)
    for j in range(tn):                                    # static unroll
        out_ref[:, j, :] = probs[j]


def decoder_forward(zh, prep, nhead, vocab):
    B, H = zh.shape
    T = prep['pos'].shape[0]
    Vpad = prep['wd'].shape[1]
    tn = _seq_tile(T, B, Vpad)
    grid = (T // tn,)

    weight_args = (
        prep['sa_wq'], prep['sa_bq'], prep['sa_wkv'], prep['sa_bkv'],
        prep['sa_wo'], prep['sa_bo'],
        prep['ca_wq'], prep['ca_bq'], prep['ca_wkv'], prep['ca_bkv'],
        prep['ca_wo'], prep['ca_bo'],
        prep['ln_g'], prep['ln_b'],
        prep['w1'], prep['b1'], prep['w2'], prep['b2'],
        prep['wd'], prep['bd'],
    )
    in_specs = ([_const_spec((B, H)),
                 pl.BlockSpec((tn, 1, H), lambda i: (i, 0, 0))]
                + [_const_spec(w.shape) for w in weight_args])

    return pl.pallas_call(
        functools.partial(_decoder_kernel, nhead=nhead, vocab=vocab),
        out_shape=jax.ShapeDtypeStruct((B, T, Vpad), jnp.float32),
        grid=grid,
        in_specs=in_specs,
        out_specs=pl.BlockSpec((B, tn, Vpad), lambda i: (0, i, 0)),
        compiler_params=pltpu.CompilerParams(
            dimension_semantics=("parallel",),
            vmem_limit_bytes=_vmem_limit()),
    )(zh, prep['pos'], *weight_args)


# ----------------------------------------------------------------------------
# Full VAE forward (2 pallas_calls + tiny glue: embedding gather, pad-slice)
# ----------------------------------------------------------------------------
def vae_forward(prep, x_tokens, eps_key, *, nhead, vocab):
    B, T = x_tokens.shape
    L = prep['bmu'].shape[1]
    # Embedding gather directly into the time-major (T, B, H) layout.
    # TODO(synk): data-dependent gather stays in XLA (no clean Pallas DMA-gather here).
    emb_tbh = jnp.take(prep['embedding'], x_tokens.T, axis=0)
    eps = jax.random.normal(eps_key, (B, L), jnp.float32)   # torch.randn_like(std)
    mu, log_var, zh = encoder_forward(emb_tbh, prep, eps)
    probs_pad = decoder_forward(zh, prep, nhead, vocab)      # (B, T, Vpad)
    probs = probs_pad[:, :, :vocab]                          # drop lane padding only
    return probs, mu, log_var


# ----------------------------------------------------------------------------
# Parameters: PyTorch-layout init + ONE-TIME kernel-friendly re-layout
# ----------------------------------------------------------------------------
def init_params(key, V, H, L, T, FF):
    keys = iter(jax.random.split(key, 32))

    def rn(shape, scale=0.1):
        return scale * jax.random.normal(next(keys), shape, jnp.float32)

    p = {}
    p['embedding'] = rn((V, H))
    p['pos_emb'] = rn((T, H))
    p['lstm_w_ih'] = rn((4 * H, H))
    p['lstm_w_hh'] = rn((4 * H, H))
    p['lstm_b_ih'] = rn((4 * H,))
    p['lstm_b_hh'] = rn((4 * H,))
    p['mu_w'] = rn((L, H)); p['mu_b'] = rn((L,))
    p['lv_w'] = rn((L, H)); p['lv_b'] = rn((L,))
    p['z2h_w'] = rn((H, L)); p['z2h_b'] = rn((H,))
    p['sa_in_w'] = rn((3 * H, H)); p['sa_in_b'] = rn((3 * H,))
    p['sa_out_w'] = rn((H, H)); p['sa_out_b'] = rn((H,))
    p['ca_in_w'] = rn((3 * H, H)); p['ca_in_b'] = rn((3 * H,))
    p['ca_out_w'] = rn((H, H)); p['ca_out_b'] = rn((H,))
    p['lin1_w'] = rn((FF, H)); p['lin1_b'] = rn((FF,))
    p['lin2_w'] = rn((H, FF)); p['lin2_b'] = rn((H,))
    for n in ('norm1', 'norm2', 'norm3'):
        p[f'{n}_g'] = jnp.ones((H,), jnp.float32)
        p[f'{n}_b'] = jnp.zeros((H,), jnp.float32)
    p['dec_w'] = rn((V, H)); p['dec_b'] = rn((V,))
    return p


def prepare_params(p, nhead):
    """One-time re-layout: transposes, LSTM gate fuse + [i|f|o|g] reorder,
    fused Q / KV / out-proj matrices, vocab padding to a lane-dense multiple of
    128, and bf16 pre-cast of every MXU weight (biases / LN params stay f32)."""
    H = p['lstm_w_hh'].shape[1]
    E = H
    V = p['dec_w'].shape[0]
    Vpad = ((V + 127) // 128) * 128

    def t(w):
        return jnp.asarray(w, jnp.float32).T

    def bf(w):
        return w.astype(jnp.bfloat16)

    def gates_ifog(w4):          # (..., 4H) columns [i f g o] -> [i f o g]
        i, f, g, o = (w4[..., :H], w4[..., H:2 * H],
                      w4[..., 2 * H:3 * H], w4[..., 3 * H:])
        return jnp.concatenate([i, f, o, g], axis=-1)

    sa_wq = bf(t(p['sa_in_w'][:E]));  sa_bq = p['sa_in_b'][:E].reshape(1, E)
    sa_wkv = bf(t(p['sa_in_w'][E:])); sa_bkv = p['sa_in_b'][E:].reshape(1, 2 * E)
    ca_wq = bf(t(p['ca_in_w'][:E]));  ca_bq = p['ca_in_b'][:E].reshape(1, E)
    ca_wkv = bf(t(p['ca_in_w'][E:])); ca_bkv = p['ca_in_b'][E:].reshape(1, 2 * E)

    return dict(
        embedding=p['embedding'],
        pos=p['pos_emb'].reshape(-1, 1, H),
        # LSTM: fused gates, transposed, reordered; columns [i | f | o | g]
        wih=bf(gates_ifog(t(p['lstm_w_ih']))),
        whh=bf(gates_ifog(t(p['lstm_w_hh']))),
        blstm=gates_ifog((p['lstm_b_ih'] + p['lstm_b_hh']).reshape(1, 4 * H)),
        wmu=bf(t(p['mu_w'])), bmu=p['mu_b'].reshape(1, -1),
        wlv=bf(t(p['lv_w'])), blv=p['lv_b'].reshape(1, -1),
        wz=bf(t(p['z2h_w'])), bz=p['z2h_b'].reshape(1, -1),
        sa_wq=sa_wq, sa_bq=sa_bq, sa_wkv=sa_wkv, sa_bkv=sa_bkv,
        sa_wo=bf(t(p['sa_out_w'])), sa_bo=p['sa_out_b'].reshape(1, -1),
        ca_wq=ca_wq, ca_bq=ca_bq, ca_wkv=ca_wkv, ca_bkv=ca_bkv,
        ca_wo=bf(t(p['ca_out_w'])), ca_bo=p['ca_out_b'].reshape(1, -1),
        ln_g=jnp.stack([p['norm1_g'], p['norm2_g'], p['norm3_g']]).reshape(3, 1, H),
        ln_b=jnp.stack([p['norm1_b'], p['norm2_b'], p['norm3_b']]).reshape(3, 1, H),
        w1=bf(t(p['lin1_w'])), b1=p['lin1_b'].reshape(1, -1),
        w2=bf(t(p['lin2_w'])), b2=p['lin2_b'].reshape(1, -1),
        # vocab projection: pre-transposed, zero-padded to Vpad lanes, bf16
        wd=bf(jnp.pad(t(p['dec_w']), ((0, 0), (0, Vpad - V)))),
        bd=jnp.pad(p['dec_b'].reshape(1, -1), ((0, 0), (0, Vpad - V))),
    )


if __name__ == "__main__":
    # Small shapes consistent with the module (seq length must equal max_length).
    vocab_size, hidden_dim, latent_dim = 20, 32, 16
    max_length, nhead, dim_feedforward, batch = 8, 4, 64, 2

    key = jax.random.PRNGKey(0)
    k_param, k_tok, k_eps = jax.random.split(key, 3)

    params = init_params(k_param, vocab_size, hidden_dim, latent_dim,
                         max_length, dim_feedforward)
    prep = prepare_params(params, nhead)
    x = jax.random.randint(k_tok, (batch, max_length), 0, vocab_size, dtype=jnp.int32)

    fwd = jax.jit(functools.partial(vae_forward, nhead=nhead, vocab=vocab_size))
    probs, mu, log_var = fwd(prep, x, k_eps)
    jax.block_until_ready((probs, mu, log_var))

    assert probs.shape == (batch, max_length, vocab_size)
    assert mu.shape == (batch, latent_dim) and log_var.shape == (batch, latent_dim)
    assert bool(jnp.all(jnp.isfinite(probs)))
    assert bool(jnp.allclose(jnp.sum(probs, axis=-1), 1.0, atol=1e-3))
    print("KERNEL_OK")
</pallas_src>

<mosaic_0001>
module attributes {stable_mosaic.version = 11 : i64} {
  func.func @_encoder_kernel(%arg0: i32, %arg1: memref<8x2x32xf32, #tpu.memory_space<vmem>>, %arg2: memref<32x128xbf16, #tpu.memory_space<vmem>>, %arg3: memref<32x128xbf16, #tpu.memory_space<vmem>>, %arg4: memref<1x128xf32, #tpu.memory_space<vmem>>, %arg5: memref<32x16xbf16, #tpu.memory_space<vmem>>, %arg6: memref<1x16xf32, #tpu.memory_space<vmem>>, %arg7: memref<32x16xbf16, #tpu.memory_space<vmem>>, %arg8: memref<1x16xf32, #tpu.memory_space<vmem>>, %arg9: memref<16x32xbf16, #tpu.memory_space<vmem>>, %arg10: memref<1x32xf32, #tpu.memory_space<vmem>>, %arg11: memref<2x16xf32, #tpu.memory_space<vmem>>, %arg12: memref<2x16xf32, #tpu.memory_space<vmem>>, %arg13: memref<2x16xf32, #tpu.memory_space<vmem>>, %arg14: memref<2x32xf32, #tpu.memory_space<vmem>>, %arg15: memref<8x2x128xbf16, #tpu.memory_space<vmem>>) attributes {dimension_semantics = [#tpu.dimension_semantics<parallel>], iteration_bounds = array<i64: 1>, scalar_prefetch = 0 : i64, scratch_operands = 1 : i64, tpu.core_type = #tpu.core_type<tc>, window_params = [{transform_indices = @transform_0, window_bounds = array<i64: 8, 2, 32>}, {pipeline_mode = #tpu.pipeline_mode<synchronous>, transform_indices = @transform_1, window_bounds = array<i64: 32, 128>}, {pipeline_mode = #tpu.pipeline_mode<synchronous>, transform_indices = @transform_2, window_bounds = array<i64: 32, 128>}, {pipeline_mode = #tpu.pipeline_mode<synchronous>, transform_indices = @transform_3, window_bounds = array<i64: 1, 128>}, {pipeline_mode = #tpu.pipeline_mode<synchronous>, transform_indices = @transform_4, window_bounds = array<i64: 32, 16>}, {pipeline_mode = #tpu.pipeline_mode<synchronous>, transform_indices = @transform_5, window_bounds = array<i64: 1, 16>}, {pipeline_mode = #tpu.pipeline_mode<synchronous>, transform_indices = @transform_6, window_bounds = array<i64: 32, 16>}, {pipeline_mode = #tpu.pipeline_mode<synchronous>, transform_indices = @transform_7, window_bounds = array<i64: 1, 16>}, {pipeline_mode = #tpu.pipeline_mode<synchronous>, transform_indices = @transform_8, window_bounds = array<i64: 16, 32>}, {pipeline_mode = #tpu.pipeline_mode<synchronous>, transform_indices = @transform_9, window_bounds = array<i64: 1, 32>}, {transform_indices = @transform_10, window_bounds = array<i64: 2, 16>}, {transform_indices = @transform_11, window_bounds = array<i64: 2, 16>}, {transform_indices = @transform_12, window_bounds = array<i64: 2, 16>}, {transform_indices = @transform_13, window_bounds = array<i64: 2, 32>}]} {
    %c0 = arith.constant 0 : index
    %c0_0 = arith.constant 0 : index
    %c0_1 = arith.constant 0 : index
    %0 = vector.load %arg1[%c0, %c0_0, %c0_1] : memref<8x2x32xf32, #tpu.memory_space<vmem>>, vector<8x2x32xf32>
    %1 = vector.shape_cast %0 : vector<8x2x32xf32> to vector<16x32xf32>
    %2 = arith.truncf %1 : vector<16x32xf32> to vector<16x32xbf16>
    %c0_2 = arith.constant 0 : index
    %c0_3 = arith.constant 0 : index
    %3 = vector.load %arg2[%c0_2, %c0_3] : memref<32x128xbf16, #tpu.memory_space<vmem>>, vector<32x128xbf16>
    %cst = arith.constant dense<0.000000e+00> : vector<16x128xf32>
    %4 = tpu.matmul %2, %3, %cst {dimension_numbers = #tpu.dot_dimension_numbers<[1], [0], [0], [1], [0, 0, 1, 1], [], []>} : vector<16x32xbf16>, vector<32x128xbf16>, vector<16x128xf32> -> vector<16x128xf32>
    %c0_4 = arith.constant 0 : index
    %c0_5 = arith.constant 0 : index
    %5 = vector.load %arg4[%c0_4, %c0_5] : memref<1x128xf32, #tpu.memory_space<vmem>>, vector<1x128xf32>
    %6 = vector.broadcast %5 : vector<1x128xf32> to vector<16x128xf32>
    %7 = arith.addf %4, %6 : vector<16x128xf32>
    %8 = vector.shape_cast %7 : vector<16x128xf32> to vector<8x2x128xf32>
    %9 = arith.truncf %8 : vector<8x2x128xf32> to vector<8x2x128xbf16>
    %c0_6 = arith.constant 0 : index
    %c0_7 = arith.constant 0 : index
    %c0_8 = arith.constant 0 : index
    %10 = vector.load %arg15[%c0_6, %c0_7, %c0_8] : memref<8x2x128xbf16, #tpu.memory_space<vmem>>, vector<8x2x128xbf16>
    tpu.vector_store %arg15[%c0_6, %c0_7, %c0_8], %9 {strides = array<i32>} : memref<8x2x128xbf16, #tpu.memory_space<vmem>>, vector<8x2x128xbf16>,
    %c0_9 = arith.constant 0 : index
    %c0_10 = arith.constant 0 : index
    %11 = vector.load %arg3[%c0_9, %c0_10] : memref<32x128xbf16, #tpu.memory_space<vmem>>, vector<32x128xbf16>
    %cst_11 = arith.constant 0.000000e+00 : f32
    %12 = vector.broadcast %cst_11 : f32 to vector<2x32xf32>
    %c0_12 = arith.constant 0 : index
    %c0_13 = arith.constant 0 : index
    %c0_14 = arith.constant 0 : index
    %13 = vector.load %arg15[%c0_12, %c0_13, %c0_14] : memref<8x2x128xbf16, #tpu.memory_space<vmem>>, vector<1x2x128xbf16>
    %14 = vector.shape_cast %13 : vector<1x2x128xbf16> to vector<2x128xbf16>
    %15 = arith.extf %14 : vector<2x128xbf16> to vector<2x128xf32>
    %16 = arith.truncf %12 : vector<2x32xf32> to vector<2x32xbf16>
    %cst_15 = arith.constant dense<0.000000e+00> : vector<2x128xf32>
    %17 = tpu.matmul %16, %11, %cst_15 {dimension_numbers = #tpu.dot_dimension_numbers<[1], [0], [0], [1], [0, 0, 1, 1], [], []>} : vector<2x32xbf16>, vector<32x128xbf16>, vector<2x128xf32> -> vector<2x128xf32>
    %18 = arith.addf %15, %17 : vector<2x128xf32>
    %19 = vector.extract_strided_slice %18 {offsets = [0, 0], sizes = [2, 96], strides = [1, 1]} : vector<2x128xf32> to vector<2x96xf32>
    %20 = arith.negf %19 : vector<2x96xf32>
    %21 = math.exp %20 : vector<2x96xf32>
    %cst_16 = arith.constant 1.000000e+00 : f32
    %22 = vector.broadcast %cst_16 : f32 to vector<2x96xf32>
    %23 = arith.addf %22, %21 : vector<2x96xf32>
    %24 = arith.divf %22, %23 : vector<2x96xf32>
    %25 = vector.extract_strided_slice %24 {offsets = [0, 0], sizes = [2, 32], strides = [1, 1]} : vector<2x96xf32> to vector<2x32xf32>
    %26 = vector.extract_strided_slice %24 {offsets = [0, 32], sizes = [2, 32], strides = [1, 1]} : vector<2x96xf32> to vector<2x32xf32>
    %27 = vector.extract_strided_slice %24 {offsets = [0, 64], sizes = [2, 32], strides = [1, 1]} : vector<2x96xf32> to vector<2x32xf32>
    %28 = vector.extract_strided_slice %18 {offsets = [0, 96], sizes = [2, 32], strides = [1, 1]} : vector<2x128xf32> to vector<2x32xf32>
    %29 = math.tanh %28 : vector<2x32xf32>
    %30 = arith.mulf %26, %12 : vector<2x32xf32>
    %31 = arith.mulf %25, %29 : vector<2x32xf32>
    %32 = arith.addf %30, %31 : vector<2x32xf32>
    %33 = math.tanh %32 : vector<2x32xf32>
    %34 = arith.mulf %27, %33 : vector<2x32xf32>
    %c1 = arith.constant 1 : index
    %c0_17 = arith.constant 0 : index
    %c0_18 = arith.constant 0 : index
    %35 = vector.load %arg15[%c1, %c0_17, %c0_18] : memref<8x2x128xbf16, #tpu.memory_space<vmem>>, vector<1x2x128xbf16>
    %36 = vector.shape_cast %35 : vector<1x2x128xbf16> to vector<2x128xbf16>
    %37 = arith.extf %36 : vector<2x128xbf16> to vector<2x128xf32>
    %38 = arith.truncf %34 : vector<2x32xf32> to vector<2x32xbf16>
    %cst_19 = arith.constant dense<0.000000e+00> : vector<2x128xf32>
    %39 = tpu.matmul %38, %11, %cst_19 {dimension_numbers = #tpu.dot_dimension_numbers<[1], [0], [0], [1], [0, 0, 1, 1], [], []>} : vector<2x32xbf16>, vector<32x128xbf16>, vector<2x128xf32> -> vector<2x128xf32>
    %40 = arith.addf %37, %39 : vector<2x128xf32>
    %41 = vector.extract_strided_slice %40 {offsets = [0, 0], sizes = [2, 96], strides = [1, 1]} : vector<2x128xf32> to vector<2x96xf32>
    %42 = arith.negf %41 : vector<2x96xf32>
    %43 = math.exp %42 : vector<2x96xf32>
    %cst_20 = arith.constant 1.000000e+00 : f32
    %44 = vector.broadcast %cst_20 : f32 to vector<2x96xf32>
    %45 = arith.addf %44, %43 : vector<2x96xf32>
    %46 = arith.divf %44, %45 : vector<2x96xf32>
    %47 = vector.extract_strided_slice %46 {offsets = [0, 0], sizes = [2, 32], strides = [1, 1]} : vector<2x96xf32> to vector<2x32xf32>
    %48 = vector.extract_strided_slice %46 {offsets = [0, 32], sizes = [2, 32], strides = [1, 1]} : vector<2x96xf32> to vector<2x32xf32>
    %49 = vector.extract_strided_slice %46 {offsets = [0, 64], sizes = [2, 32], strides = [1, 1]} : vector<2x96xf32> to vector<2x32xf32>
    %50 = vector.extract_strided_slice %40 {offsets = [0, 96], sizes = [2, 32], strides = [1, 1]} : vector<2x128xf32> to vector<2x32xf32>
    %51 = math.tanh %50 : vector<2x32xf32>
    %52 = arith.mulf %48, %32 : vector<2x32xf32>
    %53 = arith.mulf %47, %51 : vector<2x32xf32>
    %54 = arith.addf %52, %53 : vector<2x32xf32>
    %55 = math.tanh %54 : vector<2x32xf32>
    %56 = arith.mulf %49, %55 : vector<2x32xf32>
    %c2 = arith.constant 2 : index
    %c0_21 = arith.constant 0 : index
    %c0_22 = arith.constant 0 : index
    %57 = vector.load %arg15[%c2, %c0_21, %c0_22] : memref<8x2x128xbf16, #tpu.memory_space<vmem>>, vector<1x2x128xbf16>
    %58 = vector.shape_cast %57 : vector<1x2x128xbf16> to vector<2x128xbf16>
    %59 = arith.extf %58 : vector<2x128xbf16> to vector<2x128xf32>
    %60 = arith.truncf %56 : vector<2x32xf32> to vector<2x32xbf16>
    %cst_23 = arith.constant dense<0.000000e+00> : vector<2x128xf32>
    %61 = tpu.matmul %60, %11, %cst_23 {dimension_numbers = #tpu.dot_dimension_numbers<[1], [0], [0], [1], [0, 0, 1, 1], [], []>} : vector<2x32xbf16>, vector<32x128xbf16>, vector<2x128xf32> -> vector<2x128xf32>
    %62 = arith.addf %59, %61 : vector<2x128xf32>
    %63 = vector.extract_strided_slice %62 {offsets = [0, 0], sizes = [2, 96], strides = [1, 1]} : vector<2x128xf32> to vector<2x96xf32>
    %64 = arith.negf %63 : vector<2x96xf32>
    %65 = math.exp %64 : vector<2x96xf32>
    %cst_24 = arith.constant 1.000000e+00 : f32
    %66 = vector.broadcast %cst_24 : f32 to vector<2x96xf32>
    %67 = arith.addf %66, %65 : vector<2x96xf32>
    %68 = arith.divf %66, %67 : vector<2x96xf32>
    %69 = vector.extract_strided_slice %68 {offsets = [0, 0], sizes = [2, 32], strides = [1, 1]} : vector<2x96xf32> to vector<2x32xf32>
    %70 = vector.extract_strided_slice %68 {offsets = [0, 32], sizes = [2, 32], strides = [1, 1]} : vector<2x96xf32> to vector<2x32xf32>
    %71 = vector.extract_strided_slice %68 {offsets = [0, 64], sizes = [2, 32], strides = [1, 1]} : vector<2x96xf32> to vector<2x32xf32>
    %72 = vector.extract_strided_slice %62 {offsets = [0, 96], sizes = [2, 32], strides = [1, 1]} : vector<2x128xf32> to vector<2x32xf32>
    %73 = math.tanh %72 : vector<2x32xf32>
    %74 = arith.mulf %70, %54 : vector<2x32xf32>
    %75 = arith.mulf %69, %73 : vector<2x32xf32>
    %76 = arith.addf %74, %75 : vector<2x32xf32>
    %77 = math.tanh %76 : vector<2x32xf32>
    %78 = arith.mulf %71, %77 : vector<2x32xf32>
    %c3 = arith.constant 3 : index
    %c0_25 = arith.constant 0 : index
    %c0_26 = arith.constant 0 : index
    %79 = vector.load %arg15[%c3, %c0_25, %c0_26] : memref<8x2x128xbf16, #tpu.memory_space<vmem>>, vector<1x2x128xbf16>
    %80 = vector.shape_cast %79 : vector<1x2x128xbf16> to vector<2x128xbf16>
    %81 = arith.extf %80 : vector<2x128xbf16> to vector<2x128xf32>
    %82 = arith.truncf %78 : vector<2x32xf32> to vector<2x32xbf16>
    %cst_27 = arith.constant dense<0.000000e+00> : vector<2x128xf32>
    %83 = tpu.matmul %82, %11, %cst_27 {dimension_numbers = #tpu.dot_dimension_numbers<[1], [0], [0], [1], [0, 0, 1, 1], [], []>} : vector<2x32xbf16>, vector<32x128xbf16>, vector<2x128xf32> -> vector<2x128xf32>
    %84 = arith.addf %81, %83 : vector<2x128xf32>
    %85 = vector.extract_strided_slice %84 {offsets = [0, 0], sizes = [2, 96], strides = [1, 1]} : vector<2x128xf32> to vector<2x96xf32>
    %86 = arith.negf %85 : vector<2x96xf32>
    %87 = math.exp %86 : vector<2x96xf32>
    %cst_28 = arith.constant 1.000000e+00 : f32
    %88 = vector.broadcast %cst_28 : f32 to vector<2x96xf32>
    %89 = arith.addf %88, %87 : vector<2x96xf32>
    %90 = arith.divf %88, %89 : vector<2x96xf32>
    %91 = vector.extract_strided_slice %90 {offsets = [0, 0], sizes = [2, 32], strides = [1, 1]} : vector<2x96xf32> to vector<2x32xf32>
    %92 = vector.extract_strided_slice %90 {offsets = [0, 32], sizes = [2, 32], strides = [1, 1]} : vector<2x96xf32> to vector<2x32xf32>
    %93 = vector.extract_strided_slice %90 {offsets = [0, 64], sizes = [2, 32], strides = [1, 1]} : vector<2x96xf32> to vector<2x32xf32>
    %94 = vector.extract_strided_slice %84 {offsets = [0, 96], sizes = [2, 32], strides = [1, 1]} : vector<2x128xf32> to vector<2x32xf32>
    %95 = math.tanh %94 : vector<2x32xf32>
    %96 = arith.mulf %92, %76 : vector<2x32xf32>
    %97 = arith.mulf %91, %95 : vector<2x32xf32>
    %98 = arith.addf %96, %97 : vector<2x32xf32>
    %99 = math.tanh %98 : vector<2x32xf32>
    %100 = arith.mulf %93, %99 : vector<2x32xf32>
    %c4 = arith.constant 4 : index
    %c0_29 = arith.constant 0 : index
    %c0_30 = arith.constant 0 : index
    %101 = vector.load %arg15[%c4, %c0_29, %c0_30] : memref<8x2x128xbf16, #tpu.memory_space<vmem>>, vector<1x2x128xbf16>
    %102 = vector.shape_cast %101 : vector<1x2x128xbf16> to vector<2x128xbf16>
    %103 = arith.extf %102 : vector<2x128xbf16> to vector<2x128xf32>
    %104 = arith.truncf %100 : vector<2x32xf32> to vector<2x32xbf16>
    %cst_31 = arith.constant dense<0.000000e+00> : vector<2x128xf32>
    %105 = tpu.matmul %104, %11, %cst_31 {dimension_numbers = #tpu.dot_dimension_numbers<[1], [0], [0], [1], [0, 0, 1, 1], [], []>} : vector<2x32xbf16>, vector<32x128xbf16>, vector<2x128xf32> -> vector<2x128xf32>
    %106 = arith.addf %103, %105 : vector<2x128xf32>
    %107 = vector.extract_strided_slice %106 {offsets = [0, 0], sizes = [2, 96], strides = [1, 1]} : vector<2x128xf32> to vector<2x96xf32>
    %108 = arith.negf %107 : vector<2x96xf32>
    %109 = math.exp %108 : vector<2x96xf32>
    %cst_32 = arith.constant 1.000000e+00 : f32
    %110 = vector.broadcast %cst_32 : f32 to vector<2x96xf32>
    %111 = arith.addf %110, %109 : vector<2x96xf32>
    %112 = arith.divf %110, %111 : vector<2x96xf32>
    %113 = vector.extract_strided_slice %112 {offsets = [0, 0], sizes = [2, 32], strides = [1, 1]} : vector<2x96xf32> to vector<2x32xf32>
    %114 = vector.extract_strided_slice %112 {offsets = [0, 32], sizes = [2, 32], strides = [1, 1]} : vector<2x96xf32> to vector<2x32xf32>
    %115 = vector.extract_strided_slice %112 {offsets = [0, 64], sizes = [2, 32], strides = [1, 1]} : vector<2x96xf32> to vector<2x32xf32>
    %116 = vector.extract_strided_slice %106 {offsets = [0, 96], sizes = [2, 32], strides = [1, 1]} : vector<2x128xf32> to vector<2x32xf32>
    %117 = math.tanh %116 : vector<2x32xf32>
    %118 = arith.mulf %114, %98 : vector<2x32xf32>
    %119 = arith.mulf %113, %117 : vector<2x32xf32>
    %120 = arith.addf %118, %119 : vector<2x32xf32>
    %121 = math.tanh %120 : vector<2x32xf32>
    %122 = arith.mulf %115, %121 : vector<2x32xf32>
    %c5 = arith.constant 5 : index
    %c0_33 = arith.constant 0 : index
    %c0_34 = arith.constant 0 : index
    %123 = vector.load %arg15[%c5, %c0_33, %c0_34] : memref<8x2x128xbf16, #tpu.memory_space<vmem>>, vector<1x2x128xbf16>
    %124 = vector.shape_cast %123 : vector<1x2x128xbf16> to vector<2x128xbf16>
    %125 = arith.extf %124 : vector<2x128xbf16> to vector<2x128xf32>
    %126 = arith.truncf %122 : vector<2x32xf32> to vector<2x32xbf16>
    %cst_35 = arith.constant dense<0.000000e+00> : vector<2x128xf32>
    %127 = tpu.matmul %126, %11, %cst_35 {dimension_numbers = #tpu.dot_dimension_numbers<[1], [0], [0], [1], [0, 0, 1, 1], [], []>} : vector<2x32xbf16>, vector<32x128xbf16>, vector<2x128xf32> -> vector<2x128xf32>
    %128 = arith.addf %125, %127 : vector<2x128xf32>
    %129 = vector.extract_strided_slice %128 {offsets = [0, 0], sizes = [2, 96], strides = [1, 1]} : vector<2x128xf32> to vector<2x96xf32>
    %130 = arith.negf %129 : vector<2x96xf32>
    %131 = math.exp %130 : vector<2x96xf32>
    %cst_36 = arith.constant 1.000000e+00 : f32
    %132 = vector.broadcast %cst_36 : f32 to vector<2x96xf32>
    %133 = arith.addf %132, %131 : vector<2x96xf32>
    %134 = arith.divf %132, %133 : vector<2x96xf32>
    %135 = vector.extract_strided_slice %134 {offsets = [0, 0], sizes = [2, 32], strides = [1, 1]} : vector<2x96xf32> to vector<2x32xf32>
    %136 = vector.extract_strided_slice %134 {offsets = [0, 32], sizes = [2, 32], strides = [1, 1]} : vector<2x96xf32> to vector<2x32xf32>
    %137 = vector.extract_strided_slice %134 {offsets = [0, 64], sizes = [2, 32], strides = [1, 1]} : vector<2x96xf32> to vector<2x32xf32>
    %138 = vector.extract_strided_slice %128 {offsets = [0, 96], sizes = [2, 32], strides = [1, 1]} : vector<2x128xf32> to vector<2x32xf32>
    %139 = math.tanh %138 : vector<2x32xf32>
    %140 = arith.mulf %136, %120 : vector<2x32xf32>
    %141 = arith.mulf %135, %139 : vector<2x32xf32>
    %142 = arith.addf %140, %141 : vector<2x32xf32>
    %143 = math.tanh %142 : vector<2x32xf32>
    %144 = arith.mulf %137, %143 : vector<2x32xf32>
    %c6 = arith.constant 6 : index
    %c0_37 = arith.constant 0 : index
    %c0_38 = arith.constant 0 : index
    %145 = vector.load %arg15[%c6, %c0_37, %c0_38] : memref<8x2x128xbf16, #tpu.memory_space<vmem>>, vector<1x2x128xbf16>
    %146 = vector.shape_cast %145 : vector<1x2x128xbf16> to vector<2x128xbf16>
    %147 = arith.extf %146 : vector<2x128xbf16> to vector<2x128xf32>
    %148 = arith.truncf %144 : vector<2x32xf32> to vector<2x32xbf16>
    %cst_39 = arith.constant dense<0.000000e+00> : vector<2x128xf32>
    %149 = tpu.matmul %148, %11, %cst_39 {dimension_numbers = #tpu.dot_dimension_numbers<[1], [0], [0], [1], [0, 0, 1, 1], [], []>} : vector<2x32xbf16>, vector<32x128xbf16>, vector<2x128xf32> -> vector<2x128xf32>
    %150 = arith.addf %147, %149 : vector<2x128xf32>
    %151 = vector.extract_strided_slice %150 {offsets = [0, 0], sizes = [2, 96], strides = [1, 1]} : vector<2x128xf32> to vector<2x96xf32>
    %152 = arith.negf %151 : vector<2x96xf32>
    %153 = math.exp %152 : vector<2x96xf32>
    %cst_40 = arith.constant 1.000000e+00 : f32
    %154 = vector.broadcast %cst_40 : f32 to vector<2x96xf32>
    %155 = arith.addf %154, %153 : vector<2x96xf32>
    %156 = arith.divf %154, %155 : vector<2x96xf32>
    %157 = vector.extract_strided_slice %156 {offsets = [0, 0], sizes = [2, 32], strides = [1, 1]} : vector<2x96xf32> to vector<2x32xf32>
    %158 = vector.extract_strided_slice %156 {offsets = [0, 32], sizes = [2, 32], strides = [1, 1]} : vector<2x96xf32> to vector<2x32xf32>
    %159 = vector.extract_strided_slice %156 {offsets = [0, 64], sizes = [2, 32], strides = [1, 1]} : vector<2x96xf32> to vector<2x32xf32>
    %160 = vector.extract_strided_slice %150 {offsets = [0, 96], sizes = [2, 32], strides = [1, 1]} : vector<2x128xf32> to vector<2x32xf32>
    %161 = math.tanh %160 : vector<2x32xf32>
    %162 = arith.mulf %158, %142 : vector<2x32xf32>
    %163 = arith.mulf %157, %161 : vector<2x32xf32>
    %164 = arith.addf %162, %163 : vector<2x32xf32>
    %165 = math.tanh %164 : vector<2x32xf32>
    %166 = arith.mulf %159, %165 : vector<2x32xf32>
    %c7 = arith.constant 7 : index
    %c0_41 = arith.constant 0 : index
    %c0_42 = arith.constant 0 : index
    %167 = vector.load %arg15[%c7, %c0_41, %c0_42] : memref<8x2x128xbf16, #tpu.memory_space<vmem>>, vector<1x2x128xbf16>
    %168 = vector.shape_cast %167 : vector<1x2x128xbf16> to vector<2x128xbf16>
    %169 = arith.extf %168 : vector<2x128xbf16> to vector<2x128xf32>
    %170 = arith.truncf %166 : vector<2x32xf32> to vector<2x32xbf16>
    %cst_43 = arith.constant dense<0.000000e+00> : vector<2x128xf32>
    %171 = tpu.matmul %170, %11, %cst_43 {dimension_numbers = #tpu.dot_dimension_numbers<[1], [0], [0], [1], [0, 0, 1, 1], [], []>} : vector<2x32xbf16>, vector<32x128xbf16>, vector<2x128xf32> -> vector<2x128xf32>
    %172 = arith.addf %169, %171 : vector<2x128xf32>
    %173 = vector.extract_strided_slice %172 {offsets = [0, 0], sizes = [2, 96], strides = [1, 1]} : vector<2x128xf32> to vector<2x96xf32>
    %174 = arith.negf %173 : vector<2x96xf32>
    %175 = math.exp %174 : vector<2x96xf32>
    %cst_44 = arith.constant 1.000000e+00 : f32
    %176 = vector.broadcast %cst_44 : f32 to vector<2x96xf32>
    %177 = arith.addf %176, %175 : vector<2x96xf32>
    %178 = arith.divf %176, %177 : vector<2x96xf32>
    %179 = vector.extract_strided_slice %178 {offsets = [0, 0], sizes = [2, 32], strides = [1, 1]} : vector<2x96xf32> to vector<2x32xf32>
    %180 = vector.extract_strided_slice %178 {offsets = [0, 32], sizes = [2, 32], strides = [1, 1]} : vector<2x96xf32> to vector<2x32xf32>
    %181 = vector.extract_strided_slice %178 {offsets = [0, 64], sizes = [2, 32], strides = [1, 1]} : vector<2x96xf32> to vector<2x32xf32>
    %182 = vector.extract_strided_slice %172 {offsets = [0, 96], sizes = [2, 32], strides = [1, 1]} : vector<2x128xf32> to vector<2x32xf32>
    %183 = math.tanh %182 : vector<2x32xf32>
    %184 = arith.mulf %180, %164 : vector<2x32xf32>
    %185 = arith.mulf %179, %183 : vector<2x32xf32>
    %186 = arith.addf %184, %185 : vector<2x32xf32>
    %187 = math.tanh %186 : vector<2x32xf32>
    %188 = arith.mulf %181, %187 : vector<2x32xf32>
    %189 = arith.truncf %188 : vector<2x32xf32> to vector<2x32xbf16>
    %c0_45 = arith.constant 0 : index
    %c0_46 = arith.constant 0 : index
    %190 = vector.load %arg5[%c0_45, %c0_46] : memref<32x16xbf16, #tpu.memory_space<vmem>>, vector<32x16xbf16>
    %cst_47 = arith.constant dense<0.000000e+00> : vector<2x16xf32>
    %191 = tpu.matmul %189, %190, %cst_47 {dimension_numbers = #tpu.dot_dimension_numbers<[1], [0], [0], [1], [0, 0, 1, 1], [], []>} : vector<2x32xbf16>, vector<32x16xbf16>, vector<2x16xf32> -> vector<2x16xf32>
    %c0_48 = arith.constant 0 : index
    %c0_49 = arith.constant 0 : index
    %192 = vector.load %arg6[%c0_48, %c0_49] : memref<1x16xf32, #tpu.memory_space<vmem>>, vector<1x16xf32>
    %193 = vector.broadcast %192 : vector<1x16xf32> to vector<2x16xf32>
    %194 = arith.addf %191, %193 : vector<2x16xf32>
    %c0_50 = arith.constant 0 : index
    %c0_51 = arith.constant 0 : index
    %195 = vector.load %arg7[%c0_50, %c0_51] : memref<32x16xbf16, #tpu.memory_space<vmem>>, vector<32x16xbf16>
    %cst_52 = arith.constant dense<0.000000e+00> : vector<2x16xf32>
    %196 = tpu.matmul %189, %195, %cst_52 {dimension_numbers = #tpu.dot_dimension_numbers<[1], [0], [0], [1], [0, 0, 1, 1], [], []>} : vector<2x32xbf16>, vector<32x16xbf16>, vector<2x16xf32> -> vector<2x16xf32>
    %c0_53 = arith.constant 0 : index
    %c0_54 = arith.constant 0 : index
    %197 = vector.load %arg8[%c0_53, %c0_54] : memref<1x16xf32, #tpu.memory_space<vmem>>, vector<1x16xf32>
    %198 = vector.broadcast %197 : vector<1x16xf32> to vector<2x16xf32>
    %199 = arith.addf %196, %198 : vector<2x16xf32>
    %c0_55 = arith.constant 0 : index
    %c0_56 = arith.constant 0 : index
    %200 = vector.load %arg11[%c0_55, %c0_56] : memref<2x16xf32, #tpu.memory_space<vmem>>, vector<2x16xf32>
    %cst_57 = arith.constant 5.000000e-01 : f32
    %201 = vector.broadcast %cst_57 : f32 to vector<2x16xf32>
    %202 = arith.mulf %201, %199 : vector<2x16xf32>
    %203 = math.exp %202 : vector<2x16xf32>
    %204 = arith.mulf %200, %203 : vector<2x16xf32>
    %205 = arith.addf %194, %204 : vector<2x16xf32>
    %206 = arith.truncf %205 : vector<2x16xf32> to vector<2x16xbf16>
    %c0_58 = arith.constant 0 : index
    %c0_59 = arith.constant 0 : index
    %207 = vector.load %arg9[%c0_58, %c0_59] : memref<16x32xbf16, #tpu.memory_space<vmem>>, vector<16x32xbf16>
    %cst_60 = arith.constant dense<0.000000e+00> : vector<2x32xf32>
    %208 = tpu.matmul %206, %207, %cst_60 {dimension_numbers = #tpu.dot_dimension_numbers<[1], [0], [0], [1], [0, 0, 1, 1], [], []>} : vector<2x16xbf16>, vector<16x32xbf16>, vector<2x32xf32> -> vector<2x32xf32>
    %c0_61 = arith.constant 0 : index
    %c0_62 = arith.constant 0 : index
    %209 = vector.load %arg10[%c0_61, %c0_62] : memref<1x32xf32, #tpu.memory_space<vmem>>, vector<1x32xf32>
    %210 = vector.broadcast %209 : vector<1x32xf32> to vector<2x32xf32>
    %211 = arith.addf %208, %210 : vector<2x32xf32>
    %c0_63 = arith.constant 0 : index
    %c0_64 = arith.constant 0 : index
    %212 = vector.load %arg12[%c0_63, %c0_64] : memref<2x16xf32, #tpu.memory_space<vmem>>, vector<2x16xf32>
    tpu.vector_store %arg12[%c0_63, %c0_64], %194 {strides = array<i32>} : memref<2x16xf32, #tpu.memory_space<vmem>>, vector<2x16xf32>,
    %c0_65 = arith.constant 0 : index
    %c0_66 = arith.constant 0 : index
    %213 = vector.load %arg13[%c0_65, %c0_66] : memref<2x16xf32, #tpu.memory_space<vmem>>, vector<2x16xf32>
    tpu.vector_store %arg13[%c0_65, %c0_66], %199 {strides = array<i32>} : memref<2x16xf32, #tpu.memory_space<vmem>>, vector<2x16xf32>,
    %c0_67 = arith.constant 0 : index
    %c0_68 = arith.constant 0 : index
    %214 = vector.load %arg14[%c0_67, %c0_68] : memref<2x32xf32, #tpu.memory_space<vmem>>, vector<2x32xf32>
    tpu.vector_store %arg14[%c0_67, %c0_68], %211 {strides = array<i32>} : memref<2x32xf32, #tpu.memory_space<vmem>>, vector<2x32xf32>,
    return
  }
  func.func @transform_0(%arg0: i32) -> (i32, i32, i32) {
    %c0_i32 = arith.constant 0 : i32
    %c0_i32_0 = arith.constant 0 : i32
    %c0_i32_1 = arith.constant 0 : i32
    return %c0_i32, %arg0, %c0_i32_0 : i32, i32, i32
  }
  func.func @transform_1(%arg0: i32) -> (i32, i32) {
    %c0_i32 = arith.constant 0 : i32
    %c0_i32_0 = arith.constant 0 : i32
    %c0_i32_1 = arith.constant 0 : i32
    return %c0_i32, %c0_i32_0 : i32, i32
  }
  func.func @transform_2(%arg0: i32) -> (i32, i32) {
    %c0_i32 = arith.constant 0 : i32
    %c0_i32_0 = arith.constant 0 : i32
    %c0_i32_1 = arith.constant 0 : i32
    return %c0_i32, %c0_i32_0 : i32, i32
  }
  func.func @transform_3(%arg0: i32) -> (i32, i32) {
    %c0_i32 = arith.constant 0 : i32
    %c0_i32_0 = arith.constant 0 : i32
    %c0_i32_1 = arith.constant 0 : i32
    return %c0_i32, %c0_i32_0 : i32, i32
  }
  func.func @transform_4(%arg0: i32) -> (i32, i32) {
    %c0_i32 = arith.constant 0 : i32
    %c0_i32_0 = arith.constant 0 : i32
    %c0_i32_1 = arith.constant 0 : i32
    return %c0_i32, %c0_i32_0 : i32, i32
  }
  func.func @transform_5(%arg0: i32) -> (i32, i32) {
    %c0_i32 = arith.constant 0 : i32
    %c0_i32_0 = arith.constant 0 : i32
    %c0_i32_1 = arith.constant 0 : i32
    return %c0_i32, %c0_i32_0 : i32, i32
  }
  func.func @transform_6(%arg0: i32) -> (i32, i32) {
    %c0_i32 = arith.constant 0 : i32
    %c0_i32_0 = arith.constant 0 : i32
    %c0_i32_1 = arith.constant 0 : i32
    return %c0_i32, %c0_i32_0 : i32, i32
  }
  func.func @transform_7(%arg0: i32) -> (i32, i32) {
    %c0_i32 = arith.constant 0 : i32
    %c0_i32_0 = arith.constant 0 : i32
    %c0_i32_1 = arith.constant 0 : i32
    return %c0_i32, %c0_i32_0 : i32, i32
  }
  func.func @transform_8(%arg0: i32) -> (i32, i32) {
    %c0_i32 = arith.constant 0 : i32
    %c0_i32_0 = arith.constant 0 : i32
    %c0_i32_1 = arith.constant 0 : i32
    return %c0_i32, %c0_i32_0 : i32, i32
  }
  func.func @transform_9(%arg0: i32) -> (i32, i32) {
    %c0_i32 = arith.constant 0 : i32
    %c0_i32_0 = arith.constant 0 : i32
    %c0_i32_1 = arith.constant 0 : i32
    return %c0_i32, %c0_i32_0 : i32, i32
  }
  func.func @transform_10(%arg0: i32) -> (i32, i32) {
    %c0_i32 = arith.constant 0 : i32
    %c0_i32_0 = arith.constant 0 : i32
    return %arg0, %c0_i32 : i32, i32
  }
  func.func @transform_11(%arg0: i32) -> (i32, i32) {
    %c0_i32 = arith.constant 0 : i32
    %c0_i32_0 = arith.constant 0 : i32
    return %arg0, %c0_i32 : i32, i32
  }
  func.func @transform_12(%arg0: i32) -> (i32, i32) {
    %c0_i32 = arith.constant 0 : i32
    %c0_i32_0 = arith.constant 0 : i32
    return %arg0, %c0_i32 : i32, i32
  }
  func.func @transform_13(%arg0: i32) -> (i32, i32) {
    %c0_i32 = arith.constant 0 : i32
    %c0_i32_0 = arith.constant 0 : i32
    return %arg0, %c0_i32 : i32, i32
  }
}

module attributes {stable_mosaic.version = 11 : i64} {
  func.func @_decoder_kernel(%arg0: i32, %arg1: memref<2x32xf32, #tpu.memory_space<vmem>>, %arg2: memref<8x1x32xf32, #tpu.memory_space<vmem>>, %arg3: memref<32x32xbf16, #tpu.memory_space<vmem>>, %arg4: memref<1x32xf32, #tpu.memory_space<vmem>>, %arg5: memref<32x64xbf16, #tpu.memory_space<vmem>>, %arg6: memref<1x64xf32, #tpu.memory_space<vmem>>, %arg7: memref<32x32xbf16, #tpu.memory_space<vmem>>, %arg8: memref<1x32xf32, #tpu.memory_space<vmem>>, %arg9: memref<32x32xbf16, #tpu.memory_space<vmem>>, %arg10: memref<1x32xf32, #tpu.memory_space<vmem>>, %arg11: memref<32x64xbf16, #tpu.memory_space<vmem>>, %arg12: memref<1x64xf32, #tpu.memory_space<vmem>>, %arg13: memref<32x32xbf16, #tpu.memory_space<vmem>>, %arg14: memref<1x32xf32, #tpu.memory_space<vmem>>, %arg15: memref<3x1x32xf32, #tpu.memory_space<vmem>>, %arg16: memref<3x1x32xf32, #tpu.memory_space<vmem>>, %arg17: memref<32x64xbf16, #tpu.memory_space<vmem>>, %arg18: memref<1x64xf32, #tpu.memory_space<vmem>>, %arg19: memref<64x32xbf16, #tpu.memory_space<vmem>>, %arg20: memref<1x32xf32, #tpu.memory_space<vmem>>, %arg21: memref<32x128xbf16, #tpu.memory_space<vmem>>, %arg22: memref<1x128xf32, #tpu.memory_space<vmem>>, %arg23: memref<2x8x128xf32, #tpu.memory_space<vmem>>) attributes {dimension_semantics = [#tpu.dimension_semantics<parallel>], iteration_bounds = array<i64: 1>, scalar_prefetch = 0 : i64, scratch_operands = 0 : i64, tpu.core_type = #tpu.core_type<tc>, window_params = [{pipeline_mode = #tpu.pipeline_mode<synchronous>, transform_indices = @transform_0, window_bounds = array<i64: 2, 32>}, {transform_indices = @transform_1, window_bounds = array<i64: 8, 1, 32>}, {pipeline_mode = #tpu.pipeline_mode<synchronous>, transform_indices = @transform_2, window_bounds = array<i64: 32, 32>}, {pipeline_mode = #tpu.pipeline_mode<synchronous>, transform_indices = @transform_3, window_bounds = array<i64: 1, 32>}, {pipeline_mode = #tpu.pipeline_mode<synchronous>, transform_indices = @transform_4, window_bounds = array<i64: 32, 64>}, {pipeline_mode = #tpu.pipeline_mode<synchronous>, transform_indices = @transform_5, window_bounds = array<i64: 1, 64>}, {pipeline_mode = #tpu.pipeline_mode<synchronous>, transform_indices = @transform_6, window_bounds = array<i64: 32, 32>}, {pipeline_mode = #tpu.pipeline_mode<synchronous>, transform_indices = @transform_7, window_bounds = array<i64: 1, 32>}, {pipeline_mode = #tpu.pipeline_mode<synchronous>, transform_indices = @transform_8, window_bounds = array<i64: 32, 32>}, {pipeline_mode = #tpu.pipeline_mode<synchronous>, transform_indices = @transform_9, window_bounds = array<i64: 1, 32>}, {pipeline_mode = #tpu.pipeline_mode<synchronous>, transform_indices = @transform_10, window_bounds = array<i64: 32, 64>}, {pipeline_mode = #tpu.pipeline_mode<synchronous>, transform_indices = @transform_11, window_bounds = array<i64: 1, 64>}, {pipeline_mode = #tpu.pipeline_mode<synchronous>, transform_indices = @transform_12, window_bounds = array<i64: 32, 32>}, {pipeline_mode = #tpu.pipeline_mode<synchronous>, transform_indices = @transform_13, window_bounds = array<i64: 1, 32>}, {pipeline_mode = #tpu.pipeline_mode<synchronous>, transform_indices = @transform_14, window_bounds = array<i64: 3, 1, 32>}, {pipeline_mode = #tpu.pipeline_mode<synchronous>, transform_indices = @transform_15, window_bounds = array<i64: 3, 1, 32>}, {pipeline_mode = #tpu.pipeline_mode<synchronous>, transform_indices = @transform_16, window_bounds = array<i64: 32, 64>}, {pipeline_mode = #tpu.pipeline_mode<synchronous>, transform_indices = @transform_17, window_bounds = array<i64: 1, 64>}, {pipeline_mode = #tpu.pipeline_mode<synchronous>, transform_indices = @transform_18, window_bounds = array<i64: 64, 32>}, {pipeline_mode = #tpu.pipeline_mode<synchronous>, transform_indices = @transform_19, window_bounds = array<i64: 1, 32>}, {pipeline_mode = #tpu.pipeline_mode<synchronous>, transform_indices = @transform_20, window_bounds = array<i64: 32, 128>}, {pipeline_mode = #tpu.pipeline_mode<synchronous>, transform_indices = @transform_21, window_bounds = array<i64: 1, 128>}, {transform_indices = @transform_22, window_bounds = array<i64: 2, 8, 128>}]} {
    %c0 = arith.constant 0 : index
    %c0_0 = arith.constant 0 : index
    %0 = vector.load %arg1[%c0, %c0_0] : memref<2x32xf32, #tpu.memory_space<vmem>>, vector<2x32xf32>
    %1 = vector.shape_cast %0 : vector<2x32xf32> to vector<1x2x32xf32>
    %c0_1 = arith.constant 0 : index
    %c0_2 = arith.constant 0 : index
    %c0_3 = arith.constant 0 : index
    %2 = vector.load %arg2[%c0_1, %c0_2, %c0_3] : memref<8x1x32xf32, #tpu.memory_space<vmem>>, vector<8x1x32xf32>
    %3 = vector.broadcast %1 : vector<1x2x32xf32> to vector<8x2x32xf32>
    %4 = vector.broadcast %2 : vector<8x1x32xf32> to vector<8x2x32xf32>
    %5 = arith.addf %3, %4 : vector<8x2x32xf32>
    %6 = vector.shape_cast %5 : vector<8x2x32xf32> to vector<16x32xf32>
    %7 = arith.truncf %6 : vector<16x32xf32> to vector<16x32xbf16>
    %8 = vector.shape_cast %5 : vector<8x2x32xf32> to vector<16x32xf32>
    %9 = arith.truncf %8 : vector<16x32xf32> to vector<16x32xbf16>
    %c0_4 = arith.constant 0 : index
    %c0_5 = arith.constant 0 : index
    %10 = vector.load %arg3[%c0_4, %c0_5] : memref<32x32xbf16, #tpu.memory_space<vmem>>, vector<32x32xbf16>
    %cst = arith.constant dense<0.000000e+00> : vector<16x32xf32>
    %11 = tpu.matmul %7, %10, %cst {dimension_numbers = #tpu.dot_dimension_numbers<[1], [0], [0], [1], [0, 0, 1, 1], [], []>} : vector<16x32xbf16>, vector<32x32xbf16>, vector<16x32xf32> -> vector<16x32xf32>
    %c0_6 = arith.constant 0 : index
    %c0_7 = arith.constant 0 : index
    %12 = vector.load %arg4[%c0_6, %c0_7] : memref<1x32xf32, #tpu.memory_space<vmem>>, vector<1x32xf32>
    %13 = vector.broadcast %12 : vector<1x32xf32> to vector<16x32xf32>
    %14 = arith.addf %11, %13 : vector<16x32xf32>
    %c0_8 = arith.constant 0 : index
    %c0_9 = arith.constant 0 : index
    %15 = vector.load %arg5[%c0_8, %c0_9] : memref<32x64xbf16, #tpu.memory_space<vmem>>, vector<32x64xbf16>
    %cst_10 = arith.constant dense<0.000000e+00> : vector<16x64xf32>
    %16 = tpu.matmul %9, %15, %cst_10 {dimension_numbers = #tpu.dot_dimension_numbers<[1], [0], [0], [1], [0, 0, 1, 1], [], []>} : vector<16x32xbf16>, vector<32x64xbf16>, vector<16x64xf32> -> vector<16x64xf32>
    %c0_11 = arith.constant 0 : index
    %c0_12 = arith.constant 0 : index
    %17 = vector.load %arg6[%c0_11, %c0_12] : memref<1x64xf32, #tpu.memory_space<vmem>>, vector<1x64xf32>
    %18 = vector.broadcast %17 : vector<1x64xf32> to vector<16x64xf32>
    %19 = arith.addf %16, %18 : vector<16x64xf32>
    %20 = vector.extract_strided_slice %14 {offsets = [0, 0], sizes = [16, 8], strides = [1, 1]} : vector<16x32xf32> to vector<16x8xf32>
    %21 = vector.shape_cast %20 : vector<16x8xf32> to vector<8x2x8xf32>
    %22 = vector.extract_strided_slice %19 {offsets = [0, 0], sizes = [16, 8], strides = [1, 1]} : vector<16x64xf32> to vector<16x8xf32>
    %23 = vector.shape_cast %22 : vector<16x8xf32> to vector<8x2x8xf32>
    %24 = vector.extract_strided_slice %19 {offsets = [0, 32], sizes = [16, 8], strides = [1, 1]} : vector<16x64xf32> to vector<16x8xf32>
    %25 = vector.shape_cast %24 : vector<16x8xf32> to vector<8x2x8xf32>
    %26 = arith.truncf %21 : vector<8x2x8xf32> to vector<8x2x8xbf16>
    %27 = arith.truncf %23 : vector<8x2x8xf32> to vector<8x2x8xbf16>
    "tpu.trace_start"() <{level = 10 : i32, message = "nld,nsd->nls"}> : () -> ()
    %cst_13 = arith.constant dense<0.000000e+00> : vector<8x2x2xf32>
    %28 = tpu.matmul %26, %27, %cst_13 {dimension_numbers = #tpu.dot_dimension_numbers<[2], [2], [1], [1], [0, 0, 0, 1, 1, 1], [0], [0]>} : vector<8x2x8xbf16>, vector<8x2x8xbf16>, vector<8x2x2xf32> -> vector<8x2x2xf32>
    "tpu.trace_stop"() : () -> ()
    %cst_14 = arith.constant 0.353553385 : f32
    %29 = vector.broadcast %cst_14 : f32 to vector<8x2x2xf32>
    %30 = arith.mulf %28, %29 : vector<8x2x2xf32>
    %cst_15 = arith.constant dense<0xFF800000> : vector<8x2xf32>
    %31 = vector.multi_reduction <maximumf>, %30, %cst_15 [2] : vector<8x2x2xf32> to vector<8x2xf32>
    %32 = vector.shape_cast %31 : vector<8x2xf32> to vector<8x2x1xf32>
    %33 = vector.broadcast %32 : vector<8x2x1xf32> to vector<8x2x2xf32>
    %34 = arith.subf %30, %33 : vector<8x2x2xf32>
    %35 = math.exp %34 : vector<8x2x2xf32>
    %cst_16 = arith.constant dense<0.000000e+00> : vector<8x2xf32>
    %36 = vector.multi_reduction <add>, %35, %cst_16 [2] : vector<8x2x2xf32> to vector<8x2xf32>
    %37 = vector.shape_cast %36 : vector<8x2xf32> to vector<8x2x1xf32>
    %38 = tpu.reciprocal %37 {approx = true} : vector<8x2x1xf32> -> vector<8x2x1xf32>
    %39 = arith.mulf %37, %38 : vector<8x2x1xf32>
    %cst_17 = arith.constant 2.000000e+00 : f32
    %40 = vector.broadcast %cst_17 : f32 to vector<8x2x1xf32>
    %41 = arith.subf %40, %39 : vector<8x2x1xf32>
    %42 = arith.mulf %38, %41 : vector<8x2x1xf32>
    %43 = vector.broadcast %42 : vector<8x2x1xf32> to vector<8x2x2xf32>
    %44 = arith.mulf %35, %43 : vector<8x2x2xf32>
    %45 = arith.truncf %44 : vector<8x2x2xf32> to vector<8x2x2xbf16>
    %46 = arith.truncf %25 : vector<8x2x8xf32> to vector<8x2x8xbf16>
    "tpu.trace_start"() <{level = 10 : i32, message = "nls,nsd->nld"}> : () -> ()
    %cst_18 = arith.constant dense<0.000000e+00> : vector<8x2x8xf32>
    %47 = tpu.matmul %45, %46, %cst_18 {dimension_numbers = #tpu.dot_dimension_numbers<[2], [1], [1], [2], [0, 0, 0, 1, 1, 2], [0], [0]>} : vector<8x2x2xbf16>, vector<8x2x8xbf16>, vector<8x2x8xf32> -> vector<8x2x8xf32>
    "tpu.trace_stop"() : () -> ()
    %48 = vector.extract_strided_slice %14 {offsets = [0, 8], sizes = [16, 8], strides = [1, 1]} : vector<16x32xf32> to vector<16x8xf32>
    %49 = vector.shape_cast %48 : vector<16x8xf32> to vector<8x2x8xf32>
    %50 = vector.extract_strided_slice %19 {offsets = [0, 8], sizes = [16, 8], strides = [1, 1]} : vector<16x64xf32> to vector<16x8xf32>
    %51 = vector.shape_cast %50 : vector<16x8xf32> to vector<8x2x8xf32>
    %52 = vector.extract_strided_slice %19 {offsets = [0, 40], sizes = [16, 8], strides = [1, 1]} : vector<16x64xf32> to vector<16x8xf32>
    %53 = vector.shape_cast %52 : vector<16x8xf32> to vector<8x2x8xf32>
    %54 = arith.truncf %49 : vector<8x2x8xf32> to vector<8x2x8xbf16>
    %55 = arith.truncf %51 : vector<8x2x8xf32> to vector<8x2x8xbf16>
    "tpu.trace_start"() <{level = 10 : i32, message = "nld,nsd->nls"}> : () -> ()
    %cst_19 = arith.constant dense<0.000000e+00> : vector<8x2x2xf32>
    %56 = tpu.matmul %54, %55, %cst_19 {dimension_numbers = #tpu.dot_dimension_numbers<[2], [2], [1], [1], [0, 0, 0, 1, 1, 1], [0], [0]>} : vector<8x2x8xbf16>, vector<8x2x8xbf16>, vector<8x2x2xf32> -> vector<8x2x2xf32>
    "tpu.trace_stop"() : () -> ()
    %cst_20 = arith.constant 0.353553385 : f32
    %57 = vector.broadcast %cst_20 : f32 to vector<8x2x2xf32>
    %58 = arith.mulf %56, %57 : vector<8x2x2xf32>
    %cst_21 = arith.constant dense<0xFF800000> : vector<8x2xf32>
    %59 = vector.multi_reduction <maximumf>, %58, %cst_21 [2] : vector<8x2x2xf32> to vector<8x2xf32>
    %60 = vector.shape_cast %59 : vector<8x2xf32> to vector<8x2x1xf32>
    %61 = vector.broadcast %60 : vector<8x2x1xf32> to vector<8x2x2xf32>
    %62 = arith.subf %58, %61 : vector<8x2x2xf32>
    %63 = math.exp %62 : vector<8x2x2xf32>
    %cst_22 = arith.constant dense<0.000000e+00> : vector<8x2xf32>
    %64 = vector.multi_reduction <add>, %63, %cst_22 [2] : vector<8x2x2xf32> to vector<8x2xf32>
    %65 = vector.shape_cast %64 : vector<8x2xf32> to vector<8x2x1xf32>
    %66 = tpu.reciprocal %65 {approx = true} : vector<8x2x1xf32> -> vector<8x2x1xf32>
    %67 = arith.mulf %65, %66 : vector<8x2x1xf32>
    %cst_23 = arith.constant 2.000000e+00 : f32
    %68 = vector.broadcast %cst_23 : f32 to vector<8x2x1xf32>
    %69 = arith.subf %68, %67 : vector<8x2x1xf32>
    %70 = arith.mulf %66, %69 : vector<8x2x1xf32>
    %71 = vector.broadcast %70 : vector<8x2x1xf32> to vector<8x2x2xf32>
    %72 = arith.mulf %63, %71 : vector<8x2x2xf32>
    %73 = arith.truncf %72 : vector<8x2x2xf32> to vector<8x2x2xbf16>
    %74 = arith.truncf %53 : vector<8x2x8xf32> to vector<8x2x8xbf16>
    "tpu.trace_start"() <{level = 10 : i32, message = "nls,nsd->nld"}> : () -> ()
    %cst_24 = arith.constant dense<0.000000e+00> : vector<8x2x8xf32>
    %75 = tpu.matmul %73, %74, %cst_24 {dimension_numbers = #tpu.dot_dimension_numbers<[2], [1], [1], [2], [0, 0, 0, 1, 1, 2], [0], [0]>} : vector<8x2x2xbf16>, vector<8x2x8xbf16>, vector<8x2x8xf32> -> vector<8x2x8xf32>
    "tpu.trace_stop"() : () -> ()
    %76 = vector.extract_strided_slice %14 {offsets = [0, 16], sizes = [16, 8], strides = [1, 1]} : vector<16x32xf32> to vector<16x8xf32>
    %77 = vector.shape_cast %76 : vector<16x8xf32> to vector<8x2x8xf32>
    %78 = vector.extract_strided_slice %19 {offsets = [0, 16], sizes = [16, 8], strides = [1, 1]} : vector<16x64xf32> to vector<16x8xf32>
    %79 = vector.shape_cast %78 : vector<16x8xf32> to vector<8x2x8xf32>
    %80 = vector.extract_strided_slice %19 {offsets = [0, 48], sizes = [16, 8], strides = [1, 1]} : vector<16x64xf32> to vector<16x8xf32>
    %81 = vector.shape_cast %80 : vector<16x8xf32> to vector<8x2x8xf32>
    %82 = arith.truncf %77 : vector<8x2x8xf32> to vector<8x2x8xbf16>
    %83 = arith.truncf %79 : vector<8x2x8xf32> to vector<8x2x8xbf16>
    "tpu.trace_start"() <{level = 10 : i32, message = "nld,nsd->nls"}> : () -> ()
    %cst_25 = arith.constant dense<0.000000e+00> : vector<8x2x2xf32>
    %84 = tpu.matmul %82, %83, %cst_25 {dimension_numbers = #tpu.dot_dimension_numbers<[2], [2], [1], [1], [0, 0, 0, 1, 1, 1], [0], [0]>} : vector<8x2x8xbf16>, vector<8x2x8xbf16>, vector<8x2x2xf32> -> vector<8x2x2xf32>
    "tpu.trace_stop"() : () -> ()
    %cst_26 = arith.constant 0.353553385 : f32
    %85 = vector.broadcast %cst_26 : f32 to vector<8x2x2xf32>
    %86 = arith.mulf %84, %85 : vector<8x2x2xf32>
    %cst_27 = arith.constant dense<0xFF800000> : vector<8x2xf32>
    %87 = vector.multi_reduction <maximumf>, %86, %cst_27 [2] : vector<8x2x2xf32> to vector<8x2xf32>
    %88 = vector.shape_cast %87 : vector<8x2xf32> to vector<8x2x1xf32>
    %89 = vector.broadcast %88 : vector<8x2x1xf32> to vector<8x2x2xf32>
    %90 = arith.subf %86, %89 : vector<8x2x2xf32>
    %91 = math.exp %90 : vector<8x2x2xf32>
    %cst_28 = arith.constant dense<0.000000e+00> : vector<8x2xf32>
    %92 = vector.multi_reduction <add>, %91, %cst_28 [2] : vector<8x2x2xf32> to vector<8x2xf32>
    %93 = vector.shape_cast %92 : vector<8x2xf32> to vector<8x2x1xf32>
    %94 = tpu.reciprocal %93 {approx = true} : vector<8x2x1xf32> -> vector<8x2x1xf32>
    %95 = arith.mulf %93, %94 : vector<8x2x1xf32>
    %cst_29 = arith.constant 2.000000e+00 : f32
    %96 = vector.broadcast %cst_29 : f32 to vector<8x2x1xf32>
    %97 = arith.subf %96, %95 : vector<8x2x1xf32>
    %98 = arith.mulf %94, %97 : vector<8x2x1xf32>
    %99 = vector.broadcast %98 : vector<8x2x1xf32> to vector<8x2x2xf32>
    %100 = arith.mulf %91, %99 : vector<8x2x2xf32>
    %101 = arith.truncf %100 : vector<8x2x2xf32> to vector<8x2x2xbf16>
    %102 = arith.truncf %81 : vector<8x2x8xf32> to vector<8x2x8xbf16>
    "tpu.trace_start"() <{level = 10 : i32, message = "nls,nsd->nld"}> : () -> ()
    %cst_30 = arith.constant dense<0.000000e+00> : vector<8x2x8xf32>
    %103 = tpu.matmul %101, %102, %cst_30 {dimension_numbers = #tpu.dot_dimension_numbers<[2], [1], [1], [2], [0, 0, 0, 1, 1, 2], [0], [0]>} : vector<8x2x2xbf16>, vector<8x2x8xbf16>, vector<8x2x8xf32> -> vector<8x2x8xf32>
    "tpu.trace_stop"() : () -> ()
    %104 = vector.extract_strided_slice %14 {offsets = [0, 24], sizes = [16, 8], strides = [1, 1]} : vector<16x32xf32> to vector<16x8xf32>
    %105 = vector.shape_cast %104 : vector<16x8xf32> to vector<8x2x8xf32>
    %106 = vector.extract_strided_slice %19 {offsets = [0, 24], sizes = [16, 8], strides = [1, 1]} : vector<16x64xf32> to vector<16x8xf32>
    %107 = vector.shape_cast %106 : vector<16x8xf32> to vector<8x2x8xf32>
    %108 = vector.extract_strided_slice %19 {offsets = [0, 56], sizes = [16, 8], strides = [1, 1]} : vector<16x64xf32> to vector<16x8xf32>
    %109 = vector.shape_cast %108 : vector<16x8xf32> to vector<8x2x8xf32>
    %110 = arith.truncf %105 : vector<8x2x8xf32> to vector<8x2x8xbf16>
    %111 = arith.truncf %107 : vector<8x2x8xf32> to vector<8x2x8xbf16>
    "tpu.trace_start"() <{level = 10 : i32, message = "nld,nsd->nls"}> : () -> ()
    %cst_31 = arith.constant dense<0.000000e+00> : vector<8x2x2xf32>
    %112 = tpu.matmul %110, %111, %cst_31 {dimension_numbers = #tpu.dot_dimension_numbers<[2], [2], [1], [1], [0, 0, 0, 1, 1, 1], [0], [0]>} : vector<8x2x8xbf16>, vector<8x2x8xbf16>, vector<8x2x2xf32> -> vector<8x2x2xf32>
    "tpu.trace_stop"() : () -> ()
    %cst_32 = arith.constant 0.353553385 : f32
    %113 = vector.broadcast %cst_32 : f32 to vector<8x2x2xf32>
    %114 = arith.mulf %112, %113 : vector<8x2x2xf32>
    %cst_33 = arith.constant dense<0xFF800000> : vector<8x2xf32>
    %115 = vector.multi_reduction <maximumf>, %114, %cst_33 [2] : vector<8x2x2xf32> to vector<8x2xf32>
    %116 = vector.shape_cast %115 : vector<8x2xf32> to vector<8x2x1xf32>
    %117 = vector.broadcast %116 : vector<8x2x1xf32> to vector<8x2x2xf32>
    %118 = arith.subf %114, %117 : vector<8x2x2xf32>
    %119 = math.exp %118 : vector<8x2x2xf32>
    %cst_34 = arith.constant dense<0.000000e+00> : vector<8x2xf32>
    %120 = vector.multi_reduction <add>, %119, %cst_34 [2] : vector<8x2x2xf32> to vector<8x2xf32>
    %121 = vector.shape_cast %120 : vector<8x2xf32> to vector<8x2x1xf32>
    %122 = tpu.reciprocal %121 {approx = true} : vector<8x2x1xf32> -> vector<8x2x1xf32>
    %123 = arith.mulf %121, %122 : vector<8x2x1xf32>
    %cst_35 = arith.constant 2.000000e+00 : f32
    %124 = vector.broadcast %cst_35 : f32 to vector<8x2x1xf32>
    %125 = arith.subf %124, %123 : vector<8x2x1xf32>
    %126 = arith.mulf %122, %125 : vector<8x2x1xf32>
    %127 = vector.broadcast %126 : vector<8x2x1xf32> to vector<8x2x2xf32>
    %128 = arith.mulf %119, %127 : vector<8x2x2xf32>
    %129 = arith.truncf %128 : vector<8x2x2xf32> to vector<8x2x2xbf16>
    %130 = arith.truncf %109 : vector<8x2x8xf32> to vector<8x2x8xbf16>
    "tpu.trace_start"() <{level = 10 : i32, message = "nls,nsd->nld"}> : () -> ()
    %cst_36 = arith.constant dense<0.000000e+00> : vector<8x2x8xf32>
    %131 = tpu.matmul %129, %130, %cst_36 {dimension_numbers = #tpu.dot_dimension_numbers<[2], [1], [1], [2], [0, 0, 0, 1, 1, 2], [0], [0]>} : vector<8x2x2xbf16>, vector<8x2x8xbf16>, vector<8x2x8xf32> -> vector<8x2x8xf32>
    "tpu.trace_stop"() : () -> ()
    %132 = tpu.concatenate %47, %75, %103, %131 in 2 : vector<8x2x8xf32>, vector<8x2x8xf32>, vector<8x2x8xf32>, vector<8x2x8xf32> -> vector<8x2x32xf32>
    %133 = vector.shape_cast %132 : vector<8x2x32xf32> to vector<16x32xf32>
    %134 = arith.truncf %133 : vector<16x32xf32> to vector<16x32xbf16>
    %c0_37 = arith.constant 0 : index
    %c0_38 = arith.constant 0 : index
    %135 = vector.load %arg7[%c0_37, %c0_38] : memref<32x32xbf16, #tpu.memory_space<vmem>>, vector<32x32xbf16>
    %cst_39 = arith.constant dense<0.000000e+00> : vector<16x32xf32>
    %136 = tpu.matmul %134, %135, %cst_39 {dimension_numbers = #tpu.dot_dimension_numbers<[1], [0], [0], [1], [0, 0, 1, 1], [], []>} : vector<16x32xbf16>, vector<32x32xbf16>, vector<16x32xf32> -> vector<16x32xf32>
    %c0_40 = arith.constant 0 : index
    %c0_41 = arith.constant 0 : index
    %137 = vector.load %arg8[%c0_40, %c0_41] : memref<1x32xf32, #tpu.memory_space<vmem>>, vector<1x32xf32>
    %138 = vector.broadcast %137 : vector<1x32xf32> to vector<16x32xf32>
    %139 = arith.addf %136, %138 : vector<16x32xf32>
    %140 = vector.shape_cast %139 : vector<16x32xf32> to vector<8x2x32xf32>
    %141 = arith.addf %5, %140 : vector<8x2x32xf32>
    %cst_42 = arith.constant dense<0.000000e+00> : vector<8x2xf32>
    %142 = vector.multi_reduction <add>, %141, %cst_42 [2] : vector<8x2x32xf32> to vector<8x2xf32>
    %143 = vector.shape_cast %142 : vector<8x2xf32> to vector<8x2x1xf32>
    %cst_43 = arith.constant 3.200000e+01 : f32
    %144 = vector.broadcast %cst_43 : f32 to vector<8x2x1xf32>
    %145 = arith.divf %143, %144 : vector<8x2x1xf32>
    %146 = vector.broadcast %145 : vector<8x2x1xf32> to vector<8x2x32xf32>
    %147 = arith.subf %141, %146 : vector<8x2x32xf32>
    %148 = arith.mulf %147, %147 : vector<8x2x32xf32>
    %cst_44 = arith.constant dense<0.000000e+00> : vector<8x2xf32>
    %149 = vector.multi_reduction <add>, %148, %cst_44 [2] : vector<8x2x32xf32> to vector<8x2xf32>
    %150 = vector.shape_cast %149 : vector<8x2xf32> to vector<8x2x1xf32>
    %cst_45 = arith.constant 3.200000e+01 : f32
    %151 = vector.broadcast %cst_45 : f32 to vector<8x2x1xf32>
    %152 = arith.divf %150, %151 : vector<8x2x1xf32>
    %cst_46 = arith.constant 9.99999974E-6 : f32
    %153 = vector.broadcast %cst_46 : f32 to vector<8x2x1xf32>
    %154 = arith.addf %152, %153 : vector<8x2x1xf32>
    %155 = math.rsqrt %154 : vector<8x2x1xf32>
    %156 = vector.broadcast %155 : vector<8x2x1xf32> to vector<8x2x32xf32>
    %157 = arith.mulf %147, %156 : vector<8x2x32xf32>
    %c0_47 = arith.constant 0 : index
    %c0_48 = arith.constant 0 : index
    %c0_49 = arith.constant 0 : index
    %158 = vector.load %arg15[%c0_47, %c0_48, %c0_49] : memref<3x1x32xf32, #tpu.memory_space<vmem>>, vector<1x1x32xf32>
    %159 = vector.shape_cast %158 : vector<1x1x32xf32> to vector<1x32xf32>
    %160 = vector.shape_cast %159 : vector<1x32xf32> to vector<1x1x32xf32>
    %161 = vector.broadcast %160 : vector<1x1x32xf32> to vector<8x2x32xf32>
    %162 = arith.mulf %157, %161 : vector<8x2x32xf32>
    %c0_50 = arith.constant 0 : index
    %c0_51 = arith.constant 0 : index
    %c0_52 = arith.constant 0 : index
    %163 = vector.load %arg16[%c0_50, %c0_51, %c0_52] : memref<3x1x32xf32, #tpu.memory_space<vmem>>, vector<1x1x32xf32>
    %164 = vector.shape_cast %163 : vector<1x1x32xf32> to vector<1x32xf32>
    %165 = vector.shape_cast %164 : vector<1x32xf32> to vector<1x1x32xf32>
    %166 = vector.broadcast %165 : vector<1x1x32xf32> to vector<8x2x32xf32>
    %167 = arith.addf %162, %166 : vector<8x2x32xf32>
    %168 = vector.shape_cast %167 : vector<8x2x32xf32> to vector<16x32xf32>
    %169 = arith.truncf %168 : vector<16x32xf32> to vector<16x32xbf16>
    %170 = vector.shape_cast %5 : vector<8x2x32xf32> to vector<16x32xf32>
    %171 = arith.truncf %170 : vector<16x32xf32> to vector<16x32xbf16>
    %c0_53 = arith.constant 0 : index
    %c0_54 = arith.constant 0 : index
    %172 = vector.load %arg9[%c0_53, %c0_54] : memref<32x32xbf16, #tpu.memory_space<vmem>>, vector<32x32xbf16>
    %cst_55 = arith.constant dense<0.000000e+00> : vector<16x32xf32>
    %173 = tpu.matmul %169, %172, %cst_55 {dimension_numbers = #tpu.dot_dimension_numbers<[1], [0], [0], [1], [0, 0, 1, 1], [], []>} : vector<16x32xbf16>, vector<32x32xbf16>, vector<16x32xf32> -> vector<16x32xf32>
    %c0_56 = arith.constant 0 : index
    %c0_57 = arith.constant 0 : index
    %174 = vector.load %arg10[%c0_56, %c0_57] : memref<1x32xf32, #tpu.memory_space<vmem>>, vector<1x32xf32>
    %175 = vector.broadcast %174 : vector<1x32xf32> to vector<16x32xf32>
    %176 = arith.addf %173, %175 : vector<16x32xf32>
    %c0_58 = arith.constant 0 : index
    %c0_59 = arith.constant 0 : index
    %177 = vector.load %arg11[%c0_58, %c0_59] : memref<32x64xbf16, #tpu.memory_space<vmem>>, vector<32x64xbf16>
    %cst_60 = arith.constant dense<0.000000e+00> : vector<16x64xf32>
    %178 = tpu.matmul %171, %177, %cst_60 {dimension_numbers = #tpu.dot_dimension_numbers<[1], [0], [0], [1], [0, 0, 1, 1], [], []>} : vector<16x32xbf16>, vector<32x64xbf16>, vector<16x64xf32> -> vector<16x64xf32>
    %c0_61 = arith.constant 0 : index
    %c0_62 = arith.constant 0 : index
    %179 = vector.load %arg12[%c0_61, %c0_62] : memref<1x64xf32, #tpu.memory_space<vmem>>, vector<1x64xf32>
    %180 = vector.broadcast %179 : vector<1x64xf32> to vector<16x64xf32>
    %181 = arith.addf %178, %180 : vector<16x64xf32>
    %182 = vector.extract_strided_slice %176 {offsets = [0, 0], sizes = [16, 8], strides = [1, 1]} : vector<16x32xf32> to vector<16x8xf32>
    %183 = vector.shape_cast %182 : vector<16x8xf32> to vector<8x2x8xf32>
    %184 = vector.extract_strided_slice %181 {offsets = [0, 0], sizes = [16, 8], strides = [1, 1]} : vector<16x64xf32> to vector<16x8xf32>
    %185 = vector.shape_cast %184 : vector<16x8xf32> to vector<8x2x8xf32>
    %186 = vector.extract_strided_slice %181 {offsets = [0, 32], sizes = [16, 8], strides = [1, 1]} : vector<16x64xf32> to vector<16x8xf32>
    %187 = vector.shape_cast %186 : vector<16x8xf32> to vector<8x2x8xf32>
    %188 = arith.truncf %183 : vector<8x2x8xf32> to vector<8x2x8xbf16>
    %189 = arith.truncf %185 : vector<8x2x8xf32> to vector<8x2x8xbf16>
    "tpu.trace_start"() <{level = 10 : i32, message = "nld,nsd->nls"}> : () -> ()
    %cst_63 = arith.constant dense<0.000000e+00> : vector<8x2x2xf32>
    %190 = tpu.matmul %188, %189, %cst_63 {dimension_numbers = #tpu.dot_dimension_numbers<[2], [2], [1], [1], [0, 0, 0, 1, 1, 1], [0], [0]>} : vector<8x2x8xbf16>, vector<8x2x8xbf16>, vector<8x2x2xf32> -> vector<8x2x2xf32>
    "tpu.trace_stop"() : () -> ()
    %cst_64 = arith.constant 0.353553385 : f32
    %191 = vector.broadcast %cst_64 : f32 to vector<8x2x2xf32>
    %192 = arith.mulf %190, %191 : vector<8x2x2xf32>
    %cst_65 = arith.constant dense<0xFF800000> : vector<8x2xf32>
    %193 = vector.multi_reduction <maximumf>, %192, %cst_65 [2] : vector<8x2x2xf32> to vector<8x2xf32>
    %194 = vector.shape_cast %193 : vector<8x2xf32> to vector<8x2x1xf32>
    %195 = vector.broadcast %194 : vector<8x2x1xf32> to vector<8x2x2xf32>
    %196 = arith.subf %192, %195 : vector<8x2x2xf32>
    %197 = math.exp %196 : vector<8x2x2xf32>
    %cst_66 = arith.constant dense<0.000000e+00> : vector<8x2xf32>
    %198 = vector.multi_reduction <add>, %197, %cst_66 [2] : vector<8x2x2xf32> to vector<8x2xf32>
    %199 = vector.shape_cast %198 : vector<8x2xf32> to vector<8x2x1xf32>
    %200 = tpu.reciprocal %199 {approx = true} : vector<8x2x1xf32> -> vector<8x2x1xf32>
    %201 = arith.mulf %199, %200 : vector<8x2x1xf32>
    %cst_67 = arith.constant 2.000000e+00 : f32
    %202 = vector.broadcast %cst_67 : f32 to vector<8x2x1xf32>
    %203 = arith.subf %202, %201 : vector<8x2x1xf32>
    %204 = arith.mulf %200, %203 : vector<8x2x1xf32>
    %205 = vector.broadcast %204 : vector<8x2x1xf32> to vector<8x2x2xf32>
    %206 = arith.mulf %197, %205 : vector<8x2x2xf32>
    %207 = arith.truncf %206 : vector<8x2x2xf32> to vector<8x2x2xbf16>
    %208 = arith.truncf %187 : vector<8x2x8xf32> to vector<8x2x8xbf16>
    "tpu.trace_start"() <{level = 10 : i32, message = "nls,nsd->nld"}> : () -> ()
    %cst_68 = arith.constant dense<0.000000e+00> : vector<8x2x8xf32>
    %209 = tpu.matmul %207, %208, %cst_68 {dimension_numbers = #tpu.dot_dimension_numbers<[2], [1], [1], [2], [0, 0, 0, 1, 1, 2], [0], [0]>} : vector<8x2x2xbf16>, vector<8x2x8xbf16>, vector<8x2x8xf32> -> vector<8x2x8xf32>
    "tpu.trace_stop"() : () -> ()
    %210 = vector.extract_strided_slice %176 {offsets = [0, 8], sizes = [16, 8], strides = [1, 1]} : vector<16x32xf32> to vector<16x8xf32>
    %211 = vector.shape_cast %210 : vector<16x8xf32> to vector<8x2x8xf32>
    %212 = vector.extract_strided_slice %181 {offsets = [0, 8], sizes = [16, 8], strides = [1, 1]} : vector<16x64xf32> to vector<16x8xf32>
    %213 = vector.shape_cast %212 : vector<16x8xf32> to vector<8x2x8xf32>
    %214 = vector.extract_strided_slice %181 {offsets = [0, 40], sizes = [16, 8], strides = [1, 1]} : vector<16x64xf32> to vector<16x8xf32>
    %215 = vector.shape_cast %214 : vector<16x8xf32> to vector<8x2x8xf32>
    %216 = arith.truncf %211 : vector<8x2x8xf32> to vector<8x2x8xbf16>
    %217 = arith.truncf %213 : vector<8x2x8xf32> to vector<8x2x8xbf16>
    "tpu.trace_start"() <{level = 10 : i32, message = "nld,nsd->nls"}> : () -> ()
    %cst_69 = arith.constant dense<0.000000e+00> : vector<8x2x2xf32>
    %218 = tpu.matmul %216, %217, %cst_69 {dimension_numbers = #tpu.dot_dimension_numbers<[2], [2], [1], [1], [0, 0, 0, 1, 1, 1], [0], [0]>} : vector<8x2x8xbf16>, vector<8x2x8xbf16>, vector<8x2x2xf32> -> vector<8x2x2xf32>
    "tpu.trace_stop"() : () -> ()
    %cst_70 = arith.constant 0.353553385 : f32
    %219 = vector.broadcast %cst_70 : f32 to vector<8x2x2xf32>
    %220 = arith.mulf %218, %219 : vector<8x2x2xf32>
    %cst_71 = arith.constant dense<0xFF800000> : vector<8x2xf32>
    %221 = vector.multi_reduction <maximumf>, %220, %cst_71 [2] : vector<8x2x2xf32> to vector<8x2xf32>
    %222 = vector.shape_cast %221 : vector<8x2xf32> to vector<8x2x1xf32>
    %223 = vector.broadcast %222 : vector<8x2x1xf32> to vector<8x2x2xf32>
    %224 = arith.subf %220, %223 : vector<8x2x2xf32>
    %225 = math.exp %224 : vector<8x2x2xf32>
    %cst_72 = arith.constant dense<0.000000e+00> : vector<8x2xf32>
    %226 = vector.multi_reduction <add>, %225, %cst_72 [2] : vector<8x2x2xf32> to vector<8x2xf32>
    %227 = vector.shape_cast %226 : vector<8x2xf32> to vector<8x2x1xf32>
    %228 = tpu.reciprocal %227 {approx = true} : vector<8x2x1xf32> -> vector<8x2x1xf32>
    %229 = arith.mulf %227, %228 : vector<8x2x1xf32>
    %cst_73 = arith.constant 2.000000e+00 : f32
    %230 = vector.broadcast %cst_73 : f32 to vector<8x2x1xf32>
    %231 = arith.subf %230, %229 : vector<8x2x1xf32>
    %232 = arith.mulf %228, %231 : vector<8x2x1xf32>
    %233 = vector.broadcast %232 : vector<8x2x1xf32> to vector<8x2x2xf32>
    %234 = arith.mulf %225, %233 : vector<8x2x2xf32>
    %235 = arith.truncf %234 : vector<8x2x2xf32> to vector<8x2x2xbf16>
    %236 = arith.truncf %215 : vector<8x2x8xf32> to vector<8x2x8xbf16>
    "tpu.trace_start"() <{level = 10 : i32, message = "nls,nsd->nld"}> : () -> ()
    %cst_74 = arith.constant dense<0.000000e+00> : vector<8x2x8xf32>
    %237 = tpu.matmul %235, %236, %cst_74 {dimension_numbers = #tpu.dot_dimension_numbers<[2], [1], [1], [2], [0, 0, 0, 1, 1, 2], [0], [0]>} : vector<8x2x2xbf16>, vector<8x2x8xbf16>, vector<8x2x8xf32> -> vector<8x2x8xf32>
    "tpu.trace_stop"() : () -> ()
    %238 = vector.extract_strided_slice %176 {offsets = [0, 16], sizes = [16, 8], strides = [1, 1]} : vector<16x32xf32> to vector<16x8xf32>
    %239 = vector.shape_cast %238 : vector<16x8xf32> to vector<8x2x8xf32>
    %240 = vector.extract_strided_slice %181 {offsets = [0, 16], sizes = [16, 8], strides = [1, 1]} : vector<16x64xf32> to vector<16x8xf32>
    %241 = vector.shape_cast %240 : vector<16x8xf32> to vector<8x2x8xf32>
    %242 = vector.extract_strided_slice %181 {offsets = [0, 48], sizes = [16, 8], strides = [1, 1]} : vector<16x64xf32> to vector<16x8xf32>
    %243 = vector.shape_cast %242 : vector<16x8xf32> to vector<8x2x8xf32>
    %244 = arith.truncf %239 : vector<8x2x8xf32> to vector<8x2x8xbf16>
    %245 = arith.truncf %241 : vector<8x2x8xf32> to vector<8x2x8xbf16>
    "tpu.trace_start"() <{level = 10 : i32, message = "nld,nsd->nls"}> : () -> ()
    %cst_75 = arith.constant dense<0.000000e+00> : vector<8x2x2xf32>
    %246 = tpu.matmul %244, %245, %cst_75 {dimension_numbers = #tpu.dot_dimension_numbers<[2], [2], [1], [1], [0, 0, 0, 1, 1, 1], [0], [0]>} : vector<8x2x8xbf16>, vector<8x2x8xbf16>, vector<8x2x2xf32> -> vector<8x2x2xf32>
    "tpu.trace_stop"() : () -> ()
    %cst_76 = arith.constant 0.353553385 : f32
    %247 = vector.broadcast %cst_76 : f32 to vector<8x2x2xf32>
    %248 = arith.mulf %246, %247 : vector<8x2x2xf32>
    %cst_77 = arith.constant dense<0xFF800000> : vector<8x2xf32>
    %249 = vector.multi_reduction <maximumf>, %248, %cst_77 [2] : vector<8x2x2xf32> to vector<8x2xf32>
    %250 = vector.shape_cast %249 : vector<8x2xf32> to vector<8x2x1xf32>
    %251 = vector.broadcast %250 : vector<8x2x1xf32> to vector<8x2x2xf32>
    %252 = arith.subf %248, %251 : vector<8x2x2xf32>
    %253 = math.exp %252 : vector<8x2x2xf32>
    %cst_78 = arith.constant dense<0.000000e+00> : vector<8x2xf32>
    %254 = vector.multi_reduction <add>, %253, %cst_78 [2] : vector<8x2x2xf32> to vector<8x2xf32>
    %255 = vector.shape_cast %254 : vector<8x2xf32> to vector<8x2x1xf32>
    %256 = tpu.reciprocal %255 {approx = true} : vector<8x2x1xf32> -> vector<8x2x1xf32>
    %257 = arith.mulf %255, %256 : vector<8x2x1xf32>
    %cst_79 = arith.constant 2.000000e+00 : f32
    %258 = vector.broadcast %cst_79 : f32 to vector<8x2x1xf32>
    %259 = arith.subf %258, %257 : vector<8x2x1xf32>
    %260 = arith.mulf %256, %259 : vector<8x2x1xf32>
    %261 = vector.broadcast %260 : vector<8x2x1xf32> to vector<8x2x2xf32>
    %262 = arith.mulf %253, %261 : vector<8x2x2xf32>
    %263 = arith.truncf %262 : vector<8x2x2xf32> to vector<8x2x2xbf16>
    %264 = arith.truncf %243 : vector<8x2x8xf32> to vector<8x2x8xbf16>
    "tpu.trace_start"() <{level = 10 : i32, message = "nls,nsd->nld"}> : () -> ()
    %cst_80 = arith.constant dense<0.000000e+00> : vector<8x2x8xf32>
    %265 = tpu.matmul %263, %264, %cst_80 {dimension_numbers = #tpu.dot_dimension_numbers<[2], [1], [1], [2], [0, 0, 0, 1, 1, 2], [0], [0]>} : vector<8x2x2xbf16>, vector<8x2x8xbf16>, vector<8x2x8xf32> -> vector<8x2x8xf32>
    "tpu.trace_stop"() : () -> ()
    %266 = vector.extract_strided_slice %176 {offsets = [0, 24], sizes = [16, 8], strides = [1, 1]} : vector<16x32xf32> to vector<16x8xf32>
    %267 = vector.shape_cast %266 : vector<16x8xf32> to vector<8x2x8xf32>
    %268 = vector.extract_strided_slice %181 {offsets = [0, 24], sizes = [16, 8], strides = [1, 1]} : vector<16x64xf32> to vector<16x8xf32>
    %269 = vector.shape_cast %268 : vector<16x8xf32> to vector<8x2x8xf32>
    %270 = vector.extract_strided_slice %181 {offsets = [0, 56], sizes = [16, 8], strides = [1, 1]} : vector<16x64xf32> to vector<16x8xf32>
    %271 = vector.shape_cast %270 : vector<16x8xf32> to vector<8x2x8xf32>
    %272 = arith.truncf %267 : vector<8x2x8xf32> to vector<8x2x8xbf16>
    %273 = arith.truncf %269 : vector<8x2x8xf32> to vector<8x2x8xbf16>
    "tpu.trace_start"() <{level = 10 : i32, message = "nld,nsd->nls"}> : () -> ()
    %cst_81 = arith.constant dense<0.000000e+00> : vector<8x2x2xf32>
    %274 = tpu.matmul %272, %273, %cst_81 {dimension_numbers = #tpu.dot_dimension_numbers<[2], [2], [1], [1], [0, 0, 0, 1, 1, 1], [0], [0]>} : vector<8x2x8xbf16>, vector<8x2x8xbf16>, vector<8x2x2xf32> -> vector<8x2x2xf32>
    "tpu.trace_stop"() : () -> ()
    %cst_82 = arith.constant 0.353553385 : f32
    %275 = vector.broadcast %cst_82 : f32 to vector<8x2x2xf32>
    %276 = arith.mulf %274, %275 : vector<8x2x2xf32>
    %cst_83 = arith.constant dense<0xFF800000> : vector<8x2xf32>
    %277 = vector.multi_reduction <maximumf>, %276, %cst_83 [2] : vector<8x2x2xf32> to vector<8x2xf32>
    %278 = vector.shape_cast %277 : vector<8x2xf32> to vector<8x2x1xf32>
    %279 = vector.broadcast %278 : vector<8x2x1xf32> to vector<8x2x2xf32>
    %280 = arith.subf %276, %279 : vector<8x2x2xf32>
    %281 = math.exp %280 : vector<8x2x2xf32>
    %cst_84 = arith.constant dense<0.000000e+00> : vector<8x2xf32>
    %282 = vector.multi_reduction <add>, %281, %cst_84 [2] : vector<8x2x2xf32> to vector<8x2xf32>
    %283 = vector.shape_cast %282 : vector<8x2xf32> to vector<8x2x1xf32>
    %284 = tpu.reciprocal %283 {approx = true} : vector<8x2x1xf32> -> vector<8x2x1xf32>
    %285 = arith.mulf %283, %284 : vector<8x2x1xf32>
    %cst_85 = arith.constant 2.000000e+00 : f32
    %286 = vector.broadcast %cst_85 : f32 to vector<8x2x1xf32>
    %287 = arith.subf %286, %285 : vector<8x2x1xf32>
    %288 = arith.mulf %284, %287 : vector<8x2x1xf32>
    %289 = vector.broadcast %288 : vector<8x2x1xf32> to vector<8x2x2xf32>
    %290 = arith.mulf %281, %289 : vector<8x2x2xf32>
    %291 = arith.truncf %290 : vector<8x2x2xf32> to vector<8x2x2xbf16>
    %292 = arith.truncf %271 : vector<8x2x8xf32> to vector<8x2x8xbf16>
    "tpu.trace_start"() <{level = 10 : i32, message = "nls,nsd->nld"}> : () -> ()
    %cst_86 = arith.constant dense<0.000000e+00> : vector<8x2x8xf32>
    %293 = tpu.matmul %291, %292, %cst_86 {dimension_numbers = #tpu.dot_dimension_numbers<[2], [1], [1], [2], [0, 0, 0, 1, 1, 2], [0], [0]>} : vector<8x2x2xbf16>, vector<8x2x8xbf16>, vector<8x2x8xf32> -> vector<8x2x8xf32>
    "tpu.trace_stop"() : () -> ()
    %294 = tpu.concatenate %209, %237, %265, %293 in 2 : vector<8x2x8xf32>, vector<8x2x8xf32>, vector<8x2x8xf32>, vector<8x2x8xf32> -> vector<8x2x32xf32>
    %295 = vector.shape_cast %294 : vector<8x2x32xf32> to vector<16x32xf32>
    %296 = arith.truncf %295 : vector<16x32xf32> to vector<16x32xbf16>
    %c0_87 = arith.constant 0 : index
    %c0_88 = arith.constant 0 : index
    %297 = vector.load %arg13[%c0_87, %c0_88] : memref<32x32xbf16, #tpu.memory_space<vmem>>, vector<32x32xbf16>
    %cst_89 = arith.constant dense<0.000000e+00> : vector<16x32xf32>
    %298 = tpu.matmul %296, %297, %cst_89 {dimension_numbers = #tpu.dot_dimension_numbers<[1], [0], [0], [1], [0, 0, 1, 1], [], []>} : vector<16x32xbf16>, vector<32x32xbf16>, vector<16x32xf32> -> vector<16x32xf32>
    %c0_90 = arith.constant 0 : index
    %c0_91 = arith.constant 0 : index
    %299 = vector.load %arg14[%c0_90, %c0_91] : memref<1x32xf32, #tpu.memory_space<vmem>>, vector<1x32xf32>
    %300 = vector.broadcast %299 : vector<1x32xf32> to vector<16x32xf32>
    %301 = arith.addf %298, %300 : vector<16x32xf32>
    %302 = vector.shape_cast %301 : vector<16x32xf32> to vector<8x2x32xf32>
    %303 = arith.addf %167, %302 : vector<8x2x32xf32>
    %cst_92 = arith.constant dense<0.000000e+00> : vector<8x2xf32>
    %304 = vector.multi_reduction <add>, %303, %cst_92 [2] : vector<8x2x32xf32> to vector<8x2xf32>
    %305 = vector.shape_cast %304 : vector<8x2xf32> to vector<8x2x1xf32>
    %cst_93 = arith.constant 3.200000e+01 : f32
    %306 = vector.broadcast %cst_93 : f32 to vector<8x2x1xf32>
    %307 = arith.divf %305, %306 : vector<8x2x1xf32>
    %308 = vector.broadcast %307 : vector<8x2x1xf32> to vector<8x2x32xf32>
    %309 = arith.subf %303, %308 : vector<8x2x32xf32>
    %310 = arith.mulf %309, %309 : vector<8x2x32xf32>
    %cst_94 = arith.constant dense<0.000000e+00> : vector<8x2xf32>
    %311 = vector.multi_reduction <add>, %310, %cst_94 [2] : vector<8x2x32xf32> to vector<8x2xf32>
    %312 = vector.shape_cast %311 : vector<8x2xf32> to vector<8x2x1xf32>
    %cst_95 = arith.constant 3.200000e+01 : f32
    %313 = vector.broadcast %cst_95 : f32 to vector<8x2x1xf32>
    %314 = arith.divf %312, %313 : vector<8x2x1xf32>
    %cst_96 = arith.constant 9.99999974E-6 : f32
    %315 = vector.broadcast %cst_96 : f32 to vector<8x2x1xf32>
    %316 = arith.addf %314, %315 : vector<8x2x1xf32>
    %317 = math.rsqrt %316 : vector<8x2x1xf32>
    %318 = vector.broadcast %317 : vector<8x2x1xf32> to vector<8x2x32xf32>
    %319 = arith.mulf %309, %318 : vector<8x2x32xf32>
    %c1 = arith.constant 1 : index
    %c0_97 = arith.constant 0 : index
    %c0_98 = arith.constant 0 : index
    %320 = vector.load %arg15[%c1, %c0_97, %c0_98] : memref<3x1x32xf32, #tpu.memory_space<vmem>>, vector<1x1x32xf32>
    %321 = vector.shape_cast %320 : vector<1x1x32xf32> to vector<1x32xf32>
    %322 = vector.shape_cast %321 : vector<1x32xf32> to vector<1x1x32xf32>
    %323 = vector.broadcast %322 : vector<1x1x32xf32> to vector<8x2x32xf32>
    %324 = arith.mulf %319, %323 : vector<8x2x32xf32>
    %c1_99 = arith.constant 1 : index
    %c0_100 = arith.constant 0 : index
    %c0_101 = arith.constant 0 : index
    %325 = vector.load %arg16[%c1_99, %c0_100, %c0_101] : memref<3x1x32xf32, #tpu.memory_space<vmem>>, vector<1x1x32xf32>
    %326 = vector.shape_cast %325 : vector<1x1x32xf32> to vector<1x32xf32>
    %327 = vector.shape_cast %326 : vector<1x32xf32> to vector<1x1x32xf32>
    %328 = vector.broadcast %327 : vector<1x1x32xf32> to vector<8x2x32xf32>
    %329 = arith.addf %324, %328 : vector<8x2x32xf32>
    %330 = vector.shape_cast %329 : vector<8x2x32xf32> to vector<16x32xf32>
    %331 = arith.truncf %330 : vector<16x32xf32> to vector<16x32xbf16>
    %c0_102 = arith.constant 0 : index
    %c0_103 = arith.constant 0 : index
    %332 = vector.load %arg17[%c0_102, %c0_103] : memref<32x64xbf16, #tpu.memory_space<vmem>>, vector<32x64xbf16>
    %cst_104 = arith.constant dense<0.000000e+00> : vector<16x64xf32>
    %333 = tpu.matmul %331, %332, %cst_104 {dimension_numbers = #tpu.dot_dimension_numbers<[1], [0], [0], [1], [0, 0, 1, 1], [], []>} : vector<16x32xbf16>, vector<32x64xbf16>, vector<16x64xf32> -> vector<16x64xf32>
    %c0_105 = arith.constant 0 : index
    %c0_106 = arith.constant 0 : index
    %334 = vector.load %arg18[%c0_105, %c0_106] : memref<1x64xf32, #tpu.memory_space<vmem>>, vector<1x64xf32>
    %335 = vector.broadcast %334 : vector<1x64xf32> to vector<16x64xf32>
    %336 = arith.addf %333, %335 : vector<16x64xf32>
    %cst_107 = arith.constant 0.000000e+00 : f32
    %337 = vector.broadcast %cst_107 : f32 to vector<16x64xf32>
    %338 = arith.maximumf %336, %337 : vector<16x64xf32>
    %339 = arith.truncf %338 : vector<16x64xf32> to vector<16x64xbf16>
    %c0_108 = arith.constant 0 : index
    %c0_109 = arith.constant 0 : index
    %340 = vector.load %arg19[%c0_108, %c0_109] : memref<64x32xbf16, #tpu.memory_space<vmem>>, vector<64x32xbf16>
    %cst_110 = arith.constant dense<0.000000e+00> : vector<16x32xf32>
    %341 = tpu.matmul %339, %340, %cst_110 {dimension_numbers = #tpu.dot_dimension_numbers<[1], [0], [0], [1], [0, 0, 1, 1], [], []>} : vector<16x64xbf16>, vector<64x32xbf16>, vector<16x32xf32> -> vector<16x32xf32>
    %c0_111 = arith.constant 0 : index
    %c0_112 = arith.constant 0 : index
    %342 = vector.load %arg20[%c0_111, %c0_112] : memref<1x32xf32, #tpu.memory_space<vmem>>, vector<1x32xf32>
    %343 = vector.broadcast %342 : vector<1x32xf32> to vector<16x32xf32>
    %344 = arith.addf %341, %343 : vector<16x32xf32>
    %345 = vector.shape_cast %344 : vector<16x32xf32> to vector<8x2x32xf32>
    %346 = arith.addf %329, %345 : vector<8x2x32xf32>
    %cst_113 = arith.constant dense<0.000000e+00> : vector<8x2xf32>
    %347 = vector.multi_reduction <add>, %346, %cst_113 [2] : vector<8x2x32xf32> to vector<8x2xf32>
    %348 = vector.shape_cast %347 : vector<8x2xf32> to vector<8x2x1xf32>
    %cst_114 = arith.constant 3.200000e+01 : f32
    %349 = vector.broadcast %cst_114 : f32 to vector<8x2x1xf32>
    %350 = arith.divf %348, %349 : vector<8x2x1xf32>
    %351 = vector.broadcast %350 : vector<8x2x1xf32> to vector<8x2x32xf32>
    %352 = arith.subf %346, %351 : vector<8x2x32xf32>
    %353 = arith.mulf %352, %352 : vector<8x2x32xf32>
    %cst_115 = arith.constant dense<0.000000e+00> : vector<8x2xf32>
    %354 = vector.multi_reduction <add>, %353, %cst_115 [2] : vector<8x2x32xf32> to vector<8x2xf32>
    %355 = vector.shape_cast %354 : vector<8x2xf32> to vector<8x2x1xf32>
    %cst_116 = arith.constant 3.200000e+01 : f32
    %356 = vector.broadcast %cst_116 : f32 to vector<8x2x1xf32>
    %357 = arith.divf %355, %356 : vector<8x2x1xf32>
    %cst_117 = arith.constant 9.99999974E-6 : f32
    %358 = vector.broadcast %cst_117 : f32 to vector<8x2x1xf32>
    %359 = arith.addf %357, %358 : vector<8x2x1xf32>
    %360 = math.rsqrt %359 : vector<8x2x1xf32>
    %361 = vector.broadcast %360 : vector<8x2x1xf32> to vector<8x2x32xf32>
    %362 = arith.mulf %352, %361 : vector<8x2x32xf32>
    %c2 = arith.constant 2 : index
    %c0_118 = arith.constant 0 : index
    %c0_119 = arith.constant 0 : index
    %363 = vector.load %arg15[%c2, %c0_118, %c0_119] : memref<3x1x32xf32, #tpu.memory_space<vmem>>, vector<1x1x32xf32>
    %364 = vector.shape_cast %363 : vector<1x1x32xf32> to vector<1x32xf32>
    %365 = vector.shape_cast %364 : vector<1x32xf32> to vector<1x1x32xf32>
    %366 = vector.broadcast %365 : vector<1x1x32xf32> to vector<8x2x32xf32>
    %367 = arith.mulf %362, %366 : vector<8x2x32xf32>
    %c2_120 = arith.constant 2 : index
    %c0_121 = arith.constant 0 : index
    %c0_122 = arith.constant 0 : index
    %368 = vector.load %arg16[%c2_120, %c0_121, %c0_122] : memref<3x1x32xf32, #tpu.memory_space<vmem>>, vector<1x1x32xf32>
    %369 = vector.shape_cast %368 : vector<1x1x32xf32> to vector<1x32xf32>
    %370 = vector.shape_cast %369 : vector<1x32xf32> to vector<1x1x32xf32>
    %371 = vector.broadcast %370 : vector<1x1x32xf32> to vector<8x2x32xf32>
    %372 = arith.addf %367, %371 : vector<8x2x32xf32>
    %373 = vector.shape_cast %372 : vector<8x2x32xf32> to vector<16x32xf32>
    %374 = arith.truncf %373 : vector<16x32xf32> to vector<16x32xbf16>
    %c0_123 = arith.constant 0 : index
    %c0_124 = arith.constant 0 : index
    %375 = vector.load %arg21[%c0_123, %c0_124] : memref<32x128xbf16, #tpu.memory_space<vmem>>, vector<32x128xbf16>
    %cst_125 = arith.constant dense<0.000000e+00> : vector<16x128xf32>
    %376 = tpu.matmul %374, %375, %cst_125 {dimension_numbers = #tpu.dot_dimension_numbers<[1], [0], [0], [1], [0, 0, 1, 1], [], []>} : vector<16x32xbf16>, vector<32x128xbf16>, vector<16x128xf32> -> vector<16x128xf32>
    %c0_126 = arith.constant 0 : index
    %c0_127 = arith.constant 0 : index
    %377 = vector.load %arg22[%c0_126, %c0_127] : memref<1x128xf32, #tpu.memory_space<vmem>>, vector<1x128xf32>
    %378 = vector.broadcast %377 : vector<1x128xf32> to vector<16x128xf32>
    %379 = arith.addf %376, %378 : vector<16x128xf32>
    %380 = tpu.iota {dimensions = array<i32: 1>} : vector<16x128xi32>
    %c20_i32 = arith.constant 20 : i32
    %381 = vector.broadcast %c20_i32 : i32 to vector<16x128xi32>
    %382 = arith.cmpi slt, %380, %381 : vector<16x128xi32>
    %cst_128 = arith.constant -1.000000e+30 : f32
    %383 = vector.broadcast %cst_128 : f32 to vector<16x128xf32>
    %384 = arith.select %382, %379, %383 : vector<16x128xi1>, vector<16x128xf32>
    %cst_129 = arith.constant dense<0xFF800000> : vector<16xf32>
    %385 = vector.multi_reduction <maximumf>, %384, %cst_129 [1] : vector<16x128xf32> to vector<16xf32>
    %386 = vector.shape_cast %385 : vector<16xf32> to vector<16x1xf32>
    %387 = vector.broadcast %386 : vector<16x1xf32> to vector<16x128xf32>
    %388 = arith.subf %379, %387 : vector<16x128xf32>
    %389 = math.exp %388 : vector<16x128xf32>
    %cst_130 = arith.constant 0.000000e+00 : f32
    %390 = vector.broadcast %cst_130 : f32 to vector<16x128xf32>
    %391 = arith.select %382, %389, %390 : vector<16x128xi1>, vector<16x128xf32>
    %cst_131 = arith.constant dense<0.000000e+00> : vector<16xf32>
    %392 = vector.multi_reduction <add>, %391, %cst_131 [1] : vector<16x128xf32> to vector<16xf32>
    %393 = vector.shape_cast %392 : vector<16xf32> to vector<16x1xf32>
    %394 = tpu.reciprocal %393 {approx = true} : vector<16x1xf32> -> vector<16x1xf32>
    %395 = arith.mulf %393, %394 : vector<16x1xf32>
    %cst_132 = arith.constant 2.000000e+00 : f32
    %396 = vector.broadcast %cst_132 : f32 to vector<16x1xf32>
    %397 = arith.subf %396, %395 : vector<16x1xf32>
    %398 = arith.mulf %394, %397 : vector<16x1xf32>
    %399 = vector.broadcast %398 : vector<16x1xf32> to vector<16x128xf32>
    %400 = arith.mulf %391, %399 : vector<16x128xf32>
    %401 = vector.shape_cast %400 : vector<16x128xf32> to vector<8x2x128xf32>
    %402 = vector.extract_strided_slice %401 {offsets = [0, 0, 0], sizes = [1, 2, 128], strides = [1, 1, 1]} : vector<8x2x128xf32> to vector<1x2x128xf32>
    %403 = vector.shape_cast %402 : vector<1x2x128xf32> to vector<2x128xf32>
    %c0_133 = arith.constant 0 : index
    %c0_134 = arith.constant 0 : index
    %c0_135 = arith.constant 0 : index
    %404 = vector.load %arg23[%c0_133, %c0_134, %c0_135] : memref<2x8x128xf32, #tpu.memory_space<vmem>>, vector<2x1x128xf32>
    %405 = vector.shape_cast %404 : vector<2x1x128xf32> to vector<2x128xf32>
    %406 = vector.shape_cast %403 : vector<2x128xf32> to vector<2x1x128xf32>
    tpu.vector_store %arg23[%c0_133, %c0_134, %c0_135], %406 {strides = array<i32>} : memref<2x8x128xf32, #tpu.memory_space<vmem>>, vector<2x1x128xf32>,
    %407 = vector.extract_strided_slice %401 {offsets = [1, 0, 0], sizes = [1, 2, 128], strides = [1, 1, 1]} : vector<8x2x128xf32> to vector<1x2x128xf32>
    %408 = vector.shape_cast %407 : vector<1x2x128xf32> to vector<2x128xf32>
    %c0_136 = arith.constant 0 : index
    %c1_137 = arith.constant 1 : index
    %c0_138 = arith.constant 0 : index
    %409 = vector.load %arg23[%c0_136, %c1_137, %c0_138] : memref<2x8x128xf32, #tpu.memory_space<vmem>>, vector<2x1x128xf32>
    %410 = vector.shape_cast %409 : vector<2x1x128xf32> to vector<2x128xf32>
    %411 = vector.shape_cast %408 : vector<2x128xf32> to vector<2x1x128xf32>
    tpu.vector_store %arg23[%c0_136, %c1_137, %c0_138], %411 {strides = array<i32>} : memref<2x8x128xf32, #tpu.memory_space<vmem>>, vector<2x1x128xf32>,
    %412 = vector.extract_strided_slice %401 {offsets = [2, 0, 0], sizes = [1, 2, 128], strides = [1, 1, 1]} : vector<8x2x128xf32> to vector<1x2x128xf32>
    %413 = vector.shape_cast %412 : vector<1x2x128xf32> to vector<2x128xf32>
    %c0_139 = arith.constant 0 : index
    %c2_140 = arith.constant 2 : index
    %c0_141 = arith.constant 0 : index
    %414 = vector.load %arg23[%c0_139, %c2_140, %c0_141] : memref<2x8x128xf32, #tpu.memory_space<vmem>>, vector<2x1x128xf32>
    %415 = vector.shape_cast %414 : vector<2x1x128xf32> to vector<2x128xf32>
    %416 = vector.shape_cast %413 : vector<2x128xf32> to vector<2x1x128xf32>
    tpu.vector_store %arg23[%c0_139, %c2_140, %c0_141], %416 {strides = array<i32>} : memref<2x8x128xf32, #tpu.memory_space<vmem>>, vector<2x1x128xf32>,
    %417 = vector.extract_strided_slice %401 {offsets = [3, 0, 0], sizes = [1, 2, 128], strides = [1, 1, 1]} : vector<8x2x128xf32> to vector<1x2x128xf32>
    %418 = vector.shape_cast %417 : vector<1x2x128xf32> to vector<2x128xf32>
    %c0_142 = arith.constant 0 : index
    %c3 = arith.constant 3 : index
    %c0_143 = arith.constant 0 : index
    %419 = vector.load %arg23[%c0_142, %c3, %c0_143] : memref<2x8x128xf32, #tpu.memory_space<vmem>>, vector<2x1x128xf32>
    %420 = vector.shape_cast %419 : vector<2x1x128xf32> to vector<2x128xf32>
    %421 = vector.shape_cast %418 : vector<2x128xf32> to vector<2x1x128xf32>
    tpu.vector_store %arg23[%c0_142, %c3, %c0_143], %421 {strides = array<i32>} : memref<2x8x128xf32, #tpu.memory_space<vmem>>, vector<2x1x128xf32>,
    %422 = vector.extract_strided_slice %401 {offsets = [4, 0, 0], sizes = [1, 2, 128], strides = [1, 1, 1]} : vector<8x2x128xf32> to vector<1x2x128xf32>
    %423 = vector.shape_cast %422 : vector<1x2x128xf32> to vector<2x128xf32>
    %c0_144 = arith.constant 0 : index
    %c4 = arith.constant 4 : index
    %c0_145 = arith.constant 0 : index
    %424 = vector.load %arg23[%c0_144, %c4, %c0_145] : memref<2x8x128xf32, #tpu.memory_space<vmem>>, vector<2x1x128xf32>
    %425 = vector.shape_cast %424 : vector<2x1x128xf32> to vector<2x128xf32>
    %426 = vector.shape_cast %423 : vector<2x128xf32> to vector<2x1x128xf32>
    tpu.vector_store %arg23[%c0_144, %c4, %c0_145], %426 {strides = array<i32>} : memref<2x8x128xf32, #tpu.memory_space<vmem>>, vector<2x1x128xf32>,
    %427 = vector.extract_strided_slice %401 {offsets = [5, 0, 0], sizes = [1, 2, 128], strides = [1, 1, 1]} : vector<8x2x128xf32> to vector<1x2x128xf32>
    %428 = vector.shape_cast %427 : vector<1x2x128xf32> to vector<2x128xf32>
    %c0_146 = arith.constant 0 : index
    %c5 = arith.constant 5 : index
    %c0_147 = arith.constant 0 : index
    %429 = vector.load %arg23[%c0_146, %c5, %c0_147] : memref<2x8x128xf32, #tpu.memory_space<vmem>>, vector<2x1x128xf32>
    %430 = vector.shape_cast %429 : vector<2x1x128xf32> to vector<2x128xf32>
    %431 = vector.shape_cast %428 : vector<2x128xf32> to vector<2x1x128xf32>
    tpu.vector_store %arg23[%c0_146, %c5, %c0_147], %431 {strides = array<i32>} : memref<2x8x128xf32, #tpu.memory_space<vmem>>, vector<2x1x128xf32>,
    %432 = vector.extract_strided_slice %401 {offsets = [6, 0, 0], sizes = [1, 2, 128], strides = [1, 1, 1]} : vector<8x2x128xf32> to vector<1x2x128xf32>
    %433 = vector.shape_cast %432 : vector<1x2x128xf32> to vector<2x128xf32>
    %c0_148 = arith.constant 0 : index
    %c6 = arith.constant 6 : index
    %c0_149 = arith.constant 0 : index
    %434 = vector.load %arg23[%c0_148, %c6, %c0_149] : memref<2x8x128xf32, #tpu.memory_space<vmem>>, vector<2x1x128xf32>
    %435 = vector.shape_cast %434 : vector<2x1x128xf32> to vector<2x128xf32>
    %436 = vector.shape_cast %433 : vector<2x128xf32> to vector<2x1x128xf32>
    tpu.vector_store %arg23[%c0_148, %c6, %c0_149], %436 {strides = array<i32>} : memref<2x8x128xf32, #tpu.memory_space<vmem>>, vector<2x1x128xf32>,
    %437 = vector.extract_strided_slice %401 {offsets = [7, 0, 0], sizes = [1, 2, 128], strides = [1, 1, 1]} : vector<8x2x128xf32> to vector<1x2x128xf32>
    %438 = vector.shape_cast %437 : vector<1x2x128xf32> to vector<2x128xf32>
    %c0_150 = arith.constant 0 : index
    %c7 = arith.constant 7 : index
    %c0_151 = arith.constant 0 : index
    %439 = vector.load %arg23[%c0_150, %c7, %c0_151] : memref<2x8x128xf32, #tpu.memory_space<vmem>>, vector<2x1x128xf32>
    %440 = vector.shape_cast %439 : vector<2x1x128xf32> to vector<2x128xf32>
    %441 = vector.shape_cast %438 : vector<2x128xf32> to vector<2x1x128xf32>
    tpu.vector_store %arg23[%c0_150, %c7, %c0_151], %441 {strides = array<i32>} : memref<2x8x128xf32, #tpu.memory_space<vmem>>, vector<2x1x128xf32>,
    return
  }
  func.func @transform_0(%arg0: i32) -> (i32, i32) {
    %c0_i32 = arith.constant 0 : i32
    %c0_i32_0 = arith.constant 0 : i32
    %c0_i32_1 = arith.constant 0 : i32
    return %c0_i32, %c0_i32_0 : i32, i32
  }
  func.func @transform_1(%arg0: i32) -> (i32, i32, i32) {
    %c0_i32 = arith.constant 0 : i32
    %c0_i32_0 = arith.constant 0 : i32
    %c0_i32_1 = arith.constant 0 : i32
    return %arg0, %c0_i32, %c0_i32_0 : i32, i32, i32
  }
  func.func @transform_2(%arg0: i32) -> (i32, i32) {
    %c0_i32 = arith.constant 0 : i32
    %c0_i32_0 = arith.constant 0 : i32
    %c0_i32_1 = arith.constant 0 : i32
    return %c0_i32, %c0_i32_0 : i32, i32
  }
  func.func @transform_3(%arg0: i32) -> (i32, i32) {
    %c0_i32 = arith.constant 0 : i32
    %c0_i32_0 = arith.constant 0 : i32
    %c0_i32_1 = arith.constant 0 : i32
    return %c0_i32, %c0_i32_0 : i32, i32
  }
  func.func @transform_4(%arg0: i32) -> (i32, i32) {
    %c0_i32 = arith.constant 0 : i32
    %c0_i32_0 = arith.constant 0 : i32
    %c0_i32_1 = arith.constant 0 : i32
    return %c0_i32, %c0_i32_0 : i32, i32
  }
  func.func @transform_5(%arg0: i32) -> (i32, i32) {
    %c0_i32 = arith.constant 0 : i32
    %c0_i32_0 = arith.constant 0 : i32
    %c0_i32_1 = arith.constant 0 : i32
    return %c0_i32, %c0_i32_0 : i32, i32
  }
  func.func @transform_6(%arg0: i32) -> (i32, i32) {
    %c0_i32 = arith.constant 0 : i32
    %c0_i32_0 = arith.constant 0 : i32
    %c0_i32_1 = arith.constant 0 : i32
    return %c0_i32, %c0_i32_0 : i32, i32
  }
  func.func @transform_7(%arg0: i32) -> (i32, i32) {
    %c0_i32 = arith.constant 0 : i32
    %c0_i32_0 = arith.constant 0 : i32
    %c0_i32_1 = arith.constant 0 : i32
    return %c0_i32, %c0_i32_0 : i32, i32
  }
  func.func @transform_8(%arg0: i32) -> (i32, i32) {
    %c0_i32 = arith.constant 0 : i32
    %c0_i32_0 = arith.constant 0 : i32
    %c0_i32_1 = arith.constant 0 : i32
    return %c0_i32, %c0_i32_0 : i32, i32
  }
  func.func @transform_9(%arg0: i32) -> (i32, i32) {
    %c0_i32 = arith.constant 0 : i32
    %c0_i32_0 = arith.constant 0 : i32
    %c0_i32_1 = arith.constant 0 : i32
    return %c0_i32, %c0_i32_0 : i32, i32
  }
  func.func @transform_10(%arg0: i32) -> (i32, i32) {
    %c0_i32 = arith.constant 0 : i32
    %c0_i32_0 = arith.constant 0 : i32
    %c0_i32_1 = arith.constant 0 : i32
    return %c0_i32, %c0_i32_0 : i32, i32
  }
  func.func @transform_11(%arg0: i32) -> (i32, i32) {
    %c0_i32 = arith.constant 0 : i32
    %c0_i32_0 = arith.constant 0 : i32
    %c0_i32_1 = arith.constant 0 : i32
    return %c0_i32, %c0_i32_0 : i32, i32
  }
  func.func @transform_12(%arg0: i32) -> (i32, i32) {
    %c0_i32 = arith.constant 0 : i32
    %c0_i32_0 = arith.constant 0 : i32
    %c0_i32_1 = arith.constant 0 : i32
    return %c0_i32, %c0_i32_0 : i32, i32
  }
  func.func @transform_13(%arg0: i32) -> (i32, i32) {
    %c0_i32 = arith.constant 0 : i32
    %c0_i32_0 = arith.constant 0 : i32
    %c0_i32_1 = arith.constant 0 : i32
    return %c0_i32, %c0_i32_0 : i32, i32
  }
  func.func @transform_14(%arg0: i32) -> (i32, i32, i32) {
    %c0_i32 = arith.constant 0 : i32
    %c0_i32_0 = arith.constant 0 : i32
    %c0_i32_1 = arith.constant 0 : i32
    %c0_i32_2 = arith.constant 0 : i32
    return %c0_i32, %c0_i32_0, %c0_i32_1 : i32, i32, i32
  }
  func.func @transform_15(%arg0: i32) -> (i32, i32, i32) {
    %c0_i32 = arith.constant 0 : i32
    %c0_i32_0 = arith.constant 0 : i32
    %c0_i32_1 = arith.constant 0 : i32
    %c0_i32_2 = arith.constant 0 : i32
    return %c0_i32, %c0_i32_0, %c0_i32_1 : i32, i32, i32
  }
  func.func @transform_16(%arg0: i32) -> (i32, i32) {
    %c0_i32 = arith.constant 0 : i32
    %c0_i32_0 = arith.constant 0 : i32
    %c0_i32_1 = arith.constant 0 : i32
    return %c0_i32, %c0_i32_0 : i32, i32
  }
  func.func @transform_17(%arg0: i32) -> (i32, i32) {
    %c0_i32 = arith.constant 0 : i32
    %c0_i32_0 = arith.constant 0 : i32
    %c0_i32_1 = arith.constant 0 : i32
    return %c0_i32, %c0_i32_0 : i32, i32
  }
  func.func @transform_18(%arg0: i32) -> (i32, i32) {
    %c0_i32 = arith.constant 0 : i32
    %c0_i32_0 = arith.constant 0 : i32
    %c0_i32_1 = arith.constant 0 : i32
    return %c0_i32, %c0_i32_0 : i32, i32
  }
  func.func @transform_19(%arg0: i32) -> (i32, i32) {
    %c0_i32 = arith.constant 0 : i32
    %c0_i32_0 = arith.constant 0 : i32
    %c0_i32_1 = arith.constant 0 : i32
    return %c0_i32, %c0_i32_0 : i32, i32
  }
  func.func @transform_20(%arg0: i32) -> (i32, i32) {
    %c0_i32 = arith.constant 0 : i32
    %c0_i32_0 = arith.constant 0 : i32
    %c0_i32_1 = arith.constant 0 : i32
    return %c0_i32, %c0_i32_0 : i32, i32
  }
  func.func @transform_21(%arg0: i32) -> (i32, i32) {
    %c0_i32 = arith.constant 0 : i32
    %c0_i32_0 = arith.constant 0 : i32
    %c0_i32_1 = arith.constant 0 : i32
    return %c0_i32, %c0_i32_0 : i32, i32
  }
  func.func @transform_22(%arg0: i32) -> (i32, i32, i32) {
    %c0_i32 = arith.constant 0 : i32
    %c0_i32_0 = arith.constant 0 : i32
    %c0_i32_1 = arith.constant 0 : i32
    return %c0_i32, %arg0, %c0_i32_0 : i32, i32, i32
  }
}

</mosaic_0001>

<llo_original>
// kernel: vae_forward.2
$region0: #{vae_forward.2}
  #allocation0 [shape = 'u32[]', space=smem, size = 0x4, offset = 0x4, fixed_abs, tag = 'smem constant byte address 0x4 - core index']
  #allocation1 [shape = 'u32[144,128]{1,0:T(1,128)}', space=vmem, size = 0x12000, scoped, tag = 'internal scratch']
  #allocation2 [shape = 'bf16[8,2,128]{2,1,0:T(2,128)(2,1)}', space=vmem, size = 0x1000, scoped, tag = 'scratch operand']
  %s0 = inlined_call_operand.vmem [shape: f32[8,2,32], index: 0, kind: input, shape index: {}]
  %s1 = inlined_call_operand.vmem [shape: bf16[32,128], index: 1, kind: input, shape index: {}]
  %s2 = inlined_call_operand.vmem [shape: bf16[32,128], index: 2, kind: input, shape index: {}]
  %s3 = inlined_call_operand.vmem [shape: f32[1,128], index: 3, kind: input, shape index: {}]
  %s4 = inlined_call_operand.vmem [shape: bf16[32,16], index: 4, kind: input, shape index: {}]
  %s5 = inlined_call_operand.vmem [shape: f32[1,16], index: 5, kind: input, shape index: {}]
  %s6 = inlined_call_operand.vmem [shape: bf16[32,16], index: 6, kind: input, shape index: {}]
  %s7 = inlined_call_operand.vmem [shape: f32[1,16], index: 7, kind: input, shape index: {}]
  %s8 = inlined_call_operand.vmem [shape: bf16[16,32], index: 8, kind: input, shape index: {}]
  %s9 = inlined_call_operand.vmem [shape: f32[1,32], index: 9, kind: input, shape index: {}]
  %s10 = inlined_call_operand.vmem [shape: f32[2,16], index: 10, kind: input, shape index: {}]
  %s11 = inlined_call_operand.hbm [shape: f32[2,16], index: 11, kind: output, shape index: {0}]
  %s12 = inlined_call_operand.hbm [shape: f32[2,16], index: 12, kind: output, shape index: {1}]
  %s13 = inlined_call_operand.vmem [shape: f32[2,32], index: 13, kind: output, shape index: {2}]
  %14 = xla_tuple %s11, %s12, %s13
  %s15 = sld [smem:[#allocation0]]
  $region70: #{vae_forward.2} parent=0
    _
  %s17 = ssub.s32 1, %s15
  %s18 = scalar_select 0, %s17, %s15
  $region1: #{vae_forward.2} parent=0
    #allocation3 [shape = 'u8[1024]{0}', space=vmem, size = 0x400, scoped, tag = 'output window, operand 0, single buffered']
    #allocation4 [shape = 's32[1]{0}', space=sflag, size = 0x4, scoped, tag = 'scoped memory for vae_forward.2']
    #allocation5 [shape = 'u8[1024]{0}', space=vmem, size = 0x400, scoped, tag = 'output window, operand 1, single buffered']
    #allocation6 [shape = 's32[1]{0}', space=sflag, size = 0x4, scoped, tag = 'scoped memory for vae_forward.2']
    %19 = vsyncpa [#allocation4], 0
    %20 = vsyncpa [#allocation6], 0
    // Predicated region
    $region2: #{vae_forward.2} parent=1 // pred_check
      _
    $region3: #{vae_forward.2} parent=1 // pred_check_branch
      %22 = sbr.rel (0) target = $region5
    $region4: #{vae_forward.2} parent=1 // pred_region
      _
    $region5: #{vae_forward.2} parent=1 // pred_fallthru
      _
    // Predicated region
    $region6: #{vae_forward.2} parent=1 // pred_check
      _
    $region7: #{vae_forward.2} parent=1 // pred_check_branch
      %24 = sbr.rel (0) target = $region9
    $region8: #{vae_forward.2} parent=1 // pred_region
      _
    $region9: #{vae_forward.2} parent=1 // pred_fallthru
      _
    // Predicated region
    $region10: #{vae_forward.2} parent=1 // pred_check
      _
    $region11: #{vae_forward.2} parent=1 // pred_check_branch
      %26 = sbr.rel (0) target = $region13
    $region12: #{vae_forward.2} parent=1 // pred_region
      _
    $region13: #{vae_forward.2} parent=1 // pred_fallthru
      _
    // Predicated region
    $region14: #{vae_forward.2} parent=1 // pred_check
      _
    $region15: #{vae_forward.2} parent=1 // pred_check_branch
      %28 = sbr.rel (0) target = $region17
    $region16: #{vae_forward.2} parent=1 // pred_region
      _
    $region17: #{vae_forward.2} parent=1 // pred_fallthru
      _
    // Predicated region
    $region18: #{vae_forward.2} parent=1 // pred_check
      _
    $region19: #{vae_forward.2} parent=1 // pred_check_branch
      %30 = sbr.rel (0) target = $region21
    $region20: #{vae_forward.2} parent=1 // pred_region
      _
    $region21: #{vae_forward.2} parent=1 // pred_fallthru
      _
    // Predicated region
    $region22: #{vae_forward.2} parent=1 // pred_check
      _
    $region23: #{vae_forward.2} parent=1 // pred_check_branch
      %32 = sbr.rel (0) target = $region25
    $region24: #{vae_forward.2} parent=1 // pred_region
      _
    $region25: #{vae_forward.2} parent=1 // pred_fallthru
      _
    // Predicated region
    $region26: #{vae_forward.2} parent=1 // pred_check
      _
    $region27: #{vae_forward.2} parent=1 // pred_check_branch
      %34 = sbr.rel (0) target = $region29
    $region28: #{vae_forward.2} parent=1 // pred_region
      _
    $region29: #{vae_forward.2} parent=1 // pred_fallthru
      _
    // Predicated region
    $region30: #{vae_forward.2} parent=1 // pred_check
      _
    $region31: #{vae_forward.2} parent=1 // pred_check_branch
      %36 = sbr.rel (0) target = $region33
    $region32: #{vae_forward.2} parent=1 // pred_region
      _
    $region33: #{vae_forward.2} parent=1 // pred_fallthru
      _
    // Predicated region
    $region34: #{vae_forward.2} parent=1 // pred_check
      _
    $region35: #{vae_forward.2} parent=1 // pred_check_branch
      %38 = sbr.rel (0) target = $region37
    $region36: #{vae_forward.2} parent=1 // pred_region
      _
    $region37: #{vae_forward.2} parent=1 // pred_fallthru
      _
    // Predicated region
    $region38: #{vae_forward.2} parent=1 // pred_check
      _
    $region39: #{vae_forward.2} parent=1 // pred_check_branch
      %40 = sbr.rel (0) target = $region41
    $region40: #{vae_forward.2} parent=1 // pred_region
      _
    $region41: #{vae_forward.2} parent=1 // pred_fallthru
      _
    // Predicated region
    $region42: #{vae_forward.2} parent=1 // pred_check
      _
    $region43: #{vae_forward.2} parent=1 // pred_check_branch
      %42 = sbr.rel (0) target = $region45
    $region44: #{vae_forward.2} parent=1 // pred_region
      _
    $region45: #{vae_forward.2} parent=1 // pred_fallthru
      _
    %v44 = vld [vmem:[%s0] sm:$0x3]
    %v45 = vld [vmem:[%s0 + $0x2] sm:$0x3]
    %v46 = vld [vmem:[%s0 + $0x4] sm:$0x3]
    %v47 = vld [vmem:[%s0 + $0x6] sm:$0x3]
    %v48 = vld [vmem:[%s0 + $0x8] sm:$0x3]
    %v49 = vld [vmem:[%s0 + $0xa] sm:$0x3]
    %v50 = vld [vmem:[%s0 + $0xc] sm:$0x3]
    %v51 = vld [vmem:[%s0 + $0xe] sm:$0x3]
    %v60 = vcombine.low %v44, %v45
    %v61 = vcombine.low %v46, %v47
    %v63 = vunpack.c.l.s4 1983009808
    %v64 = vunpack.c.0.s8 %v63
    %v65 = vlaneseq
    %v66 = vshrl.u32 %v65, 7
    %v67 = vsub.s32 %v64, %v66
    %v68 = vrot.slane %v60, %v67
    %v70 = vunpack.c.l.s4 1983009808
    %v71 = vunpack.c.0.s8 %v70
    %v72 = vlaneseq
    %v73 = vshrl.u32 %v72, 7
    %v74 = vsub.s32 %v71, %v73
    %v75 = vrot.slane %v61, %v74
    %v76 = vcombine.low %v68, %v75
    %v77 = vcombine.low %v48, %v49
    %v78 = vcombine.low %v50, %v51
    %v80 = vunpack.c.l.s4 1983009808
    %v81 = vunpack.c.0.s8 %v80
    %v82 = vlaneseq
    %v83 = vshrl.u32 %v82, 7
    %v84 = vsub.s32 %v81, %v83
    %v85 = vrot.slane %v77, %v84
    %v87 = vunpack.c.l.s4 1983009808
    %v88 = vunpack.c.0.s8 %v87
    %v89 = vlaneseq
    %v90 = vshrl.u32 %v89, 7
    %v91 = vsub.s32 %v88, %v90
    %v92 = vrot.slane %v78, %v91
    %v93 = vcombine.low %v85, %v92
    %v96 = vpack.c.bf16 %v93, %v76
    %v97 = vld [vmem:[%s1] sm:$0xf]
    %v98 = vld [vmem:[%s1 + $0x4] sm:$0xf]
    %v99 = vld [vmem:[%s1 + $0x8] sm:$0xf]
    %v100 = vld [vmem:[%s1 + $0xc] sm:$0xf]
    %v101 = vld [vmem:[%s3] sm:$0x1]
    %v103 = vlaneseq
    %v104 = vshrl.u32 %v103, 7
    %v105 = vsub.s32 0, %v104
    %v106 = vrot.slane %v101, %v105
    %v112 = vunpack.c.l.b16 %v97
    %v113 = vunpack.c.l.b16 %v98
    %v114 = vunpack.c.l.b16 %v99
    %v115 = vunpack.c.l.b16 %v100
    %v116 = vpack.c.b16 %v113, %v112
    %v117 = vpack.c.b16 %v115, %v114
    %vm120 = vcmask 261120
    %v122 = vsel %vm120, %v96, 0
    %124 = vmatprep.subr.bf16.mxu0 0
    %125 = vmatpush1.bf16.msra.mxu0 %v116
    %126 = vmatprep.subr.bf16.mxu0 0
    %127 = vmatpush1.bf16.msra.mxu0 %v117
    %128 = vmatprep.subr.bf16.mxu0 0
    %129 = vmatpush1.bf16.msra.mxu0 0
    %130 = vmatprep.subr.bf16.mxu0 0
    %131 = vmatpush1.bf16.msra.mxu0 0
    %132 = vmatprep.subr.bf16.mxu0 0
    %133 = vmatpush1.bf16.msra.mxu0 0
    %134 = vmatprep.subr.bf16.mxu0 0
    %135 = vmatpush1.bf16.msra.mxu0 0
    %136 = vmatprep.subr.bf16.mxu0 0
    %137 = vmatpush1.bf16.msra.mxu0 0
    %138 = vmatprep.subr.bf16.mxu0 0
    %139 = vmatpush1.bf16.msra.mxu0 0
    %140 = vmatprep.subr.bf16.mxu0 0
    %141 = vmatpush1.bf16.msra.mxu0 0
    %142 = vmatprep.subr.bf16.mxu0 0
    %143 = vmatpush1.bf16.msra.mxu0 0
    %144 = vmatprep.subr.bf16.mxu0 0
    %145 = vmatpush1.bf16.msra.mxu0 0
    %146 = vmatprep.subr.bf16.mxu0 0
    %147 = vmatpush1.bf16.msra.mxu0 0
    %148 = vmatprep.subr.bf16.mxu0 0
    %149 = vmatpush1.bf16.msra.mxu0 0
    %150 = vmatprep.subr.bf16.mxu0 0
    %151 = vmatpush1.bf16.msra.mxu0 0
    %152 = vmatprep.subr.bf16.mxu0 0
    %153 = vmatpush1.bf16.msra.mxu0 0
    %154 = vmatprep.subr.bf16.mxu0 0
    %155 = vmatpush1.bf16.msra.mxu0 0
    %156 = vmatprep.mubr.bf16.mxu0 0
    %157 = vmatmul.mubr.bf16.gmra.mrb[0].mxu0 %v122
    %v158 = vpop.f32.mrb[0].mxu0
    %v159 = vadd.f32 %v106, %v158
    %v160 = vpop.f32.mrb[0].mxu0
    %v161 = vpop.f32.mrb[0].mxu0
    %v162 = vadd.f32 %v106, %v161
    %v163 = vpop.f32.mrb[0].mxu0
    %164 = vdwg.mxu0
    %v167 = vcombine.high %v159, %v159
    %v169 = vunpack.c.l.s4 1983009808
    %v170 = vunpack.c.0.s8 %v169
    %v171 = vlaneseq
    %v172 = vshrl.u32 %v171, 7
    %v173 = vsub.s32 %v170, %v172
    %v174 = vrot.slane %v159, %v173
    %v176 = vunpack.c.l.s4 1983009808
    %v177 = vunpack.c.0.s8 %v176
    %v178 = vlaneseq
    %v179 = vshrl.u32 %v178, 7
    %v180 = vsub.s32 %v177, %v179
    %v181 = vrot.slane %v167, %v180
    %v182 = vcombine.high %v174, %v174
    %v183 = vcombine.high %v181, %v181
    %v184 = vcombine.high %v162, %v162
    %v186 = vunpack.c.l.s4 1983009808
    %v187 = vunpack.c.0.s8 %v186
    %v188 = vlaneseq
    %v189 = vshrl.u32 %v188, 7
    %v190 = vsub.s32 %v187, %v189
    %v191 = vrot.slane %v162, %v190
    %v193 = vunpack.c.l.s4 1983009808
    %v194 = vunpack.c.0.s8 %v193
    %v195 = vlaneseq
    %v196 = vshrl.u32 %v195, 7
    %v197 = vsub.s32 %v194, %v196
    %v198 = vrot.slane %v184, %v197
    %v199 = vcombine.high %v191, %v191
    %v200 = vcombine.high %v198, %v198
    %v209 = vpack.c.bf16 %v174, %v174
    %v210 = vpack.c.bf16 %v182, %v182
    %v211 = vpack.c.bf16 %v181, %v181
    %v212 = vpack.c.bf16 %v183, %v183
    %v213 = vpack.c.bf16 %v191, %v191
    %v214 = vpack.c.bf16 %v199, %v199
    %v215 = vpack.c.bf16 %v198, %v198
    %v216 = vpack.c.bf16 %v200, %v200
    %217 = vst [vmem:[#allocation2] sm:$0x1] %v209
    %218 = vst [vmem:[#allocation2 + $0x1] sm:$0x1] %v210
    %219 = vst [vmem:[#allocation2 + $0x2] sm:$0x1] %v211
    %220 = vst [vmem:[#allocation2 + $0x3] sm:$0x1] %v212
    %221 = vst [vmem:[#allocation2 + $0x4] sm:$0x1] %v213
    %222 = vst [vmem:[#allocation2 + $0x5] sm:$0x1] %v214
    %223 = vst [vmem:[#allocation2 + $0x6] sm:$0x1] %v215
    %224 = vst [vmem:[#allocation2 + $0x7] sm:$0x1] %v216
    %v225 = vld [vmem:[%s2] sm:$0xf]
    %v226 = vld [vmem:[%s2 + $0x4] sm:$0xf]
    %v227 = vld [vmem:[%s2 + $0x8] sm:$0xf]
    %v228 = vld [vmem:[%s2 + $0xc] sm:$0xf]
    %v229 = vld [vmem:[#allocation2] sm:$0x1]
    %v230 = vunpack.c.l.bf16 %v229
    %v235 = vunpack.c.l.b16 %v225
    %v236 = vunpack.c.l.b16 %v226
    %v237 = vunpack.c.l.b16 %v227
    %v238 = vunpack.c.l.b16 %v228
    %v239 = vpack.c.b16 %v236, %v235
    %v240 = vpack.c.b16 %v238, %v237
    %v244 = vsel %vm120, 0, 0
    %246 = vmatprep.subr.bf16.mxu0 0
    %247 = vmatpush1.bf16.msra.mxu0 %v239
    %248 = vmatprep.subr.bf16.mxu0 0
    %249 = vmatpush1.bf16.msra.mxu0 %v240
    %250 = vmatprep.subr.bf16.mxu0 0
    %251 = vmatpush1.bf16.msra.mxu0 0
    %252 = vmatprep.subr.bf16.mxu0 0
    %253 = vmatpush1.bf16.msra.mxu0 0
    %254 = vmatprep.subr.bf16.mxu0 0
    %255 = vmatpush1.bf16.msra.mxu0 0
    %256 = vmatprep.subr.bf16.mxu0 0
    %257 = vmatpush1.bf16.msra.mxu0 0
    %258 = vmatprep.subr.bf16.mxu0 0
    %259 = vmatpush1.bf16.msra.mxu0 0
    %260 = vmatprep.subr.bf16.mxu0 0
    %261 = vmatpush1.bf16.msra.mxu0 0
    %262 = vmatprep.subr.bf16.mxu0 0
    %263 = vmatpush1.bf16.msra.mxu0 0
    %264 = vmatprep.subr.bf16.mxu0 0
    %265 = vmatpush1.bf16.msra.mxu0 0
    %266 = vmatprep.subr.bf16.mxu0 0
    %267 = vmatpush1.bf16.msra.mxu0 0
    %268 = vmatprep.subr.bf16.mxu0 0
    %269 = vmatpush1.bf16.msra.mxu0 0
    %270 = vmatprep.subr.bf16.mxu0 0
    %271 = vmatpush1.bf16.msra.mxu0 0
    %272 = vmatprep.subr.bf16.mxu0 0
    %273 = vmatpush1.bf16.msra.mxu0 0
    %274 = vmatprep.subr.bf16.mxu0 0
    %275 = vmatpush1.bf16.msra.mxu0 0
    %276 = vmatprep.subr.bf16.mxu0 0
    %277 = vmatpush1.bf16.msra.mxu0 0
    %278 = vmatprep.mubr.bf16.mxu0 0
    %279 = vmatmul.mubr.bf16.gmra.mrb[0].mxu0 %v244
    %v280 = vpop.f32.mrb[0].mxu0
    %v281 = vadd.f32 0.0, %v280
    %v282 = vpop.f32.mrb[0].mxu0
    %v283 = vpop.f32.mrb[0].mxu0
    %v284 = vpop.f32.mrb[0].mxu0
    %285 = vdwg.mxu0
    %v286 = vadd.f32 %v230, %v281
    %v287 = vxor.u32 %v286, 2147483648
    %v288 = vmul.f32 %v287, 1.442695
    %v289 = vpow.pop %v288
    %v290 = vadd.f32 %v289, 1.0
    %v291 = vrcp.pop %v290
    %v292 = vmul.f32 1.0, %v291
    %v293 = vtanh.pop %v286
    %v294 = vmul.f32 %v292, 0.0
    %296 = vrot.lane.b32.xlu0 %v293, 32
    %v297 = vpop.permute.xlu0 %296
    %v299 = vmul.f32 %v292, %v297
    %301 = vrot.lane.b32.xlu0 %v299, 32
    %v302 = vpop.permute.xlu0 %301
    %v304 = vadd.f32 %v294, %v302
    %v305 = vtanh.pop %v304
    %307 = vrot.lane.b32.xlu0 %v305, 32
    %v308 = vpop.permute.xlu0 %307
    %v310 = vmul.f32 %v292, %v308
    %s311 = scalar_lea.vmem [#allocation2], 1
    %v312 = vld [vmem:[%s311] sm:$0x1]
    %v313 = vunpack.c.l.bf16 %v312
    %v314 = vpack.c.bf16 %v310, %v310
    %316 = vrot.lane.b32.xlu0 %v314, 64
    %v317 = vpop.permute.xlu0 %316
    %v319 = vsel %vm120, %v317, 0
    %321 = vmatprep.subr.bf16.mxu0 0
    %322 = vmatpush1.bf16.msra.mxu0 %v239
    %323 = vmatprep.subr.bf16.mxu0 0
    %324 = vmatpush1.bf16.msra.mxu0 %v240
    %325 = vmatprep.subr.bf16.mxu0 0
    %326 = vmatpush1.bf16.msra.mxu0 0
    %327 = vmatprep.subr.bf16.mxu0 0
    %328 = vmatpush1.bf16.msra.mxu0 0
    %329 = vmatprep.subr.bf16.mxu0 0
    %330 = vmatpush1.bf16.msra.mxu0 0
    %331 = vmatprep.subr.bf16.mxu0 0
    %332 = vmatpush1.bf16.msra.mxu0 0
    %333 = vmatprep.subr.bf16.mxu0 0
    %334 = vmatpush1.bf16.msra.mxu0 0
    %335 = vmatprep.subr.bf16.mxu0 0
    %336 = vmatpush1.bf16.msra.mxu0 0
    %337 = vmatprep.subr.bf16.mxu0 0
    %338 = vmatpush1.bf16.msra.mxu0 0
    %339 = vmatprep.subr.bf16.mxu0 0
    %340 = vmatpush1.bf16.msra.mxu0 0
    %341 = vmatprep.subr.bf16.mxu0 0
    %342 = vmatpush1.bf16.msra.mxu0 0
    %343 = vmatprep.subr.bf16.mxu0 0
    %344 = vmatpush1.bf16.msra.mxu0 0
    %345 = vmatprep.subr.bf16.mxu0 0
    %346 = vmatpush1.bf16.msra.mxu0 0
    %347 = vmatprep.subr.bf16.mxu0 0
    %348 = vmatpush1.bf16.msra.mxu0 0
    %349 = vmatprep.subr.bf16.mxu0 0
    %350 = vmatpush1.bf16.msra.mxu0 0
    %351 = vmatprep.subr.bf16.mxu0 0
    %352 = vmatpush1.bf16.msra.mxu0 0
    %353 = vmatprep.mubr.bf16.mxu0 0
    %354 = vmatmul.mubr.bf16.gmra.mrb[0].mxu0 %v319
    %v355 = vpop.f32.mrb[0].mxu0
    %v356 = vadd.f32 0.0, %v355
    %v357 = vpop.f32.mrb[0].mxu0
    %v358 = vpop.f32.mrb[0].mxu0
    %v359 = vpop.f32.mrb[0].mxu0
    %360 = vdwg.mxu0
    %v361 = vadd.f32 %v313, %v356
    %v362 = vxor.u32 %v361, 2147483648
    %v363 = vmul.f32 %v362, 1.442695
    %v364 = vpow.pop %v363
    %v365 = vadd.f32 %v364, 1.0
    %v366 = vrcp.pop %v365
    %v367 = vmul.f32 1.0, %v366
    %v368 = vtanh.pop %v361
    %v369 = vmul.f32 %v367, %v304
    %371 = vrot.lane.b32.xlu0 %v368, 32
    %v372 = vpop.permute.xlu0 %371
    %v374 = vmul.f32 %v367, %v372
    %376 = vrot.lane.b32.xlu0 %v374, 32
    %v377 = vpop.permute.xlu0 %376
    %v379 = vadd.f32 %v369, %v377
    %v380 = vtanh.pop %v379
    %382 = vrot.lane.b32.xlu0 %v380, 32
    %v383 = vpop.permute.xlu0 %382
    %v385 = vmul.f32 %v367, %v383
    %s386 = scalar_lea.vmem [#allocation2], 2
    %v387 = vld [vmem:[%s386] sm:$0x1]
    %v388 = vunpack.c.l.bf16 %v387
    %v389 = vpack.c.bf16 %v385, %v385
    %391 = vrot.lane.b32.xlu0 %v389, 64
    %v392 = vpop.permute.xlu0 %391
    %v394 = vsel %vm120, %v392, 0
    %396 = vmatprep.subr.bf16.mxu0 0
    %397 = vmatpush1.bf16.msra.mxu0 %v239
    %398 = vmatprep.subr.bf16.mxu0 0
    %399 = vmatpush1.bf16.msra.mxu0 %v240
    %400 = vmatprep.subr.bf16.mxu0 0
    %401 = vmatpush1.bf16.msra.mxu0 0
    %402 = vmatprep.subr.bf16.mxu0 0
    %403 = vmatpush1.bf16.msra.mxu0 0
    %404 = vmatprep.subr.bf16.mxu0 0
    %405 = vmatpush1.bf16.msra.mxu0 0
    %406 = vmatprep.subr.bf16.mxu0 0
    %407 = vmatpush1.bf16.msra.mxu0 0
    %408 = vmatprep.subr.bf16.mxu0 0
    %409 = vmatpush1.bf16.msra.mxu0 0
    %410 = vmatprep.subr.bf16.mxu0 0
    %411 = vmatpush1.bf16.msra.mxu0 0
    %412 = vmatprep.subr.bf16.mxu0 0
    %413 = vmatpush1.bf16.msra.mxu0 0
    %414 = vmatprep.subr.bf16.mxu0 0
    %415 = vmatpush1.bf16.msra.mxu0 0
    %416 = vmatprep.subr.bf16.mxu0 0
    %417 = vmatpush1.bf16.msra.mxu0 0
    %418 = vmatprep.subr.bf16.mxu0 0
    %419 = vmatpush1.bf16.msra.mxu0 0
    %420 = vmatprep.subr.bf16.mxu0 0
    %421 = vmatpush1.bf16.msra.mxu0 0
    %422 = vmatprep.subr.bf16.mxu0 0
    %423 = vmatpush1.bf16.msra.mxu0 0
    %424 = vmatprep.subr.bf16.mxu0 0
    %425 = vmatpush1.bf16.msra.mxu0 0
    %426 = vmatprep.subr.bf16.mxu0 0
    %427 = vmatpush1.bf16.msra.mxu0 0
    %428 = vmatprep.mubr.bf16.mxu0 0
    %429 = vmatmul.mubr.bf16.gmra.mrb[0].mxu0 %v394
    %v430 = vpop.f32.mrb[0].mxu0
    %v431 = vadd.f32 0.0, %v430
    %v432 = vpop.f32.mrb[0].mxu0
    %v433 = vpop.f32.mrb[0].mxu0
    %v434 = vpop.f32.mrb[0].mxu0
    %435 = vdwg.mxu0
    %v436 = vadd.f32 %v388, %v431
    %v437 = vxor.u32 %v436, 2147483648
    %v438 = vmul.f32 %v437, 1.442695
    %v439 = vpow.pop %v438
    %v440 = vadd.f32 %v439, 1.0
    %v441 = vrcp.pop %v440
    %v442 = vmul.f32 1.0, %v441
    %v443 = vtanh.pop %v436
    %v444 = vmul.f32 %v442, %v379
    %446 = vrot.lane.b32.xlu0 %v443, 32
    %v447 = vpop.permute.xlu0 %446
    %v449 = vmul.f32 %v442, %v447
    %451 = vrot.lane.b32.xlu0 %v449, 32
    %v452 = vpop.permute.xlu0 %451
    %v454 = vadd.f32 %v444, %v452
    %v455 = vtanh.pop %v454
    %457 = vrot.lane.b32.xlu0 %v455, 32
    %v458 = vpop.permute.xlu0 %457
    %v460 = vmul.f32 %v442, %v458
    %s461 = scalar_lea.vmem [#allocation2], 3
    %v462 = vld [vmem:[%s461] sm:$0x1]
    %v463 = vunpack.c.l.bf16 %v462
    %v464 = vpack.c.bf16 %v460, %v460
    %466 = vrot.lane.b32.xlu0 %v464, 64
    %v467 = vpop.permute.xlu0 %466
    %v469 = vsel %vm120, %v467, 0
    %471 = vmatprep.subr.bf16.mxu0 0
    %472 = vmatpush1.bf16.msra.mxu0 %v239
    %473 = vmatprep.subr.bf16.mxu0 0
    %474 = vmatpush1.bf16.msra.mxu0 %v240
    %475 = vmatprep.subr.bf16.mxu0 0
    %476 = vmatpush1.bf16.msra.mxu0 0
    %477 = vmatprep.subr.bf16.mxu0 0
    %478 = vmatpush1.bf16.msra.mxu0 0
    %479 = vmatprep.subr.bf16.mxu0 0
    %480 = vmatpush1.bf16.msra.mxu0 0
    %481 = vmatprep.subr.bf16.mxu0 0
    %482 = vmatpush1.bf16.msra.mxu0 0
    %483 = vmatprep.subr.bf16.mxu0 0
    %484 = vmatpush1.bf16.msra.mxu0 0
    %485 = vmatprep.subr.bf16.mxu0 0
    %486 = vmatpush1.bf16.msra.mxu0 0
    %487 = vmatprep.subr.bf16.mxu0 0
    %488 = vmatpush1.bf16.msra.mxu0 0
    %489 = vmatprep.subr.bf16.mxu0 0
    %490 = vmatpush1.bf16.msra.mxu0 0
    %491 = vmatprep.subr.bf16.mxu0 0
    %492 = vmatpush1.bf16.msra.mxu0 0
    %493 = vmatprep.subr.bf16.mxu0 0
    %494 = vmatpush1.bf16.msra.mxu0 0
    %495 = vmatprep.subr.bf16.mxu0 0
    %496 = vmatpush1.bf16.msra.mxu0 0
    %497 = vmatprep.subr.bf16.mxu0 0
    %498 = vmatpush1.bf16.msra.mxu0 0
    %499 = vmatprep.subr.bf16.mxu0 0
    %500 = vmatpush1.bf16.msra.mxu0 0
    %501 = vmatprep.subr.bf16.mxu0 0
    %502 = vmatpush1.bf16.msra.mxu0 0
    %503 = vmatprep.mubr.bf16.mxu0 0
    %504 = vmatmul.mubr.bf16.gmra.mrb[0].mxu0 %v469
    %v505 = vpop.f32.mrb[0].mxu0
    %v506 = vadd.f32 0.0, %v505
    %v507 = vpop.f32.mrb[0].mxu0
    %v508 = vpop.f32.mrb[0].mxu0
    %v509 = vpop.f32.mrb[0].mxu0
    %510 = vdwg.mxu0
    %v511 = vadd.f32 %v463, %v506
    %v512 = vxor.u32 %v511, 2147483648
    %v513 = vmul.f32 %v512, 1.442695
    %v514 = vpow.pop %v513
    %v515 = vadd.f32 %v514, 1.0
    %v516 = vrcp.pop %v515
    %v517 = vmul.f32 1.0, %v516
    %v518 = vtanh.pop %v511
    %v519 = vmul.f32 %v517, %v454
    %521 = vrot.lane.b32.xlu0 %v518, 32
    %v522 = vpop.permute.xlu0 %521
    %v524 = vmul.f32 %v517, %v522
    %526 = vrot.lane.b32.xlu0 %v524, 32
    %v527 = vpop.permute.xlu0 %526
    %v529 = vadd.f32 %v519, %v527
    %v530 = vtanh.pop %v529
    %532 = vrot.lane.b32.xlu0 %v530, 32
    %v533 = vpop.permute.xlu0 %532
    %v535 = vmul.f32 %v517, %v533
    %s536 = scalar_lea.vmem [#allocation2], 4
    %v537 = vld [vmem:[%s536] sm:$0x1]
    %v538 = vunpack.c.l.bf16 %v537
    %v539 = vpack.c.bf16 %v535, %v535
    %541 = vrot.lane.b32.xlu0 %v539, 64
    %v542 = vpop.permute.xlu0 %541
    %v544 = vsel %vm120, %v542, 0
    %546 = vmatprep.subr.bf16.mxu0 0
    %547 = vmatpush1.bf16.msra.mxu0 %v239
    %548 = vmatprep.subr.bf16.mxu0 0
    %549 = vmatpush1.bf16.msra.mxu0 %v240
    %550 = vmatprep.subr.bf16.mxu0 0
    %551 = vmatpush1.bf16.msra.mxu0 0
    %552 = vmatprep.subr.bf16.mxu0 0
    %553 = vmatpush1.bf16.msra.mxu0 0
    %554 = vmatprep.subr.bf16.mxu0 0
    %555 = vmatpush1.bf16.msra.mxu0 0
    %556 = vmatprep.subr.bf16.mxu0 0
    %557 = vmatpush1.bf16.msra.mxu0 0
    %558 = vmatprep.subr.bf16.mxu0 0
    %559 = vmatpush1.bf16.msra.mxu0 0
    %560 = vmatprep.subr.bf16.mxu0 0
    %561 = vmatpush1.bf16.msra.mxu0 0
    %562 = vmatprep.subr.bf16.mxu0 0
    %563 = vmatpush1.bf16.msra.mxu0 0
    %564 = vmatprep.subr.bf16.mxu0 0
    %565 = vmatpush1.bf16.msra.mxu0 0
    %566 = vmatprep.subr.bf16.mxu0 0
    %567 = vmatpush1.bf16.msra.mxu0 0
    %568 = vmatprep.subr.bf16.mxu0 0
    %569 = vmatpush1.bf16.msra.mxu0 0
    %570 = vmatprep.subr.bf16.mxu0 0
    %571 = vmatpush1.bf16.msra.mxu0 0
    %572 = vmatprep.subr.bf16.mxu0 0
    %573 = vmatpush1.bf16.msra.mxu0 0
    %574 = vmatprep.subr.bf16.mxu0 0
    %575 = vmatpush1.bf16.msra.mxu0 0
    %576 = vmatprep.subr.bf16.mxu0 0
    %577 = vmatpush1.bf16.msra.mxu0 0
    %578 = vmatprep.mubr.bf16.mxu0 0
    %579 = vmatmul.mubr.bf16.gmra.mrb[0].mxu0 %v544
    %v580 = vpop.f32.mrb[0].mxu0
    %v581 = vadd.f32 0.0, %v580
    %v582 = vpop.f32.mrb[0].mxu0
    %v583 = vpop.f32.mrb[0].mxu0
    %v584 = vpop.f32.mrb[0].mxu0
    %585 = vdwg.mxu0
    %v586 = vadd.f32 %v538, %v581
    %v587 = vxor.u32 %v586, 2147483648
    %v588 = vmul.f32 %v587, 1.442695
    %v589 = vpow.pop %v588
    %v590 = vadd.f32 %v589, 1.0
    %v591 = vrcp.pop %v590
    %v592 = vmul.f32 1.0, %v591
    %v593 = vtanh.pop %v586
    %v594 = vmul.f32 %v592, %v529
    %596 = vrot.lane.b32.xlu0 %v593, 32
    %v597 = vpop.permute.xlu0 %596
    %v599 = vmul.f32 %v592, %v597
    %601 = vrot.lane.b32.xlu0 %v599, 32
    %v602 = vpop.permute.xlu0 %601
    %v604 = vadd.f32 %v594, %v602
    %v605 = vtanh.pop %v604
    %607 = vrot.lane.b32.xlu0 %v605, 32
    %v608 = vpop.permute.xlu0 %607
    %v610 = vmul.f32 %v592, %v608
    %s611 = scalar_lea.vmem [#allocation2], 5
    %v612 = vld [vmem:[%s611] sm:$0x1]
    %v613 = vunpack.c.l.bf16 %v612
    %v614 = vpack.c.bf16 %v610, %v610
    %616 = vrot.lane.b32.xlu0 %v614, 64
    %v617 = vpop.permute.xlu0 %616
    %v619 = vsel %vm120, %v617, 0
    %621 = vmatprep.subr.bf16.mxu0 0
    %622 = vmatpush1.bf16.msra.mxu0 %v239
    %623 = vmatprep.subr.bf16.mxu0 0
    %624 = vmatpush1.bf16.msra.mxu0 %v240
    %625 = vmatprep.subr.bf16.mxu0 0
    %626 = vmatpush1.bf16.msra.mxu0 0
    %627 = vmatprep.subr.bf16.mxu0 0
    %628 = vmatpush1.bf16.msra.mxu0 0
    %629 = vmatprep.subr.bf16.mxu0 0
    %630 = vmatpush1.bf16.msra.mxu0 0
    %631 = vmatprep.subr.bf16.mxu0 0
    %632 = vmatpush1.bf16.msra.mxu0 0
    %633 = vmatprep.subr.bf16.mxu0 0
    %634 = vmatpush1.bf16.msra.mxu0 0
    %635 = vmatprep.subr.bf16.mxu0 0
    %636 = vmatpush1.bf16.msra.mxu0 0
    %637 = vmatprep.subr.bf16.mxu0 0
    %638 = vmatpush1.bf16.msra.mxu0 0
    %639 = vmatprep.subr.bf16.mxu0 0
    %640 = vmatpush1.bf16.msra.mxu0 0
    %641 = vmatprep.subr.bf16.mxu0 0
    %642 = vmatpush1.bf16.msra.mxu0 0
    %643 = vmatprep.subr.bf16.mxu0 0
    %644 = vmatpush1.bf16.msra.mxu0 0
    %645 = vmatprep.subr.bf16.mxu0 0
    %646 = vmatpush1.bf16.msra.mxu0 0
    %647 = vmatprep.subr.bf16.mxu0 0
    %648 = vmatpush1.bf16.msra.mxu0 0
    %649 = vmatprep.subr.bf16.mxu0 0
    %650 = vmatpush1.bf16.msra.mxu0 0
    %651 = vmatprep.subr.bf16.mxu0 0
    %652 = vmatpush1.bf16.msra.mxu0 0
    %653 = vmatprep.mubr.bf16.mxu0 0
    %654 = vmatmul.mubr.bf16.gmra.mrb[0].mxu0 %v619
    %v655 = vpop.f32.mrb[0].mxu0
    %v656 = vadd.f32 0.0, %v655
    %v657 = vpop.f32.mrb[0].mxu0
    %v658 = vpop.f32.mrb[0].mxu0
    %v659 = vpop.f32.mrb[0].mxu0
    %660 = vdwg.mxu0
    %v661 = vadd.f32 %v613, %v656
    %v662 = vxor.u32 %v661, 2147483648
    %v663 = vmul.f32 %v662, 1.442695
    %v664 = vpow.pop %v663
    %v665 = vadd.f32 %v664, 1.0
    %v666 = vrcp.pop %v665
    %v667 = vmul.f32 1.0, %v666
    %v668 = vtanh.pop %v661
    %v669 = vmul.f32 %v667, %v604
    %671 = vrot.lane.b32.xlu0 %v668, 32
    %v672 = vpop.permute.xlu0 %671
    %v674 = vmul.f32 %v667, %v672
    %676 = vrot.lane.b32.xlu0 %v674, 32
    %v677 = vpop.permute.xlu0 %676
    %v679 = vadd.f32 %v669, %v677
    %v680 = vtanh.pop %v679
    %682 = vrot.lane.b32.xlu0 %v680, 32
    %v683 = vpop.permute.xlu0 %682
    %v685 = vmul.f32 %v667, %v683
    %s686 = scalar_lea.vmem [#allocation2], 6
    %v687 = vld [vmem:[%s686] sm:$0x1]
    %v688 = vunpack.c.l.bf16 %v687
    %v689 = vpack.c.bf16 %v685, %v685
    %691 = vrot.lane.b32.xlu0 %v689, 64
    %v692 = vpop.permute.xlu0 %691
    %v694 = vsel %vm120, %v692, 0
    %696 = vmatprep.subr.bf16.mxu0 0
    %697 = vmatpush1.bf16.msra.mxu0 %v239
    %698 = vmatprep.subr.bf16.mxu0 0
    %699 = vmatpush1.bf16.msra.mxu0 %v240
    %700 = vmatprep.subr.bf16.mxu0 0
    %701 = vmatpush1.bf16.msra.mxu0 0
    %702 = vmatprep.subr.bf16.mxu0 0
    %703 = vmatpush1.bf16.msra.mxu0 0
    %704 = vmatprep.subr.bf16.mxu0 0
    %705 = vmatpush1.bf16.msra.mxu0 0
    %706 = vmatprep.subr.bf16.mxu0 0
    %707 = vmatpush1.bf16.msra.mxu0 0
    %708 = vmatprep.subr.bf16.mxu0 0
    %709 = vmatpush1.bf16.msra.mxu0 0
    %710 = vmatprep.subr.bf16.mxu0 0
    %711 = vmatpush1.bf16.msra.mxu0 0
    %712 = vmatprep.subr.bf16.mxu0 0
    %713 = vmatpush1.bf16.msra.mxu0 0
    %714 = vmatprep.subr.bf16.mxu0 0
    %715 = vmatpush1.bf16.msra.mxu0 0
    %716 = vmatprep.subr.bf16.mxu0 0
    %717 = vmatpush1.bf16.msra.mxu0 0
    %718 = vmatprep.subr.bf16.mxu0 0
    %719 = vmatpush1.bf16.msra.mxu0 0
    %720 = vmatprep.subr.bf16.mxu0 0
    %721 = vmatpush1.bf16.msra.mxu0 0
    %722 = vmatprep.subr.bf16.mxu0 0
    %723 = vmatpush1.bf16.msra.mxu0 0
    %724 = vmatprep.subr.bf16.mxu0 0
    %725 = vmatpush1.bf16.msra.mxu0 0
    %726 = vmatprep.subr.bf16.mxu0 0
    %727 = vmatpush1.bf16.msra.mxu0 0
    %728 = vmatprep.mubr.bf16.mxu0 0
    %729 = vmatmul.mubr.bf16.gmra.mrb[0].mxu0 %v694
    %v730 = vpop.f32.mrb[0].mxu0
    %v731 = vadd.f32 0.0, %v730
    %v732 = vpop.f32.mrb[0].mxu0
    %v733 = vpop.f32.mrb[0].mxu0
    %v734 = vpop.f32.mrb[0].mxu0
    %735 = vdwg.mxu0
    %v736 = vadd.f32 %v688, %v731
    %v737 = vxor.u32 %v736, 2147483648
    %v738 = vmul.f32 %v737, 1.442695
    %v739 = vpow.pop %v738
    %v740 = vadd.f32 %v739, 1.0
    %v741 = vrcp.pop %v740
    %v742 = vmul.f32 1.0, %v741
    %v743 = vtanh.pop %v736
    %v744 = vmul.f32 %v742, %v679
    %746 = vrot.lane.b32.xlu0 %v743, 32
    %v747 = vpop.permute.xlu0 %746
    %v749 = vmul.f32 %v742, %v747
    %751 = vrot.lane.b32.xlu0 %v749, 32
    %v752 = vpop.permute.xlu0 %751
    %v754 = vadd.f32 %v744, %v752
    %v755 = vtanh.pop %v754
    %757 = vrot.lane.b32.xlu0 %v755, 32
    %v758 = vpop.permute.xlu0 %757
    %v760 = vmul.f32 %v742, %v758
    %s761 = scalar_lea.vmem [#allocation2], 7
    %v762 = vld [vmem:[%s761] sm:$0x1]
    %v763 = vunpack.c.l.bf16 %v762
    %v764 = vpack.c.bf16 %v760, %v760
    %766 = vrot.lane.b32.xlu0 %v764, 64
    %v767 = vpop.permute.xlu0 %766
    %v769 = vsel %vm120, %v767, 0
    %771 = vmatprep.subr.bf16.mxu0 0
    %772 = vmatpush1.bf16.msra.mxu0 %v239
    %773 = vmatprep.subr.bf16.mxu0 0
    %774 = vmatpush1.bf16.msra.mxu0 %v240
    %775 = vmatprep.subr.bf16.mxu0 0
    %776 = vmatpush1.bf16.msra.mxu0 0
    %777 = vmatprep.subr.bf16.mxu0 0
    %778 = vmatpush1.bf16.msra.mxu0 0
    %779 = vmatprep.subr.bf16.mxu0 0
    %780 = vmatpush1.bf16.msra.mxu0 0
    %781 = vmatprep.subr.bf16.mxu0 0
    %782 = vmatpush1.bf16.msra.mxu0 0
    %783 = vmatprep.subr.bf16.mxu0 0
    %784 = vmatpush1.bf16.msra.mxu0 0
    %785 = vmatprep.subr.bf16.mxu0 0
    %786 = vmatpush1.bf16.msra.mxu0 0
    %787 = vmatprep.subr.bf16.mxu0 0
    %788 = vmatpush1.bf16.msra.mxu0 0
    %789 = vmatprep.subr.bf16.mxu0 0
    %790 = vmatpush1.bf16.msra.mxu0 0
    %791 = vmatprep.subr.bf16.mxu0 0
    %792 = vmatpush1.bf16.msra.mxu0 0
    %793 = vmatprep.subr.bf16.mxu0 0
    %794 = vmatpush1.bf16.msra.mxu0 0
    %795 = vmatprep.subr.bf16.mxu0 0
    %796 = vmatpush1.bf16.msra.mxu0 0
    %797 = vmatprep.subr.bf16.mxu0 0
    %798 = vmatpush1.bf16.msra.mxu0 0
    %799 = vmatprep.subr.bf16.mxu0 0
    %800 = vmatpush1.bf16.msra.mxu0 0
    %801 = vmatprep.subr.bf16.mxu0 0
    %802 = vmatpush1.bf16.msra.mxu0 0
    %803 = vmatprep.mubr.bf16.mxu0 0
    %804 = vmatmul.mubr.bf16.gmra.mrb[0].mxu0 %v769
    %v805 = vpop.f32.mrb[0].mxu0
    %v806 = vadd.f32 0.0, %v805
    %v807 = vpop.f32.mrb[0].mxu0
    %v808 = vpop.f32.mrb[0].mxu0
    %v809 = vpop.f32.mrb[0].mxu0
    %810 = vdwg.mxu0
    %v811 = vadd.f32 %v763, %v806
    %v812 = vxor.u32 %v811, 2147483648
    %v813 = vmul.f32 %v812, 1.442695
    %v814 = vpow.pop %v813
    %v815 = vadd.f32 %v814, 1.0
    %v816 = vrcp.pop %v815
    %v817 = vmul.f32 1.0, %v816
    %v818 = vtanh.pop %v811
    %v819 = vmul.f32 %v817, %v754
    %821 = vrot.lane.b32.xlu0 %v818, 32
    %v822 = vpop.permute.xlu0 %821
    %v824 = vmul.f32 %v817, %v822
    %826 = vrot.lane.b32.xlu0 %v824, 32
    %v827 = vpop.permute.xlu0 %826
    %v829 = vadd.f32 %v819, %v827
    %v830 = vtanh.pop %v829
    %832 = vrot.lane.b32.xlu0 %v830, 32
    %v833 = vpop.permute.xlu0 %832
    %v835 = vmul.f32 %v817, %v833
    %v836 = vpack.c.bf16 %v835, %v835
    %v837 = vld [vmem:[%s4] sm:$0xf]
    %v838 = vld [vmem:[%s4 + $0x4] sm:$0xf]
    %v839 = vld [vmem:[%s4 + $0x8] sm:$0xf]
    %v840 = vld [vmem:[%s4 + $0xc] sm:$0xf]
    %v841 = vld [vmem:[%s5] sm:$0x1]
    %v843 = vlaneseq
    %v844 = vshrl.u32 %v843, 7
    %v845 = vsub.s32 0, %v844
    %v846 = vrot.slane %v841, %v845
    %849 = vrot.lane.b32.xlu0 %v836, 64
    %v850 = vpop.permute.xlu0 %849
    %v855 = vunpack.c.l.b16 %v837
    %v856 = vunpack.c.l.b16 %v838
    %v857 = vunpack.c.l.b16 %v839
    %v858 = vunpack.c.l.b16 %v840
    %v859 = vpack.c.b16 %v856, %v855
    %v860 = vpack.c.b16 %v858, %v857
    %v864 = vsel %vm120, %v850, 0
    %866 = vmatprep.subr.bf16.mxu0 0
    %867 = vmatpush1.bf16.msra.mxu0 %v859
    %868 = vmatprep.subr.bf16.mxu0 0
    %869 = vmatpush1.bf16.msra.mxu0 %v860
    %870 = vmatprep.subr.bf16.mxu0 0
    %871 = vmatpush1.bf16.msra.mxu0 0
    %872 = vmatprep.subr.bf16.mxu0 0
    %873 = vmatpush1.bf16.msra.mxu0 0
    %874 = vmatprep.subr.bf16.mxu0 0
    %875 = vmatpush1.bf16.msra.mxu0 0
    %876 = vmatprep.subr.bf16.mxu0 0
    %877 = vmatpush1.bf16.msra.mxu0 0
    %878 = vmatprep.subr.bf16.mxu0 0
    %879 = vmatpush1.bf16.msra.mxu0 0
    %880 = vmatprep.subr.bf16.mxu0 0
    %881 = vmatpush1.bf16.msra.mxu0 0
    %882 = vmatprep.subr.bf16.mxu0 0
    %883 = vmatpush1.bf16.msra.mxu0 0
    %884 = vmatprep.subr.bf16.mxu0 0
    %885 = vmatpush1.bf16.msra.mxu0 0
    %886 = vmatprep.subr.bf16.mxu0 0
    %887 = vmatpush1.bf16.msra.mxu0 0
    %888 = vmatprep.subr.bf16.mxu0 0
    %889 = vmatpush1.bf16.msra.mxu0 0
    %890 = vmatprep.subr.bf16.mxu0 0
    %891 = vmatpush1.bf16.msra.mxu0 0
    %892 = vmatprep.subr.bf16.mxu0 0
    %893 = vmatpush1.bf16.msra.mxu0 0
    %894 = vmatprep.subr.bf16.mxu0 0
    %895 = vmatpush1.bf16.msra.mxu0 0
    %896 = vmatprep.subr.bf16.mxu0 0
    %897 = vmatpush1.bf16.msra.mxu0 0
    %898 = vmatprep.mubr.bf16.mxu0 0
    %899 = vmatmul.mubr.bf16.gmra.mrb[0].mxu0 %v864
    %v900 = vpop.f32.mrb[0].mxu0
    %v901 = vadd.f32 %v846, %v900
    %v902 = vpop.f32.mrb[0].mxu0
    %v903 = vpop.f32.mrb[0].mxu0
    %v904 = vpop.f32.mrb[0].mxu0
    %905 = vdwg.mxu0
    %v906 = vld [vmem:[%s6] sm:$0xf]
    %v907 = vld [vmem:[%s6 + $0x4] sm:$0xf]
    %v908 = vld [vmem:[%s6 + $0x8] sm:$0xf]
    %v909 = vld [vmem:[%s6 + $0xc] sm:$0xf]
    %v910 = vld [vmem:[%s7] sm:$0x1]
    %v912 = vlaneseq
    %v913 = vshrl.u32 %v912, 7
    %v914 = vsub.s32 0, %v913
    %v915 = vrot.slane %v910, %v914
    %v921 = vunpack.c.l.b16 %v906
    %v922 = vunpack.c.l.b16 %v907
    %v923 = vunpack.c.l.b16 %v908
    %v924 = vunpack.c.l.b16 %v909
    %v925 = vpack.c.b16 %v922, %v921
    %v926 = vpack.c.b16 %v924, %v923
    %929 = vmatprep.subr.bf16.mxu0 0
    %930 = vmatpush1.bf16.msra.mxu0 %v925
    %931 = vmatprep.subr.bf16.mxu0 0
    %932 = vmatpush1.bf16.msra.mxu0 %v926
    %933 = vmatprep.subr.bf16.mxu0 0
    %934 = vmatpush1.bf16.msra.mxu0 0
    %935 = vmatprep.subr.bf16.mxu0 0
    %936 = vmatpush1.bf16.msra.mxu0 0
    %937 = vmatprep.subr.bf16.mxu0 0
    %938 = vmatpush1.bf16.msra.mxu0 0
    %939 = vmatprep.subr.bf16.mxu0 0
    %940 = vmatpush1.bf16.msra.mxu0 0
    %941 = vmatprep.subr.bf16.mxu0 0
    %942 = vmatpush1.bf16.msra.mxu0 0
    %943 = vmatprep.subr.bf16.mxu0 0
    %944 = vmatpush1.bf16.msra.mxu0 0
    %945 = vmatprep.subr.bf16.mxu0 0
    %946 = vmatpush1.bf16.msra.mxu0 0
    %947 = vmatprep.subr.bf16.mxu0 0
    %948 = vmatpush1.bf16.msra.mxu0 0
    %949 = vmatprep.subr.bf16.mxu0 0
    %950 = vmatpush1.bf16.msra.mxu0 0
    %951 = vmatprep.subr.bf16.mxu0 0
    %952 = vmatpush1.bf16.msra.mxu0 0
    %953 = vmatprep.subr.bf16.mxu0 0
    %954 = vmatpush1.bf16.msra.mxu0 0
    %955 = vmatprep.subr.bf16.mxu0 0
    %956 = vmatpush1.bf16.msra.mxu0 0
    %957 = vmatprep.subr.bf16.mxu0 0
    %958 = vmatpush1.bf16.msra.mxu0 0
    %959 = vmatprep.subr.bf16.mxu0 0
    %960 = vmatpush1.bf16.msra.mxu0 0
    %961 = vmatprep.mubr.bf16.mxu0 0
    %962 = vmatmul.mubr.bf16.gmra.mrb[0].mxu0 %v864
    %v963 = vpop.f32.mrb[0].mxu0
    %v964 = vadd.f32 %v915, %v963
    %v965 = vpop.f32.mrb[0].mxu0
    %v966 = vpop.f32.mrb[0].mxu0
    %v967 = vpop.f32.mrb[0].mxu0
    %968 = vdwg.mxu0
    %v969 = vld [vmem:[%s10] sm:$0x3]
    %v970 = vmul.f32 %v964, 0.5
    %v971 = vmul.f32 %v970, 1.442695
    %v972 = vpow.pop %v971
    %v973 = vmul.f32 %v969, %v972
    %v974 = vadd.f32 %v901, %v973
    %v975 = vpack.c.bf16 %v974, %v974
    %v976 = vld [vmem:[%s8] sm:$0xf]
    %v977 = vld [vmem:[%s8 + $0x4] sm:$0xf]
    %v978 = vld [vmem:[%s9] sm:$0x1]
    %v980 = vlaneseq
    %v981 = vshrl.u32 %v980, 7
    %v982 = vsub.s32 0, %v981
    %v983 = vrot.slane %v978, %v982
    %v987 = vunpack.c.l.b16 %v976
    %v988 = vunpack.c.l.b16 %v977
    %v989 = vpack.c.b16 %v988, %v987
    %vm991 = vcmask 130048
    %v993 = vsel %vm991, %v975, 0
    %995 = vmatprep.subr.bf16.mxu0 0
    %996 = vmatpush1.bf16.msra.mxu0 %v989
    %997 = vmatprep.subr.bf16.mxu0 0
    %998 = vmatpush1.bf16.msra.mxu0 0
    %999 = vmatprep.subr.bf16.mxu0 0
    %1000 = vmatpush1.bf16.msra.mxu0 0
    %1001 = vmatprep.subr.bf16.mxu0 0
    %1002 = vmatpush1.bf16.msra.mxu0 0
    %1003 = vmatprep.subr.bf16.mxu0 0
    %1004 = vmatpush1.bf16.msra.mxu0 0
    %1005 = vmatprep.subr.bf16.mxu0 0
    %1006 = vmatpush1.bf16.msra.mxu0 0
    %1007 = vmatprep.subr.bf16.mxu0 0
    %1008 = vmatpush1.bf16.msra.mxu0 0
    %1009 = vmatprep.subr.bf16.mxu0 0
    %1010 = vmatpush1.bf16.msra.mxu0 0
    %1011 = vmatprep.subr.bf16.mxu0 0
    %1012 = vmatpush1.bf16.msra.mxu0 0
    %1013 = vmatprep.subr.bf16.mxu0 0
    %1014 = vmatpush1.bf16.msra.mxu0 0
    %1015 = vmatprep.subr.bf16.mxu0 0
    %1016 = vmatpush1.bf16.msra.mxu0 0
    %1017 = vmatprep.subr.bf16.mxu0 0
    %1018 = vmatpush1.bf16.msra.mxu0 0
    %1019 = vmatprep.subr.bf16.mxu0 0
    %1020 = vmatpush1.bf16.msra.mxu0 0
    %1021 = vmatprep.subr.bf16.mxu0 0
    %1022 = vmatpush1.bf16.msra.mxu0 0
    %1023 = vmatprep.subr.bf16.mxu0 0
    %1024 = vmatpush1.bf16.msra.mxu0 0
    %1025 = vmatprep.subr.bf16.mxu0 0
    %1026 = vmatpush1.bf16.msra.mxu0 0
    %1027 = vmatprep.mubr.bf16.mxu0 0
    %1028 = vmatmul.mubr.bf16.gmra.mrb[0].mxu0 %v993
    %v1029 = vpop.f32.mrb[0].mxu0
    %v1030 = vadd.f32 %v983, %v1029
    %v1031 = vpop.f32.mrb[0].mxu0
    %v1032 = vpop.f32.mrb[0].mxu0
    %v1033 = vpop.f32.mrb[0].mxu0
    %1034 = vdwg.mxu0
    %vm1035 = vcmask 123904
    %1036 = vst.msk [vmem:[#allocation3] sm:$0x3] %vm1035, %v901
    %1037 = vst.msk [vmem:[#allocation5] sm:$0x3] %vm1035, %v964
    %vm1038 = vcmask 254976
    %1039 = vst.msk [vmem:[%s13] sm:$0x3] %vm1038, %v1030
    // Predicated region
    $region46: #{vae_forward.2} parent=1 // pred_check
      _
    $region47: #{vae_forward.2} parent=1 // pred_check_branch
      %1041 = sbr.rel (0) target = $region49
    $region48: #{vae_forward.2} parent=1 // pred_region
      %s1043 = ssub.s32 32, 32
      %1044 = vsyncadd [#allocation4], %s1043
      %s1046 = sshll.u32 [#allocation3], 4
      %s1047 = int_to_ptr.vmem [resolvable:$true] %s1046
      %1049 = dma.vmem_to_hbm [thread:$0]  %s1047, 32, %s11, [#allocation4]
    $region49: #{vae_forward.2} parent=1 // pred_fallthru
      _
    // Predicated region
    $region50: #{vae_forward.2} parent=1 // pred_check
      _
    $region51: #{vae_forward.2} parent=1 // pred_check_branch
      %1051 = sbr.rel (0) target = $region53
    $region52: #{vae_forward.2} parent=1 // pred_region
      %s1053 = ssub.s32 32, 32
      %1054 = vsyncadd [#allocation6], %s1053
      %s1056 = sshll.u32 [#allocation5], 4
      %s1057 = int_to_ptr.vmem [resolvable:$true] %s1056
      %1059 = dma.vmem_to_hbm [thread:$0]  %s1057, 32, %s12, [#allocation6]
    $region53: #{vae_forward.2} parent=1 // pred_fallthru
      _
    // Predicated region
    $region54: #{vae_forward.2} parent=1 // pred_check
      _
    $region55: #{vae_forward.2} parent=1 // pred_check_branch
      %1061 = sbr.rel (0) target = $region57
    $region56: #{vae_forward.2} parent=1 // pred_region
      _
    $region57: #{vae_forward.2} parent=1 // pred_fallthru
      _
    // Predicated region
    $region58: #{vae_forward.2} parent=1 // pred_check
      _
    $region59: #{vae_forward.2} parent=1 // pred_check_branch
      %1063 = sbr.rel (0) target = $region61
    $region60: #{vae_forward.2} parent=1 // pred_region
      %1064 = dma.done [#allocation4], 32
    $region61: #{vae_forward.2} parent=1 // pred_fallthru
      _
    // Predicated region
    $region62: #{vae_forward.2} parent=1 // pred_check
      _
    $region63: #{vae_forward.2} parent=1 // pred_check_branch
      %1066 = sbr.rel (0) target = $region65
    $region64: #{vae_forward.2} parent=1 // pred_region
      %1067 = dma.done [#allocation6], 32
    $region65: #{vae_forward.2} parent=1 // pred_fallthru
      _
    // Predicated region
    $region66: #{vae_forward.2} parent=1 // pred_check
      _
    $region67: #{vae_forward.2} parent=1 // pred_check_branch
      %1069 = sbr.rel (0) target = $region69
    $region68: #{vae_forward.2} parent=1 // pred_region
      _
    $region69: #{vae_forward.2} parent=1 // pred_fallthru
      _
    %1070 = vsyncpa [#allocation4], 1
    %1071 = vsyncpa [#allocation6], 1

// kernel: vae_forward.3
$region0: #{vae_forward.3}
  #allocation0 [shape = 'u32[]', space=smem, size = 0x4, offset = 0x4, fixed_abs, tag = 'smem constant byte address 0x4 - core index']
  #allocation1 [shape = 'u32[144,128]{1,0:T(1,128)}', space=vmem, size = 0x12000, scoped, tag = 'internal scratch']
  %s0 = inlined_call_operand.vmem [shape: f32[2,32], index: 0, kind: input, shape index: {}]
  %s1 = inlined_call_operand.vmem [shape: f32[8,1,32], index: 1, kind: input, shape index: {}]
  %s2 = inlined_call_operand.vmem [shape: bf16[32,32], index: 2, kind: input, shape index: {}]
  %s3 = inlined_call_operand.vmem [shape: f32[1,32], index: 3, kind: input, shape index: {}]
  %s4 = inlined_call_operand.vmem [shape: bf16[32,64], index: 4, kind: input, shape index: {}]
  %s5 = inlined_call_operand.vmem [shape: f32[1,64], index: 5, kind: input, shape index: {}]
  %s6 = inlined_call_operand.vmem [shape: bf16[32,32], index: 6, kind: input, shape index: {}]
  %s7 = inlined_call_operand.vmem [shape: f32[1,32], index: 7, kind: input, shape index: {}]
  %s8 = inlined_call_operand.vmem [shape: bf16[32,32], index: 8, kind: input, shape index: {}]
  %s9 = inlined_call_operand.vmem [shape: f32[1,32], index: 9, kind: input, shape index: {}]
  %s10 = inlined_call_operand.vmem [shape: bf16[32,64], index: 10, kind: input, shape index: {}]
  %s11 = inlined_call_operand.vmem [shape: f32[1,64], index: 11, kind: input, shape index: {}]
  %s12 = inlined_call_operand.vmem [shape: bf16[32,32], index: 12, kind: input, shape index: {}]
  %s13 = inlined_call_operand.vmem [shape: f32[1,32], index: 13, kind: input, shape index: {}]
  %s14 = inlined_call_operand.vmem [shape: f32[3,1,32], index: 14, kind: input, shape index: {}]
  %s15 = inlined_call_operand.vmem [shape: f32[3,1,32], index: 15, kind: input, shape index: {}]
  %s16 = inlined_call_operand.vmem [shape: bf16[32,64], index: 16, kind: input, shape index: {}]
  %s17 = inlined_call_operand.vmem [shape: f32[1,64], index: 17, kind: input, shape index: {}]
  %s18 = inlined_call_operand.vmem [shape: bf16[64,32], index: 18, kind: input, shape index: {}]
  %s19 = inlined_call_operand.vmem [shape: f32[1,32], index: 19, kind: input, shape index: {}]
  %s20 = inlined_call_operand.vmem [shape: bf16[32,128], index: 20, kind: input, shape index: {}]
  %s21 = inlined_call_operand.vmem [shape: f32[1,128], index: 21, kind: input, shape index: {}]
  %s22 = inlined_call_operand.hbm [shape: f32[2,8,128], index: 22, kind: output, shape index: {}]
  %s23 = sld [smem:[#allocation0]]
  $region98: #{vae_forward.3} parent=0
    _
  %s25 = ssub.s32 1, %s23
  %s26 = scalar_select 0, %s25, %s23
  $region1: #{vae_forward.3} parent=0
    #allocation2 [shape = 'u8[8192]{0}', space=vmem, size = 0x2000, scoped, tag = 'output window, operand 0, single buffered']
    #allocation3 [shape = 's32[1]{0}', space=sflag, size = 0x4, scoped, tag = 'scoped memory for vae_forward.3']
    %27 = vsyncpa [#allocation3], 0
    // Predicated region
    $region2: #{vae_forward.3} parent=1 // pred_check
      _
    $region3: #{vae_forward.3} parent=1 // pred_check_branch
      %29 = sbr.rel (0) target = $region5
    $region4: #{vae_forward.3} parent=1 // pred_region
      _
    $region5: #{vae_forward.3} parent=1 // pred_fallthru
      _
    // Predicated region
    $region6: #{vae_forward.3} parent=1 // pred_check
      _
    $region7: #{vae_forward.3} parent=1 // pred_check_branch
      %31 = sbr.rel (0) target = $region9
    $region8: #{vae_forward.3} parent=1 // pred_region
      _
    $region9: #{vae_forward.3} parent=1 // pred_fallthru
      _
    // Predicated region
    $region10: #{vae_forward.3} parent=1 // pred_check
      _
    $region11: #{vae_forward.3} parent=1 // pred_check_branch
      %33 = sbr.rel (0) target = $region13
    $region12: #{vae_forward.3} parent=1 // pred_region
      _
    $region13: #{vae_forward.3} parent=1 // pred_fallthru
      _
    // Predicated region
    $region14: #{vae_forward.3} parent=1 // pred_check
      _
    $region15: #{vae_forward.3} parent=1 // pred_check_branch
      %35 = sbr.rel (0) target = $region17
    $region16: #{vae_forward.3} parent=1 // pred_region
      _
    $region17: #{vae_forward.3} parent=1 // pred_fallthru
      _
    // Predicated region
    $region18: #{vae_forward.3} parent=1 // pred_check
      _
    $region19: #{vae_forward.3} parent=1 // pred_check_branch
      %37 = sbr.rel (0) target = $region21
    $region20: #{vae_forward.3} parent=1 // pred_region
      _
    $region21: #{vae_forward.3} parent=1 // pred_fallthru
      _
    // Predicated region
    $region22: #{vae_forward.3} parent=1 // pred_check
      _
    $region23: #{vae_forward.3} parent=1 // pred_check_branch
      %39 = sbr.rel (0) target = $region25
    $region24: #{vae_forward.3} parent=1 // pred_region
      _
    $region25: #{vae_forward.3} parent=1 // pred_fallthru
      _
    // Predicated region
    $region26: #{vae_forward.3} parent=1 // pred_check
      _
    $region27: #{vae_forward.3} parent=1 // pred_check_branch
      %41 = sbr.rel (0) target = $region29
    $region28: #{vae_forward.3} parent=1 // pred_region
      _
    $region29: #{vae_forward.3} parent=1 // pred_fallthru
      _
    // Predicated region
    $region30: #{vae_forward.3} parent=1 // pred_check
      _
    $region31: #{vae_forward.3} parent=1 // pred_check_branch
      %43 = sbr.rel (0) target = $region33
    $region32: #{vae_forward.3} parent=1 // pred_region
      _
    $region33: #{vae_forward.3} parent=1 // pred_fallthru
      _
    // Predicated region
    $region34: #{vae_forward.3} parent=1 // pred_check
      _
    $region35: #{vae_forward.3} parent=1 // pred_check_branch
      %45 = sbr.rel (0) target = $region37
    $region36: #{vae_forward.3} parent=1 // pred_region
      _
    $region37: #{vae_forward.3} parent=1 // pred_fallthru
      _
    // Predicated region
    $region38: #{vae_forward.3} parent=1 // pred_check
      _
    $region39: #{vae_forward.3} parent=1 // pred_check_branch
      %47 = sbr.rel (0) target = $region41
    $region40: #{vae_forward.3} parent=1 // pred_region
      _
    $region41: #{vae_forward.3} parent=1 // pred_fallthru
      _
    // Predicated region
    $region42: #{vae_forward.3} parent=1 // pred_check
      _
    $region43: #{vae_forward.3} parent=1 // pred_check_branch
      %49 = sbr.rel (0) target = $region45
    $region44: #{vae_forward.3} parent=1 // pred_region
      _
    $region45: #{vae_forward.3} parent=1 // pred_fallthru
      _
    // Predicated region
    $region46: #{vae_forward.3} parent=1 // pred_check
      _
    $region47: #{vae_forward.3} parent=1 // pred_check_branch
      %51 = sbr.rel (0) target = $region49
    $region48: #{vae_forward.3} parent=1 // pred_region
      _
    $region49: #{vae_forward.3} parent=1 // pred_fallthru
      _
    // Predicated region
    $region50: #{vae_forward.3} parent=1 // pred_check
      _
    $region51: #{vae_forward.3} parent=1 // pred_check_branch
      %53 = sbr.rel (0) target = $region53
    $region52: #{vae_forward.3} parent=1 // pred_region
      _
    $region53: #{vae_forward.3} parent=1 // pred_fallthru
      _
    // Predicated region
    $region54: #{vae_forward.3} parent=1 // pred_check
      _
    $region55: #{vae_forward.3} parent=1 // pred_check_branch
      %55 = sbr.rel (0) target = $region57
    $region56: #{vae_forward.3} parent=1 // pred_region
      _
    $region57: #{vae_forward.3} parent=1 // pred_fallthru
      _
    // Predicated region
    $region58: #{vae_forward.3} parent=1 // pred_check
      _
    $region59: #{vae_forward.3} parent=1 // pred_check_branch
      %57 = sbr.rel (0) target = $region61
    $region60: #{vae_forward.3} parent=1 // pred_region
      _
    $region61: #{vae_forward.3} parent=1 // pred_fallthru
      _
    // Predicated region
    $region62: #{vae_forward.3} parent=1 // pred_check
      _
    $region63: #{vae_forward.3} parent=1 // pred_check_branch
      %59 = sbr.rel (0) target = $region65
    $region64: #{vae_forward.3} parent=1 // pred_region
      _
    $region65: #{vae_forward.3} parent=1 // pred_fallthru
      _
    // Predicated region
    $region66: #{vae_forward.3} parent=1 // pred_check
      _
    $region67: #{vae_forward.3} parent=1 // pred_check_branch
      %61 = sbr.rel (0) target = $region69
    $region68: #{vae_forward.3} parent=1 // pred_region
      _
    $region69: #{vae_forward.3} parent=1 // pred_fallthru
      _
    // Predicated region
    $region70: #{vae_forward.3} parent=1 // pred_check
      _
    $region71: #{vae_forward.3} parent=1 // pred_check_branch
      %63 = sbr.rel (0) target = $region73
    $region72: #{vae_forward.3} parent=1 // pred_region
      _
    $region73: #{vae_forward.3} parent=1 // pred_fallthru
      _
    // Predicated region
    $region74: #{vae_forward.3} parent=1 // pred_check
      _
    $region75: #{vae_forward.3} parent=1 // pred_check_branch
      %65 = sbr.rel (0) target = $region77
    $region76: #{vae_forward.3} parent=1 // pred_region
      _
    $region77: #{vae_forward.3} parent=1 // pred_fallthru
      _
    // Predicated region
    $region78: #{vae_forward.3} parent=1 // pred_check
      _
    $region79: #{vae_forward.3} parent=1 // pred_check_branch
      %67 = sbr.rel (0) target = $region81
    $region80: #{vae_forward.3} parent=1 // pred_region
      _
    $region81: #{vae_forward.3} parent=1 // pred_fallthru
      _
    // Predicated region
    $region82: #{vae_forward.3} parent=1 // pred_check
      _
    $region83: #{vae_forward.3} parent=1 // pred_check_branch
      %69 = sbr.rel (0) target = $region85
    $region84: #{vae_forward.3} parent=1 // pred_region
      _
    $region85: #{vae_forward.3} parent=1 // pred_fallthru
      _
    // Predicated region
    $region86: #{vae_forward.3} parent=1 // pred_check
      _
    $region87: #{vae_forward.3} parent=1 // pred_check_branch
      %71 = sbr.rel (0) target = $region89
    $region88: #{vae_forward.3} parent=1 // pred_region
      _
    $region89: #{vae_forward.3} parent=1 // pred_fallthru
      _
    %v73 = vld [vmem:[%s0] sm:$0x3]
    %v74 = vld [vmem:[%s1] sm:$0x1]
    %v75 = vld [vmem:[%s1 + $0x1] sm:$0x1]
    %v76 = vld [vmem:[%s1 + $0x2] sm:$0x1]
    %v77 = vld [vmem:[%s1 + $0x3] sm:$0x1]
    %v78 = vld [vmem:[%s1 + $0x4] sm:$0x1]
    %v79 = vld [vmem:[%s1 + $0x5] sm:$0x1]
    %v80 = vld [vmem:[%s1 + $0x6] sm:$0x1]
    %v81 = vld [vmem:[%s1 + $0x7] sm:$0x1]
    %v90 = vlaneseq
    %v91 = vshrl.u32 %v90, 7
    %v92 = vsub.s32 0, %v91
    %v93 = vrot.slane %v74, %v92
    %v94 = vlaneseq
    %v95 = vshrl.u32 %v94, 7
    %v96 = vsub.s32 0, %v95
    %v97 = vrot.slane %v75, %v96
    %v98 = vlaneseq
    %v99 = vshrl.u32 %v98, 7
    %v100 = vsub.s32 0, %v99
    %v101 = vrot.slane %v76, %v100
    %v102 = vlaneseq
    %v103 = vshrl.u32 %v102, 7
    %v104 = vsub.s32 0, %v103
    %v105 = vrot.slane %v77, %v104
    %v106 = vlaneseq
    %v107 = vshrl.u32 %v106, 7
    %v108 = vsub.s32 0, %v107
    %v109 = vrot.slane %v78, %v108
    %v110 = vlaneseq
    %v111 = vshrl.u32 %v110, 7
    %v112 = vsub.s32 0, %v111
    %v113 = vrot.slane %v79, %v112
    %v114 = vlaneseq
    %v115 = vshrl.u32 %v114, 7
    %v116 = vsub.s32 0, %v115
    %v117 = vrot.slane %v80, %v116
    %v118 = vlaneseq
    %v119 = vshrl.u32 %v118, 7
    %v120 = vsub.s32 0, %v119
    %v121 = vrot.slane %v81, %v120
    %v130 = vadd.f32 %v73, %v93
    %v131 = vadd.f32 %v73, %v97
    %v132 = vadd.f32 %v73, %v101
    %v133 = vadd.f32 %v73, %v105
    %v134 = vadd.f32 %v73, %v109
    %v135 = vadd.f32 %v73, %v113
    %v136 = vadd.f32 %v73, %v117
    %v137 = vadd.f32 %v73, %v121
    %v146 = vcombine.low %v130, %v131
    %v147 = vcombine.low %v132, %v133
    %v149 = vunpack.c.l.s4 1983009808
    %v150 = vunpack.c.0.s8 %v149
    %v151 = vlaneseq
    %v152 = vshrl.u32 %v151, 7
    %v153 = vsub.s32 %v150, %v152
    %v154 = vrot.slane %v146, %v153
    %v156 = vunpack.c.l.s4 1983009808
    %v157 = vunpack.c.0.s8 %v156
    %v158 = vlaneseq
    %v159 = vshrl.u32 %v158, 7
    %v160 = vsub.s32 %v157, %v159
    %v161 = vrot.slane %v147, %v160
    %v162 = vcombine.low %v154, %v161
    %v163 = vcombine.low %v134, %v135
    %v164 = vcombine.low %v136, %v137
    %v166 = vunpack.c.l.s4 1983009808
    %v167 = vunpack.c.0.s8 %v166
    %v168 = vlaneseq
    %v169 = vshrl.u32 %v168, 7
    %v170 = vsub.s32 %v167, %v169
    %v171 = vrot.slane %v163, %v170
    %v173 = vunpack.c.l.s4 1983009808
    %v174 = vunpack.c.0.s8 %v173
    %v175 = vlaneseq
    %v176 = vshrl.u32 %v175, 7
    %v177 = vsub.s32 %v174, %v176
    %v178 = vrot.slane %v164, %v177
    %v179 = vcombine.low %v171, %v178
    %v182 = vpack.c.bf16 %v179, %v162
    %v183 = vld [vmem:[%s2] sm:$0xf]
    %v184 = vld [vmem:[%s2 + $0x4] sm:$0xf]
    %v185 = vld [vmem:[%s2 + $0x8] sm:$0xf]
    %v186 = vld [vmem:[%s2 + $0xc] sm:$0xf]
    %v187 = vld [vmem:[%s3] sm:$0x1]
    %v189 = vlaneseq
    %v190 = vshrl.u32 %v189, 7
    %v191 = vsub.s32 0, %v190
    %v192 = vrot.slane %v187, %v191
    %v198 = vunpack.c.l.b16 %v183
    %v199 = vunpack.c.l.b16 %v184
    %v200 = vunpack.c.l.b16 %v185
    %v201 = vunpack.c.l.b16 %v186
    %v202 = vpack.c.b16 %v199, %v198
    %v203 = vpack.c.b16 %v201, %v200
    %vm206 = vcmask 261120
    %v208 = vsel %vm206, %v182, 0
    %210 = vmatprep.subr.bf16.mxu0 0
    %211 = vmatpush1.bf16.msra.mxu0 %v202
    %212 = vmatprep.subr.bf16.mxu0 0
    %213 = vmatpush1.bf16.msra.mxu0 %v203
    %214 = vmatprep.subr.bf16.mxu0 0
    %215 = vmatpush1.bf16.msra.mxu0 0
    %216 = vmatprep.subr.bf16.mxu0 0
    %217 = vmatpush1.bf16.msra.mxu0 0
    %218 = vmatprep.subr.bf16.mxu0 0
    %219 = vmatpush1.bf16.msra.mxu0 0
    %220 = vmatprep.subr.bf16.mxu0 0
    %221 = vmatpush1.bf16.msra.mxu0 0
    %222 = vmatprep.subr.bf16.mxu0 0
    %223 = vmatpush1.bf16.msra.mxu0 0
    %224 = vmatprep.subr.bf16.mxu0 0
    %225 = vmatpush1.bf16.msra.mxu0 0
    %226 = vmatprep.subr.bf16.mxu0 0
    %227 = vmatpush1.bf16.msra.mxu0 0
    %228 = vmatprep.subr.bf16.mxu0 0
    %229 = vmatpush1.bf16.msra.mxu0 0
    %230 = vmatprep.subr.bf16.mxu0 0
    %231 = vmatpush1.bf16.msra.mxu0 0
    %232 = vmatprep.subr.bf16.mxu0 0
    %233 = vmatpush1.bf16.msra.mxu0 0
    %234 = vmatprep.subr.bf16.mxu0 0
    %235 = vmatpush1.bf16.msra.mxu0 0
    %236 = vmatprep.subr.bf16.mxu0 0
    %237 = vmatpush1.bf16.msra.mxu0 0
    %238 = vmatprep.subr.bf16.mxu0 0
    %239 = vmatpush1.bf16.msra.mxu0 0
    %240 = vmatprep.subr.bf16.mxu0 0
    %241 = vmatpush1.bf16.msra.mxu0 0
    %242 = vmatprep.mubr.bf16.mxu0 0
    %243 = vmatmul.mubr.bf16.gmra.mrb[0].mxu0 %v208
    %v244 = vpop.f32.mrb[0].mxu0
    %v245 = vadd.f32 %v192, %v244
    %v246 = vpop.f32.mrb[0].mxu0
    %v247 = vpop.f32.mrb[0].mxu0
    %v248 = vadd.f32 %v192, %v247
    %v249 = vpop.f32.mrb[0].mxu0
    %250 = vdwg.mxu0
    %v251 = vld [vmem:[%s4] sm:$0xf]
    %v252 = vld [vmem:[%s4 + $0x4] sm:$0xf]
    %v253 = vld [vmem:[%s4 + $0x8] sm:$0xf]
    %v254 = vld [vmem:[%s4 + $0xc] sm:$0xf]
    %v255 = vld [vmem:[%s5] sm:$0x1]
    %v257 = vlaneseq
    %v258 = vshrl.u32 %v257, 7
    %v259 = vsub.s32 0, %v258
    %v260 = vrot.slane %v255, %v259
    %v266 = vunpack.c.l.b16 %v251
    %v267 = vunpack.c.l.b16 %v252
    %v268 = vunpack.c.l.b16 %v253
    %v269 = vunpack.c.l.b16 %v254
    %v270 = vpack.c.b16 %v267, %v266
    %v271 = vpack.c.b16 %v269, %v268
    %274 = vmatprep.subr.bf16.mxu0 0
    %275 = vmatpush1.bf16.msra.mxu0 %v270
    %276 = vmatprep.subr.bf16.mxu0 0
    %277 = vmatpush1.bf16.msra.mxu0 %v271
    %278 = vmatprep.subr.bf16.mxu0 0
    %279 = vmatpush1.bf16.msra.mxu0 0
    %280 = vmatprep.subr.bf16.mxu0 0
    %281 = vmatpush1.bf16.msra.mxu0 0
    %282 = vmatprep.subr.bf16.mxu0 0
    %283 = vmatpush1.bf16.msra.mxu0 0
    %284 = vmatprep.subr.bf16.mxu0 0
    %285 = vmatpush1.bf16.msra.mxu0 0
    %286 = vmatprep.subr.bf16.mxu0 0
    %287 = vmatpush1.bf16.msra.mxu0 0
    %288 = vmatprep.subr.bf16.mxu0 0
    %289 = vmatpush1.bf16.msra.mxu0 0
    %290 = vmatprep.subr.bf16.mxu0 0
    %291 = vmatpush1.bf16.msra.mxu0 0
    %292 = vmatprep.subr.bf16.mxu0 0
    %293 = vmatpush1.bf16.msra.mxu0 0
    %294 = vmatprep.subr.bf16.mxu0 0
    %295 = vmatpush1.bf16.msra.mxu0 0
    %296 = vmatprep.subr.bf16.mxu0 0
    %297 = vmatpush1.bf16.msra.mxu0 0
    %298 = vmatprep.subr.bf16.mxu0 0
    %299 = vmatpush1.bf16.msra.mxu0 0
    %300 = vmatprep.subr.bf16.mxu0 0
    %301 = vmatpush1.bf16.msra.mxu0 0
    %302 = vmatprep.subr.bf16.mxu0 0
    %303 = vmatpush1.bf16.msra.mxu0 0
    %304 = vmatprep.subr.bf16.mxu0 0
    %305 = vmatpush1.bf16.msra.mxu0 0
    %306 = vmatprep.mubr.bf16.mxu0 0
    %307 = vmatmul.mubr.bf16.gmra.mrb[0].mxu0 %v208
    %v308 = vpop.f32.mrb[0].mxu0
    %v309 = vadd.f32 %v260, %v308
    %v310 = vpop.f32.mrb[0].mxu0
    %v311 = vpop.f32.mrb[0].mxu0
    %v312 = vadd.f32 %v260, %v311
    %v313 = vpop.f32.mrb[0].mxu0
    %314 = vdwg.mxu0
    %v317 = vcombine.high %v245, %v245
    %v319 = vunpack.c.l.s4 1983009808
    %v320 = vunpack.c.0.s8 %v319
    %v321 = vlaneseq
    %v322 = vshrl.u32 %v321, 7
    %v323 = vsub.s32 %v320, %v322
    %v324 = vrot.slane %v245, %v323
    %v326 = vunpack.c.l.s4 1983009808
    %v327 = vunpack.c.0.s8 %v326
    %v328 = vlaneseq
    %v329 = vshrl.u32 %v328, 7
    %v330 = vsub.s32 %v327, %v329
    %v331 = vrot.slane %v317, %v330
    %v332 = vcombine.high %v324, %v324
    %v333 = vcombine.high %v331, %v331
    %v334 = vcombine.high %v248, %v248
    %v336 = vunpack.c.l.s4 1983009808
    %v337 = vunpack.c.0.s8 %v336
    %v338 = vlaneseq
    %v339 = vshrl.u32 %v338, 7
    %v340 = vsub.s32 %v337, %v339
    %v341 = vrot.slane %v248, %v340
    %v343 = vunpack.c.l.s4 1983009808
    %v344 = vunpack.c.0.s8 %v343
    %v345 = vlaneseq
    %v346 = vshrl.u32 %v345, 7
    %v347 = vsub.s32 %v344, %v346
    %v348 = vrot.slane %v334, %v347
    %v349 = vcombine.high %v341, %v341
    %v350 = vcombine.high %v348, %v348
    %v361 = vcombine.high %v309, %v309
    %v363 = vunpack.c.l.s4 1983009808
    %v364 = vunpack.c.0.s8 %v363
    %v365 = vlaneseq
    %v366 = vshrl.u32 %v365, 7
    %v367 = vsub.s32 %v364, %v366
    %v368 = vrot.slane %v309, %v367
    %v370 = vunpack.c.l.s4 1983009808
    %v371 = vunpack.c.0.s8 %v370
    %v372 = vlaneseq
    %v373 = vshrl.u32 %v372, 7
    %v374 = vsub.s32 %v371, %v373
    %v375 = vrot.slane %v361, %v374
    %v376 = vcombine.high %v368, %v368
    %v377 = vcombine.high %v375, %v375
    %v378 = vcombine.high %v312, %v312
    %v380 = vunpack.c.l.s4 1983009808
    %v381 = vunpack.c.0.s8 %v380
    %v382 = vlaneseq
    %v383 = vshrl.u32 %v382, 7
    %v384 = vsub.s32 %v381, %v383
    %v385 = vrot.slane %v312, %v384
    %v387 = vunpack.c.l.s4 1983009808
    %v388 = vunpack.c.0.s8 %v387
    %v389 = vlaneseq
    %v390 = vshrl.u32 %v389, 7
    %v391 = vsub.s32 %v388, %v390
    %v392 = vrot.slane %v378, %v391
    %v393 = vcombine.high %v385, %v385
    %v394 = vcombine.high %v392, %v392
    %v403 = vpack.c.bf16 %v324, %v324
    %v404 = vpack.c.bf16 %v332, %v332
    %v405 = vpack.c.bf16 %v331, %v331
    %v406 = vpack.c.bf16 %v333, %v333
    %v407 = vpack.c.bf16 %v341, %v341
    %v408 = vpack.c.bf16 %v349, %v349
    %v409 = vpack.c.bf16 %v348, %v348
    %v410 = vpack.c.bf16 %v350, %v350
    %v411 = vpack.c.bf16 %v368, %v368
    %v412 = vpack.c.bf16 %v376, %v376
    %v413 = vpack.c.bf16 %v375, %v375
    %v414 = vpack.c.bf16 %v377, %v377
    %v415 = vpack.c.bf16 %v385, %v385
    %v416 = vpack.c.bf16 %v393, %v393
    %v417 = vpack.c.bf16 %v392, %v392
    %v418 = vpack.c.bf16 %v394, %v394
    %vm419 = vcmask 64512
    %v421 = vsel %vm419, %v403, 0
    %v424 = vsel %vm419, %v411, 0
    %426 = vmatprep.subr.bf16.mxu0 0
    %427 = vmatpush1.bf16.xpose.msra.mxu0 %v424
    %428 = vmatprep.subr.bf16.mxu0 0
    %429 = vmatpush1.bf16.xpose.msra.mxu0 0
    %430 = vmatprep.subr.bf16.mxu0 0
    %431 = vmatpush1.bf16.xpose.msra.mxu0 0
    %432 = vmatprep.subr.bf16.mxu0 0
    %433 = vmatpush1.bf16.xpose.msra.mxu0 0
    %434 = vmatprep.subr.bf16.mxu0 0
    %435 = vmatpush1.bf16.xpose.msra.mxu0 0
    %436 = vmatprep.subr.bf16.mxu0 0
    %437 = vmatpush1.bf16.xpose.msra.mxu0 0
    %438 = vmatprep.subr.bf16.mxu0 0
    %439 = vmatpush1.bf16.xpose.msra.mxu0 0
    %440 = vmatprep.subr.bf16.mxu0 0
    %441 = vmatpush1.bf16.xpose.msra.mxu0 0
    %442 = vmatprep.subr.bf16.mxu0 0
    %443 = vmatpush1.bf16.xpose.msra.mxu0 0
    %444 = vmatprep.subr.bf16.mxu0 0
    %445 = vmatpush1.bf16.xpose.msra.mxu0 0
    %446 = vmatprep.subr.bf16.mxu0 0
    %447 = vmatpush1.bf16.xpose.msra.mxu0 0
    %448 = vmatprep.subr.bf16.mxu0 0
    %449 = vmatpush1.bf16.xpose.msra.mxu0 0
    %450 = vmatprep.subr.bf16.mxu0 0
    %451 = vmatpush1.bf16.xpose.msra.mxu0 0
    %452 = vmatprep.subr.bf16.mxu0 0
    %453 = vmatpush1.bf16.xpose.msra.mxu0 0
    %454 = vmatprep.subr.bf16.mxu0 0
    %455 = vmatpush1.bf16.xpose.msra.mxu0 0
    %456 = vmatprep.subr.bf16.mxu0 0
    %457 = vmatpush1.bf16.xpose.msra.mxu0 0
    %458 = vmatprep.mubr.bf16.mxu0 0
    %459 = vmatmul.mubr.bf16.gmra.mrb[0].mxu0 %v421
    %v460 = vpop.f32.mrb[0].mxu0
    %v461 = vadd.f32 0.0, %v460
    %v462 = vpop.f32.mrb[0].mxu0
    %v463 = vpop.f32.mrb[0].mxu0
    %v464 = vpop.f32.mrb[0].mxu0
    %465 = vdwg.mxu0
    %v467 = vsel %vm419, %v404, 0
    %v470 = vsel %vm419, %v412, 0
    %472 = vmatprep.subr.bf16.mxu0 0
    %473 = vmatpush1.bf16.xpose.msra.mxu0 %v470
    %474 = vmatprep.subr.bf16.mxu0 0
    %475 = vmatpush1.bf16.xpose.msra.mxu0 0
    %476 = vmatprep.subr.bf16.mxu0 0
    %477 = vmatpush1.bf16.xpose.msra.mxu0 0
    %478 = vmatprep.subr.bf16.mxu0 0
    %479 = vmatpush1.bf16.xpose.msra.mxu0 0
    %480 = vmatprep.subr.bf16.mxu0 0
    %481 = vmatpush1.bf16.xpose.msra.mxu0 0
    %482 = vmatprep.subr.bf16.mxu0 0
    %483 = vmatpush1.bf16.xpose.msra.mxu0 0
    %484 = vmatprep.subr.bf16.mxu0 0
    %485 = vmatpush1.bf16.xpose.msra.mxu0 0
    %486 = vmatprep.subr.bf16.mxu0 0
    %487 = vmatpush1.bf16.xpose.msra.mxu0 0
    %488 = vmatprep.subr.bf16.mxu0 0
    %489 = vmatpush1.bf16.xpose.msra.mxu0 0
    %490 = vmatprep.subr.bf16.mxu0 0
    %491 = vmatpush1.bf16.xpose.msra.mxu0 0
    %492 = vmatprep.subr.bf16.mxu0 0
    %493 = vmatpush1.bf16.xpose.msra.mxu0 0
    %494 = vmatprep.subr.bf16.mxu0 0
    %495 = vmatpush1.bf16.xpose.msra.mxu0 0
    %496 = vmatprep.subr.bf16.mxu0 0
    %497 = vmatpush1.bf16.xpose.msra.mxu0 0
    %498 = vmatprep.subr.bf16.mxu0 0
    %499 = vmatpush1.bf16.xpose.msra.mxu0 0
    %500 = vmatprep.subr.bf16.mxu0 0
    %501 = vmatpush1.bf16.xpose.msra.mxu0 0
    %502 = vmatprep.subr.bf16.mxu0 0
    %503 = vmatpush1.bf16.xpose.msra.mxu0 0
    %504 = vmatprep.mubr.bf16.mxu0 0
    %505 = vmatmul.mubr.bf16.gmra.mrb[0].mxu0 %v467
    %v506 = vpop.f32.mrb[0].mxu0
    %v507 = vadd.f32 0.0, %v506
    %v508 = vpop.f32.mrb[0].mxu0
    %v509 = vpop.f32.mrb[0].mxu0
    %v510 = vpop.f32.mrb[0].mxu0
    %511 = vdwg.mxu0
    %v513 = vsel %vm419, %v405, 0
    %v516 = vsel %vm419, %v413, 0
    %518 = vmatprep.subr.bf16.mxu0 0
    %519 = vmatpush1.bf16.xpose.msra.mxu0 %v516
    %520 = vmatprep.subr.bf16.mxu0 0
    %521 = vmatpush1.bf16.xpose.msra.mxu0 0
    %522 = vmatprep.subr.bf16.mxu0 0
    %523 = vmatpush1.bf16.xpose.msra.mxu0 0
    %524 = vmatprep.subr.bf16.mxu0 0
    %525 = vmatpush1.bf16.xpose.msra.mxu0 0
    %526 = vmatprep.subr.bf16.mxu0 0
    %527 = vmatpush1.bf16.xpose.msra.mxu0 0
    %528 = vmatprep.subr.bf16.mxu0 0
    %529 = vmatpush1.bf16.xpose.msra.mxu0 0
    %530 = vmatprep.subr.bf16.mxu0 0
    %531 = vmatpush1.bf16.xpose.msra.mxu0 0
    %532 = vmatprep.subr.bf16.mxu0 0
    %533 = vmatpush1.bf16.xpose.msra.mxu0 0
    %534 = vmatprep.subr.bf16.mxu0 0
    %535 = vmatpush1.bf16.xpose.msra.mxu0 0
    %536 = vmatprep.subr.bf16.mxu0 0
    %537 = vmatpush1.bf16.xpose.msra.mxu0 0
    %538 = vmatprep.subr.bf16.mxu0 0
    %539 = vmatpush1.bf16.xpose.msra.mxu0 0
    %540 = vmatprep.subr.bf16.mxu0 0
    %541 = vmatpush1.bf16.xpose.msra.mxu0 0
    %542 = vmatprep.subr.bf16.mxu0 0
    %543 = vmatpush1.bf16.xpose.msra.mxu0 0
    %544 = vmatprep.subr.bf16.mxu0 0
    %545 = vmatpush1.bf16.xpose.msra.mxu0 0
    %546 = vmatprep.subr.bf16.mxu0 0
    %547 = vmatpush1.bf16.xpose.msra.mxu0 0
    %548 = vmatprep.subr.bf16.mxu0 0
    %549 = vmatpush1.bf16.xpose.msra.mxu0 0
    %550 = vmatprep.mubr.bf16.mxu0 0
    %551 = vmatmul.mubr.bf16.gmra.mrb[0].mxu0 %v513
    %v552 = vpop.f32.mrb[0].mxu0
    %v553 = vadd.f32 0.0, %v552
    %v554 = vpop.f32.mrb[0].mxu0
    %v555 = vpop.f32.mrb[0].mxu0
    %v556 = vpop.f32.mrb[0].mxu0
    %557 = vdwg.mxu0
    %v559 = vsel %vm419, %v406, 0
    %v562 = vsel %vm419, %v414, 0
    %564 = vmatprep.subr.bf16.mxu0 0
    %565 = vmatpush1.bf16.xpose.msra.mxu0 %v562
    %566 = vmatprep.subr.bf16.mxu0 0
    %567 = vmatpush1.bf16.xpose.msra.mxu0 0
    %568 = vmatprep.subr.bf16.mxu0 0
    %569 = vmatpush1.bf16.xpose.msra.mxu0 0
    %570 = vmatprep.subr.bf16.mxu0 0
    %571 = vmatpush1.bf16.xpose.msra.mxu0 0
    %572 = vmatprep.subr.bf16.mxu0 0
    %573 = vmatpush1.bf16.xpose.msra.mxu0 0
    %574 = vmatprep.subr.bf16.mxu0 0
    %575 = vmatpush1.bf16.xpose.msra.mxu0 0
    %576 = vmatprep.subr.bf16.mxu0 0
    %577 = vmatpush1.bf16.xpose.msra.mxu0 0
    %578 = vmatprep.subr.bf16.mxu0 0
    %579 = vmatpush1.bf16.xpose.msra.mxu0 0
    %580 = vmatprep.subr.bf16.mxu0 0
    %581 = vmatpush1.bf16.xpose.msra.mxu0 0
    %582 = vmatprep.subr.bf16.mxu0 0
    %583 = vmatpush1.bf16.xpose.msra.mxu0 0
    %584 = vmatprep.subr.bf16.mxu0 0
    %585 = vmatpush1.bf16.xpose.msra.mxu0 0
    %586 = vmatprep.subr.bf16.mxu0 0
    %587 = vmatpush1.bf16.xpose.msra.mxu0 0
    %588 = vmatprep.subr.bf16.mxu0 0
    %589 = vmatpush1.bf16.xpose.msra.mxu0 0
    %590 = vmatprep.subr.bf16.mxu0 0
    %591 = vmatpush1.bf16.xpose.msra.mxu0 0
    %592 = vmatprep.subr.bf16.mxu0 0
    %593 = vmatpush1.bf16.xpose.msra.mxu0 0
    %594 = vmatprep.subr.bf16.mxu0 0
    %595 = vmatpush1.bf16.xpose.msra.mxu0 0
    %596 = vmatprep.mubr.bf16.mxu0 0
    %597 = vmatmul.mubr.bf16.gmra.mrb[0].mxu0 %v559
    %v598 = vpop.f32.mrb[0].mxu0
    %v599 = vadd.f32 0.0, %v598
    %v600 = vpop.f32.mrb[0].mxu0
    %v601 = vpop.f32.mrb[0].mxu0
    %v602 = vpop.f32.mrb[0].mxu0
    %603 = vdwg.mxu0
    %v605 = vsel %vm419, %v407, 0
    %v608 = vsel %vm419, %v415, 0
    %610 = vmatprep.subr.bf16.mxu0 0
    %611 = vmatpush1.bf16.xpose.msra.mxu0 %v608
    %612 = vmatprep.subr.bf16.mxu0 0
    %613 = vmatpush1.bf16.xpose.msra.mxu0 0
    %614 = vmatprep.subr.bf16.mxu0 0
    %615 = vmatpush1.bf16.xpose.msra.mxu0 0
    %616 = vmatprep.subr.bf16.mxu0 0
    %617 = vmatpush1.bf16.xpose.msra.mxu0 0
    %618 = vmatprep.subr.bf16.mxu0 0
    %619 = vmatpush1.bf16.xpose.msra.mxu0 0
    %620 = vmatprep.subr.bf16.mxu0 0
    %621 = vmatpush1.bf16.xpose.msra.mxu0 0
    %622 = vmatprep.subr.bf16.mxu0 0
    %623 = vmatpush1.bf16.xpose.msra.mxu0 0
    %624 = vmatprep.subr.bf16.mxu0 0
    %625 = vmatpush1.bf16.xpose.msra.mxu0 0
    %626 = vmatprep.subr.bf16.mxu0 0
    %627 = vmatpush1.bf16.xpose.msra.mxu0 0
    %628 = vmatprep.subr.bf16.mxu0 0
    %629 = vmatpush1.bf16.xpose.msra.mxu0 0
    %630 = vmatprep.subr.bf16.mxu0 0
    %631 = vmatpush1.bf16.xpose.msra.mxu0 0
    %632 = vmatprep.subr.bf16.mxu0 0
    %633 = vmatpush1.bf16.xpose.msra.mxu0 0
    %634 = vmatprep.subr.bf16.mxu0 0
    %635 = vmatpush1.bf16.xpose.msra.mxu0 0
    %636 = vmatprep.subr.bf16.mxu0 0
    %637 = vmatpush1.bf16.xpose.msra.mxu0 0
    %638 = vmatprep.subr.bf16.mxu0 0
    %639 = vmatpush1.bf16.xpose.msra.mxu0 0
    %640 = vmatprep.subr.bf16.mxu0 0
    %641 = vmatpush1.bf16.xpose.msra.mxu0 0
    %642 = vmatprep.mubr.bf16.mxu0 0
    %643 = vmatmul.mubr.bf16.gmra.mrb[0].mxu0 %v605
    %v644 = vpop.f32.mrb[0].mxu0
    %v645 = vadd.f32 0.0, %v644
    %v646 = vpop.f32.mrb[0].mxu0
    %v647 = vpop.f32.mrb[0].mxu0
    %v648 = vpop.f32.mrb[0].mxu0
    %649 = vdwg.mxu0
    %v651 = vsel %vm419, %v408, 0
    %v654 = vsel %vm419, %v416, 0
    %656 = vmatprep.subr.bf16.mxu0 0
    %657 = vmatpush1.bf16.xpose.msra.mxu0 %v654
    %658 = vmatprep.subr.bf16.mxu0 0
    %659 = vmatpush1.bf16.xpose.msra.mxu0 0
    %660 = vmatprep.subr.bf16.mxu0 0
    %661 = vmatpush1.bf16.xpose.msra.mxu0 0
    %662 = vmatprep.subr.bf16.mxu0 0
    %663 = vmatpush1.bf16.xpose.msra.mxu0 0
    %664 = vmatprep.subr.bf16.mxu0 0
    %665 = vmatpush1.bf16.xpose.msra.mxu0 0
    %666 = vmatprep.subr.bf16.mxu0 0
    %667 = vmatpush1.bf16.xpose.msra.mxu0 0
    %668 = vmatprep.subr.bf16.mxu0 0
    %669 = vmatpush1.bf16.xpose.msra.mxu0 0
    %670 = vmatprep.subr.bf16.mxu0 0
    %671 = vmatpush1.bf16.xpose.msra.mxu0 0
    %672 = vmatprep.subr.bf16.mxu0 0
    %673 = vmatpush1.bf16.xpose.msra.mxu0 0
    %674 = vmatprep.subr.bf16.mxu0 0
    %675 = vmatpush1.bf16.xpose.msra.mxu0 0
    %676 = vmatprep.subr.bf16.mxu0 0
    %677 = vmatpush1.bf16.xpose.msra.mxu0 0
    %678 = vmatprep.subr.bf16.mxu0 0
    %679 = vmatpush1.bf16.xpose.msra.mxu0 0
    %680 = vmatprep.subr.bf16.mxu0 0
    %681 = vmatpush1.bf16.xpose.msra.mxu0 0
    %682 = vmatprep.subr.bf16.mxu0 0
    %683 = vmatpush1.bf16.xpose.msra.mxu0 0
    %684 = vmatprep.subr.bf16.mxu0 0
    %685 = vmatpush1.bf16.xpose.msra.mxu0 0
    %686 = vmatprep.subr.bf16.mxu0 0
    %687 = vmatpush1.bf16.xpose.msra.mxu0 0
    %688 = vmatprep.mubr.bf16.mxu0 0
    %689 = vmatmul.mubr.bf16.gmra.mrb[0].mxu0 %v651
    %v690 = vpop.f32.mrb[0].mxu0
    %v691 = vadd.f32 0.0, %v690
    %v692 = vpop.f32.mrb[0].mxu0
    %v693 = vpop.f32.mrb[0].mxu0
    %v694 = vpop.f32.mrb[0].mxu0
    %695 = vdwg.mxu0
    %v697 = vsel %vm419, %v409, 0
    %v700 = vsel %vm419, %v417, 0
    %702 = vmatprep.subr.bf16.mxu0 0
    %703 = vmatpush1.bf16.xpose.msra.mxu0 %v700
    %704 = vmatprep.subr.bf16.mxu0 0
    %705 = vmatpush1.bf16.xpose.msra.mxu0 0
    %706 = vmatprep.subr.bf16.mxu0 0
    %707 = vmatpush1.bf16.xpose.msra.mxu0 0
    %708 = vmatprep.subr.bf16.mxu0 0
    %709 = vmatpush1.bf16.xpose.msra.mxu0 0
    %710 = vmatprep.subr.bf16.mxu0 0
    %711 = vmatpush1.bf16.xpose.msra.mxu0 0
    %712 = vmatprep.subr.bf16.mxu0 0
    %713 = vmatpush1.bf16.xpose.msra.mxu0 0
    %714 = vmatprep.subr.bf16.mxu0 0
    %715 = vmatpush1.bf16.xpose.msra.mxu0 0
    %716 = vmatprep.subr.bf16.mxu0 0
    %717 = vmatpush1.bf16.xpose.msra.mxu0 0
    %718 = vmatprep.subr.bf16.mxu0 0
    %719 = vmatpush1.bf16.xpose.msra.mxu0 0
    %720 = vmatprep.subr.bf16.mxu0 0
    %721 = vmatpush1.bf16.xpose.msra.mxu0 0
    %722 = vmatprep.subr.bf16.mxu0 0
    %723 = vmatpush1.bf16.xpose.msra.mxu0 0
    %724 = vmatprep.subr.bf16.mxu0 0
    %725 = vmatpush1.bf16.xpose.msra.mxu0 0
    %726 = vmatprep.subr.bf16.mxu0 0
    %727 = vmatpush1.bf16.xpose.msra.mxu0 0
    %728 = vmatprep.subr.bf16.mxu0 0
    %729 = vmatpush1.bf16.xpose.msra.mxu0 0
    %730 = vmatprep.subr.bf16.mxu0 0
    %731 = vmatpush1.bf16.xpose.msra.mxu0 0
    %732 = vmatprep.subr.bf16.mxu0 0
    %733 = vmatpush1.bf16.xpose.msra.mxu0 0
    %734 = vmatprep.mubr.bf16.mxu0 0
    %735 = vmatmul.mubr.bf16.gmra.mrb[0].mxu0 %v697
    %v736 = vpop.f32.mrb[0].mxu0
    %v737 = vadd.f32 0.0, %v736
    %v738 = vpop.f32.mrb[0].mxu0
    %v739 = vpop.f32.mrb[0].mxu0
    %v740 = vpop.f32.mrb[0].mxu0
    %741 = vdwg.mxu0
    %v743 = vsel %vm419, %v410, 0
    %v746 = vsel %vm419, %v418, 0
    %748 = vmatprep.subr.bf16.mxu0 0
    %749 = vmatpush1.bf16.xpose.msra.mxu0 %v746
    %750 = vmatprep.subr.bf16.mxu0 0
    %751 = vmatpush1.bf16.xpose.msra.mxu0 0
    %752 = vmatprep.subr.bf16.mxu0 0
    %753 = vmatpush1.bf16.xpose.msra.mxu0 0
    %754 = vmatprep.subr.bf16.mxu0 0
    %755 = vmatpush1.bf16.xpose.msra.mxu0 0
    %756 = vmatprep.subr.bf16.mxu0 0
    %757 = vmatpush1.bf16.xpose.msra.mxu0 0
    %758 = vmatprep.subr.bf16.mxu0 0
    %759 = vmatpush1.bf16.xpose.msra.mxu0 0
    %760 = vmatprep.subr.bf16.mxu0 0
    %761 = vmatpush1.bf16.xpose.msra.mxu0 0
    %762 = vmatprep.subr.bf16.mxu0 0
    %763 = vmatpush1.bf16.xpose.msra.mxu0 0
    %764 = vmatprep.subr.bf16.mxu0 0
    %765 = vmatpush1.bf16.xpose.msra.mxu0 0
    %766 = vmatprep.subr.bf16.mxu0 0
    %767 = vmatpush1.bf16.xpose.msra.mxu0 0
    %768 = vmatprep.subr.bf16.mxu0 0
    %769 = vmatpush1.bf16.xpose.msra.mxu0 0
    %770 = vmatprep.subr.bf16.mxu0 0
    %771 = vmatpush1.bf16.xpose.msra.mxu0 0
    %772 = vmatprep.subr.bf16.mxu0 0
    %773 = vmatpush1.bf16.xpose.msra.mxu0 0
    %774 = vmatprep.subr.bf16.mxu0 0
    %775 = vmatpush1.bf16.xpose.msra.mxu0 0
    %776 = vmatprep.subr.bf16.mxu0 0
    %777 = vmatpush1.bf16.xpose.msra.mxu0 0
    %778 = vmatprep.subr.bf16.mxu0 0
    %779 = vmatpush1.bf16.xpose.msra.mxu0 0
    %780 = vmatprep.mubr.bf16.mxu0 0
    %781 = vmatmul.mubr.bf16.gmra.mrb[0].mxu0 %v743
    %v782 = vpop.f32.mrb[0].mxu0
    %v783 = vadd.f32 0.0, %v782
    %v784 = vpop.f32.mrb[0].mxu0
    %v785 = vpop.f32.mrb[0].mxu0
    %v786 = vpop.f32.mrb[0].mxu0
    %787 = vdwg.mxu0
    %v788 = vmul.f32 %v461, 0.35355338
    %v789 = vmul.f32 %v507, 0.35355338
    %v790 = vmul.f32 %v553, 0.35355338
    %v791 = vmul.f32 %v599, 0.35355338
    %v792 = vmul.f32 %v645, 0.35355338
    %v793 = vmul.f32 %v691, 0.35355338
    %v794 = vmul.f32 %v737, 0.35355338
    %v795 = vmul.f32 %v783, 0.35355338
    %vm796 = vcmask 9216
    %v797 = vsel %vm796, %v788, -inf
    %798 = vmax.xlane.f32.xlu0 %v797
    %v799 = vpop.xlane.xlu0 %798
    %v800 = vsel %vm796, %v789, -inf
    %801 = vmax.xlane.f32.xlu0 %v800
    %v802 = vpop.xlane.xlu0 %801
    %v803 = vsel %vm796, %v790, -inf
    %804 = vmax.xlane.f32.xlu0 %v803
    %v805 = vpop.xlane.xlu0 %804
    %v806 = vsel %vm796, %v791, -inf
    %807 = vmax.xlane.f32.xlu0 %v806
    %v808 = vpop.xlane.xlu0 %807
    %v809 = vsel %vm796, %v792, -inf
    %810 = vmax.xlane.f32.xlu0 %v809
    %v811 = vpop.xlane.xlu0 %810
    %v812 = vsel %vm796, %v793, -inf
    %813 = vmax.xlane.f32.xlu0 %v812
    %v814 = vpop.xlane.xlu0 %813
    %v815 = vsel %vm796, %v794, -inf
    %816 = vmax.xlane.f32.xlu0 %v815
    %v817 = vpop.xlane.xlu0 %816
    %v818 = vsel %vm796, %v795, -inf
    %819 = vmax.xlane.f32.xlu0 %v818
    %v820 = vpop.xlane.xlu0 %819
    %v821 = vsub.f32 %v788, %v799
    %v822 = vsub.f32 %v789, %v802
    %v823 = vsub.f32 %v790, %v805
    %v824 = vsub.f32 %v791, %v808
    %v825 = vsub.f32 %v792, %v811
    %v826 = vsub.f32 %v793, %v814
    %v827 = vsub.f32 %v794, %v817
    %v828 = vsub.f32 %v795, %v820
    %v829 = vmul.f32 %v821, 1.442695
    %v830 = vpow.pop %v829
    %v831 = vmul.f32 %v822, 1.442695
    %v832 = vpow.pop %v831
    %v833 = vmul.f32 %v823, 1.442695
    %v834 = vpow.pop %v833
    %v835 = vmul.f32 %v824, 1.442695
    %v836 = vpow.pop %v835
    %v837 = vmul.f32 %v825, 1.442695
    %v838 = vpow.pop %v837
    %v839 = vmul.f32 %v826, 1.442695
    %v840 = vpow.pop %v839
    %v841 = vmul.f32 %v827, 1.442695
    %v842 = vpow.pop %v841
    %v843 = vmul.f32 %v828, 1.442695
    %v844 = vpow.pop %v843
    %v845 = vsel %vm796, %v830, 0.0
    %846 = vadd.xlane.f32.xlu0 %v845
    %v847 = vpop.xlane.xlu0 %846
    %v848 = vsel %vm796, %v832, 0.0
    %849 = vadd.xlane.f32.xlu0 %v848
    %v850 = vpop.xlane.xlu0 %849
    %v851 = vsel %vm796, %v834, 0.0
    %852 = vadd.xlane.f32.xlu0 %v851
    %v853 = vpop.xlane.xlu0 %852
    %v854 = vsel %vm796, %v836, 0.0
    %855 = vadd.xlane.f32.xlu0 %v854
    %v856 = vpop.xlane.xlu0 %855
    %v857 = vsel %vm796, %v838, 0.0
    %858 = vadd.xlane.f32.xlu0 %v857
    %v859 = vpop.xlane.xlu0 %858
    %v860 = vsel %vm796, %v840, 0.0
    %861 = vadd.xlane.f32.xlu0 %v860
    %v862 = vpop.xlane.xlu0 %861
    %v863 = vsel %vm796, %v842, 0.0
    %864 = vadd.xlane.f32.xlu0 %v863
    %v865 = vpop.xlane.xlu0 %864
    %v866 = vsel %vm796, %v844, 0.0
    %867 = vadd.xlane.f32.xlu0 %v866
    %v868 = vpop.xlane.xlu0 %867
    %v869 = vrcp.pop %v847
    %v870 = vrcp.pop %v850
    %v871 = vrcp.pop %v853
    %v872 = vrcp.pop %v856
    %v873 = vrcp.pop %v859
    %v874 = vrcp.pop %v862
    %v875 = vrcp.pop %v865
    %v876 = vrcp.pop %v868
    %v877 = vmul.f32 %v847, %v869
    %v878 = vmul.f32 %v850, %v870
    %v879 = vmul.f32 %v853, %v871
    %v880 = vmul.f32 %v856, %v872
    %v881 = vmul.f32 %v859, %v873
    %v882 = vmul.f32 %v862, %v874
    %v883 = vmul.f32 %v865, %v875
    %v884 = vmul.f32 %v868, %v876
    %v885 = vsub.f32 2.0, %v877
    %v886 = vsub.f32 2.0, %v878
    %v887 = vsub.f32 2.0, %v879
    %v888 = vsub.f32 2.0, %v880
    %v889 = vsub.f32 2.0, %v881
    %v890 = vsub.f32 2.0, %v882
    %v891 = vsub.f32 2.0, %v883
    %v892 = vsub.f32 2.0, %v884
    %v893 = vmul.f32 %v869, %v885
    %v894 = vmul.f32 %v870, %v886
    %v895 = vmul.f32 %v871, %v887
    %v896 = vmul.f32 %v872, %v888
    %v897 = vmul.f32 %v873, %v889
    %v898 = vmul.f32 %v874, %v890
    %v899 = vmul.f32 %v875, %v891
    %v900 = vmul.f32 %v876, %v892
    %v901 = vmul.f32 %v830, %v893
    %v902 = vmul.f32 %v832, %v894
    %v903 = vmul.f32 %v834, %v895
    %v904 = vmul.f32 %v836, %v896
    %v905 = vmul.f32 %v838, %v897
    %v906 = vmul.f32 %v840, %v898
    %v907 = vmul.f32 %v842, %v899
    %v908 = vmul.f32 %v844, %v900
    %v909 = vpack.c.bf16 %v901, %v901
    %v910 = vpack.c.bf16 %v902, %v902
    %v911 = vpack.c.bf16 %v903, %v903
    %v912 = vpack.c.bf16 %v904, %v904
    %v913 = vpack.c.bf16 %v905, %v905
    %v914 = vpack.c.bf16 %v906, %v906
    %v915 = vpack.c.bf16 %v907, %v907
    %v916 = vpack.c.bf16 %v908, %v908
    %918 = vrot.lane.b32.xlu0 %v411, 96
    %v919 = vpop.permute.xlu0 %918
    %vm920 = vcmask 15360
    %v922 = vsel %vm920, %v909, 0
    %vm924 = vcmask 1040384
    %v926 = vsel %vm924, %v919, 0
    %928 = vmatprep.subr.bf16.mxu0 0
    %929 = vmatpush1.bf16.msra.mxu0 %v926
    %930 = vmatprep.subr.bf16.mxu0 0
    %931 = vmatpush1.bf16.msra.mxu0 0
    %932 = vmatprep.subr.bf16.mxu0 0
    %933 = vmatpush1.bf16.msra.mxu0 0
    %934 = vmatprep.subr.bf16.mxu0 0
    %935 = vmatpush1.bf16.msra.mxu0 0
    %936 = vmatprep.subr.bf16.mxu0 0
    %937 = vmatpush1.bf16.msra.mxu0 0
    %938 = vmatprep.subr.bf16.mxu0 0
    %939 = vmatpush1.bf16.msra.mxu0 0
    %940 = vmatprep.subr.bf16.mxu0 0
    %941 = vmatpush1.bf16.msra.mxu0 0
    %942 = vmatprep.subr.bf16.mxu0 0
    %943 = vmatpush1.bf16.msra.mxu0 0
    %944 = vmatprep.subr.bf16.mxu0 0
    %945 = vmatpush1.bf16.msra.mxu0 0
    %946 = vmatprep.subr.bf16.mxu0 0
    %947 = vmatpush1.bf16.msra.mxu0 0
    %948 = vmatprep.subr.bf16.mxu0 0
    %949 = vmatpush1.bf16.msra.mxu0 0
    %950 = vmatprep.subr.bf16.mxu0 0
    %951 = vmatpush1.bf16.msra.mxu0 0
    %952 = vmatprep.subr.bf16.mxu0 0
    %953 = vmatpush1.bf16.msra.mxu0 0
    %954 = vmatprep.subr.bf16.mxu0 0
    %955 = vmatpush1.bf16.msra.mxu0 0
    %956 = vmatprep.subr.bf16.mxu0 0
    %957 = vmatpush1.bf16.msra.mxu0 0
    %958 = vmatprep.subr.bf16.mxu0 0
    %959 = vmatpush1.bf16.msra.mxu0 0
    %960 = vmatprep.mubr.bf16.mxu0 0
    %961 = vmatmul.mubr.bf16.gmra.mrb[0].mxu0 %v922
    %v962 = vpop.f32.mrb[0].mxu0
    %v963 = vadd.f32 0.0, %v962
    %v964 = vpop.f32.mrb[0].mxu0
    %v965 = vpop.f32.mrb[0].mxu0
    %v966 = vpop.f32.mrb[0].mxu0
    %967 = vdwg.mxu0
    %969 = vrot.lane.b32.xlu0 %v412, 96
    %v970 = vpop.permute.xlu0 %969
    %v972 = vsel %vm920, %v910, 0
    %v975 = vsel %vm924, %v970, 0
    %977 = vmatprep.subr.bf16.mxu0 0
    %978 = vmatpush1.bf16.msra.mxu0 %v975
    %979 = vmatprep.subr.bf16.mxu0 0
    %980 = vmatpush1.bf16.msra.mxu0 0
    %981 = vmatprep.subr.bf16.mxu0 0
    %982 = vmatpush1.bf16.msra.mxu0 0
    %983 = vmatprep.subr.bf16.mxu0 0
    %984 = vmatpush1.bf16.msra.mxu0 0
    %985 = vmatprep.subr.bf16.mxu0 0
    %986 = vmatpush1.bf16.msra.mxu0 0
    %987 = vmatprep.subr.bf16.mxu0 0
    %988 = vmatpush1.bf16.msra.mxu0 0
    %989 = vmatprep.subr.bf16.mxu0 0
    %990 = vmatpush1.bf16.msra.mxu0 0
    %991 = vmatprep.subr.bf16.mxu0 0
    %992 = vmatpush1.bf16.msra.mxu0 0
    %993 = vmatprep.subr.bf16.mxu0 0
    %994 = vmatpush1.bf16.msra.mxu0 0
    %995 = vmatprep.subr.bf16.mxu0 0
    %996 = vmatpush1.bf16.msra.mxu0 0
    %997 = vmatprep.subr.bf16.mxu0 0
    %998 = vmatpush1.bf16.msra.mxu0 0
    %999 = vmatprep.subr.bf16.mxu0 0
    %1000 = vmatpush1.bf16.msra.mxu0 0
    %1001 = vmatprep.subr.bf16.mxu0 0
    %1002 = vmatpush1.bf16.msra.mxu0 0
    %1003 = vmatprep.subr.bf16.mxu0 0
    %1004 = vmatpush1.bf16.msra.mxu0 0
    %1005 = vmatprep.subr.bf16.mxu0 0
    %1006 = vmatpush1.bf16.msra.mxu0 0
    %1007 = vmatprep.subr.bf16.mxu0 0
    %1008 = vmatpush1.bf16.msra.mxu0 0
    %1009 = vmatprep.mubr.bf16.mxu0 0
    %1010 = vmatmul.mubr.bf16.gmra.mrb[0].mxu0 %v972
    %v1011 = vpop.f32.mrb[0].mxu0
    %v1012 = vadd.f32 0.0, %v1011
    %v1013 = vpop.f32.mrb[0].mxu0
    %v1014 = vpop.f32.mrb[0].mxu0
    %v1015 = vpop.f32.mrb[0].mxu0
    %1016 = vdwg.mxu0
    %1018 = vrot.lane.b32.xlu0 %v413, 96
    %v1019 = vpop.permute.xlu0 %1018
    %v1021 = vsel %vm920, %v911, 0
    %v1024 = vsel %vm924, %v1019, 0
    %1026 = vmatprep.subr.bf16.mxu0 0
    %1027 = vmatpush1.bf16.msra.mxu0 %v1024
    %1028 = vmatprep.subr.bf16.mxu0 0
    %1029 = vmatpush1.bf16.msra.mxu0 0
    %1030 = vmatprep.subr.bf16.mxu0 0
    %1031 = vmatpush1.bf16.msra.mxu0 0
    %1032 = vmatprep.subr.bf16.mxu0 0
    %1033 = vmatpush1.bf16.msra.mxu0 0
    %1034 = vmatprep.subr.bf16.mxu0 0
    %1035 = vmatpush1.bf16.msra.mxu0 0
    %1036 = vmatprep.subr.bf16.mxu0 0
    %1037 = vmatpush1.bf16.msra.mxu0 0
    %1038 = vmatprep.subr.bf16.mxu0 0
    %1039 = vmatpush1.bf16.msra.mxu0 0
    %1040 = vmatprep.subr.bf16.mxu0 0
    %1041 = vmatpush1.bf16.msra.mxu0 0
    %1042 = vmatprep.subr.bf16.mxu0 0
    %1043 = vmatpush1.bf16.msra.mxu0 0
    %1044 = vmatprep.subr.bf16.mxu0 0
    %1045 = vmatpush1.bf16.msra.mxu0 0
    %1046 = vmatprep.subr.bf16.mxu0 0
    %1047 = vmatpush1.bf16.msra.mxu0 0
    %1048 = vmatprep.subr.bf16.mxu0 0
    %1049 = vmatpush1.bf16.msra.mxu0 0
    %1050 = vmatprep.subr.bf16.mxu0 0
    %1051 = vmatpush1.bf16.msra.mxu0 0
    %1052 = vmatprep.subr.bf16.mxu0 0
    %1053 = vmatpush1.bf16.msra.mxu0 0
    %1054 = vmatprep.subr.bf16.mxu0 0
    %1055 = vmatpush1.bf16.msra.mxu0 0
    %1056 = vmatprep.subr.bf16.mxu0 0
    %1057 = vmatpush1.bf16.msra.mxu0 0
    %1058 = vmatprep.mubr.bf16.mxu0 0
    %1059 = vmatmul.mubr.bf16.gmra.mrb[0].mxu0 %v1021
    %v1060 = vpop.f32.mrb[0].mxu0
    %v1061 = vadd.f32 0.0, %v1060
    %v1062 = vpop.f32.mrb[0].mxu0
    %v1063 = vpop.f32.mrb[0].mxu0
    %v1064 = vpop.f32.mrb[0].mxu0
    %1065 = vdwg.mxu0
    %1067 = vrot.lane.b32.xlu0 %v414, 96
    %v1068 = vpop.permute.xlu0 %1067
    %v1070 = vsel %vm920, %v912, 0
    %v1073 = vsel %vm924, %v1068, 0
    %1075 = vmatprep.subr.bf16.mxu0 0
    %1076 = vmatpush1.bf16.msra.mxu0 %v1073
    %1077 = vmatprep.subr.bf16.mxu0 0
    %1078 = vmatpush1.bf16.msra.mxu0 0
    %1079 = vmatprep.subr.bf16.mxu0 0
    %1080 = vmatpush1.bf16.msra.mxu0 0
    %1081 = vmatprep.subr.bf16.mxu0 0
    %1082 = vmatpush1.bf16.msra.mxu0 0
    %1083 = vmatprep.subr.bf16.mxu0 0
    %1084 = vmatpush1.bf16.msra.mxu0 0
    %1085 = vmatprep.subr.bf16.mxu0 0
    %1086 = vmatpush1.bf16.msra.mxu0 0
    %1087 = vmatprep.subr.bf16.mxu0 0
    %1088 = vmatpush1.bf16.msra.mxu0 0
    %1089 = vmatprep.subr.bf16.mxu0 0
    %1090 = vmatpush1.bf16.msra.mxu0 0
    %1091 = vmatprep.subr.bf16.mxu0 0
    %1092 = vmatpush1.bf16.msra.mxu0 0
    %1093 = vmatprep.subr.bf16.mxu0 0
    %1094 = vmatpush1.bf16.msra.mxu0 0
    %1095 = vmatprep.subr.bf16.mxu0 0
    %1096 = vmatpush1.bf16.msra.mxu0 0
    %1097 = vmatprep.subr.bf16.mxu0 0
    %1098 = vmatpush1.bf16.msra.mxu0 0
    %1099 = vmatprep.subr.bf16.mxu0 0
    %1100 = vmatpush1.bf16.msra.mxu0 0
    %1101 = vmatprep.subr.bf16.mxu0 0
    %1102 = vmatpush1.bf16.msra.mxu0 0
    %1103 = vmatprep.subr.bf16.mxu0 0
    %1104 = vmatpush1.bf16.msra.mxu0 0
    %1105 = vmatprep.subr.bf16.mxu0 0
    %1106 = vmatpush1.bf16.msra.mxu0 0
    %1107 = vmatprep.mubr.bf16.mxu0 0
    %1108 = vmatmul.mubr.bf16.gmra.mrb[0].mxu0 %v1070
    %v1109 = vpop.f32.mrb[0].mxu0
    %v1110 = vadd.f32 0.0, %v1109
    %v1111 = vpop.f32.mrb[0].mxu0
    %v1112 = vpop.f32.mrb[0].mxu0
    %v1113 = vpop.f32.mrb[0].mxu0
    %1114 = vdwg.mxu0
    %1116 = vrot.lane.b32.xlu0 %v415, 96
    %v1117 = vpop.permute.xlu0 %1116
    %v1119 = vsel %vm920, %v913, 0
    %v1122 = vsel %vm924, %v1117, 0
    %1124 = vmatprep.subr.bf16.mxu0 0
    %1125 = vmatpush1.bf16.msra.mxu0 %v1122
    %1126 = vmatprep.subr.bf16.mxu0 0
    %1127 = vmatpush1.bf16.msra.mxu0 0
    %1128 = vmatprep.subr.bf16.mxu0 0
    %1129 = vmatpush1.bf16.msra.mxu0 0
    %1130 = vmatprep.subr.bf16.mxu0 0
    %1131 = vmatpush1.bf16.msra.mxu0 0
    %1132 = vmatprep.subr.bf16.mxu0 0
    %1133 = vmatpush1.bf16.msra.mxu0 0
    %1134 = vmatprep.subr.bf16.mxu0 0
    %1135 = vmatpush1.bf16.msra.mxu0 0
    %1136 = vmatprep.subr.bf16.mxu0 0
    %1137 = vmatpush1.bf16.msra.mxu0 0
    %1138 = vmatprep.subr.bf16.mxu0 0
    %1139 = vmatpush1.bf16.msra.mxu0 0
    %1140 = vmatprep.subr.bf16.mxu0 0
    %1141 = vmatpush1.bf16.msra.mxu0 0
    %1142 = vmatprep.subr.bf16.mxu0 0
    %1143 = vmatpush1.bf16.msra.mxu0 0
    %1144 = vmatprep.subr.bf16.mxu0 0
    %1145 = vmatpush1.bf16.msra.mxu0 0
    %1146 = vmatprep.subr.bf16.mxu0 0
    %1147 = vmatpush1.bf16.msra.mxu0 0
    %1148 = vmatprep.subr.bf16.mxu0 0
    %1149 = vmatpush1.bf16.msra.mxu0 0
    %1150 = vmatprep.subr.bf16.mxu0 0
    %1151 = vmatpush1.bf16.msra.mxu0 0
    %1152 = vmatprep.subr.bf16.mxu0 0
    %1153 = vmatpush1.bf16.msra.mxu0 0
    %1154 = vmatprep.subr.bf16.mxu0 0
    %1155 = vmatpush1.bf16.msra.mxu0 0
    %1156 = vmatprep.mubr.bf16.mxu0 0
    %1157 = vmatmul.mubr.bf16.gmra.mrb[0].mxu0 %v1119
    %v1158 = vpop.f32.mrb[0].mxu0
    %v1159 = vadd.f32 0.0, %v1158
    %v1160 = vpop.f32.mrb[0].mxu0
    %v1161 = vpop.f32.mrb[0].mxu0
    %v1162 = vpop.f32.mrb[0].mxu0
    %1163 = vdwg.mxu0
    %1165 = vrot.lane.b32.xlu0 %v416, 96
    %v1166 = vpop.permute.xlu0 %1165
    %v1168 = vsel %vm920, %v914, 0
    %v1171 = vsel %vm924, %v1166, 0
    %1173 = vmatprep.subr.bf16.mxu0 0
    %1174 = vmatpush1.bf16.msra.mxu0 %v1171
    %1175 = vmatprep.subr.bf16.mxu0 0
    %1176 = vmatpush1.bf16.msra.mxu0 0
    %1177 = vmatprep.subr.bf16.mxu0 0
    %1178 = vmatpush1.bf16.msra.mxu0 0
    %1179 = vmatprep.subr.bf16.mxu0 0
    %1180 = vmatpush1.bf16.msra.mxu0 0
    %1181 = vmatprep.subr.bf16.mxu0 0
    %1182 = vmatpush1.bf16.msra.mxu0 0
    %1183 = vmatprep.subr.bf16.mxu0 0
    %1184 = vmatpush1.bf16.msra.mxu0 0
    %1185 = vmatprep.subr.bf16.mxu0 0
    %1186 = vmatpush1.bf16.msra.mxu0 0
    %1187 = vmatprep.subr.bf16.mxu0 0
    %1188 = vmatpush1.bf16.msra.mxu0 0
    %1189 = vmatprep.subr.bf16.mxu0 0
    %1190 = vmatpush1.bf16.msra.mxu0 0
    %1191 = vmatprep.subr.bf16.mxu0 0
    %1192 = vmatpush1.bf16.msra.mxu0 0
    %1193 = vmatprep.subr.bf16.mxu0 0
    %1194 = vmatpush1.bf16.msra.mxu0 0
    %1195 = vmatprep.subr.bf16.mxu0 0
    %1196 = vmatpush1.bf16.msra.mxu0 0
    %1197 = vmatprep.subr.bf16.mxu0 0
    %1198 = vmatpush1.bf16.msra.mxu0 0
    %1199 = vmatprep.subr.bf16.mxu0 0
    %1200 = vmatpush1.bf16.msra.mxu0 0
    %1201 = vmatprep.subr.bf16.mxu0 0
    %1202 = vmatpush1.bf16.msra.mxu0 0
    %1203 = vmatprep.subr.bf16.mxu0 0
    %1204 = vmatpush1.bf16.msra.mxu0 0
    %1205 = vmatprep.mubr.bf16.mxu0 0
    %1206 = vmatmul.mubr.bf16.gmra.mrb[0].mxu0 %v1168
    %v1207 = vpop.f32.mrb[0].mxu0
    %v1208 = vadd.f32 0.0, %v1207
    %v1209 = vpop.f32.mrb[0].mxu0
    %v1210 = vpop.f32.mrb[0].mxu0
    %v1211 = vpop.f32.mrb[0].mxu0
    %1212 = vdwg.mxu0
    %1214 = vrot.lane.b32.xlu0 %v417, 96
    %v1215 = vpop.permute.xlu0 %1214
    %v1217 = vsel %vm920, %v915, 0
    %v1220 = vsel %vm924, %v1215, 0
    %1222 = vmatprep.subr.bf16.mxu0 0
    %1223 = vmatpush1.bf16.msra.mxu0 %v1220
    %1224 = vmatprep.subr.bf16.mxu0 0
    %1225 = vmatpush1.bf16.msra.mxu0 0
    %1226 = vmatprep.subr.bf16.mxu0 0
    %1227 = vmatpush1.bf16.msra.mxu0 0
    %1228 = vmatprep.subr.bf16.mxu0 0
    %1229 = vmatpush1.bf16.msra.mxu0 0
    %1230 = vmatprep.subr.bf16.mxu0 0
    %1231 = vmatpush1.bf16.msra.mxu0 0
    %1232 = vmatprep.subr.bf16.mxu0 0
    %1233 = vmatpush1.bf16.msra.mxu0 0
    %1234 = vmatprep.subr.bf16.mxu0 0
    %1235 = vmatpush1.bf16.msra.mxu0 0
    %1236 = vmatprep.subr.bf16.mxu0 0
    %1237 = vmatpush1.bf16.msra.mxu0 0
    %1238 = vmatprep.subr.bf16.mxu0 0
    %1239 = vmatpush1.bf16.msra.mxu0 0
    %1240 = vmatprep.subr.bf16.mxu0 0
    %1241 = vmatpush1.bf16.msra.mxu0 0
    %1242 = vmatprep.subr.bf16.mxu0 0
    %1243 = vmatpush1.bf16.msra.mxu0 0
    %1244 = vmatprep.subr.bf16.mxu0 0
    %1245 = vmatpush1.bf16.msra.mxu0 0
    %1246 = vmatprep.subr.bf16.mxu0 0
    %1247 = vmatpush1.bf16.msra.mxu0 0
    %1248 = vmatprep.subr.bf16.mxu0 0
    %1249 = vmatpush1.bf16.msra.mxu0 0
    %1250 = vmatprep.subr.bf16.mxu0 0
    %1251 = vmatpush1.bf16.msra.mxu0 0
    %1252 = vmatprep.subr.bf16.mxu0 0
    %1253 = vmatpush1.bf16.msra.mxu0 0
    %1254 = vmatprep.mubr.bf16.mxu0 0
    %1255 = vmatmul.mubr.bf16.gmra.mrb[0].mxu0 %v1217
    %v1256 = vpop.f32.mrb[0].mxu0
    %v1257 = vadd.f32 0.0, %v1256
    %v1258 = vpop.f32.mrb[0].mxu0
    %v1259 = vpop.f32.mrb[0].mxu0
    %v1260 = vpop.f32.mrb[0].mxu0
    %1261 = vdwg.mxu0
    %1263 = vrot.lane.b32.xlu0 %v418, 96
    %v1264 = vpop.permute.xlu0 %1263
    %v1266 = vsel %vm920, %v916, 0
    %v1269 = vsel %vm924, %v1264, 0
    %1271 = vmatprep.subr.bf16.mxu0 0
    %1272 = vmatpush1.bf16.msra.mxu0 %v1269
    %1273 = vmatprep.subr.bf16.mxu0 0
    %1274 = vmatpush1.bf16.msra.mxu0 0
    %1275 = vmatprep.subr.bf16.mxu0 0
    %1276 = vmatpush1.bf16.msra.mxu0 0
    %1277 = vmatprep.subr.bf16.mxu0 0
    %1278 = vmatpush1.bf16.msra.mxu0 0
    %1279 = vmatprep.subr.bf16.mxu0 0
    %1280 = vmatpush1.bf16.msra.mxu0 0
    %1281 = vmatprep.subr.bf16.mxu0 0
    %1282 = vmatpush1.bf16.msra.mxu0 0
    %1283 = vmatprep.subr.bf16.mxu0 0
    %1284 = vmatpush1.bf16.msra.mxu0 0
    %1285 = vmatprep.subr.bf16.mxu0 0
    %1286 = vmatpush1.bf16.msra.mxu0 0
    %1287 = vmatprep.subr.bf16.mxu0 0
    %1288 = vmatpush1.bf16.msra.mxu0 0
    %1289 = vmatprep.subr.bf16.mxu0 0
    %1290 = vmatpush1.bf16.msra.mxu0 0
    %1291 = vmatprep.subr.bf16.mxu0 0
    %1292 = vmatpush1.bf16.msra.mxu0 0
    %1293 = vmatprep.subr.bf16.mxu0 0
    %1294 = vmatpush1.bf16.msra.mxu0 0
    %1295 = vmatprep.subr.bf16.mxu0 0
    %1296 = vmatpush1.bf16.msra.mxu0 0
    %1297 = vmatprep.subr.bf16.mxu0 0
    %1298 = vmatpush1.bf16.msra.mxu0 0
    %1299 = vmatprep.subr.bf16.mxu0 0
    %1300 = vmatpush1.bf16.msra.mxu0 0
    %1301 = vmatprep.subr.bf16.mxu0 0
    %1302 = vmatpush1.bf16.msra.mxu0 0
    %1303 = vmatprep.mubr.bf16.mxu0 0
    %1304 = vmatmul.mubr.bf16.gmra.mrb[0].mxu0 %v1266
    %v1305 = vpop.f32.mrb[0].mxu0
    %v1306 = vadd.f32 0.0, %v1305
    %v1307 = vpop.f32.mrb[0].mxu0
    %v1308 = vpop.f32.mrb[0].mxu0
    %v1309 = vpop.f32.mrb[0].mxu0
    %1310 = vdwg.mxu0
    %1312 = vrot.lane.b32.xlu0 %v403, 120
    %v1313 = vpop.permute.xlu0 %1312
    %1314 = vrot.lane.b32.xlu0 %v411, 120
    %v1315 = vpop.permute.xlu0 %1314
    %v1317 = vsel %vm419, %v1313, 0
    %v1320 = vsel %vm419, %v1315, 0
    %1322 = vmatprep.subr.bf16.mxu0 0
    %1323 = vmatpush1.bf16.xpose.msra.mxu0 %v1320
    %1324 = vmatprep.subr.bf16.mxu0 0
    %1325 = vmatpush1.bf16.xpose.msra.mxu0 0
    %1326 = vmatprep.subr.bf16.mxu0 0
    %1327 = vmatpush1.bf16.xpose.msra.mxu0 0
    %1328 = vmatprep.subr.bf16.mxu0 0
    %1329 = vmatpush1.bf16.xpose.msra.mxu0 0
    %1330 = vmatprep.subr.bf16.mxu0 0
    %1331 = vmatpush1.bf16.xpose.msra.mxu0 0
    %1332 = vmatprep.subr.bf16.mxu0 0
    %1333 = vmatpush1.bf16.xpose.msra.mxu0 0
    %1334 = vmatprep.subr.bf16.mxu0 0
    %1335 = vmatpush1.bf16.xpose.msra.mxu0 0
    %1336 = vmatprep.subr.bf16.mxu0 0
    %1337 = vmatpush1.bf16.xpose.msra.mxu0 0
    %1338 = vmatprep.subr.bf16.mxu0 0
    %1339 = vmatpush1.bf16.xpose.msra.mxu0 0
    %1340 = vmatprep.subr.bf16.mxu0 0
    %1341 = vmatpush1.bf16.xpose.msra.mxu0 0
    %1342 = vmatprep.subr.bf16.mxu0 0
    %1343 = vmatpush1.bf16.xpose.msra.mxu0 0
    %1344 = vmatprep.subr.bf16.mxu0 0
    %1345 = vmatpush1.bf16.xpose.msra.mxu0 0
    %1346 = vmatprep.subr.bf16.mxu0 0
    %1347 = vmatpush1.bf16.xpose.msra.mxu0 0
    %1348 = vmatprep.subr.bf16.mxu0 0
    %1349 = vmatpush1.bf16.xpose.msra.mxu0 0
    %1350 = vmatprep.subr.bf16.mxu0 0
    %1351 = vmatpush1.bf16.xpose.msra.mxu0 0
    %1352 = vmatprep.subr.bf16.mxu0 0
    %1353 = vmatpush1.bf16.xpose.msra.mxu0 0
    %1354 = vmatprep.mubr.bf16.mxu0 0
    %1355 = vmatmul.mubr.bf16.gmra.mrb[0].mxu0 %v1317
    %v1356 = vpop.f32.mrb[0].mxu0
    %v1357 = vadd.f32 0.0, %v1356
    %v1358 = vpop.f32.mrb[0].mxu0
    %v1359 = vpop.f32.mrb[0].mxu0
    %v1360 = vpop.f32.mrb[0].mxu0
    %1361 = vdwg.mxu0
    %1363 = vrot.lane.b32.xlu0 %v404, 120
    %v1364 = vpop.permute.xlu0 %1363
    %1365 = vrot.lane.b32.xlu0 %v412, 120
    %v1366 = vpop.permute.xlu0 %1365
    %v1368 = vsel %vm419, %v1364, 0
    %v1371 = vsel %vm419, %v1366, 0
    %1373 = vmatprep.subr.bf16.mxu0 0
    %1374 = vmatpush1.bf16.xpose.msra.mxu0 %v1371
    %1375 = vmatprep.subr.bf16.mxu0 0
    %1376 = vmatpush1.bf16.xpose.msra.mxu0 0
    %1377 = vmatprep.subr.bf16.mxu0 0
    %1378 = vmatpush1.bf16.xpose.msra.mxu0 0
    %1379 = vmatprep.subr.bf16.mxu0 0
    %1380 = vmatpush1.bf16.xpose.msra.mxu0 0
    %1381 = vmatprep.subr.bf16.mxu0 0
    %1382 = vmatpush1.bf16.xpose.msra.mxu0 0
    %1383 = vmatprep.subr.bf16.mxu0 0
    %1384 = vmatpush1.bf16.xpose.msra.mxu0 0
    %1385 = vmatprep.subr.bf16.mxu0 0
    %1386 = vmatpush1.bf16.xpose.msra.mxu0 0
    %1387 = vmatprep.subr.bf16.mxu0 0
    %1388 = vmatpush1.bf16.xpose.msra.mxu0 0
    %1389 = vmatprep.subr.bf16.mxu0 0
    %1390 = vmatpush1.bf16.xpose.msra.mxu0 0
    %1391 = vmatprep.subr.bf16.mxu0 0
    %1392 = vmatpush1.bf16.xpose.msra.mxu0 0
    %1393 = vmatprep.subr.bf16.mxu0 0
    %1394 = vmatpush1.bf16.xpose.msra.mxu0 0
    %1395 = vmatprep.subr.bf16.mxu0 0
    %1396 = vmatpush1.bf16.xpose.msra.mxu0 0
    %1397 = vmatprep.subr.bf16.mxu0 0
    %1398 = vmatpush1.bf16.xpose.msra.mxu0 0
    %1399 = vmatprep.subr.bf16.mxu0 0
    %1400 = vmatpush1.bf16.xpose.msra.mxu0 0
    %1401 = vmatprep.subr.bf16.mxu0 0
    %1402 = vmatpush1.bf16.xpose.msra.mxu0 0
    %1403 = vmatprep.subr.bf16.mxu0 0
    %1404 = vmatpush1.bf16.xpose.msra.mxu0 0
    %1405 = vmatprep.mubr.bf16.mxu0 0
    %1406 = vmatmul.mubr.bf16.gmra.mrb[0].mxu0 %v1368
    %v1407 = vpop.f32.mrb[0].mxu0
    %v1408 = vadd.f32 0.0, %v1407
    %v1409 = vpop.f32.mrb[0].mxu0
    %v1410 = vpop.f32.mrb[0].mxu0
    %v1411 = vpop.f32.mrb[0].mxu0
    %1412 = vdwg.mxu0
    %1414 = vrot.lane.b32.xlu0 %v405, 120
    %v1415 = vpop.permute.xlu0 %1414
    %1416 = vrot.lane.b32.xlu0 %v413, 120
    %v1417 = vpop.permute.xlu0 %1416
    %v1419 = vsel %vm419, %v1415, 0
    %v1422 = vsel %vm419, %v1417, 0
    %1424 = vmatprep.subr.bf16.mxu0 0
    %1425 = vmatpush1.bf16.xpose.msra.mxu0 %v1422
    %1426 = vmatprep.subr.bf16.mxu0 0
    %1427 = vmatpush1.bf16.xpose.msra.mxu0 0
    %1428 = vmatprep.subr.bf16.mxu0 0
    %1429 = vmatpush1.bf16.xpose.msra.mxu0 0
    %1430 = vmatprep.subr.bf16.mxu0 0
    %1431 = vmatpush1.bf16.xpose.msra.mxu0 0
    %1432 = vmatprep.subr.bf16.mxu0 0
    %1433 = vmatpush1.bf16.xpose.msra.mxu0 0
    %1434 = vmatprep.subr.bf16.mxu0 0
    %1435 = vmatpush1.bf16.xpose.msra.mxu0 0
    %1436 = vmatprep.subr.bf16.mxu0 0
    %1437 = vmatpush1.bf16.xpose.msra.mxu0 0
    %1438 = vmatprep.subr.bf16.mxu0 0
    %1439 = vmatpush1.bf16.xpose.msra.mxu0 0
    %1440 = vmatprep.subr.bf16.mxu0 0
    %1441 = vmatpush1.bf16.xpose.msra.mxu0 0
    %1442 = vmatprep.subr.bf16.mxu0 0
    %1443 = vmatpush1.bf16.xpose.msra.mxu0 0
    %1444 = vmatprep.subr.bf16.mxu0 0
    %1445 = vmatpush1.bf16.xpose.msra.mxu0 0
    %1446 = vmatprep.subr.bf16.mxu0 0
    %1447 = vmatpush1.bf16.xpose.msra.mxu0 0
    %1448 = vmatprep.subr.bf16.mxu0 0
    %1449 = vmatpush1.bf16.xpose.msra.mxu0 0
    %1450 = vmatprep.subr.bf16.mxu0 0
    %1451 = vmatpush1.bf16.xpose.msra.mxu0 0
    %1452 = vmatprep.subr.bf16.mxu0 0
    %1453 = vmatpush1.bf16.xpose.msra.mxu0 0
    %1454 = vmatprep.subr.bf16.mxu0 0
    %1455 = vmatpush1.bf16.xpose.msra.mxu0 0
    %1456 = vmatprep.mubr.bf16.mxu0 0
    %1457 = vmatmul.mubr.bf16.gmra.mrb[0].mxu0 %v1419
    %v1458 = vpop.f32.mrb[0].mxu0
    %v1459 = vadd.f32 0.0, %v1458
    %v1460 = vpop.f32.mrb[0].mxu0
    %v1461 = vpop.f32.mrb[0].mxu0
    %v1462 = vpop.f32.mrb[0].mxu0
    %1463 = vdwg.mxu0
    %1465 = vrot.lane.b32.xlu0 %v406, 120
    %v1466 = vpop.permute.xlu0 %1465
    %1467 = vrot.lane.b32.xlu0 %v414, 120
    %v1468 = vpop.permute.xlu0 %1467
    %v1470 = vsel %vm419, %v1466, 0
    %v1473 = vsel %vm419, %v1468, 0
    %1475 = vmatprep.subr.bf16.mxu0 0
    %1476 = vmatpush1.bf16.xpose.msra.mxu0 %v1473
    %1477 = vmatprep.subr.bf16.mxu0 0
    %1478 = vmatpush1.bf16.xpose.msra.mxu0 0
    %1479 = vmatprep.subr.bf16.mxu0 0
    %1480 = vmatpush1.bf16.xpose.msra.mxu0 0
    %1481 = vmatprep.subr.bf16.mxu0 0
    %1482 = vmatpush1.bf16.xpose.msra.mxu0 0
    %1483 = vmatprep.subr.bf16.mxu0 0
    %1484 = vmatpush1.bf16.xpose.msra.mxu0 0
    %1485 = vmatprep.subr.bf16.mxu0 0
    %1486 = vmatpush1.bf16.xpose.msra.mxu0 0
    %1487 = vmatprep.subr.bf16.mxu0 0
    %1488 = vmatpush1.bf16.xpose.msra.mxu0 0
    %1489 = vmatprep.subr.bf16.mxu0 0
    %1490 = vmatpush1.bf16.xpose.msra.mxu0 0
    %1491 = vmatprep.subr.bf16.mxu0 0
    %1492 = vmatpush1.bf16.xpose.msra.mxu0 0
    %1493 = vmatprep.subr.bf16.mxu0 0
    %1494 = vmatpush1.bf16.xpose.msra.mxu0 0
    %1495 = vmatprep.subr.bf16.mxu0 0
    %1496 = vmatpush1.bf16.xpose.msra.mxu0 0
    %1497 = vmatprep.subr.bf16.mxu0 0
    %1498 = vmatpush1.bf16.xpose.msra.mxu0 0
    %1499 = vmatprep.subr.bf16.mxu0 0
    %1500 = vmatpush1.bf16.xpose.msra.mxu0 0
    %1501 = vmatprep.subr.bf16.mxu0 0
    %1502 = vmatpush1.bf16.xpose.msra.mxu0 0
    %1503 = vmatprep.subr.bf16.mxu0 0
    %1504 = vmatpush1.bf16.xpose.msra.mxu0 0
    %1505 = vmatprep.subr.bf16.mxu0 0
    %1506 = vmatpush1.bf16.xpose.msra.mxu0 0
    %1507 = vmatprep.mubr.bf16.mxu0 0
    %1508 = vmatmul.mubr.bf16.gmra.mrb[0].mxu0 %v1470
    %v1509 = vpop.f32.mrb[0].mxu0
    %v1510 = vadd.f32 0.0, %v1509
    %v1511 = vpop.f32.mrb[0].mxu0
    %v1512 = vpop.f32.mrb[0].mxu0
    %v1513 = vpop.f32.mrb[0].mxu0
    %1514 = vdwg.mxu0
    %1516 = vrot.lane.b32.xlu0 %v407, 120
    %v1517 = vpop.permute.xlu0 %1516
    %1518 = vrot.lane.b32.xlu0 %v415, 120
    %v1519 = vpop.permute.xlu0 %1518
    %v1521 = vsel %vm419, %v1517, 0
    %v1524 = vsel %vm419, %v1519, 0
    %1526 = vmatprep.subr.bf16.mxu0 0
    %1527 = vmatpush1.bf16.xpose.msra.mxu0 %v1524
    %1528 = vmatprep.subr.bf16.mxu0 0
    %1529 = vmatpush1.bf16.xpose.msra.mxu0 0
    %1530 = vmatprep.subr.bf16.mxu0 0
    %1531 = vmatpush1.bf16.xpose.msra.mxu0 0
    %1532 = vmatprep.subr.bf16.mxu0 0
    %1533 = vmatpush1.bf16.xpose.msra.mxu0 0
    %1534 = vmatprep.subr.bf16.mxu0 0
    %1535 = vmatpush1.bf16.xpose.msra.mxu0 0
    %1536 = vmatprep.subr.bf16.mxu0 0
    %1537 = vmatpush1.bf16.xpose.msra.mxu0 0
    %1538 = vmatprep.subr.bf16.mxu0 0
    %1539 = vmatpush1.bf16.xpose.msra.mxu0 0
    %1540 = vmatprep.subr.bf16.mxu0 0
    %1541 = vmatpush1.bf16.xpose.msra.mxu0 0
    %1542 = vmatprep.subr.bf16.mxu0 0
    %1543 = vmatpush1.bf16.xpose.msra.mxu0 0
    %1544 = vmatprep.subr.bf16.mxu0 0
    %1545 = vmatpush1.bf16.xpose.msra.mxu0 0
    %1546 = vmatprep.subr.bf16.mxu0 0
    %1547 = vmatpush1.bf16.xpose.msra.mxu0 0
    %1548 = vmatprep.subr.bf16.mxu0 0
    %1549 = vmatpush1.bf16.xpose.msra.mxu0 0
    %1550 = vmatprep.subr.bf16.mxu0 0
    %1551 = vmatpush1.bf16.xpose.msra.mxu0 0
    %1552 = vmatprep.subr.bf16.mxu0 0
    %1553 = vmatpush1.bf16.xpose.msra.mxu0 0
    %1554 = vmatprep.subr.bf16.mxu0 0
    %1555 = vmatpush1.bf16.xpose.msra.mxu0 0
    %1556 = vmatprep.subr.bf16.mxu0 0
    %1557 = vmatpush1.bf16.xpose.msra.mxu0 0
    %1558 = vmatprep.mubr.bf16.mxu0 0
    %1559 = vmatmul.mubr.bf16.gmra.mrb[0].mxu0 %v1521
    %v1560 = vpop.f32.mrb[0].mxu0
    %v1561 = vadd.f32 0.0, %v1560
    %v1562 = vpop.f32.mrb[0].mxu0
    %v1563 = vpop.f32.mrb[0].mxu0
    %v1564 = vpop.f32.mrb[0].mxu0
    %1565 = vdwg.mxu0
    %1567 = vrot.lane.b32.xlu0 %v408, 120
    %v1568 = vpop.permute.xlu0 %1567
    %1569 = vrot.lane.b32.xlu0 %v416, 120
    %v1570 = vpop.permute.xlu0 %1569
    %v1572 = vsel %vm419, %v1568, 0
    %v1575 = vsel %vm419, %v1570, 0
    %1577 = vmatprep.subr.bf16.mxu0 0
    %1578 = vmatpush1.bf16.xpose.msra.mxu0 %v1575
    %1579 = vmatprep.subr.bf16.mxu0 0
    %1580 = vmatpush1.bf16.xpose.msra.mxu0 0
    %1581 = vmatprep.subr.bf16.mxu0 0
    %1582 = vmatpush1.bf16.xpose.msra.mxu0 0
    %1583 = vmatprep.subr.bf16.mxu0 0
    %1584 = vmatpush1.bf16.xpose.msra.mxu0 0
    %1585 = vmatprep.subr.bf16.mxu0 0
    %1586 = vmatpush1.bf16.xpose.msra.mxu0 0
    %1587 = vmatprep.subr.bf16.mxu0 0
    %1588 = vmatpush1.bf16.xpose.msra.mxu0 0
    %1589 = vmatprep.subr.bf16.mxu0 0
    %1590 = vmatpush1.bf16.xpose.msra.mxu0 0
    %1591 = vmatprep.subr.bf16.mxu0 0
    %1592 = vmatpush1.bf16.xpose.msra.mxu0 0
    %1593 = vmatprep.subr.bf16.mxu0 0
    %1594 = vmatpush1.bf16.xpose.msra.mxu0 0
    %1595 = vmatprep.subr.bf16.mxu0 0
    %1596 = vmatpush1.bf16.xpose.msra.mxu0 0
    %1597 = vmatprep.subr.bf16.mxu0 0
    %1598 = vmatpush1.bf16.xpose.msra.mxu0 0
    %1599 = vmatprep.subr.bf16.mxu0 0
    %1600 = vmatpush1.bf16.xpose.msra.mxu0 0
    %1601 = vmatprep.subr.bf16.mxu0 0
    %1602 = vmatpush1.bf16.xpose.msra.mxu0 0
    %1603 = vmatprep.subr.bf16.mxu0 0
    %1604 = vmatpush1.bf16.xpose.msra.mxu0 0
    %1605 = vmatprep.subr.bf16.mxu0 0
    %1606 = vmatpush1.bf16.xpose.msra.mxu0 0
    %1607 = vmatprep.subr.bf16.mxu0 0
    %1608 = vmatpush1.bf16.xpose.msra.mxu0 0
    %1609 = vmatprep.mubr.bf16.mxu0 0
    %1610 = vmatmul.mubr.bf16.gmra.mrb[0].mxu0 %v1572
    %v1611 = vpop.f32.mrb[0].mxu0
    %v1612 = vadd.f32 0.0, %v1611
    %v1613 = vpop.f32.mrb[0].mxu0
    %v1614 = vpop.f32.mrb[0].mxu0
    %v1615 = vpop.f32.mrb[0].mxu0
    %1616 = vdwg.mxu0
    %1618 = vrot.lane.b32.xlu0 %v409, 120
    %v1619 = vpop.permute.xlu0 %1618
    %1620 = vrot.lane.b32.xlu0 %v417, 120
    %v1621 = vpop.permute.xlu0 %1620
    %v1623 = vsel %vm419, %v1619, 0
    %v1626 = vsel %vm419, %v1621, 0
    %1628 = vmatprep.subr.bf16.mxu0 0
    %1629 = vmatpush1.bf16.xpose.msra.mxu0 %v1626
    %1630 = vmatprep.subr.bf16.mxu0 0
    %1631 = vmatpush1.bf16.xpose.msra.mxu0 0
    %1632 = vmatprep.subr.bf16.mxu0 0
    %1633 = vmatpush1.bf16.xpose.msra.mxu0 0
    %1634 = vmatprep.subr.bf16.mxu0 0
    %1635 = vmatpush1.bf16.xpose.msra.mxu0 0
    %1636 = vmatprep.subr.bf16.mxu0 0
    %1637 = vmatpush1.bf16.xpose.msra.mxu0 0
    %1638 = vmatprep.subr.bf16.mxu0 0
    %1639 = vmatpush1.bf16.xpose.msra.mxu0 0
    %1640 = vmatprep.subr.bf16.mxu0 0
    %1641 = vmatpush1.bf16.xpose.msra.mxu0 0
    %1642 = vmatprep.subr.bf16.mxu0 0
    %1643 = vmatpush1.bf16.xpose.msra.mxu0 0
    %1644 = vmatprep.subr.bf16.mxu0 0
    %1645 = vmatpush1.bf16.xpose.msra.mxu0 0
    %1646 = vmatprep.subr.bf16.mxu0 0
    %1647 = vmatpush1.bf16.xpose.msra.mxu0 0
    %1648 = vmatprep.subr.bf16.mxu0 0
    %1649 = vmatpush1.bf16.xpose.msra.mxu0 0
    %1650 = vmatprep.subr.bf16.mxu0 0
    %1651 = vmatpush1.bf16.xpose.msra.mxu0 0
    %1652 = vmatprep.subr.bf16.mxu0 0
    %1653 = vmatpush1.bf16.xpose.msra.mxu0 0
    %1654 = vmatprep.subr.bf16.mxu0 0
    %1655 = vmatpush1.bf16.xpose.msra.mxu0 0
    %1656 = vmatprep.subr.bf16.mxu0 0
    %1657 = vmatpush1.bf16.xpose.msra.mxu0 0
    %1658 = vmatprep.subr.bf16.mxu0 0
    %1659 = vmatpush1.bf16.xpose.msra.mxu0 0
    %1660 = vmatprep.mubr.bf16.mxu0 0
    %1661 = vmatmul.mubr.bf16.gmra.mrb[0].mxu0 %v1623
    %v1662 = vpop.f32.mrb[0].mxu0
    %v1663 = vadd.f32 0.0, %v1662
    %v1664 = vpop.f32.mrb[0].mxu0
    %v1665 = vpop.f32.mrb[0].mxu0
    %v1666 = vpop.f32.mrb[0].mxu0
    %1667 = vdwg.mxu0
    %1669 = vrot.lane.b32.xlu0 %v410, 120
    %v1670 = vpop.permute.xlu0 %1669
    %1671 = vrot.lane.b32.xlu0 %v418, 120
    %v1672 = vpop.permute.xlu0 %1671
    %v1674 = vsel %vm419, %v1670, 0
    %v1677 = vsel %vm419, %v1672, 0
    %1679 = vmatprep.subr.bf16.mxu0 0
    %1680 = vmatpush1.bf16.xpose.msra.mxu0 %v1677
    %1681 = vmatprep.subr.bf16.mxu0 0
    %1682 = vmatpush1.bf16.xpose.msra.mxu0 0
    %1683 = vmatprep.subr.bf16.mxu0 0
    %1684 = vmatpush1.bf16.xpose.msra.mxu0 0
    %1685 = vmatprep.subr.bf16.mxu0 0
    %1686 = vmatpush1.bf16.xpose.msra.mxu0 0
    %1687 = vmatprep.subr.bf16.mxu0 0
    %1688 = vmatpush1.bf16.xpose.msra.mxu0 0
    %1689 = vmatprep.subr.bf16.mxu0 0
    %1690 = vmatpush1.bf16.xpose.msra.mxu0 0
    %1691 = vmatprep.subr.bf16.mxu0 0
    %1692 = vmatpush1.bf16.xpose.msra.mxu0 0
    %1693 = vmatprep.subr.bf16.mxu0 0
    %1694 = vmatpush1.bf16.xpose.msra.mxu0 0
    %1695 = vmatprep.subr.bf16.mxu0 0
    %1696 = vmatpush1.bf16.xpose.msra.mxu0 0
    %1697 = vmatprep.subr.bf16.mxu0 0
    %1698 = vmatpush1.bf16.xpose.msra.mxu0 0
    %1699 = vmatprep.subr.bf16.mxu0 0
    %1700 = vmatpush1.bf16.xpose.msra.mxu0 0
    %1701 = vmatprep.subr.bf16.mxu0 0
    %1702 = vmatpush1.bf16.xpose.msra.mxu0 0
    %1703 = vmatprep.subr.bf16.mxu0 0
    %1704 = vmatpush1.bf16.xpose.msra.mxu0 0
    %1705 = vmatprep.subr.bf16.mxu0 0
    %1706 = vmatpush1.bf16.xpose.msra.mxu0 0
    %1707 = vmatprep.subr.bf16.mxu0 0
    %1708 = vmatpush1.bf16.xpose.msra.mxu0 0
    %1709 = vmatprep.subr.bf16.mxu0 0
    %1710 = vmatpush1.bf16.xpose.msra.mxu0 0
    %1711 = vmatprep.mubr.bf16.mxu0 0
    %1712 = vmatmul.mubr.bf16.gmra.mrb[0].mxu0 %v1674
    %v1713 = vpop.f32.mrb[0].mxu0
    %v1714 = vadd.f32 0.0, %v1713
    %v1715 = vpop.f32.mrb[0].mxu0
    %v1716 = vpop.f32.mrb[0].mxu0
    %v1717 = vpop.f32.mrb[0].mxu0
    %1718 = vdwg.mxu0
    %v1719 = vmul.f32 %v1357, 0.35355338
    %v1720 = vmul.f32 %v1408, 0.35355338
    %v1721 = vmul.f32 %v1459, 0.35355338
    %v1722 = vmul.f32 %v1510, 0.35355338
    %v1723 = vmul.f32 %v1561, 0.35355338
    %v1724 = vmul.f32 %v1612, 0.35355338
    %v1725 = vmul.f32 %v1663, 0.35355338
    %v1726 = vmul.f32 %v1714, 0.35355338
    %v1727 = vsel %vm796, %v1719, -inf
    %1728 = vmax.xlane.f32.xlu0 %v1727
    %v1729 = vpop.xlane.xlu0 %1728
    %v1730 = vsel %vm796, %v1720, -inf
    %1731 = vmax.xlane.f32.xlu0 %v1730
    %v1732 = vpop.xlane.xlu0 %1731
    %v1733 = vsel %vm796, %v1721, -inf
    %1734 = vmax.xlane.f32.xlu0 %v1733
    %v1735 = vpop.xlane.xlu0 %1734
    %v1736 = vsel %vm796, %v1722, -inf
    %1737 = vmax.xlane.f32.xlu0 %v1736
    %v1738 = vpop.xlane.xlu0 %1737
    %v1739 = vsel %vm796, %v1723, -inf
    %1740 = vmax.xlane.f32.xlu0 %v1739
    %v1741 = vpop.xlane.xlu0 %1740
    %v1742 = vsel %vm796, %v1724, -inf
    %1743 = vmax.xlane.f32.xlu0 %v1742
    %v1744 = vpop.xlane.xlu0 %1743
    %v1745 = vsel %vm796, %v1725, -inf
    %1746 = vmax.xlane.f32.xlu0 %v1745
    %v1747 = vpop.xlane.xlu0 %1746
    %v1748 = vsel %vm796, %v1726, -inf
    %1749 = vmax.xlane.f32.xlu0 %v1748
    %v1750 = vpop.xlane.xlu0 %1749
    %v1751 = vsub.f32 %v1719, %v1729
    %v1752 = vsub.f32 %v1720, %v1732
    %v1753 = vsub.f32 %v1721, %v1735
    %v1754 = vsub.f32 %v1722, %v1738
    %v1755 = vsub.f32 %v1723, %v1741
    %v1756 = vsub.f32 %v1724, %v1744
    %v1757 = vsub.f32 %v1725, %v1747
    %v1758 = vsub.f32 %v1726, %v1750
    %v1759 = vmul.f32 %v1751, 1.442695
    %v1760 = vpow.pop %v1759
    %v1761 = vmul.f32 %v1752, 1.442695
    %v1762 = vpow.pop %v1761
    %v1763 = vmul.f32 %v1753, 1.442695
    %v1764 = vpow.pop %v1763
    %v1765 = vmul.f32 %v1754, 1.442695
    %v1766 = vpow.pop %v1765
    %v1767 = vmul.f32 %v1755, 1.442695
    %v1768 = vpow.pop %v1767
    %v1769 = vmul.f32 %v1756, 1.442695
    %v1770 = vpow.pop %v1769
    %v1771 = vmul.f32 %v1757, 1.442695
    %v1772 = vpow.pop %v1771
    %v1773 = vmul.f32 %v1758, 1.442695
    %v1774 = vpow.pop %v1773
    %v1775 = vsel %vm796, %v1760, 0.0
    %1776 = vadd.xlane.f32.xlu0 %v1775
    %v1777 = vpop.xlane.xlu0 %1776
    %v1778 = vsel %vm796, %v1762, 0.0
    %1779 = vadd.xlane.f32.xlu0 %v1778
    %v1780 = vpop.xlane.xlu0 %1779
    %v1781 = vsel %vm796, %v1764, 0.0
    %1782 = vadd.xlane.f32.xlu0 %v1781
    %v1783 = vpop.xlane.xlu0 %1782
    %v1784 = vsel %vm796, %v1766, 0.0
    %1785 = vadd.xlane.f32.xlu0 %v1784
    %v1786 = vpop.xlane.xlu0 %1785
    %v1787 = vsel %vm796, %v1768, 0.0
    %1788 = vadd.xlane.f32.xlu0 %v1787
    %v1789 = vpop.xlane.xlu0 %1788
    %v1790 = vsel %vm796, %v1770, 0.0
    %1791 = vadd.xlane.f32.xlu0 %v1790
    %v1792 = vpop.xlane.xlu0 %1791
    %v1793 = vsel %vm796, %v1772, 0.0
    %1794 = vadd.xlane.f32.xlu0 %v1793
    %v1795 = vpop.xlane.xlu0 %1794
    %v1796 = vsel %vm796, %v1774, 0.0
    %1797 = vadd.xlane.f32.xlu0 %v1796
    %v1798 = vpop.xlane.xlu0 %1797
    %v1799 = vrcp.pop %v1777
    %v1800 = vrcp.pop %v1780
    %v1801 = vrcp.pop %v1783
    %v1802 = vrcp.pop %v1786
    %v1803 = vrcp.pop %v1789
    %v1804 = vrcp.pop %v1792
    %v1805 = vrcp.pop %v1795
    %v1806 = vrcp.pop %v1798
    %v1807 = vmul.f32 %v1777, %v1799
    %v1808 = vmul.f32 %v1780, %v1800
    %v1809 = vmul.f32 %v1783, %v1801
    %v1810 = vmul.f32 %v1786, %v1802
    %v1811 = vmul.f32 %v1789, %v1803
    %v1812 = vmul.f32 %v1792, %v1804
    %v1813 = vmul.f32 %v1795, %v1805
    %v1814 = vmul.f32 %v1798, %v1806
    %v1815 = vsub.f32 2.0, %v1807
    %v1816 = vsub.f32 2.0, %v1808
    %v1817 = vsub.f32 2.0, %v1809
    %v1818 = vsub.f32 2.0, %v1810
    %v1819 = vsub.f32 2.0, %v1811
    %v1820 = vsub.f32 2.0, %v1812
    %v1821 = vsub.f32 2.0, %v1813
    %v1822 = vsub.f32 2.0, %v1814
    %v1823 = vmul.f32 %v1799, %v1815
    %v1824 = vmul.f32 %v1800, %v1816
    %v1825 = vmul.f32 %v1801, %v1817
    %v1826 = vmul.f32 %v1802, %v1818
    %v1827 = vmul.f32 %v1803, %v1819
    %v1828 = vmul.f32 %v1804, %v1820
    %v1829 = vmul.f32 %v1805, %v1821
    %v1830 = vmul.f32 %v1806, %v1822
    %v1831 = vmul.f32 %v1760, %v1823
    %v1832 = vmul.f32 %v1762, %v1824
    %v1833 = vmul.f32 %v1764, %v1825
    %v1834 = vmul.f32 %v1766, %v1826
    %v1835 = vmul.f32 %v1768, %v1827
    %v1836 = vmul.f32 %v1770, %v1828
    %v1837 = vmul.f32 %v1772, %v1829
    %v1838 = vmul.f32 %v1774, %v1830
    %v1839 = vpack.c.bf16 %v1831, %v1831
    %v1840 = vpack.c.bf16 %v1832, %v1832
    %v1841 = vpack.c.bf16 %v1833, %v1833
    %v1842 = vpack.c.bf16 %v1834, %v1834
    %v1843 = vpack.c.bf16 %v1835, %v1835
    %v1844 = vpack.c.bf16 %v1836, %v1836
    %v1845 = vpack.c.bf16 %v1837, %v1837
    %v1846 = vpack.c.bf16 %v1838, %v1838
    %1847 = vrot.lane.b32.xlu0 %v411, 88
    %v1848 = vpop.permute.xlu0 %1847
    %v1850 = vsel %vm920, %v1839, 0
    %v1853 = vsel %vm924, %v1848, 0
    %1855 = vmatprep.subr.bf16.mxu0 0
    %1856 = vmatpush1.bf16.msra.mxu0 %v1853
    %1857 = vmatprep.subr.bf16.mxu0 0
    %1858 = vmatpush1.bf16.msra.mxu0 0
    %1859 = vmatprep.subr.bf16.mxu0 0
    %1860 = vmatpush1.bf16.msra.mxu0 0
    %1861 = vmatprep.subr.bf16.mxu0 0
    %1862 = vmatpush1.bf16.msra.mxu0 0
    %1863 = vmatprep.subr.bf16.mxu0 0
    %1864 = vmatpush1.bf16.msra.mxu0 0
    %1865 = vmatprep.subr.bf16.mxu0 0
    %1866 = vmatpush1.bf16.msra.mxu0 0
    %1867 = vmatprep.subr.bf16.mxu0 0
    %1868 = vmatpush1.bf16.msra.mxu0 0
    %1869 = vmatprep.subr.bf16.mxu0 0
    %1870 = vmatpush1.bf16.msra.mxu0 0
    %1871 = vmatprep.subr.bf16.mxu0 0
    %1872 = vmatpush1.bf16.msra.mxu0 0
    %1873 = vmatprep.subr.bf16.mxu0 0
    %1874 = vmatpush1.bf16.msra.mxu0 0
    %1875 = vmatprep.subr.bf16.mxu0 0
    %1876 = vmatpush1.bf16.msra.mxu0 0
    %1877 = vmatprep.subr.bf16.mxu0 0
    %1878 = vmatpush1.bf16.msra.mxu0 0
    %1879 = vmatprep.subr.bf16.mxu0 0
    %1880 = vmatpush1.bf16.msra.mxu0 0
    %1881 = vmatprep.subr.bf16.mxu0 0
    %1882 = vmatpush1.bf16.msra.mxu0 0
    %1883 = vmatprep.subr.bf16.mxu0 0
    %1884 = vmatpush1.bf16.msra.mxu0 0
    %1885 = vmatprep.subr.bf16.mxu0 0
    %1886 = vmatpush1.bf16.msra.mxu0 0
    %1887 = vmatprep.mubr.bf16.mxu0 0
    %1888 = vmatmul.mubr.bf16.gmra.mrb[0].mxu0 %v1850
    %v1889 = vpop.f32.mrb[0].mxu0
    %v1890 = vadd.f32 0.0, %v1889
    %v1891 = vpop.f32.mrb[0].mxu0
    %v1892 = vpop.f32.mrb[0].mxu0
    %v1893 = vpop.f32.mrb[0].mxu0
    %1894 = vdwg.mxu0
    %1895 = vrot.lane.b32.xlu0 %v412, 88
    %v1896 = vpop.permute.xlu0 %1895
    %v1898 = vsel %vm920, %v1840, 0
    %v1901 = vsel %vm924, %v1896, 0
    %1903 = vmatprep.subr.bf16.mxu0 0
    %1904 = vmatpush1.bf16.msra.mxu0 %v1901
    %1905 = vmatprep.subr.bf16.mxu0 0
    %1906 = vmatpush1.bf16.msra.mxu0 0
    %1907 = vmatprep.subr.bf16.mxu0 0
    %1908 = vmatpush1.bf16.msra.mxu0 0
    %1909 = vmatprep.subr.bf16.mxu0 0
    %1910 = vmatpush1.bf16.msra.mxu0 0
    %1911 = vmatprep.subr.bf16.mxu0 0
    %1912 = vmatpush1.bf16.msra.mxu0 0
    %1913 = vmatprep.subr.bf16.mxu0 0
    %1914 = vmatpush1.bf16.msra.mxu0 0
    %1915 = vmatprep.subr.bf16.mxu0 0
    %1916 = vmatpush1.bf16.msra.mxu0 0
    %1917 = vmatprep.subr.bf16.mxu0 0
    %1918 = vmatpush1.bf16.msra.mxu0 0
    %1919 = vmatprep.subr.bf16.mxu0 0
    %1920 = vmatpush1.bf16.msra.mxu0 0
    %1921 = vmatprep.subr.bf16.mxu0 0
    %1922 = vmatpush1.bf16.msra.mxu0 0
    %1923 = vmatprep.subr.bf16.mxu0 0
    %1924 = vmatpush1.bf16.msra.mxu0 0
    %1925 = vmatprep.subr.bf16.mxu0 0
    %1926 = vmatpush1.bf16.msra.mxu0 0
    %1927 = vmatprep.subr.bf16.mxu0 0
    %1928 = vmatpush1.bf16.msra.mxu0 0
    %1929 = vmatprep.subr.bf16.mxu0 0
    %1930 = vmatpush1.bf16.msra.mxu0 0
    %1931 = vmatprep.subr.bf16.mxu0 0
    %1932 = vmatpush1.bf16.msra.mxu0 0
    %1933 = vmatprep.subr.bf16.mxu0 0
    %1934 = vmatpush1.bf16.msra.mxu0 0
    %1935 = vmatprep.mubr.bf16.mxu0 0
    %1936 = vmatmul.mubr.bf16.gmra.mrb[0].mxu0 %v1898
    %v1937 = vpop.f32.mrb[0].mxu0
    %v1938 = vadd.f32 0.0, %v1937
    %v1939 = vpop.f32.mrb[0].mxu0
    %v1940 = vpop.f32.mrb[0].mxu0
    %v1941 = vpop.f32.mrb[0].mxu0
    %1942 = vdwg.mxu0
    %1943 = vrot.lane.b32.xlu0 %v413, 88
    %v1944 = vpop.permute.xlu0 %1943
    %v1946 = vsel %vm920, %v1841, 0
    %v1949 = vsel %vm924, %v1944, 0
    %1951 = vmatprep.subr.bf16.mxu0 0
    %1952 = vmatpush1.bf16.msra.mxu0 %v1949
    %1953 = vmatprep.subr.bf16.mxu0 0
    %1954 = vmatpush1.bf16.msra.mxu0 0
    %1955 = vmatprep.subr.bf16.mxu0 0
    %1956 = vmatpush1.bf16.msra.mxu0 0
    %1957 = vmatprep.subr.bf16.mxu0 0
    %1958 = vmatpush1.bf16.msra.mxu0 0
    %1959 = vmatprep.subr.bf16.mxu0 0
    %1960 = vmatpush1.bf16.msra.mxu0 0
    %1961 = vmatprep.subr.bf16.mxu0 0
    %1962 = vmatpush1.bf16.msra.mxu0 0
    %1963 = vmatprep.subr.bf16.mxu0 0
    %1964 = vmatpush1.bf16.msra.mxu0 0
    %1965 = vmatprep.subr.bf16.mxu0 0
    %1966 = vmatpush1.bf16.msra.mxu0 0
    %1967 = vmatprep.subr.bf16.mxu0 0
    %1968 = vmatpush1.bf16.msra.mxu0 0
    %1969 = vmatprep.subr.bf16.mxu0 0
    %1970 = vmatpush1.bf16.msra.mxu0 0
    %1971 = vmatprep.subr.bf16.mxu0 0
    %1972 = vmatpush1.bf16.msra.mxu0 0
    %1973 = vmatprep.subr.bf16.mxu0 0
    %1974 = vmatpush1.bf16.msra.mxu0 0
    %1975 = vmatprep.subr.bf16.mxu0 0
    %1976 = vmatpush1.bf16.msra.mxu0 0
    %1977 = vmatprep.subr.bf16.mxu0 0
    %1978 = vmatpush1.bf16.msra.mxu0 0
    %1979 = vmatprep.subr.bf16.mxu0 0
    %1980 = vmatpush1.bf16.msra.mxu0 0
    %1981 = vmatprep.subr.bf16.mxu0 0
    %1982 = vmatpush1.bf16.msra.mxu0 0
    %1983 = vmatprep.mubr.bf16.mxu0 0
    %1984 = vmatmul.mubr.bf16.gmra.mrb[0].mxu0 %v1946
    %v1985 = vpop.f32.mrb[0].mxu0
    %v1986 = vadd.f32 0.0, %v1985
    %v1987 = vpop.f32.mrb[0].mxu0
    %v1988 = vpop.f32.mrb[0].mxu0
    %v1989 = vpop.f32.mrb[0].mxu0
    %1990 = vdwg.mxu0
    %1991 = vrot.lane.b32.xlu0 %v414, 88
    %v1992 = vpop.permute.xlu0 %1991
    %v1994 = vsel %vm920, %v1842, 0
    %v1997 = vsel %vm924, %v1992, 0
    %1999 = vmatprep.subr.bf16.mxu0 0
    %2000 = vmatpush1.bf16.msra.mxu0 %v1997
    %2001 = vmatprep.subr.bf16.mxu0 0
    %2002 = vmatpush1.bf16.msra.mxu0 0
    %2003 = vmatprep.subr.bf16.mxu0 0
    %2004 = vmatpush1.bf16.msra.mxu0 0
    %2005 = vmatprep.subr.bf16.mxu0 0
    %2006 = vmatpush1.bf16.msra.mxu0 0
    %2007 = vmatprep.subr.bf16.mxu0 0
    %2008 = vmatpush1.bf16.msra.mxu0 0
    %2009 = vmatprep.subr.bf16.mxu0 0
    %2010 = vmatpush1.bf16.msra.mxu0 0
    %2011 = vmatprep.subr.bf16.mxu0 0
    %2012 = vmatpush1.bf16.msra.mxu0 0
    %2013 = vmatprep.subr.bf16.mxu0 0
    %2014 = vmatpush1.bf16.msra.mxu0 0
    %2015 = vmatprep.subr.bf16.mxu0 0
    %2016 = vmatpush1.bf16.msra.mxu0 0
    %2017 = vmatprep.subr.bf16.mxu0 0
    %2018 = vmatpush1.bf16.msra.mxu0 0
    %2019 = vmatprep.subr.bf16.mxu0 0
    %2020 = vmatpush1.bf16.msra.mxu0 0
    %2021 = vmatprep.subr.bf16.mxu0 0
    %2022 = vmatpush1.bf16.msra.mxu0 0
    %2023 = vmatprep.subr.bf16.mxu0 0
    %2024 = vmatpush1.bf16.msra.mxu0 0
    %2025 = vmatprep.subr.bf16.mxu0 0
    %2026 = vmatpush1.bf16.msra.mxu0 0
    %2027 = vmatprep.subr.bf16.mxu0 0
    %2028 = vmatpush1.bf16.msra.mxu0 0
    %2029 = vmatprep.subr.bf16.mxu0 0
    %2030 = vmatpush1.bf16.msra.mxu0 0
    %2031 = vmatprep.mubr.bf16.mxu0 0
    %2032 = vmatmul.mubr.bf16.gmra.mrb[0].mxu0 %v1994
    %v2033 = vpop.f32.mrb[0].mxu0
    %v2034 = vadd.f32 0.0, %v2033
    %v2035 = vpop.f32.mrb[0].mxu0
    %v2036 = vpop.f32.mrb[0].mxu0
    %v2037 = vpop.f32.mrb[0].mxu0
    %2038 = vdwg.mxu0
    %2039 = vrot.lane.b32.xlu0 %v415, 88
    %v2040 = vpop.permute.xlu0 %2039
    %v2042 = vsel %vm920, %v1843, 0
    %v2045 = vsel %vm924, %v2040, 0
    %2047 = vmatprep.subr.bf16.mxu0 0
    %2048 = vmatpush1.bf16.msra.mxu0 %v2045
    %2049 = vmatprep.subr.bf16.mxu0 0
    %2050 = vmatpush1.bf16.msra.mxu0 0
    %2051 = vmatprep.subr.bf16.mxu0 0
    %2052 = vmatpush1.bf16.msra.mxu0 0
    %2053 = vmatprep.subr.bf16.mxu0 0
    %2054 = vmatpush1.bf16.msra.mxu0 0
    %2055 = vmatprep.subr.bf16.mxu0 0
    %2056 = vmatpush1.bf16.msra.mxu0 0
    %2057 = vmatprep.subr.bf16.mxu0 0
    %2058 = vmatpush1.bf16.msra.mxu0 0
    %2059 = vmatprep.subr.bf16.mxu0 0
    %2060 = vmatpush1.bf16.msra.mxu0 0
    %2061 = vmatprep.subr.bf16.mxu0 0
    %2062 = vmatpush1.bf16.msra.mxu0 0
    %2063 = vmatprep.subr.bf16.mxu0 0
    %2064 = vmatpush1.bf16.msra.mxu0 0
    %2065 = vmatprep.subr.bf16.mxu0 0
    %2066 = vmatpush1.bf16.msra.mxu0 0
    %2067 = vmatprep.subr.bf16.mxu0 0
    %2068 = vmatpush1.bf16.msra.mxu0 0
    %2069 = vmatprep.subr.bf16.mxu0 0
    %2070 = vmatpush1.bf16.msra.mxu0 0
    %2071 = vmatprep.subr.bf16.mxu0 0
    %2072 = vmatpush1.bf16.msra.mxu0 0
    %2073 = vmatprep.subr.bf16.mxu0 0
    %2074 = vmatpush1.bf16.msra.mxu0 0
    %2075 = vmatprep.subr.bf16.mxu0 0
    %2076 = vmatpush1.bf16.msra.mxu0 0
    %2077 = vmatprep.subr.bf16.mxu0 0
    %2078 = vmatpush1.bf16.msra.mxu0 0
    %2079 = vmatprep.mubr.bf16.mxu0 0
    %2080 = vmatmul.mubr.bf16.gmra.mrb[0].mxu0 %v2042
    %v2081 = vpop.f32.mrb[0].mxu0
    %v2082 = vadd.f32 0.0, %v2081
    %v2083 = vpop.f32.mrb[0].mxu0
    %v2084 = vpop.f32.mrb[0].mxu0
    %v2085 = vpop.f32.mrb[0].mxu0
    %2086 = vdwg.mxu0
    %2087 = vrot.lane.b32.xlu0 %v416, 88
    %v2088 = vpop.permute.xlu0 %2087
    %v2090 = vsel %vm920, %v1844, 0
    %v2093 = vsel %vm924, %v2088, 0
    %2095 = vmatprep.subr.bf16.mxu0 0
    %2096 = vmatpush1.bf16.msra.mxu0 %v2093
    %2097 = vmatprep.subr.bf16.mxu0 0
    %2098 = vmatpush1.bf16.msra.mxu0 0
    %2099 = vmatprep.subr.bf16.mxu0 0
    %2100 = vmatpush1.bf16.msra.mxu0 0
    %2101 = vmatprep.subr.bf16.mxu0 0
    %2102 = vmatpush1.bf16.msra.mxu0 0
    %2103 = vmatprep.subr.bf16.mxu0 0
    %2104 = vmatpush1.bf16.msra.mxu0 0
    %2105 = vmatprep.subr.bf16.mxu0 0
    %2106 = vmatpush1.bf16.msra.mxu0 0
    %2107 = vmatprep.subr.bf16.mxu0 0
    %2108 = vmatpush1.bf16.msra.mxu0 0
    %2109 = vmatprep.subr.bf16.mxu0 0
    %2110 = vmatpush1.bf16.msra.mxu0 0
    %2111 = vmatprep.subr.bf16.mxu0 0
    %2112 = vmatpush1.bf16.msra.mxu0 0
    %2113 = vmatprep.subr.bf16.mxu0 0
    %2114 = vmatpush1.bf16.msra.mxu0 0
    %2115 = vmatprep.subr.bf16.mxu0 0
    %2116 = vmatpush1.bf16.msra.mxu0 0
    %2117 = vmatprep.subr.bf16.mxu0 0
    %2118 = vmatpush1.bf16.msra.mxu0 0
    %2119 = vmatprep.subr.bf16.mxu0 0
    %2120 = vmatpush1.bf16.msra.mxu0 0
    %2121 = vmatprep.subr.bf16.mxu0 0
    %2122 = vmatpush1.bf16.msra.mxu0 0
    %2123 = vmatprep.subr.bf16.mxu0 0
    %2124 = vmatpush1.bf16.msra.mxu0 0
    %2125 = vmatprep.subr.bf16.mxu0 0
    %2126 = vmatpush1.bf16.msra.mxu0 0
    %2127 = vmatprep.mubr.bf16.mxu0 0
    %2128 = vmatmul.mubr.bf16.gmra.mrb[0].mxu0 %v2090
    %v2129 = vpop.f32.mrb[0].mxu0
    %v2130 = vadd.f32 0.0, %v2129
    %v2131 = vpop.f32.mrb[0].mxu0
    %v2132 = vpop.f32.mrb[0].mxu0
    %v2133 = vpop.f32.mrb[0].mxu0
    %2134 = vdwg.mxu0
    %2135 = vrot.lane.b32.xlu0 %v417, 88
    %v2136 = vpop.permute.xlu0 %2135
    %v2138 = vsel %vm920, %v1845, 0
    %v2141 = vsel %vm924, %v2136, 0
    %2143 = vmatprep.subr.bf16.mxu0 0
    %2144 = vmatpush1.bf16.msra.mxu0 %v2141
    %2145 = vmatprep.subr.bf16.mxu0 0
    %2146 = vmatpush1.bf16.msra.mxu0 0
    %2147 = vmatprep.subr.bf16.mxu0 0
    %2148 = vmatpush1.bf16.msra.mxu0 0
    %2149 = vmatprep.subr.bf16.mxu0 0
    %2150 = vmatpush1.bf16.msra.mxu0 0
    %2151 = vmatprep.subr.bf16.mxu0 0
    %2152 = vmatpush1.bf16.msra.mxu0 0
    %2153 = vmatprep.subr.bf16.mxu0 0
    %2154 = vmatpush1.bf16.msra.mxu0 0
    %2155 = vmatprep.subr.bf16.mxu0 0
    %2156 = vmatpush1.bf16.msra.mxu0 0
    %2157 = vmatprep.subr.bf16.mxu0 0
    %2158 = vmatpush1.bf16.msra.mxu0 0
    %2159 = vmatprep.subr.bf16.mxu0 0
    %2160 = vmatpush1.bf16.msra.mxu0 0
    %2161 = vmatprep.subr.bf16.mxu0 0
    %2162 = vmatpush1.bf16.msra.mxu0 0
    %2163 = vmatprep.subr.bf16.mxu0 0
    %2164 = vmatpush1.bf16.msra.mxu0 0
    %2165 = vmatprep.subr.bf16.mxu0 0
    %2166 = vmatpush1.bf16.msra.mxu0 0
    %2167 = vmatprep.subr.bf16.mxu0 0
    %2168 = vmatpush1.bf16.msra.mxu0 0
    %2169 = vmatprep.subr.bf16.mxu0 0
    %2170 = vmatpush1.bf16.msra.mxu0 0
    %2171 = vmatprep.subr.bf16.mxu0 0
    %2172 = vmatpush1.bf16.msra.mxu0 0
    %2173 = vmatprep.subr.bf16.mxu0 0
    %2174 = vmatpush1.bf16.msra.mxu0 0
    %2175 = vmatprep.mubr.bf16.mxu0 0
    %2176 = vmatmul.mubr.bf16.gmra.mrb[0].mxu0 %v2138
    %v2177 = vpop.f32.mrb[0].mxu0
    %v2178 = vadd.f32 0.0, %v2177
    %v2179 = vpop.f32.mrb[0].mxu0
    %v2180 = vpop.f32.mrb[0].mxu0
    %v2181 = vpop.f32.mrb[0].mxu0
    %2182 = vdwg.mxu0
    %2183 = vrot.lane.b32.xlu0 %v418, 88
    %v2184 = vpop.permute.xlu0 %2183
    %v2186 = vsel %vm920, %v1846, 0
    %v2189 = vsel %vm924, %v2184, 0
    %2191 = vmatprep.subr.bf16.mxu0 0
    %2192 = vmatpush1.bf16.msra.mxu0 %v2189
    %2193 = vmatprep.subr.bf16.mxu0 0
    %2194 = vmatpush1.bf16.msra.mxu0 0
    %2195 = vmatprep.subr.bf16.mxu0 0
    %2196 = vmatpush1.bf16.msra.mxu0 0
    %2197 = vmatprep.subr.bf16.mxu0 0
    %2198 = vmatpush1.bf16.msra.mxu0 0
    %2199 = vmatprep.subr.bf16.mxu0 0
    %2200 = vmatpush1.bf16.msra.mxu0 0
    %2201 = vmatprep.subr.bf16.mxu0 0
    %2202 = vmatpush1.bf16.msra.mxu0 0
    %2203 = vmatprep.subr.bf16.mxu0 0
    %2204 = vmatpush1.bf16.msra.mxu0 0
    %2205 = vmatprep.subr.bf16.mxu0 0
    %2206 = vmatpush1.bf16.msra.mxu0 0
    %2207 = vmatprep.subr.bf16.mxu0 0
    %2208 = vmatpush1.bf16.msra.mxu0 0
    %2209 = vmatprep.subr.bf16.mxu0 0
    %2210 = vmatpush1.bf16.msra.mxu0 0
    %2211 = vmatprep.subr.bf16.mxu0 0
    %2212 = vmatpush1.bf16.msra.mxu0 0
    %2213 = vmatprep.subr.bf16.mxu0 0
    %2214 = vmatpush1.bf16.msra.mxu0 0
    %2215 = vmatprep.subr.bf16.mxu0 0
    %2216 = vmatpush1.bf16.msra.mxu0 0
    %2217 = vmatprep.subr.bf16.mxu0 0
    %2218 = vmatpush1.bf16.msra.mxu0 0
    %2219 = vmatprep.subr.bf16.mxu0 0
    %2220 = vmatpush1.bf16.msra.mxu0 0
    %2221 = vmatprep.subr.bf16.mxu0 0
    %2222 = vmatpush1.bf16.msra.mxu0 0
    %2223 = vmatprep.mubr.bf16.mxu0 0
    %2224 = vmatmul.mubr.bf16.gmra.mrb[0].mxu0 %v2186
    %v2225 = vpop.f32.mrb[0].mxu0
    %v2226 = vadd.f32 0.0, %v2225
    %v2227 = vpop.f32.mrb[0].mxu0
    %v2228 = vpop.f32.mrb[0].mxu0
    %v2229 = vpop.f32.mrb[0].mxu0
    %2230 = vdwg.mxu0
    %2231 = vrot.lane.b32.xlu0 %v403, 112
    %v2232 = vpop.permute.xlu0 %2231
    %2233 = vrot.lane.b32.xlu0 %v411, 112
    %v2234 = vpop.permute.xlu0 %2233
    %v2236 = vsel %vm419, %v2232, 0
    %v2239 = vsel %vm419, %v2234, 0
    %2241 = vmatprep.subr.bf16.mxu0 0
    %2242 = vmatpush1.bf16.xpose.msra.mxu0 %v2239
    %2243 = vmatprep.subr.bf16.mxu0 0
    %2244 = vmatpush1.bf16.xpose.msra.mxu0 0
    %2245 = vmatprep.subr.bf16.mxu0 0
    %2246 = vmatpush1.bf16.xpose.msra.mxu0 0
    %2247 = vmatprep.subr.bf16.mxu0 0
    %2248 = vmatpush1.bf16.xpose.msra.mxu0 0
    %2249 = vmatprep.subr.bf16.mxu0 0
    %2250 = vmatpush1.bf16.xpose.msra.mxu0 0
    %2251 = vmatprep.subr.bf16.mxu0 0
    %2252 = vmatpush1.bf16.xpose.msra.mxu0 0
    %2253 = vmatprep.subr.bf16.mxu0 0
    %2254 = vmatpush1.bf16.xpose.msra.mxu0 0
    %2255 = vmatprep.subr.bf16.mxu0 0
    %2256 = vmatpush1.bf16.xpose.msra.mxu0 0
    %2257 = vmatprep.subr.bf16.mxu0 0
    %2258 = vmatpush1.bf16.xpose.msra.mxu0 0
    %2259 = vmatprep.subr.bf16.mxu0 0
    %2260 = vmatpush1.bf16.xpose.msra.mxu0 0
    %2261 = vmatprep.subr.bf16.mxu0 0
    %2262 = vmatpush1.bf16.xpose.msra.mxu0 0
    %2263 = vmatprep.subr.bf16.mxu0 0
    %2264 = vmatpush1.bf16.xpose.msra.mxu0 0
    %2265 = vmatprep.subr.bf16.mxu0 0
    %2266 = vmatpush1.bf16.xpose.msra.mxu0 0
    %2267 = vmatprep.subr.bf16.mxu0 0
    %2268 = vmatpush1.bf16.xpose.msra.mxu0 0
    %2269 = vmatprep.subr.bf16.mxu0 0
    %2270 = vmatpush1.bf16.xpose.msra.mxu0 0
    %2271 = vmatprep.subr.bf16.mxu0 0
    %2272 = vmatpush1.bf16.xpose.msra.mxu0 0
    %2273 = vmatprep.mubr.bf16.mxu0 0
    %2274 = vmatmul.mubr.bf16.gmra.mrb[0].mxu0 %v2236
    %v2275 = vpop.f32.mrb[0].mxu0
    %v2276 = vadd.f32 0.0, %v2275
    %v2277 = vpop.f32.mrb[0].mxu0
    %v2278 = vpop.f32.mrb[0].mxu0
    %v2279 = vpop.f32.mrb[0].mxu0
    %2280 = vdwg.mxu0
    %2281 = vrot.lane.b32.xlu0 %v404, 112
    %v2282 = vpop.permute.xlu0 %2281
    %2283 = vrot.lane.b32.xlu0 %v412, 112
    %v2284 = vpop.permute.xlu0 %2283
    %v2286 = vsel %vm419, %v2282, 0
    %v2289 = vsel %vm419, %v2284, 0
    %2291 = vmatprep.subr.bf16.mxu0 0
    %2292 = vmatpush1.bf16.xpose.msra.mxu0 %v2289
    %2293 = vmatprep.subr.bf16.mxu0 0
    %2294 = vmatpush1.bf16.xpose.msra.mxu0 0
    %2295 = vmatprep.subr.bf16.mxu0 0
    %2296 = vmatpush1.bf16.xpose.msra.mxu0 0
    %2297 = vmatprep.subr.bf16.mxu0 0
    %2298 = vmatpush1.bf16.xpose.msra.mxu0 0
    %2299 = vmatprep.subr.bf16.mxu0 0
    %2300 = vmatpush1.bf16.xpose.msra.mxu0 0
    %2301 = vmatprep.subr.bf16.mxu0 0
    %2302 = vmatpush1.bf16.xpose.msra.mxu0 0
    %2303 = vmatprep.subr.bf16.mxu0 0
    %2304 = vmatpush1.bf16.xpose.msra.mxu0 0
    %2305 = vmatprep.subr.bf16.mxu0 0
    %2306 = vmatpush1.bf16.xpose.msra.mxu0 0
    %2307 = vmatprep.subr.bf16.mxu0 0
    %2308 = vmatpush1.bf16.xpose.msra.mxu0 0
    %2309 = vmatprep.subr.bf16.mxu0 0
    %2310 = vmatpush1.bf16.xpose.msra.mxu0 0
    %2311 = vmatprep.subr.bf16.mxu0 0
    %2312 = vmatpush1.bf16.xpose.msra.mxu0 0
    %2313 = vmatprep.subr.bf16.mxu0 0
    %2314 = vmatpush1.bf16.xpose.msra.mxu0 0
    %2315 = vmatprep.subr.bf16.mxu0 0
    %2316 = vmatpush1.bf16.xpose.msra.mxu0 0
    %2317 = vmatprep.subr.bf16.mxu0 0
    %2318 = vmatpush1.bf16.xpose.msra.mxu0 0
    %2319 = vmatprep.subr.bf16.mxu0 0
    %2320 = vmatpush1.bf16.xpose.msra.mxu0 0
    %2321 = vmatprep.subr.bf16.mxu0 0
    %2322 = vmatpush1.bf16.xpose.msra.mxu0 0
    %2323 = vmatprep.mubr.bf16.mxu0 0
    %2324 = vmatmul.mubr.bf16.gmra.mrb[0].mxu0 %v2286
    %v2325 = vpop.f32.mrb[0].mxu0
    %v2326 = vadd.f32 0.0, %v2325
    %v2327 = vpop.f32.mrb[0].mxu0
    %v2328 = vpop.f32.mrb[0].mxu0
    %v2329 = vpop.f32.mrb[0].mxu0
    %2330 = vdwg.mxu0
    %2331 = vrot.lane.b32.xlu0 %v405, 112
    %v2332 = vpop.permute.xlu0 %2331
    %2333 = vrot.lane.b32.xlu0 %v413, 112
    %v2334 = vpop.permute.xlu0 %2333
    %v2336 = vsel %vm419, %v2332, 0
    %v2339 = vsel %vm419, %v2334, 0
    %2341 = vmatprep.subr.bf16.mxu0 0
    %2342 = vmatpush1.bf16.xpose.msra.mxu0 %v2339
    %2343 = vmatprep.subr.bf16.mxu0 0
    %2344 = vmatpush1.bf16.xpose.msra.mxu0 0
    %2345 = vmatprep.subr.bf16.mxu0 0
    %2346 = vmatpush1.bf16.xpose.msra.mxu0 0
    %2347 = vmatprep.subr.bf16.mxu0 0
    %2348 = vmatpush1.bf16.xpose.msra.mxu0 0
    %2349 = vmatprep.subr.bf16.mxu0 0
    %2350 = vmatpush1.bf16.xpose.msra.mxu0 0
    %2351 = vmatprep.subr.bf16.mxu0 0
    %2352 = vmatpush1.bf16.xpose.msra.mxu0 0
    %2353 = vmatprep.subr.bf16.mxu0 0
    %2354 = vmatpush1.bf16.xpose.msra.mxu0 0
    %2355 = vmatprep.subr.bf16.mxu0 0
    %2356 = vmatpush1.bf16.xpose.msra.mxu0 0
    %2357 = vmatprep.subr.bf16.mxu0 0
    %2358 = vmatpush1.bf16.xpose.msra.mxu0 0
    %2359 = vmatprep.subr.bf16.mxu0 0
    %2360 = vmatpush1.bf16.xpose.msra.mxu0 0
    %2361 = vmatprep.subr.bf16.mxu0 0
    %2362 = vmatpush1.bf16.xpose.msra.mxu0 0
    %2363 = vmatprep.subr.bf16.mxu0 0
    %2364 = vmatpush1.bf16.xpose.msra.mxu0 0
    %2365 = vmatprep.subr.bf16.mxu0 0
    %2366 = vmatpush1.bf16.xpose.msra.mxu0 0
    %2367 = vmatprep.subr.bf16.mxu0 0
    %2368 = vmatpush1.bf16.xpose.msra.mxu0 0
    %2369 = vmatprep.subr.bf16.mxu0 0
    %2370 = vmatpush1.bf16.xpose.msra.mxu0 0
    %2371 = vmatprep.subr.bf16.mxu0 0
    %2372 = vmatpush1.bf16.xpose.msra.mxu0 0
    %2373 = vmatprep.mubr.bf16.mxu0 0
    %2374 = vmatmul.mubr.bf16.gmra.mrb[0].mxu0 %v2336
    %v2375 = vpop.f32.mrb[0].mxu0
    %v2376 = vadd.f32 0.0, %v2375
    %v2377 = vpop.f32.mrb[0].mxu0
    %v2378 = vpop.f32.mrb[0].mxu0
    %v2379 = vpop.f32.mrb[0].mxu0
    %2380 = vdwg.mxu0
    %2381 = vrot.lane.b32.xlu0 %v406, 112
    %v2382 = vpop.permute.xlu0 %2381
    %2383 = vrot.lane.b32.xlu0 %v414, 112
    %v2384 = vpop.permute.xlu0 %2383
    %v2386 = vsel %vm419, %v2382, 0
    %v2389 = vsel %vm419, %v2384, 0
    %2391 = vmatprep.subr.bf16.mxu0 0
    %2392 = vmatpush1.bf16.xpose.msra.mxu0 %v2389
    %2393 = vmatprep.subr.bf16.mxu0 0
    %2394 = vmatpush1.bf16.xpose.msra.mxu0 0
    %2395 = vmatprep.subr.bf16.mxu0 0
    %2396 = vmatpush1.bf16.xpose.msra.mxu0 0
    %2397 = vmatprep.subr.bf16.mxu0 0
    %2398 = vmatpush1.bf16.xpose.msra.mxu0 0
    %2399 = vmatprep.subr.bf16.mxu0 0
    %2400 = vmatpush1.bf16.xpose.msra.mxu0 0
    %2401 = vmatprep.subr.bf16.mxu0 0
    %2402 = vmatpush1.bf16.xpose.msra.mxu0 0
    %2403 = vmatprep.subr.bf16.mxu0 0
    %2404 = vmatpush1.bf16.xpose.msra.mxu0 0
    %2405 = vmatprep.subr.bf16.mxu0 0
    %2406 = vmatpush1.bf16.xpose.msra.mxu0 0
    %2407 = vmatprep.subr.bf16.mxu0 0
    %2408 = vmatpush1.bf16.xpose.msra.mxu0 0
    %2409 = vmatprep.subr.bf16.mxu0 0
    %2410 = vmatpush1.bf16.xpose.msra.mxu0 0
    %2411 = vmatprep.subr.bf16.mxu0 0
    %2412 = vmatpush1.bf16.xpose.msra.mxu0 0
    %2413 = vmatprep.subr.bf16.mxu0 0
    %2414 = vmatpush1.bf16.xpose.msra.mxu0 0
    %2415 = vmatprep.subr.bf16.mxu0 0
    %2416 = vmatpush1.bf16.xpose.msra.mxu0 0
    %2417 = vmatprep.subr.bf16.mxu0 0
    %2418 = vmatpush1.bf16.xpose.msra.mxu0 0
    %2419 = vmatprep.subr.bf16.mxu0 0
    %2420 = vmatpush1.bf16.xpose.msra.mxu0 0
    %2421 = vmatprep.subr.bf16.mxu0 0
    %2422 = vmatpush1.bf16.xpose.msra.mxu0 0
    %2423 = vmatprep.mubr.bf16.mxu0 0
    %2424 = vmatmul.mubr.bf16.gmra.mrb[0].mxu0 %v2386
    %v2425 = vpop.f32.mrb[0].mxu0
    %v2426 = vadd.f32 0.0, %v2425
    %v2427 = vpop.f32.mrb[0].mxu0
    %v2428 = vpop.f32.mrb[0].mxu0
    %v2429 = vpop.f32.mrb[0].mxu0
    %2430 = vdwg.mxu0
    %2431 = vrot.lane.b32.xlu0 %v407, 112
    %v2432 = vpop.permute.xlu0 %2431
    %2433 = vrot.lane.b32.xlu0 %v415, 112
    %v2434 = vpop.permute.xlu0 %2433
    %v2436 = vsel %vm419, %v2432, 0
    %v2439 = vsel %vm419, %v2434, 0
    %2441 = vmatprep.subr.bf16.mxu0 0
    %2442 = vmatpush1.bf16.xpose.msra.mxu0 %v2439
    %2443 = vmatprep.subr.bf16.mxu0 0
    %2444 = vmatpush1.bf16.xpose.msra.mxu0 0
    %2445 = vmatprep.subr.bf16.mxu0 0
    %2446 = vmatpush1.bf16.xpose.msra.mxu0 0
    %2447 = vmatprep.subr.bf16.mxu0 0
    %2448 = vmatpush1.bf16.xpose.msra.mxu0 0
    %2449 = vmatprep.subr.bf16.mxu0 0
    %2450 = vmatpush1.bf16.xpose.msra.mxu0 0
    %2451 = vmatprep.subr.bf16.mxu0 0
    %2452 = vmatpush1.bf16.xpose.msra.mxu0 0
    %2453 = vmatprep.subr.bf16.mxu0 0
    %2454 = vmatpush1.bf16.xpose.msra.mxu0 0
    %2455 = vmatprep.subr.bf16.mxu0 0
    %2456 = vmatpush1.bf16.xpose.msra.mxu0 0
    %2457 = vmatprep.subr.bf16.mxu0 0
    %2458 = vmatpush1.bf16.xpose.msra.mxu0 0
    %2459 = vmatprep.subr.bf16.mxu0 0
    %2460 = vmatpush1.bf16.xpose.msra.mxu0 0
    %2461 = vmatprep.subr.bf16.mxu0 0
    %2462 = vmatpush1.bf16.xpose.msra.mxu0 0
    %2463 = vmatprep.subr.bf16.mxu0 0
    %2464 = vmatpush1.bf16.xpose.msra.mxu0 0
    %2465 = vmatprep.subr.bf16.mxu0 0
    %2466 = vmatpush1.bf16.xpose.msra.mxu0 0
    %2467 = vmatprep.subr.bf16.mxu0 0
    %2468 = vmatpush1.bf16.xpose.msra.mxu0 0
    %2469 = vmatprep.subr.bf16.mxu0 0
    %2470 = vmatpush1.bf16.xpose.msra.mxu0 0
    %2471 = vmatprep.subr.bf16.mxu0 0
    %2472 = vmatpush1.bf16.xpose.msra.mxu0 0
    %2473 = vmatprep.mubr.bf16.mxu0 0
    %2474 = vmatmul.mubr.bf16.gmra.mrb[0].mxu0 %v2436
    %v2475 = vpop.f32.mrb[0].mxu0
    %v2476 = vadd.f32 0.0, %v2475
    %v2477 = vpop.f32.mrb[0].mxu0
    %v2478 = vpop.f32.mrb[0].mxu0
    %v2479 = vpop.f32.mrb[0].mxu0
    %2480 = vdwg.mxu0
    %2481 = vrot.lane.b32.xlu0 %v408, 112
    %v2482 = vpop.permute.xlu0 %2481
    %2483 = vrot.lane.b32.xlu0 %v416, 112
    %v2484 = vpop.permute.xlu0 %2483
    %v2486 = vsel %vm419, %v2482, 0
    %v2489 = vsel %vm419, %v2484, 0
    %2491 = vmatprep.subr.bf16.mxu0 0
    %2492 = vmatpush1.bf16.xpose.msra.mxu0 %v2489
    %2493 = vmatprep.subr.bf16.mxu0 0
    %2494 = vmatpush1.bf16.xpose.msra.mxu0 0
    %2495 = vmatprep.subr.bf16.mxu0 0
    %2496 = vmatpush1.bf16.xpose.msra.mxu0 0
    %2497 = vmatprep.subr.bf16.mxu0 0
    %2498 = vmatpush1.bf16.xpose.msra.mxu0 0
    %2499 = vmatprep.subr.bf16.mxu0 0
    %2500 = vmatpush1.bf16.xpose.msra.mxu0 0
    %2501 = vmatprep.subr.bf16.mxu0 0
    %2502 = vmatpush1.bf16.xpose.msra.mxu0 0
    %2503 = vmatprep.subr.bf16.mxu0 0
    %2504 = vmatpush1.bf16.xpose.msra.mxu0 0
    %2505 = vmatprep.subr.bf16.mxu0 0
    %2506 = vmatpush1.bf16.xpose.msra.mxu0 0
    %2507 = vmatprep.subr.bf16.mxu0 0
    %2508 = vmatpush1.bf16.xpose.msra.mxu0 0
    %2509 = vmatprep.subr.bf16.mxu0 0
    %2510 = vmatpush1.bf16.xpose.msra.mxu0 0
    %2511 = vmatprep.subr.bf16.mxu0 0
    %2512 = vmatpush1.bf16.xpose.msra.mxu0 0
    %2513 = vmatprep.subr.bf16.mxu0 0
    %2514 = vmatpush1.bf16.xpose.msra.mxu0 0
    %2515 = vmatprep.subr.bf16.mxu0 0
    %2516 = vmatpush1.bf16.xpose.msra.mxu0 0
    %2517 = vmatprep.subr.bf16.mxu0 0
    %2518 = vmatpush1.bf16.xpose.msra.mxu0 0
    %2519 = vmatprep.subr.bf16.mxu0 0
    %2520 = vmatpush1.bf16.xpose.msra.mxu0 0
    %2521 = vmatprep.subr.bf16.mxu0 0
    %2522 = vmatpush1.bf16.xpose.msra.mxu0 0
    %2523 = vmatprep.mubr.bf16.mxu0 0
    %2524 = vmatmul.mubr.bf16.gmra.mrb[0].mxu0 %v2486
    %v2525 = vpop.f32.mrb[0].mxu0
    %v2526 = vadd.f32 0.0, %v2525
    %v2527 = vpop.f32.mrb[0].mxu0
    %v2528 = vpop.f32.mrb[0].mxu0
    %v2529 = vpop.f32.mrb[0].mxu0
    %2530 = vdwg.mxu0
    %2531 = vrot.lane.b32.xlu0 %v409, 112
    %v2532 = vpop.permute.xlu0 %2531
    %2533 = vrot.lane.b32.xlu0 %v417, 112
    %v2534 = vpop.permute.xlu0 %2533
    %v2536 = vsel %vm419, %v2532, 0
    %v2539 = vsel %vm419, %v2534, 0
    %2541 = vmatprep.subr.bf16.mxu0 0
    %2542 = vmatpush1.bf16.xpose.msra.mxu0 %v2539
    %2543 = vmatprep.subr.bf16.mxu0 0
    %2544 = vmatpush1.bf16.xpose.msra.mxu0 0
    %2545 = vmatprep.subr.bf16.mxu0 0
    %2546 = vmatpush1.bf16.xpose.msra.mxu0 0
    %2547 = vmatprep.subr.bf16.mxu0 0
    %2548 = vmatpush1.bf16.xpose.msra.mxu0 0
    %2549 = vmatprep.subr.bf16.mxu0 0
    %2550 = vmatpush1.bf16.xpose.msra.mxu0 0
    %2551 = vmatprep.subr.bf16.mxu0 0
    %2552 = vmatpush1.bf16.xpose.msra.mxu0 0
    %2553 = vmatprep.subr.bf16.mxu0 0
    %2554 = vmatpush1.bf16.xpose.msra.mxu0 0
    %2555 = vmatprep.subr.bf16.mxu0 0
    %2556 = vmatpush1.bf16.xpose.msra.mxu0 0
    %2557 = vmatprep.subr.bf16.mxu0 0
    %2558 = vmatpush1.bf16.xpose.msra.mxu0 0
    %2559 = vmatprep.subr.bf16.mxu0 0
    %2560 = vmatpush1.bf16.xpose.msra.mxu0 0
    %2561 = vmatprep.subr.bf16.mxu0 0
    %2562 = vmatpush1.bf16.xpose.msra.mxu0 0
    %2563 = vmatprep.subr.bf16.mxu0 0
    %2564 = vmatpush1.bf16.xpose.msra.mxu0 0
    %2565 = vmatprep.subr.bf16.mxu0 0
    %2566 = vmatpush1.bf16.xpose.msra.mxu0 0
    %2567 = vmatprep.subr.bf16.mxu0 0
    %2568 = vmatpush1.bf16.xpose.msra.mxu0 0
    %2569 = vmatprep.subr.bf16.mxu0 0
    %2570 = vmatpush1.bf16.xpose.msra.mxu0 0
    %2571 = vmatprep.subr.bf16.mxu0 0
    %2572 = vmatpush1.bf16.xpose.msra.mxu0 0
    %2573 = vmatprep.mubr.bf16.mxu0 0
    %2574 = vmatmul.mubr.bf16.gmra.mrb[0].mxu0 %v2536
    %v2575 = vpop.f32.mrb[0].mxu0
    %v2576 = vadd.f32 0.0, %v2575
    %v2577 = vpop.f32.mrb[0].mxu0
    %v2578 = vpop.f32.mrb[0].mxu0
    %v2579 = vpop.f32.mrb[0].mxu0
    %2580 = vdwg.mxu0
    %2581 = vrot.lane.b32.xlu0 %v410, 112
    %v2582 = vpop.permute.xlu0 %2581
    %2583 = vrot.lane.b32.xlu0 %v418, 112
    %v2584 = vpop.permute.xlu0 %2583
    %v2586 = vsel %vm419, %v2582, 0
    %v2589 = vsel %vm419, %v2584, 0
    %2591 = vmatprep.subr.bf16.mxu0 0
    %2592 = vmatpush1.bf16.xpose.msra.mxu0 %v2589
    %2593 = vmatprep.subr.bf16.mxu0 0
    %2594 = vmatpush1.bf16.xpose.msra.mxu0 0
    %2595 = vmatprep.subr.bf16.mxu0 0
    %2596 = vmatpush1.bf16.xpose.msra.mxu0 0
    %2597 = vmatprep.subr.bf16.mxu0 0
    %2598 = vmatpush1.bf16.xpose.msra.mxu0 0
    %2599 = vmatprep.subr.bf16.mxu0 0
    %2600 = vmatpush1.bf16.xpose.msra.mxu0 0
    %2601 = vmatprep.subr.bf16.mxu0 0
    %2602 = vmatpush1.bf16.xpose.msra.mxu0 0
    %2603 = vmatprep.subr.bf16.mxu0 0
    %2604 = vmatpush1.bf16.xpose.msra.mxu0 0
    %2605 = vmatprep.subr.bf16.mxu0 0
    %2606 = vmatpush1.bf16.xpose.msra.mxu0 0
    %2607 = vmatprep.subr.bf16.mxu0 0
    %2608 = vmatpush1.bf16.xpose.msra.mxu0 0
    %2609 = vmatprep.subr.bf16.mxu0 0
    %2610 = vmatpush1.bf16.xpose.msra.mxu0 0
    %2611 = vmatprep.subr.bf16.mxu0 0
    %2612 = vmatpush1.bf16.xpose.msra.mxu0 0
    %2613 = vmatprep.subr.bf16.mxu0 0
    %2614 = vmatpush1.bf16.xpose.msra.mxu0 0
    %2615 = vmatprep.subr.bf16.mxu0 0
    %2616 = vmatpush1.bf16.xpose.msra.mxu0 0
    %2617 = vmatprep.subr.bf16.mxu0 0
    %2618 = vmatpush1.bf16.xpose.msra.mxu0 0
    %2619 = vmatprep.subr.bf16.mxu0 0
    %2620 = vmatpush1.bf16.xpose.msra.mxu0 0
    %2621 = vmatprep.subr.bf16.mxu0 0
    %2622 = vmatpush1.bf16.xpose.msra.mxu0 0
    %2623 = vmatprep.mubr.bf16.mxu0 0
    %2624 = vmatmul.mubr.bf16.gmra.mrb[0].mxu0 %v2586
    %v2625 = vpop.f32.mrb[0].mxu0
    %v2626 = vadd.f32 0.0, %v2625
    %v2627 = vpop.f32.mrb[0].mxu0
    %v2628 = vpop.f32.mrb[0].mxu0
    %v2629 = vpop.f32.mrb[0].mxu0
    %2630 = vdwg.mxu0
    %v2631 = vmul.f32 %v2276, 0.35355338
    %v2632 = vmul.f32 %v2326, 0.35355338
    %v2633 = vmul.f32 %v2376, 0.35355338
    %v2634 = vmul.f32 %v2426, 0.35355338
    %v2635 = vmul.f32 %v2476, 0.35355338
    %v2636 = vmul.f32 %v2526, 0.35355338
    %v2637 = vmul.f32 %v2576, 0.35355338
    %v2638 = vmul.f32 %v2626, 0.35355338
    %v2639 = vsel %vm796, %v2631, -inf
    %2640 = vmax.xlane.f32.xlu0 %v2639
    %v2641 = vpop.xlane.xlu0 %2640
    %v2642 = vsel %vm796, %v2632, -inf
    %2643 = vmax.xlane.f32.xlu0 %v2642
    %v2644 = vpop.xlane.xlu0 %2643
    %v2645 = vsel %vm796, %v2633, -inf
    %2646 = vmax.xlane.f32.xlu0 %v2645
    %v2647 = vpop.xlane.xlu0 %2646
    %v2648 = vsel %vm796, %v2634, -inf
    %2649 = vmax.xlane.f32.xlu0 %v2648
    %v2650 = vpop.xlane.xlu0 %2649
    %v2651 = vsel %vm796, %v2635, -inf
    %2652 = vmax.xlane.f32.xlu0 %v2651
    %v2653 = vpop.xlane.xlu0 %2652
    %v2654 = vsel %vm796, %v2636, -inf
    %2655 = vmax.xlane.f32.xlu0 %v2654
    %v2656 = vpop.xlane.xlu0 %2655
    %v2657 = vsel %vm796, %v2637, -inf
    %2658 = vmax.xlane.f32.xlu0 %v2657
    %v2659 = vpop.xlane.xlu0 %2658
    %v2660 = vsel %vm796, %v2638, -inf
    %2661 = vmax.xlane.f32.xlu0 %v2660
    %v2662 = vpop.xlane.xlu0 %2661
    %v2663 = vsub.f32 %v2631, %v2641
    %v2664 = vsub.f32 %v2632, %v2644
    %v2665 = vsub.f32 %v2633, %v2647
    %v2666 = vsub.f32 %v2634, %v2650
    %v2667 = vsub.f32 %v2635, %v2653
    %v2668 = vsub.f32 %v2636, %v2656
    %v2669 = vsub.f32 %v2637, %v2659
    %v2670 = vsub.f32 %v2638, %v2662
    %v2671 = vmul.f32 %v2663, 1.442695
    %v2672 = vpow.pop %v2671
    %v2673 = vmul.f32 %v2664, 1.442695
    %v2674 = vpow.pop %v2673
    %v2675 = vmul.f32 %v2665, 1.442695
    %v2676 = vpow.pop %v2675
    %v2677 = vmul.f32 %v2666, 1.442695
    %v2678 = vpow.pop %v2677
    %v2679 = vmul.f32 %v2667, 1.442695
    %v2680 = vpow.pop %v2679
    %v2681 = vmul.f32 %v2668, 1.442695
    %v2682 = vpow.pop %v2681
    %v2683 = vmul.f32 %v2669, 1.442695
    %v2684 = vpow.pop %v2683
    %v2685 = vmul.f32 %v2670, 1.442695
    %v2686 = vpow.pop %v2685
    %v2687 = vsel %vm796, %v2672, 0.0
    %2688 = vadd.xlane.f32.xlu0 %v2687
    %v2689 = vpop.xlane.xlu0 %2688
    %v2690 = vsel %vm796, %v2674, 0.0
    %2691 = vadd.xlane.f32.xlu0 %v2690
    %v2692 = vpop.xlane.xlu0 %2691
    %v2693 = vsel %vm796, %v2676, 0.0
    %2694 = vadd.xlane.f32.xlu0 %v2693
    %v2695 = vpop.xlane.xlu0 %2694
    %v2696 = vsel %vm796, %v2678, 0.0
    %2697 = vadd.xlane.f32.xlu0 %v2696
    %v2698 = vpop.xlane.xlu0 %2697
    %v2699 = vsel %vm796, %v2680, 0.0
    %2700 = vadd.xlane.f32.xlu0 %v2699
    %v2701 = vpop.xlane.xlu0 %2700
    %v2702 = vsel %vm796, %v2682, 0.0
    %2703 = vadd.xlane.f32.xlu0 %v2702
    %v2704 = vpop.xlane.xlu0 %2703
    %v2705 = vsel %vm796, %v2684, 0.0
    %2706 = vadd.xlane.f32.xlu0 %v2705
    %v2707 = vpop.xlane.xlu0 %2706
    %v2708 = vsel %vm796, %v2686, 0.0
    %2709 = vadd.xlane.f32.xlu0 %v2708
    %v2710 = vpop.xlane.xlu0 %2709
    %v2711 = vrcp.pop %v2689
    %v2712 = vrcp.pop %v2692
    %v2713 = vrcp.pop %v2695
    %v2714 = vrcp.pop %v2698
    %v2715 = vrcp.pop %v2701
    %v2716 = vrcp.pop %v2704
    %v2717 = vrcp.pop %v2707
    %v2718 = vrcp.pop %v2710
    %v2719 = vmul.f32 %v2689, %v2711
    %v2720 = vmul.f32 %v2692, %v2712
    %v2721 = vmul.f32 %v2695, %v2713
    %v2722 = vmul.f32 %v2698, %v2714
    %v2723 = vmul.f32 %v2701, %v2715
    %v2724 = vmul.f32 %v2704, %v2716
    %v2725 = vmul.f32 %v2707, %v2717
    %v2726 = vmul.f32 %v2710, %v2718
    %v2727 = vsub.f32 2.0, %v2719
    %v2728 = vsub.f32 2.0, %v2720
    %v2729 = vsub.f32 2.0, %v2721
    %v2730 = vsub.f32 2.0, %v2722
    %v2731 = vsub.f32 2.0, %v2723
    %v2732 = vsub.f32 2.0, %v2724
    %v2733 = vsub.f32 2.0, %v2725
    %v2734 = vsub.f32 2.0, %v2726
    %v2735 = vmul.f32 %v2711, %v2727
    %v2736 = vmul.f32 %v2712, %v2728
    %v2737 = vmul.f32 %v2713, %v2729
    %v2738 = vmul.f32 %v2714, %v2730
    %v2739 = vmul.f32 %v2715, %v2731
    %v2740 = vmul.f32 %v2716, %v2732
    %v2741 = vmul.f32 %v2717, %v2733
    %v2742 = vmul.f32 %v2718, %v2734
    %v2743 = vmul.f32 %v2672, %v2735
    %v2744 = vmul.f32 %v2674, %v2736
    %v2745 = vmul.f32 %v2676, %v2737
    %v2746 = vmul.f32 %v2678, %v2738
    %v2747 = vmul.f32 %v2680, %v2739
    %v2748 = vmul.f32 %v2682, %v2740
    %v2749 = vmul.f32 %v2684, %v2741
    %v2750 = vmul.f32 %v2686, %v2742
    %v2751 = vpack.c.bf16 %v2743, %v2743
    %v2752 = vpack.c.bf16 %v2744, %v2744
    %v2753 = vpack.c.bf16 %v2745, %v2745
    %v2754 = vpack.c.bf16 %v2746, %v2746
    %v2755 = vpack.c.bf16 %v2747, %v2747
    %v2756 = vpack.c.bf16 %v2748, %v2748
    %v2757 = vpack.c.bf16 %v2749, %v2749
    %v2758 = vpack.c.bf16 %v2750, %v2750
    %2759 = vrot.lane.b32.xlu0 %v411, 80
    %v2760 = vpop.permute.xlu0 %2759
    %v2762 = vsel %vm920, %v2751, 0
    %v2765 = vsel %vm924, %v2760, 0
    %2767 = vmatprep.subr.bf16.mxu0 0
    %2768 = vmatpush1.bf16.msra.mxu0 %v2765
    %2769 = vmatprep.subr.bf16.mxu0 0
    %2770 = vmatpush1.bf16.msra.mxu0 0
    %2771 = vmatprep.subr.bf16.mxu0 0
    %2772 = vmatpush1.bf16.msra.mxu0 0
    %2773 = vmatprep.subr.bf16.mxu0 0
    %2774 = vmatpush1.bf16.msra.mxu0 0
    %2775 = vmatprep.subr.bf16.mxu0 0
    %2776 = vmatpush1.bf16.msra.mxu0 0
    %2777 = vmatprep.subr.bf16.mxu0 0
    %2778 = vmatpush1.bf16.msra.mxu0 0
    %2779 = vmatprep.subr.bf16.mxu0 0
    %2780 = vmatpush1.bf16.msra.mxu0 0
    %2781 = vmatprep.subr.bf16.mxu0 0
    %2782 = vmatpush1.bf16.msra.mxu0 0
    %2783 = vmatprep.subr.bf16.mxu0 0
    %2784 = vmatpush1.bf16.msra.mxu0 0
    %2785 = vmatprep.subr.bf16.mxu0 0
    %2786 = vmatpush1.bf16.msra.mxu0 0
    %2787 = vmatprep.subr.bf16.mxu0 0
    %2788 = vmatpush1.bf16.msra.mxu0 0
    %2789 = vmatprep.subr.bf16.mxu0 0
    %2790 = vmatpush1.bf16.msra.mxu0 0
    %2791 = vmatprep.subr.bf16.mxu0 0
    %2792 = vmatpush1.bf16.msra.mxu0 0
    %2793 = vmatprep.subr.bf16.mxu0 0
    %2794 = vmatpush1.bf16.msra.mxu0 0
    %2795 = vmatprep.subr.bf16.mxu0 0
    %2796 = vmatpush1.bf16.msra.mxu0 0
    %2797 = vmatprep.subr.bf16.mxu0 0
    %2798 = vmatpush1.bf16.msra.mxu0 0
    %2799 = vmatprep.mubr.bf16.mxu0 0
    %2800 = vmatmul.mubr.bf16.gmra.mrb[0].mxu0 %v2762
    %v2801 = vpop.f32.mrb[0].mxu0
    %v2802 = vadd.f32 0.0, %v2801
    %v2803 = vpop.f32.mrb[0].mxu0
    %v2804 = vpop.f32.mrb[0].mxu0
    %v2805 = vpop.f32.mrb[0].mxu0
    %2806 = vdwg.mxu0
    %2807 = vrot.lane.b32.xlu0 %v412, 80
    %v2808 = vpop.permute.xlu0 %2807
    %v2810 = vsel %vm920, %v2752, 0
    %v2813 = vsel %vm924, %v2808, 0
    %2815 = vmatprep.subr.bf16.mxu0 0
    %2816 = vmatpush1.bf16.msra.mxu0 %v2813
    %2817 = vmatprep.subr.bf16.mxu0 0
    %2818 = vmatpush1.bf16.msra.mxu0 0
    %2819 = vmatprep.subr.bf16.mxu0 0
    %2820 = vmatpush1.bf16.msra.mxu0 0
    %2821 = vmatprep.subr.bf16.mxu0 0
    %2822 = vmatpush1.bf16.msra.mxu0 0
    %2823 = vmatprep.subr.bf16.mxu0 0
    %2824 = vmatpush1.bf16.msra.mxu0 0
    %2825 = vmatprep.subr.bf16.mxu0 0
    %2826 = vmatpush1.bf16.msra.mxu0 0
    %2827 = vmatprep.subr.bf16.mxu0 0
    %2828 = vmatpush1.bf16.msra.mxu0 0
    %2829 = vmatprep.subr.bf16.mxu0 0
    %2830 = vmatpush1.bf16.msra.mxu0 0
    %2831 = vmatprep.subr.bf16.mxu0 0
    %2832 = vmatpush1.bf16.msra.mxu0 0
    %2833 = vmatprep.subr.bf16.mxu0 0
    %2834 = vmatpush1.bf16.msra.mxu0 0
    %2835 = vmatprep.subr.bf16.mxu0 0
    %2836 = vmatpush1.bf16.msra.mxu0 0
    %2837 = vmatprep.subr.bf16.mxu0 0
    %2838 = vmatpush1.bf16.msra.mxu0 0
    %2839 = vmatprep.subr.bf16.mxu0 0
    %2840 = vmatpush1.bf16.msra.mxu0 0
    %2841 = vmatprep.subr.bf16.mxu0 0
    %2842 = vmatpush1.bf16.msra.mxu0 0
    %2843 = vmatprep.subr.bf16.mxu0 0
    %2844 = vmatpush1.bf16.msra.mxu0 0
    %2845 = vmatprep.subr.bf16.mxu0 0
    %2846 = vmatpush1.bf16.msra.mxu0 0
    %2847 = vmatprep.mubr.bf16.mxu0 0
    %2848 = vmatmul.mubr.bf16.gmra.mrb[0].mxu0 %v2810
    %v2849 = vpop.f32.mrb[0].mxu0
    %v2850 = vadd.f32 0.0, %v2849
    %v2851 = vpop.f32.mrb[0].mxu0
    %v2852 = vpop.f32.mrb[0].mxu0
    %v2853 = vpop.f32.mrb[0].mxu0
    %2854 = vdwg.mxu0
    %2855 = vrot.lane.b32.xlu0 %v413, 80
    %v2856 = vpop.permute.xlu0 %2855
    %v2858 = vsel %vm920, %v2753, 0
    %v2861 = vsel %vm924, %v2856, 0
    %2863 = vmatprep.subr.bf16.mxu0 0
    %2864 = vmatpush1.bf16.msra.mxu0 %v2861
    %2865 = vmatprep.subr.bf16.mxu0 0
    %2866 = vmatpush1.bf16.msra.mxu0 0
    %2867 = vmatprep.subr.bf16.mxu0 0
    %2868 = vmatpush1.bf16.msra.mxu0 0
    %2869 = vmatprep.subr.bf16.mxu0 0
    %2870 = vmatpush1.bf16.msra.mxu0 0
    %2871 = vmatprep.subr.bf16.mxu0 0
    %2872 = vmatpush1.bf16.msra.mxu0 0
    %2873 = vmatprep.subr.bf16.mxu0 0
    %2874 = vmatpush1.bf16.msra.mxu0 0
    %2875 = vmatprep.subr.bf16.mxu0 0
    %2876 = vmatpush1.bf16.msra.mxu0 0
    %2877 = vmatprep.subr.bf16.mxu0 0
    %2878 = vmatpush1.bf16.msra.mxu0 0
    %2879 = vmatprep.subr.bf16.mxu0 0
    %2880 = vmatpush1.bf16.msra.mxu0 0
    %2881 = vmatprep.subr.bf16.mxu0 0
    %2882 = vmatpush1.bf16.msra.mxu0 0
    %2883 = vmatprep.subr.bf16.mxu0 0
    %2884 = vmatpush1.bf16.msra.mxu0 0
    %2885 = vmatprep.subr.bf16.mxu0 0
    %2886 = vmatpush1.bf16.msra.mxu0 0
    %2887 = vmatprep.subr.bf16.mxu0 0
    %2888 = vmatpush1.bf16.msra.mxu0 0
    %2889 = vmatprep.subr.bf16.mxu0 0
    %2890 = vmatpush1.bf16.msra.mxu0 0
    %2891 = vmatprep.subr.bf16.mxu0 0
    %2892 = vmatpush1.bf16.msra.mxu0 0
    %2893 = vmatprep.subr.bf16.mxu0 0
    %2894 = vmatpush1.bf16.msra.mxu0 0
    %2895 = vmatprep.mubr.bf16.mxu0 0
    %2896 = vmatmul.mubr.bf16.gmra.mrb[0].mxu0 %v2858
    %v2897 = vpop.f32.mrb[0].mxu0
    %v2898 = vadd.f32 0.0, %v2897
    %v2899 = vpop.f32.mrb[0].mxu0
    %v2900 = vpop.f32.mrb[0].mxu0
    %v2901 = vpop.f32.mrb[0].mxu0
    %2902 = vdwg.mxu0
    %2903 = vrot.lane.b32.xlu0 %v414, 80
    %v2904 = vpop.permute.xlu0 %2903
    %v2906 = vsel %vm920, %v2754, 0
    %v2909 = vsel %vm924, %v2904, 0
    %2911 = vmatprep.subr.bf16.mxu0 0
    %2912 = vmatpush1.bf16.msra.mxu0 %v2909
    %2913 = vmatprep.subr.bf16.mxu0 0
    %2914 = vmatpush1.bf16.msra.mxu0 0
    %2915 = vmatprep.subr.bf16.mxu0 0
    %2916 = vmatpush1.bf16.msra.mxu0 0
    %2917 = vmatprep.subr.bf16.mxu0 0
    %2918 = vmatpush1.bf16.msra.mxu0 0
    %2919 = vmatprep.subr.bf16.mxu0 0
    %2920 = vmatpush1.bf16.msra.mxu0 0
    %2921 = vmatprep.subr.bf16.mxu0 0
    %2922 = vmatpush1.bf16.msra.mxu0 0
    %2923 = vmatprep.subr.bf16.mxu0 0
    %2924 = vmatpush1.bf16.msra.mxu0 0
    %2925 = vmatprep.subr.bf16.mxu0 0
    %2926 = vmatpush1.bf16.msra.mxu0 0
    %2927 = vmatprep.subr.bf16.mxu0 0
    %2928 = vmatpush1.bf16.msra.mxu0 0
    %2929 = vmatprep.subr.bf16.mxu0 0
    %2930 = vmatpush1.bf16.msra.mxu0 0
    %2931 = vmatprep.subr.bf16.mxu0 0
    %2932 = vmatpush1.bf16.msra.mxu0 0
    %2933 = vmatprep.subr.bf16.mxu0 0
    %2934 = vmatpush1.bf16.msra.mxu0 0
    %2935 = vmatprep.subr.bf16.mxu0 0
    %2936 = vmatpush1.bf16.msra.mxu0 0
    %2937 = vmatprep.subr.bf16.mxu0 0
    %2938 = vmatpush1.bf16.msra.mxu0 0
    %2939 = vmatprep.subr.bf16.mxu0 0
    %2940 = vmatpush1.bf16.msra.mxu0 0
    %2941 = vmatprep.subr.bf16.mxu0 0
    %2942 = vmatpush1.bf16.msra.mxu0 0
    %2943 = vmatprep.mubr.bf16.mxu0 0
    %2944 = vmatmul.mubr.bf16.gmra.mrb[0].mxu0 %v2906
    %v2945 = vpop.f32.mrb[0].mxu0
    %v2946 = vadd.f32 0.0, %v2945
    %v2947 = vpop.f32.mrb[0].mxu0
    %v2948 = vpop.f32.mrb[0].mxu0
    %v2949 = vpop.f32.mrb[0].mxu0
    %2950 = vdwg.mxu0
    %2951 = vrot.lane.b32.xlu0 %v415, 80
    %v2952 = vpop.permute.xlu0 %2951
    %v2954 = vsel %vm920, %v2755, 0
    %v2957 = vsel %vm924, %v2952, 0
    %2959 = vmatprep.subr.bf16.mxu0 0
    %2960 = vmatpush1.bf16.msra.mxu0 %v2957
    %2961 = vmatprep.subr.bf16.mxu0 0
    %2962 = vmatpush1.bf16.msra.mxu0 0
    %2963 = vmatprep.subr.bf16.mxu0 0
    %2964 = vmatpush1.bf16.msra.mxu0 0
    %2965 = vmatprep.subr.bf16.mxu0 0
    %2966 = vmatpush1.bf16.msra.mxu0 0
    %2967 = vmatprep.subr.bf16.mxu0 0
    %2968 = vmatpush1.bf16.msra.mxu0 0
    %2969 = vmatprep.subr.bf16.mxu0 0
    %2970 = vmatpush1.bf16.msra.mxu0 0
    %2971 = vmatprep.subr.bf16.mxu0 0
    %2972 = vmatpush1.bf16.msra.mxu0 0
    %2973 = vmatprep.subr.bf16.mxu0 0
    %2974 = vmatpush1.bf16.msra.mxu0 0
    %2975 = vmatprep.subr.bf16.mxu0 0
    %2976 = vmatpush1.bf16.msra.mxu0 0
    %2977 = vmatprep.subr.bf16.mxu0 0
    %2978 = vmatpush1.bf16.msra.mxu0 0
    %2979 = vmatprep.subr.bf16.mxu0 0
    %2980 = vmatpush1.bf16.msra.mxu0 0
    %2981 = vmatprep.subr.bf16.mxu0 0
    %2982 = vmatpush1.bf16.msra.mxu0 0
    %2983 = vmatprep.subr.bf16.mxu0 0
    %2984 = vmatpush1.bf16.msra.mxu0 0
    %2985 = vmatprep.subr.bf16.mxu0 0
    %2986 = vmatpush1.bf16.msra.mxu0 0
    %2987 = vmatprep.subr.bf16.mxu0 0
    %2988 = vmatpush1.bf16.msra.mxu0 0
    %2989 = vmatprep.subr.bf16.mxu0 0
    %2990 = vmatpush1.bf16.msra.mxu0 0
    %2991 = vmatprep.mubr.bf16.mxu0 0
    %2992 = vmatmul.mubr.bf16.gmra.mrb[0].mxu0 %v2954
    %v2993 = vpop.f32.mrb[0].mxu0
    %v2994 = vadd.f32 0.0, %v2993
    %v2995 = vpop.f32.mrb[0].mxu0
    %v2996 = vpop.f32.mrb[0].mxu0
    %v2997 = vpop.f32.mrb[0].mxu0
    %2998 = vdwg.mxu0
    %2999 = vrot.lane.b32.xlu0 %v416, 80
    %v3000 = vpop.permute.xlu0 %2999
    %v3002 = vsel %vm920, %v2756, 0
    %v3005 = vsel %vm924, %v3000, 0
    %3007 = vmatprep.subr.bf16.mxu0 0
    %3008 = vmatpush1.bf16.msra.mxu0 %v3005
    %3009 = vmatprep.subr.bf16.mxu0 0
    %3010 = vmatpush1.bf16.msra.mxu0 0
    %3011 = vmatprep.subr.bf16.mxu0 0
    %3012 = vmatpush1.bf16.msra.mxu0 0
    %3013 = vmatprep.subr.bf16.mxu0 0
    %3014 = vmatpush1.bf16.msra.mxu0 0
    %3015 = vmatprep.subr.bf16.mxu0 0
    %3016 = vmatpush1.bf16.msra.mxu0 0
    %3017 = vmatprep.subr.bf16.mxu0 0
    %3018 = vmatpush1.bf16.msra.mxu0 0
    %3019 = vmatprep.subr.bf16.mxu0 0
    %3020 = vmatpush1.bf16.msra.mxu0 0
    %3021 = vmatprep.subr.bf16.mxu0 0
    %3022 = vmatpush1.bf16.msra.mxu0 0
    %3023 = vmatprep.subr.bf16.mxu0 0
    %3024 = vmatpush1.bf16.msra.mxu0 0
    %3025 = vmatprep.subr.bf16.mxu0 0
    %3026 = vmatpush1.bf16.msra.mxu0 0
    %3027 = vmatprep.subr.bf16.mxu0 0
    %3028 = vmatpush1.bf16.msra.mxu0 0
    %3029 = vmatprep.subr.bf16.mxu0 0
    %3030 = vmatpush1.bf16.msra.mxu0 0
    %3031 = vmatprep.subr.bf16.mxu0 0
    %3032 = vmatpush1.bf16.msra.mxu0 0
    %3033 = vmatprep.subr.bf16.mxu0 0
    %3034 = vmatpush1.bf16.msra.mxu0 0
    %3035 = vmatprep.subr.bf16.mxu0 0
    %3036 = vmatpush1.bf16.msra.mxu0 0
    %3037 = vmatprep.subr.bf16.mxu0 0
    %3038 = vmatpush1.bf16.msra.mxu0 0
    %3039 = vmatprep.mubr.bf16.mxu0 0
    %3040 = vmatmul.mubr.bf16.gmra.mrb[0].mxu0 %v3002
    %v3041 = vpop.f32.mrb[0].mxu0
    %v3042 = vadd.f32 0.0, %v3041
    %v3043 = vpop.f32.mrb[0].mxu0
    %v3044 = vpop.f32.mrb[0].mxu0
    %v3045 = vpop.f32.mrb[0].mxu0
    %3046 = vdwg.mxu0
    %3047 = vrot.lane.b32.xlu0 %v417, 80
    %v3048 = vpop.permute.xlu0 %3047
    %v3050 = vsel %vm920, %v2757, 0
    %v3053 = vsel %vm924, %v3048, 0
    %3055 = vmatprep.subr.bf16.mxu0 0
    %3056 = vmatpush1.bf16.msra.mxu0 %v3053
    %3057 = vmatprep.subr.bf16.mxu0 0
    %3058 = vmatpush1.bf16.msra.mxu0 0
    %3059 = vmatprep.subr.bf16.mxu0 0
    %3060 = vmatpush1.bf16.msra.mxu0 0
    %3061 = vmatprep.subr.bf16.mxu0 0
    %3062 = vmatpush1.bf16.msra.mxu0 0
    %3063 = vmatprep.subr.bf16.mxu0 0
    %3064 = vmatpush1.bf16.msra.mxu0 0
    %3065 = vmatprep.subr.bf16.mxu0 0
    %3066 = vmatpush1.bf16.msra.mxu0 0
    %3067 = vmatprep.subr.bf16.mxu0 0
    %3068 = vmatpush1.bf16.msra.mxu0 0
    %3069 = vmatprep.subr.bf16.mxu0 0
    %3070 = vmatpush1.bf16.msra.mxu0 0
    %3071 = vmatprep.subr.bf16.mxu0 0
    %3072 = vmatpush1.bf16.msra.mxu0 0
    %3073 = vmatprep.subr.bf16.mxu0 0
    %3074 = vmatpush1.bf16.msra.mxu0 0
    %3075 = vmatprep.subr.bf16.mxu0 0
    %3076 = vmatpush1.bf16.msra.mxu0 0
    %3077 = vmatprep.subr.bf16.mxu0 0
    %3078 = vmatpush1.bf16.msra.mxu0 0
    %3079 = vmatprep.subr.bf16.mxu0 0
    %3080 = vmatpush1.bf16.msra.mxu0 0
    %3081 = vmatprep.subr.bf16.mxu0 0
    %3082 = vmatpush1.bf16.msra.mxu0 0
    %3083 = vmatprep.subr.bf16.mxu0 0
    %3084 = vmatpush1.bf16.msra.mxu0 0
    %3085 = vmatprep.subr.bf16.mxu0 0
    %3086 = vmatpush1.bf16.msra.mxu0 0
    %3087 = vmatprep.mubr.bf16.mxu0 0
    %3088 = vmatmul.mubr.bf16.gmra.mrb[0].mxu0 %v3050
    %v3089 = vpop.f32.mrb[0].mxu0
    %v3090 = vadd.f32 0.0, %v3089
    %v3091 = vpop.f32.mrb[0].mxu0
    %v3092 = vpop.f32.mrb[0].mxu0
    %v3093 = vpop.f32.mrb[0].mxu0
    %3094 = vdwg.mxu0
    %3095 = vrot.lane.b32.xlu0 %v418, 80
    %v3096 = vpop.permute.xlu0 %3095
    %v3098 = vsel %vm920, %v2758, 0
    %v3101 = vsel %vm924, %v3096, 0
    %3103 = vmatprep.subr.bf16.mxu0 0
    %3104 = vmatpush1.bf16.msra.mxu0 %v3101
    %3105 = vmatprep.subr.bf16.mxu0 0
    %3106 = vmatpush1.bf16.msra.mxu0 0
    %3107 = vmatprep.subr.bf16.mxu0 0
    %3108 = vmatpush1.bf16.msra.mxu0 0
    %3109 = vmatprep.subr.bf16.mxu0 0
    %3110 = vmatpush1.bf16.msra.mxu0 0
    %3111 = vmatprep.subr.bf16.mxu0 0
    %3112 = vmatpush1.bf16.msra.mxu0 0
    %3113 = vmatprep.subr.bf16.mxu0 0
    %3114 = vmatpush1.bf16.msra.mxu0 0
    %3115 = vmatprep.subr.bf16.mxu0 0
    %3116 = vmatpush1.bf16.msra.mxu0 0
    %3117 = vmatprep.subr.bf16.mxu0 0
    %3118 = vmatpush1.bf16.msra.mxu0 0
    %3119 = vmatprep.subr.bf16.mxu0 0
    %3120 = vmatpush1.bf16.msra.mxu0 0
    %3121 = vmatprep.subr.bf16.mxu0 0
    %3122 = vmatpush1.bf16.msra.mxu0 0
    %3123 = vmatprep.subr.bf16.mxu0 0
    %3124 = vmatpush1.bf16.msra.mxu0 0
    %3125 = vmatprep.subr.bf16.mxu0 0
    %3126 = vmatpush1.bf16.msra.mxu0 0
    %3127 = vmatprep.subr.bf16.mxu0 0
    %3128 = vmatpush1.bf16.msra.mxu0 0
    %3129 = vmatprep.subr.bf16.mxu0 0
    %3130 = vmatpush1.bf16.msra.mxu0 0
    %3131 = vmatprep.subr.bf16.mxu0 0
    %3132 = vmatpush1.bf16.msra.mxu0 0
    %3133 = vmatprep.subr.bf16.mxu0 0
    %3134 = vmatpush1.bf16.msra.mxu0 0
    %3135 = vmatprep.mubr.bf16.mxu0 0
    %3136 = vmatmul.mubr.bf16.gmra.mrb[0].mxu0 %v3098
    %v3137 = vpop.f32.mrb[0].mxu0
    %v3138 = vadd.f32 0.0, %v3137
    %v3139 = vpop.f32.mrb[0].mxu0
    %v3140 = vpop.f32.mrb[0].mxu0
    %v3141 = vpop.f32.mrb[0].mxu0
    %3142 = vdwg.mxu0
    %3143 = vrot.lane.b32.xlu0 %v403, 104
    %v3144 = vpop.permute.xlu0 %3143
    %3145 = vrot.lane.b32.xlu0 %v411, 104
    %v3146 = vpop.permute.xlu0 %3145
    %v3148 = vsel %vm419, %v3144, 0
    %v3151 = vsel %vm419, %v3146, 0
    %3153 = vmatprep.subr.bf16.mxu0 0
    %3154 = vmatpush1.bf16.xpose.msra.mxu0 %v3151
    %3155 = vmatprep.subr.bf16.mxu0 0
    %3156 = vmatpush1.bf16.xpose.msra.mxu0 0
    %3157 = vmatprep.subr.bf16.mxu0 0
    %3158 = vmatpush1.bf16.xpose.msra.mxu0 0
    %3159 = vmatprep.subr.bf16.mxu0 0
    %3160 = vmatpush1.bf16.xpose.msra.mxu0 0
    %3161 = vmatprep.subr.bf16.mxu0 0
    %3162 = vmatpush1.bf16.xpose.msra.mxu0 0
    %3163 = vmatprep.subr.bf16.mxu0 0
    %3164 = vmatpush1.bf16.xpose.msra.mxu0 0
    %3165 = vmatprep.subr.bf16.mxu0 0
    %3166 = vmatpush1.bf16.xpose.msra.mxu0 0
    %3167 = vmatprep.subr.bf16.mxu0 0
    %3168 = vmatpush1.bf16.xpose.msra.mxu0 0
    %3169 = vmatprep.subr.bf16.mxu0 0
    %3170 = vmatpush1.bf16.xpose.msra.mxu0 0
    %3171 = vmatprep.subr.bf16.mxu0 0
    %3172 = vmatpush1.bf16.xpose.msra.mxu0 0
    %3173 = vmatprep.subr.bf16.mxu0 0
    %3174 = vmatpush1.bf16.xpose.msra.mxu0 0
    %3175 = vmatprep.subr.bf16.mxu0 0
    %3176 = vmatpush1.bf16.xpose.msra.mxu0 0
    %3177 = vmatprep.subr.bf16.mxu0 0
    %3178 = vmatpush1.bf16.xpose.msra.mxu0 0
    %3179 = vmatprep.subr.bf16.mxu0 0
    %3180 = vmatpush1.bf16.xpose.msra.mxu0 0
    %3181 = vmatprep.subr.bf16.mxu0 0
    %3182 = vmatpush1.bf16.xpose.msra.mxu0 0
    %3183 = vmatprep.subr.bf16.mxu0 0
    %3184 = vmatpush1.bf16.xpose.msra.mxu0 0
    %3185 = vmatprep.mubr.bf16.mxu0 0
    %3186 = vmatmul.mubr.bf16.gmra.mrb[0].mxu0 %v3148
    %v3187 = vpop.f32.mrb[0].mxu0
    %v3188 = vadd.f32 0.0, %v3187
    %v3189 = vpop.f32.mrb[0].mxu0
    %v3190 = vpop.f32.mrb[0].mxu0
    %v3191 = vpop.f32.mrb[0].mxu0
    %3192 = vdwg.mxu0
    %3193 = vrot.lane.b32.xlu0 %v404, 104
    %v3194 = vpop.permute.xlu0 %3193
    %3195 = vrot.lane.b32.xlu0 %v412, 104
    %v3196 = vpop.permute.xlu0 %3195
    %v3198 = vsel %vm419, %v3194, 0
    %v3201 = vsel %vm419, %v3196, 0
    %3203 = vmatprep.subr.bf16.mxu0 0
    %3204 = vmatpush1.bf16.xpose.msra.mxu0 %v3201
    %3205 = vmatprep.subr.bf16.mxu0 0
    %3206 = vmatpush1.bf16.xpose.msra.mxu0 0
    %3207 = vmatprep.subr.bf16.mxu0 0
    %3208 = vmatpush1.bf16.xpose.msra.mxu0 0
    %3209 = vmatprep.subr.bf16.mxu0 0
    %3210 = vmatpush1.bf16.xpose.msra.mxu0 0
    %3211 = vmatprep.subr.bf16.mxu0 0
    %3212 = vmatpush1.bf16.xpose.msra.mxu0 0
    %3213 = vmatprep.subr.bf16.mxu0 0
    %3214 = vmatpush1.bf16.xpose.msra.mxu0 0
    %3215 = vmatprep.subr.bf16.mxu0 0
    %3216 = vmatpush1.bf16.xpose.msra.mxu0 0
    %3217 = vmatprep.subr.bf16.mxu0 0
    %3218 = vmatpush1.bf16.xpose.msra.mxu0 0
    %3219 = vmatprep.subr.bf16.mxu0 0
    %3220 = vmatpush1.bf16.xpose.msra.mxu0 0
    %3221 = vmatprep.subr.bf16.mxu0 0
    %3222 = vmatpush1.bf16.xpose.msra.mxu0 0
    %3223 = vmatprep.subr.bf16.mxu0 0
    %3224 = vmatpush1.bf16.xpose.msra.mxu0 0
    %3225 = vmatprep.subr.bf16.mxu0 0
    %3226 = vmatpush1.bf16.xpose.msra.mxu0 0
    %3227 = vmatprep.subr.bf16.mxu0 0
    %3228 = vmatpush1.bf16.xpose.msra.mxu0 0
    %3229 = vmatprep.subr.bf16.mxu0 0
    %3230 = vmatpush1.bf16.xpose.msra.mxu0 0
    %3231 = vmatprep.subr.bf16.mxu0 0
    %3232 = vmatpush1.bf16.xpose.msra.mxu0 0
    %3233 = vmatprep.subr.bf16.mxu0 0
    %3234 = vmatpush1.bf16.xpose.msra.mxu0 0
    %3235 = vmatprep.mubr.bf16.mxu0 0
    %3236 = vmatmul.mubr.bf16.gmra.mrb[0].mxu0 %v3198
    %v3237 = vpop.f32.mrb[0].mxu0
    %v3238 = vadd.f32 0.0, %v3237
    %v3239 = vpop.f32.mrb[0].mxu0
    %v3240 = vpop.f32.mrb[0].mxu0
    %v3241 = vpop.f32.mrb[0].mxu0
    %3242 = vdwg.mxu0
    %3243 = vrot.lane.b32.xlu0 %v405, 104
    %v3244 = vpop.permute.xlu0 %3243
    %3245 = vrot.lane.b32.xlu0 %v413, 104
    %v3246 = vpop.permute.xlu0 %3245
    %v3248 = vsel %vm419, %v3244, 0
    %v3251 = vsel %vm419, %v3246, 0
    %3253 = vmatprep.subr.bf16.mxu0 0
    %3254 = vmatpush1.bf16.xpose.msra.mxu0 %v3251
    %3255 = vmatprep.subr.bf16.mxu0 0
    %3256 = vmatpush1.bf16.xpose.msra.mxu0 0
    %3257 = vmatprep.subr.bf16.mxu0 0
    %3258 = vmatpush1.bf16.xpose.msra.mxu0 0
    %3259 = vmatprep.subr.bf16.mxu0 0
    %3260 = vmatpush1.bf16.xpose.msra.mxu0 0
    %3261 = vmatprep.subr.bf16.mxu0 0
    %3262 = vmatpush1.bf16.xpose.msra.mxu0 0
    %3263 = vmatprep.subr.bf16.mxu0 0
    %3264 = vmatpush1.bf16.xpose.msra.mxu0 0
    %3265 = vmatprep.subr.bf16.mxu0 0
    %3266 = vmatpush1.bf16.xpose.msra.mxu0 0
    %3267 = vmatprep.subr.bf16.mxu0 0
    %3268 = vmatpush1.bf16.xpose.msra.mxu0 0
    %3269 = vmatprep.subr.bf16.mxu0 0
    %3270 = vmatpush1.bf16.xpose.msra.mxu0 0
    %3271 = vmatprep.subr.bf16.mxu0 0
    %3272 = vmatpush1.bf16.xpose.msra.mxu0 0
    %3273 = vmatprep.subr.bf16.mxu0 0
    %3274 = vmatpush1.bf16.xpose.msra.mxu0 0
    %3275 = vmatprep.subr.bf16.mxu0 0
    %3276 = vmatpush1.bf16.xpose.msra.mxu0 0
    %3277 = vmatprep.subr.bf16.mxu0 0
    %3278 = vmatpush1.bf16.xpose.msra.mxu0 0
    %3279 = vmatprep.subr.bf16.mxu0 0
    %3280 = vmatpush1.bf16.xpose.msra.mxu0 0
    %3281 = vmatprep.subr.bf16.mxu0 0
    %3282 = vmatpush1.bf16.xpose.msra.mxu0 0
    %3283 = vmatprep.subr.bf16.mxu0 0
    %3284 = vmatpush1.bf16.xpose.msra.mxu0 0
    %3285 = vmatprep.mubr.bf16.mxu0 0
    %3286 = vmatmul.mubr.bf16.gmra.mrb[0].mxu0 %v3248
    %v3287 = vpop.f32.mrb[0].mxu0
    %v3288 = vadd.f32 0.0, %v3287
    %v3289 = vpop.f32.mrb[0].mxu0
    %v3290 = vpop.f32.mrb[0].mxu0
    %v3291 = vpop.f32.mrb[0].mxu0
    %3292 = vdwg.mxu0
    %3293 = vrot.lane.b32.xlu0 %v406, 104
    %v3294 = vpop.permute.xlu0 %3293
    %3295 = vrot.lane.b32.xlu0 %v414, 104
    %v3296 = vpop.permute.xlu0 %3295
    %v3298 = vsel %vm419, %v3294, 0
    %v3301 = vsel %vm419, %v3296, 0
    %3303 = vmatprep.subr.bf16.mxu0 0
    %3304 = vmatpush1.bf16.xpose.msra.mxu0 %v3301
    %3305 = vmatprep.subr.bf16.mxu0 0
    %3306 = vmatpush1.bf16.xpose.msra.mxu0 0
    %3307 = vmatprep.subr.bf16.mxu0 0
    %3308 = vmatpush1.bf16.xpose.msra.mxu0 0
    %3309 = vmatprep.subr.bf16.mxu0 0
    %3310 = vmatpush1.bf16.xpose.msra.mxu0 0
    %3311 = vmatprep.subr.bf16.mxu0 0
    %3312 = vmatpush1.bf16.xpose.msra.mxu0 0
    %3313 = vmatprep.subr.bf16.mxu0 0
    %3314 = vmatpush1.bf16.xpose.msra.mxu0 0
    %3315 = vmatprep.subr.bf16.mxu0 0
    %3316 = vmatpush1.bf16.xpose.msra.mxu0 0
    %3317 = vmatprep.subr.bf16.mxu0 0
    %3318 = vmatpush1.bf16.xpose.msra.mxu0 0
    %3319 = vmatprep.subr.bf16.mxu0 0
    %3320 = vmatpush1.bf16.xpose.msra.mxu0 0
    %3321 = vmatprep.subr.bf16.mxu0 0
    %3322 = vmatpush1.bf16.xpose.msra.mxu0 0
    %3323 = vmatprep.subr.bf16.mxu0 0
    %3324 = vmatpush1.bf16.xpose.msra.mxu0 0
    %3325 = vmatprep.subr.bf16.mxu0 0
    %3326 = vmatpush1.bf16.xpose.msra.mxu0 0
    %3327 = vmatprep.subr.bf16.mxu0 0
    %3328 = vmatpush1.bf16.xpose.msra.mxu0 0
    %3329 = vmatprep.subr.bf16.mxu0 0
    %3330 = vmatpush1.bf16.xpose.msra.mxu0 0
    %3331 = vmatprep.subr.bf16.mxu0 0
    %3332 = vmatpush1.bf16.xpose.msra.mxu0 0
    %3333 = vmatprep.subr.bf16.mxu0 0
    %3334 = vmatpush1.bf16.xpose.msra.mxu0 0
    %3335 = vmatprep.mubr.bf16.mxu0 0
    %3336 = vmatmul.mubr.bf16.gmra.mrb[0].mxu0 %v3298
    %v3337 = vpop.f32.mrb[0].mxu0
    %v3338 = vadd.f32 0.0, %v3337
    %v3339 = vpop.f32.mrb[0].mxu0
    %v3340 = vpop.f32.mrb[0].mxu0
    %v3341 = vpop.f32.mrb[0].mxu0
    %3342 = vdwg.mxu0
    %3343 = vrot.lane.b32.xlu0 %v407, 104
    %v3344 = vpop.permute.xlu0 %3343
    %3345 = vrot.lane.b32.xlu0 %v415, 104
    %v3346 = vpop.permute.xlu0 %3345
    %v3348 = vsel %vm419, %v3344, 0
    %v3351 = vsel %vm419, %v3346, 0
    %3353 = vmatprep.subr.bf16.mxu0 0
    %3354 = vmatpush1.bf16.xpose.msra.mxu0 %v3351
    %3355 = vmatprep.subr.bf16.mxu0 0
    %3356 = vmatpush1.bf16.xpose.msra.mxu0 0
    %3357 = vmatprep.subr.bf16.mxu0 0
    %3358 = vmatpush1.bf16.xpose.msra.mxu0 0
    %3359 = vmatprep.subr.bf16.mxu0 0
    %3360 = vmatpush1.bf16.xpose.msra.mxu0 0
    %3361 = vmatprep.subr.bf16.mxu0 0
    %3362 = vmatpush1.bf16.xpose.msra.mxu0 0
    %3363 = vmatprep.subr.bf16.mxu0 0
    %3364 = vmatpush1.bf16.xpose.msra.mxu0 0
    %3365 = vmatprep.subr.bf16.mxu0 0
    %3366 = vmatpush1.bf16.xpose.msra.mxu0 0
    %3367 = vmatprep.subr.bf16.mxu0 0
    %3368 = vmatpush1.bf16.xpose.msra.mxu0 0
    %3369 = vmatprep.subr.bf16.mxu0 0
    %3370 = vmatpush1.bf16.xpose.msra.mxu0 0
    %3371 = vmatprep.subr.bf16.mxu0 0
    %3372 = vmatpush1.bf16.xpose.msra.mxu0 0
    %3373 = vmatprep.subr.bf16.mxu0 0
    %3374 = vmatpush1.bf16.xpose.msra.mxu0 0
    %3375 = vmatprep.subr.bf16.mxu0 0
    %3376 = vmatpush1.bf16.xpose.msra.mxu0 0
    %3377 = vmatprep.subr.bf16.mxu0 0
    %3378 = vmatpush1.bf16.xpose.msra.mxu0 0
    %3379 = vmatprep.subr.bf16.mxu0 0
    %3380 = vmatpush1.bf16.xpose.msra.mxu0 0
    %3381 = vmatprep.subr.bf16.mxu0 0
    %3382 = vmatpush1.bf16.xpose.msra.mxu0 0
    %3383 = vmatprep.subr.bf16.mxu0 0
    %3384 = vmatpush1.bf16.xpose.msra.mxu0 0
    %3385 = vmatprep.mubr.bf16.mxu0 0
    %3386 = vmatmul.mubr.bf16.gmra.mrb[0].mxu0 %v3348
    %v3387 = vpop.f32.mrb[0].mxu0
    %v3388 = vadd.f32 0.0, %v3387
    %v3389 = vpop.f32.mrb[0].mxu0
    %v3390 = vpop.f32.mrb[0].mxu0
    %v3391 = vpop.f32.mrb[0].mxu0
    %3392 = vdwg.mxu0
    %3393 = vrot.lane.b32.xlu0 %v408, 104
    %v3394 = vpop.permute.xlu0 %3393
    %3395 = vrot.lane.b32.xlu0 %v416, 104
    %v3396 = vpop.permute.xlu0 %3395
    %v3398 = vsel %vm419, %v3394, 0
    %v3401 = vsel %vm419, %v3396, 0
    %3403 = vmatprep.subr.bf16.mxu0 0
    %3404 = vmatpush1.bf16.xpose.msra.mxu0 %v3401
    %3405 = vmatprep.subr.bf16.mxu0 0
    %3406 = vmatpush1.bf16.xpose.msra.mxu0 0
    %3407 = vmatprep.subr.bf16.mxu0 0
    %3408 = vmatpush1.bf16.xpose.msra.mxu0 0
    %3409 = vmatprep.subr.bf16.mxu0 0
    %3410 = vmatpush1.bf16.xpose.msra.mxu0 0
    %3411 = vmatprep.subr.bf16.mxu0 0
    %3412 = vmatpush1.bf16.xpose.msra.mxu0 0
    %3413 = vmatprep.subr.bf16.mxu0 0
    %3414 = vmatpush1.bf16.xpose.msra.mxu0 0
    %3415 = vmatprep.subr.bf16.mxu0 0
    %3416 = vmatpush1.bf16.xpose.msra.mxu0 0
    %3417 = vmatprep.subr.bf16.mxu0 0
    %3418 = vmatpush1.bf16.xpose.msra.mxu0 0
    %3419 = vmatprep.subr.bf16.mxu0 0
    %3420 = vmatpush1.bf16.xpose.msra.mxu0 0
    %3421 = vmatprep.subr.bf16.mxu0 0
    %3422 = vmatpush1.bf16.xpose.msra.mxu0 0
    %3423 = vmatprep.subr.bf16.mxu0 0
    %3424 = vmatpush1.bf16.xpose.msra.mxu0 0
    %3425 = vmatprep.subr.bf16.mxu0 0
    %3426 = vmatpush1.bf16.xpose.msra.mxu0 0
    %3427 = vmatprep.subr.bf16.mxu0 0
    %3428 = vmatpush1.bf16.xpose.msra.mxu0 0
    %3429 = vmatprep.subr.bf16.mxu0 0
    %3430 = vmatpush1.bf16.xpose.msra.mxu0 0
    %3431 = vmatprep.subr.bf16.mxu0 0
    %3432 = vmatpush1.bf16.xpose.msra.mxu0 0
    %3433 = vmatprep.subr.bf16.mxu0 0
    %3434 = vmatpush1.bf16.xpose.msra.mxu0 0
    %3435 = vmatprep.mubr.bf16.mxu0 0
    %3436 = vmatmul.mubr.bf16.gmra.mrb[0].mxu0 %v3398
    %v3437 = vpop.f32.mrb[0].mxu0
    %v3438 = vadd.f32 0.0, %v3437
    %v3439 = vpop.f32.mrb[0].mxu0
    %v3440 = vpop.f32.mrb[0].mxu0
    %v3441 = vpop.f32.mrb[0].mxu0
    %3442 = vdwg.mxu0
    %3443 = vrot.lane.b32.xlu0 %v409, 104
    %v3444 = vpop.permute.xlu0 %3443
    %3445 = vrot.lane.b32.xlu0 %v417, 104
    %v3446 = vpop.permute.xlu0 %3445
    %v3448 = vsel %vm419, %v3444, 0
    %v3451 = vsel %vm419, %v3446, 0
    %3453 = vmatprep.subr.bf16.mxu0 0
    %3454 = vmatpush1.bf16.xpose.msra.mxu0 %v3451
    %3455 = vmatprep.subr.bf16.mxu0 0
    %3456 = vmatpush1.bf16.xpose.msra.mxu0 0
    %3457 = vmatprep.subr.bf16.mxu0 0
    %3458 = vmatpush1.bf16.xpose.msra.mxu0 0
    %3459 = vmatprep.subr.bf16.mxu0 0
    %3460 = vmatpush1.bf16.xpose.msra.mxu0 0
    %3461 = vmatprep.subr.bf16.mxu0 0
    %3462 = vmatpush1.bf16.xpose.msra.mxu0 0
    %3463 = vmatprep.subr.bf16.mxu0 0
    %3464 = vmatpush1.bf16.xpose.msra.mxu0 0
    %3465 = vmatprep.subr.bf16.mxu0 0
    %3466 = vmatpush1.bf16.xpose.msra.mxu0 0
    %3467 = vmatprep.subr.bf16.mxu0 0
    %3468 = vmatpush1.bf16.xpose.msra.mxu0 0
    %3469 = vmatprep.subr.bf16.mxu0 0
    %3470 = vmatpush1.bf16.xpose.msra.mxu0 0
    %3471 = vmatprep.subr.bf16.mxu0 0
    %3472 = vmatpush1.bf16.xpose.msra.mxu0 0
    %3473 = vmatprep.subr.bf16.mxu0 0
    %3474 = vmatpush1.bf16.xpose.msra.mxu0 0
    %3475 = vmatprep.subr.bf16.mxu0 0
    %3476 = vmatpush1.bf16.xpose.msra.mxu0 0
    %3477 = vmatprep.subr.bf16.mxu0 0
    %3478 = vmatpush1.bf16.xpose.msra.mxu0 0
    %3479 = vmatprep.subr.bf16.mxu0 0
    %3480 = vmatpush1.bf16.xpose.msra.mxu0 0
    %3481 = vmatprep.subr.bf16.mxu0 0
    %3482 = vmatpush1.bf16.xpose.msra.mxu0 0
    %3483 = vmatprep.subr.bf16.mxu0 0
    %3484 = vmatpush1.bf16.xpose.msra.mxu0 0
    %3485 = vmatprep.mubr.bf16.mxu0 0
    %3486 = vmatmul.mubr.bf16.gmra.mrb[0].mxu0 %v3448
    %v3487 = vpop.f32.mrb[0].mxu0
    %v3488 = vadd.f32 0.0, %v3487
    %v3489 = vpop.f32.mrb[0].mxu0
    %v3490 = vpop.f32.mrb[0].mxu0
    %v3491 = vpop.f32.mrb[0].mxu0
    %3492 = vdwg.mxu0
    %3493 = vrot.lane.b32.xlu0 %v410, 104
    %v3494 = vpop.permute.xlu0 %3493
    %3495 = vrot.lane.b32.xlu0 %v418, 104
    %v3496 = vpop.permute.xlu0 %3495
    %v3498 = vsel %vm419, %v3494, 0
    %v3501 = vsel %vm419, %v3496, 0
    %3503 = vmatprep.subr.bf16.mxu0 0
    %3504 = vmatpush1.bf16.xpose.msra.mxu0 %v3501
    %3505 = vmatprep.subr.bf16.mxu0 0
    %3506 = vmatpush1.bf16.xpose.msra.mxu0 0
    %3507 = vmatprep.subr.bf16.mxu0 0
    %3508 = vmatpush1.bf16.xpose.msra.mxu0 0
    %3509 = vmatprep.subr.bf16.mxu0 0
    %3510 = vmatpush1.bf16.xpose.msra.mxu0 0
    %3511 = vmatprep.subr.bf16.mxu0 0
    %3512 = vmatpush1.bf16.xpose.msra.mxu0 0
    %3513 = vmatprep.subr.bf16.mxu0 0
    %3514 = vmatpush1.bf16.xpose.msra.mxu0 0
    %3515 = vmatprep.subr.bf16.mxu0 0
    %3516 = vmatpush1.bf16.xpose.msra.mxu0 0
    %3517 = vmatprep.subr.bf16.mxu0 0
    %3518 = vmatpush1.bf16.xpose.msra.mxu0 0
    %3519 = vmatprep.subr.bf16.mxu0 0
    %3520 = vmatpush1.bf16.xpose.msra.mxu0 0
    %3521 = vmatprep.subr.bf16.mxu0 0
    %3522 = vmatpush1.bf16.xpose.msra.mxu0 0
    %3523 = vmatprep.subr.bf16.mxu0 0
    %3524 = vmatpush1.bf16.xpose.msra.mxu0 0
    %3525 = vmatprep.subr.bf16.mxu0 0
    %3526 = vmatpush1.bf16.xpose.msra.mxu0 0
    %3527 = vmatprep.subr.bf16.mxu0 0
    %3528 = vmatpush1.bf16.xpose.msra.mxu0 0
    %3529 = vmatprep.subr.bf16.mxu0 0
    %3530 = vmatpush1.bf16.xpose.msra.mxu0 0
    %3531 = vmatprep.subr.bf16.mxu0 0
    %3532 = vmatpush1.bf16.xpose.msra.mxu0 0
    %3533 = vmatprep.subr.bf16.mxu0 0
    %3534 = vmatpush1.bf16.xpose.msra.mxu0 0
    %3535 = vmatprep.mubr.bf16.mxu0 0
    %3536 = vmatmul.mubr.bf16.gmra.mrb[0].mxu0 %v3498
    %v3537 = vpop.f32.mrb[0].mxu0
    %v3538 = vadd.f32 0.0, %v3537
    %v3539 = vpop.f32.mrb[0].mxu0
    %v3540 = vpop.f32.mrb[0].mxu0
    %v3541 = vpop.f32.mrb[0].mxu0
    %3542 = vdwg.mxu0
    %v3543 = vmul.f32 %v3188, 0.35355338
    %v3544 = vmul.f32 %v3238, 0.35355338
    %v3545 = vmul.f32 %v3288, 0.35355338
    %v3546 = vmul.f32 %v3338, 0.35355338
    %v3547 = vmul.f32 %v3388, 0.35355338
    %v3548 = vmul.f32 %v3438, 0.35355338
    %v3549 = vmul.f32 %v3488, 0.35355338
    %v3550 = vmul.f32 %v3538, 0.35355338
    %v3551 = vsel %vm796, %v3543, -inf
    %3552 = vmax.xlane.f32.xlu0 %v3551
    %v3553 = vpop.xlane.xlu0 %3552
    %v3554 = vsel %vm796, %v3544, -inf
    %3555 = vmax.xlane.f32.xlu0 %v3554
    %v3556 = vpop.xlane.xlu0 %3555
    %v3557 = vsel %vm796, %v3545, -inf
    %3558 = vmax.xlane.f32.xlu0 %v3557
    %v3559 = vpop.xlane.xlu0 %3558
    %v3560 = vsel %vm796, %v3546, -inf
    %3561 = vmax.xlane.f32.xlu0 %v3560
    %v3562 = vpop.xlane.xlu0 %3561
    %v3563 = vsel %vm796, %v3547, -inf
    %3564 = vmax.xlane.f32.xlu0 %v3563
    %v3565 = vpop.xlane.xlu0 %3564
    %v3566 = vsel %vm796, %v3548, -inf
    %3567 = vmax.xlane.f32.xlu0 %v3566
    %v3568 = vpop.xlane.xlu0 %3567
    %v3569 = vsel %vm796, %v3549, -inf
    %3570 = vmax.xlane.f32.xlu0 %v3569
    %v3571 = vpop.xlane.xlu0 %3570
    %v3572 = vsel %vm796, %v3550, -inf
    %3573 = vmax.xlane.f32.xlu0 %v3572
    %v3574 = vpop.xlane.xlu0 %3573
    %v3575 = vsub.f32 %v3543, %v3553
    %v3576 = vsub.f32 %v3544, %v3556
    %v3577 = vsub.f32 %v3545, %v3559
    %v3578 = vsub.f32 %v3546, %v3562
    %v3579 = vsub.f32 %v3547, %v3565
    %v3580 = vsub.f32 %v3548, %v3568
    %v3581 = vsub.f32 %v3549, %v3571
    %v3582 = vsub.f32 %v3550, %v3574
    %v3583 = vmul.f32 %v3575, 1.442695
    %v3584 = vpow.pop %v3583
    %v3585 = vmul.f32 %v3576, 1.442695
    %v3586 = vpow.pop %v3585
    %v3587 = vmul.f32 %v3577, 1.442695
    %v3588 = vpow.pop %v3587
    %v3589 = vmul.f32 %v3578, 1.442695
    %v3590 = vpow.pop %v3589
    %v3591 = vmul.f32 %v3579, 1.442695
    %v3592 = vpow.pop %v3591
    %v3593 = vmul.f32 %v3580, 1.442695
    %v3594 = vpow.pop %v3593
    %v3595 = vmul.f32 %v3581, 1.442695
    %v3596 = vpow.pop %v3595
    %v3597 = vmul.f32 %v3582, 1.442695
    %v3598 = vpow.pop %v3597
    %v3599 = vsel %vm796, %v3584, 0.0
    %3600 = vadd.xlane.f32.xlu0 %v3599
    %v3601 = vpop.xlane.xlu0 %3600
    %v3602 = vsel %vm796, %v3586, 0.0
    %3603 = vadd.xlane.f32.xlu0 %v3602
    %v3604 = vpop.xlane.xlu0 %3603
    %v3605 = vsel %vm796, %v3588, 0.0
    %3606 = vadd.xlane.f32.xlu0 %v3605
    %v3607 = vpop.xlane.xlu0 %3606
    %v3608 = vsel %vm796, %v3590, 0.0
    %3609 = vadd.xlane.f32.xlu0 %v3608
    %v3610 = vpop.xlane.xlu0 %3609
    %v3611 = vsel %vm796, %v3592, 0.0
    %3612 = vadd.xlane.f32.xlu0 %v3611
    %v3613 = vpop.xlane.xlu0 %3612
    %v3614 = vsel %vm796, %v3594, 0.0
    %3615 = vadd.xlane.f32.xlu0 %v3614
    %v3616 = vpop.xlane.xlu0 %3615
    %v3617 = vsel %vm796, %v3596, 0.0
    %3618 = vadd.xlane.f32.xlu0 %v3617
    %v3619 = vpop.xlane.xlu0 %3618
    %v3620 = vsel %vm796, %v3598, 0.0
    %3621 = vadd.xlane.f32.xlu0 %v3620
    %v3622 = vpop.xlane.xlu0 %3621
    %v3623 = vrcp.pop %v3601
    %v3624 = vrcp.pop %v3604
    %v3625 = vrcp.pop %v3607
    %v3626 = vrcp.pop %v3610
    %v3627 = vrcp.pop %v3613
    %v3628 = vrcp.pop %v3616
    %v3629 = vrcp.pop %v3619
    %v3630 = vrcp.pop %v3622
    %v3631 = vmul.f32 %v3601, %v3623
    %v3632 = vmul.f32 %v3604, %v3624
    %v3633 = vmul.f32 %v3607, %v3625
    %v3634 = vmul.f32 %v3610, %v3626
    %v3635 = vmul.f32 %v3613, %v3627
    %v3636 = vmul.f32 %v3616, %v3628
    %v3637 = vmul.f32 %v3619, %v3629
    %v3638 = vmul.f32 %v3622, %v3630
    %v3639 = vsub.f32 2.0, %v3631
    %v3640 = vsub.f32 2.0, %v3632
    %v3641 = vsub.f32 2.0, %v3633
    %v3642 = vsub.f32 2.0, %v3634
    %v3643 = vsub.f32 2.0, %v3635
    %v3644 = vsub.f32 2.0, %v3636
    %v3645 = vsub.f32 2.0, %v3637
    %v3646 = vsub.f32 2.0, %v3638
    %v3647 = vmul.f32 %v3623, %v3639
    %v3648 = vmul.f32 %v3624, %v3640
    %v3649 = vmul.f32 %v3625, %v3641
    %v3650 = vmul.f32 %v3626, %v3642
    %v3651 = vmul.f32 %v3627, %v3643
    %v3652 = vmul.f32 %v3628, %v3644
    %v3653 = vmul.f32 %v3629, %v3645
    %v3654 = vmul.f32 %v3630, %v3646
    %v3655 = vmul.f32 %v3584, %v3647
    %v3656 = vmul.f32 %v3586, %v3648
    %v3657 = vmul.f32 %v3588, %v3649
    %v3658 = vmul.f32 %v3590, %v3650
    %v3659 = vmul.f32 %v3592, %v3651
    %v3660 = vmul.f32 %v3594, %v3652
    %v3661 = vmul.f32 %v3596, %v3653
    %v3662 = vmul.f32 %v3598, %v3654
    %v3663 = vpack.c.bf16 %v3655, %v3655
    %v3664 = vpack.c.bf16 %v3656, %v3656
    %v3665 = vpack.c.bf16 %v3657, %v3657
    %v3666 = vpack.c.bf16 %v3658, %v3658
    %v3667 = vpack.c.bf16 %v3659, %v3659
    %v3668 = vpack.c.bf16 %v3660, %v3660
    %v3669 = vpack.c.bf16 %v3661, %v3661
    %v3670 = vpack.c.bf16 %v3662, %v3662
    %3671 = vrot.lane.b32.xlu0 %v411, 72
    %v3672 = vpop.permute.xlu0 %3671
    %v3674 = vsel %vm920, %v3663, 0
    %v3677 = vsel %vm924, %v3672, 0
    %3679 = vmatprep.subr.bf16.mxu0 0
    %3680 = vmatpush1.bf16.msra.mxu0 %v3677
    %3681 = vmatprep.subr.bf16.mxu0 0
    %3682 = vmatpush1.bf16.msra.mxu0 0
    %3683 = vmatprep.subr.bf16.mxu0 0
    %3684 = vmatpush1.bf16.msra.mxu0 0
    %3685 = vmatprep.subr.bf16.mxu0 0
    %3686 = vmatpush1.bf16.msra.mxu0 0
    %3687 = vmatprep.subr.bf16.mxu0 0
    %3688 = vmatpush1.bf16.msra.mxu0 0
    %3689 = vmatprep.subr.bf16.mxu0 0
    %3690 = vmatpush1.bf16.msra.mxu0 0
    %3691 = vmatprep.subr.bf16.mxu0 0
    %3692 = vmatpush1.bf16.msra.mxu0 0
    %3693 = vmatprep.subr.bf16.mxu0 0
    %3694 = vmatpush1.bf16.msra.mxu0 0
    %3695 = vmatprep.subr.bf16.mxu0 0
    %3696 = vmatpush1.bf16.msra.mxu0 0
    %3697 = vmatprep.subr.bf16.mxu0 0
    %3698 = vmatpush1.bf16.msra.mxu0 0
    %3699 = vmatprep.subr.bf16.mxu0 0
    %3700 = vmatpush1.bf16.msra.mxu0 0
    %3701 = vmatprep.subr.bf16.mxu0 0
    %3702 = vmatpush1.bf16.msra.mxu0 0
    %3703 = vmatprep.subr.bf16.mxu0 0
    %3704 = vmatpush1.bf16.msra.mxu0 0
    %3705 = vmatprep.subr.bf16.mxu0 0
    %3706 = vmatpush1.bf16.msra.mxu0 0
    %3707 = vmatprep.subr.bf16.mxu0 0
    %3708 = vmatpush1.bf16.msra.mxu0 0
    %3709 = vmatprep.subr.bf16.mxu0 0
    %3710 = vmatpush1.bf16.msra.mxu0 0
    %3711 = vmatprep.mubr.bf16.mxu0 0
    %3712 = vmatmul.mubr.bf16.gmra.mrb[0].mxu0 %v3674
    %v3713 = vpop.f32.mrb[0].mxu0
    %v3714 = vadd.f32 0.0, %v3713
    %v3715 = vpop.f32.mrb[0].mxu0
    %v3716 = vpop.f32.mrb[0].mxu0
    %v3717 = vpop.f32.mrb[0].mxu0
    %3718 = vdwg.mxu0
    %3719 = vrot.lane.b32.xlu0 %v412, 72
    %v3720 = vpop.permute.xlu0 %3719
    %v3722 = vsel %vm920, %v3664, 0
    %v3725 = vsel %vm924, %v3720, 0
    %3727 = vmatprep.subr.bf16.mxu0 0
    %3728 = vmatpush1.bf16.msra.mxu0 %v3725
    %3729 = vmatprep.subr.bf16.mxu0 0
    %3730 = vmatpush1.bf16.msra.mxu0 0
    %3731 = vmatprep.subr.bf16.mxu0 0
    %3732 = vmatpush1.bf16.msra.mxu0 0
    %3733 = vmatprep.subr.bf16.mxu0 0
    %3734 = vmatpush1.bf16.msra.mxu0 0
    %3735 = vmatprep.subr.bf16.mxu0 0
    %3736 = vmatpush1.bf16.msra.mxu0 0
    %3737 = vmatprep.subr.bf16.mxu0 0
    %3738 = vmatpush1.bf16.msra.mxu0 0
    %3739 = vmatprep.subr.bf16.mxu0 0
    %3740 = vmatpush1.bf16.msra.mxu0 0
    %3741 = vmatprep.subr.bf16.mxu0 0
    %3742 = vmatpush1.bf16.msra.mxu0 0
    %3743 = vmatprep.subr.bf16.mxu0 0
    %3744 = vmatpush1.bf16.msra.mxu0 0
    %3745 = vmatprep.subr.bf16.mxu0 0
    %3746 = vmatpush1.bf16.msra.mxu0 0
    %3747 = vmatprep.subr.bf16.mxu0 0
    %3748 = vmatpush1.bf16.msra.mxu0 0
    %3749 = vmatprep.subr.bf16.mxu0 0
    %3750 = vmatpush1.bf16.msra.mxu0 0
    %3751 = vmatprep.subr.bf16.mxu0 0
    %3752 = vmatpush1.bf16.msra.mxu0 0
    %3753 = vmatprep.subr.bf16.mxu0 0
    %3754 = vmatpush1.bf16.msra.mxu0 0
    %3755 = vmatprep.subr.bf16.mxu0 0
    %3756 = vmatpush1.bf16.msra.mxu0 0
    %3757 = vmatprep.subr.bf16.mxu0 0
    %3758 = vmatpush1.bf16.msra.mxu0 0
    %3759 = vmatprep.mubr.bf16.mxu0 0
    %3760 = vmatmul.mubr.bf16.gmra.mrb[0].mxu0 %v3722
    %v3761 = vpop.f32.mrb[0].mxu0
    %v3762 = vadd.f32 0.0, %v3761
    %v3763 = vpop.f32.mrb[0].mxu0
    %v3764 = vpop.f32.mrb[0].mxu0
    %v3765 = vpop.f32.mrb[0].mxu0
    %3766 = vdwg.mxu0
    %3767 = vrot.lane.b32.xlu0 %v413, 72
    %v3768 = vpop.permute.xlu0 %3767
    %v3770 = vsel %vm920, %v3665, 0
    %v3773 = vsel %vm924, %v3768, 0
    %3775 = vmatprep.subr.bf16.mxu0 0
    %3776 = vmatpush1.bf16.msra.mxu0 %v3773
    %3777 = vmatprep.subr.bf16.mxu0 0
    %3778 = vmatpush1.bf16.msra.mxu0 0
    %3779 = vmatprep.subr.bf16.mxu0 0
    %3780 = vmatpush1.bf16.msra.mxu0 0
    %3781 = vmatprep.subr.bf16.mxu0 0
    %3782 = vmatpush1.bf16.msra.mxu0 0
    %3783 = vmatprep.subr.bf16.mxu0 0
    %3784 = vmatpush1.bf16.msra.mxu0 0
    %3785 = vmatprep.subr.bf16.mxu0 0
    %3786 = vmatpush1.bf16.msra.mxu0 0
    %3787 = vmatprep.subr.bf16.mxu0 0
    %3788 = vmatpush1.bf16.msra.mxu0 0
    %3789 = vmatprep.subr.bf16.mxu0 0
    %3790 = vmatpush1.bf16.msra.mxu0 0
    %3791 = vmatprep.subr.bf16.mxu0 0
    %3792 = vmatpush1.bf16.msra.mxu0 0
    %3793 = vmatprep.subr.bf16.mxu0 0
    %3794 = vmatpush1.bf16.msra.mxu0 0
    %3795 = vmatprep.subr.bf16.mxu0 0
    %3796 = vmatpush1.bf16.msra.mxu0 0
    %3797 = vmatprep.subr.bf16.mxu0 0
    %3798 = vmatpush1.bf16.msra.mxu0 0
    %3799 = vmatprep.subr.bf16.mxu0 0
    %3800 = vmatpush1.bf16.msra.mxu0 0
    %3801 = vmatprep.subr.bf16.mxu0 0
    %3802 = vmatpush1.bf16.msra.mxu0 0
    %3803 = vmatprep.subr.bf16.mxu0 0
    %3804 = vmatpush1.bf16.msra.mxu0 0
    %3805 = vmatprep.subr.bf16.mxu0 0
    %3806 = vmatpush1.bf16.msra.mxu0 0
    %3807 = vmatprep.mubr.bf16.mxu0 0
    %3808 = vmatmul.mubr.bf16.gmra.mrb[0].mxu0 %v3770
    %v3809 = vpop.f32.mrb[0].mxu0
    %v3810 = vadd.f32 0.0, %v3809
    %v3811 = vpop.f32.mrb[0].mxu0
    %v3812 = vpop.f32.mrb[0].mxu0
    %v3813 = vpop.f32.mrb[0].mxu0
    %3814 = vdwg.mxu0
    %3815 = vrot.lane.b32.xlu0 %v414, 72
    %v3816 = vpop.permute.xlu0 %3815
    %v3818 = vsel %vm920, %v3666, 0
    %v3821 = vsel %vm924, %v3816, 0
    %3823 = vmatprep.subr.bf16.mxu0 0
    %3824 = vmatpush1.bf16.msra.mxu0 %v3821
    %3825 = vmatprep.subr.bf16.mxu0 0
    %3826 = vmatpush1.bf16.msra.mxu0 0
    %3827 = vmatprep.subr.bf16.mxu0 0
    %3828 = vmatpush1.bf16.msra.mxu0 0
    %3829 = vmatprep.subr.bf16.mxu0 0
    %3830 = vmatpush1.bf16.msra.mxu0 0
    %3831 = vmatprep.subr.bf16.mxu0 0
    %3832 = vmatpush1.bf16.msra.mxu0 0
    %3833 = vmatprep.subr.bf16.mxu0 0
    %3834 = vmatpush1.bf16.msra.mxu0 0
    %3835 = vmatprep.subr.bf16.mxu0 0
    %3836 = vmatpush1.bf16.msra.mxu0 0
    %3837 = vmatprep.subr.bf16.mxu0 0
    %3838 = vmatpush1.bf16.msra.mxu0 0
    %3839 = vmatprep.subr.bf16.mxu0 0
    %3840 = vmatpush1.bf16.msra.mxu0 0
    %3841 = vmatprep.subr.bf16.mxu0 0
    %3842 = vmatpush1.bf16.msra.mxu0 0
    %3843 = vmatprep.subr.bf16.mxu0 0
    %3844 = vmatpush1.bf16.msra.mxu0 0
    %3845 = vmatprep.subr.bf16.mxu0 0
    %3846 = vmatpush1.bf16.msra.mxu0 0
    %3847 = vmatprep.subr.bf16.mxu0 0
    %3848 = vmatpush1.bf16.msra.mxu0 0
    %3849 = vmatprep.subr.bf16.mxu0 0
    %3850 = vmatpush1.bf16.msra.mxu0 0
    %3851 = vmatprep.subr.bf16.mxu0 0
    %3852 = vmatpush1.bf16.msra.mxu0 0
    %3853 = vmatprep.subr.bf16.mxu0 0
    %3854 = vmatpush1.bf16.msra.mxu0 0
    %3855 = vmatprep.mubr.bf16.mxu0 0
    %3856 = vmatmul.mubr.bf16.gmra.mrb[0].mxu0 %v3818
    %v3857 = vpop.f32.mrb[0].mxu0
    %v3858 = vadd.f32 0.0, %v3857
    %v3859 = vpop.f32.mrb[0].mxu0
    %v3860 = vpop.f32.mrb[0].mxu0
    %v3861 = vpop.f32.mrb[0].mxu0
    %3862 = vdwg.mxu0
    %3863 = vrot.lane.b32.xlu0 %v415, 72
    %v3864 = vpop.permute.xlu0 %3863
    %v3866 = vsel %vm920, %v3667, 0
    %v3869 = vsel %vm924, %v3864, 0
    %3871 = vmatprep.subr.bf16.mxu0 0
    %3872 = vmatpush1.bf16.msra.mxu0 %v3869
    %3873 = vmatprep.subr.bf16.mxu0 0
    %3874 = vmatpush1.bf16.msra.mxu0 0
    %3875 = vmatprep.subr.bf16.mxu0 0
    %3876 = vmatpush1.bf16.msra.mxu0 0
    %3877 = vmatprep.subr.bf16.mxu0 0
    %3878 = vmatpush1.bf16.msra.mxu0 0
    %3879 = vmatprep.subr.bf16.mxu0 0
    %3880 = vmatpush1.bf16.msra.mxu0 0
    %3881 = vmatprep.subr.bf16.mxu0 0
    %3882 = vmatpush1.bf16.msra.mxu0 0
    %3883 = vmatprep.subr.bf16.mxu0 0
    %3884 = vmatpush1.bf16.msra.mxu0 0
    %3885 = vmatprep.subr.bf16.mxu0 0
    %3886 = vmatpush1.bf16.msra.mxu0 0
    %3887 = vmatprep.subr.bf16.mxu0 0
    %3888 = vmatpush1.bf16.msra.mxu0 0
    %3889 = vmatprep.subr.bf16.mxu0 0
    %3890 = vmatpush1.bf16.msra.mxu0 0
    %3891 = vmatprep.subr.bf16.mxu0 0
    %3892 = vmatpush1.bf16.msra.mxu0 0
    %3893 = vmatprep.subr.bf16.mxu0 0
    %3894 = vmatpush1.bf16.msra.mxu0 0
    %3895 = vmatprep.subr.bf16.mxu0 0
    %3896 = vmatpush1.bf16.msra.mxu0 0
    %3897 = vmatprep.subr.bf16.mxu0 0
    %3898 = vmatpush1.bf16.msra.mxu0 0
    %3899 = vmatprep.subr.bf16.mxu0 0
    %3900 = vmatpush1.bf16.msra.mxu0 0
    %3901 = vmatprep.subr.bf16.mxu0 0
    %3902 = vmatpush1.bf16.msra.mxu0 0
    %3903 = vmatprep.mubr.bf16.mxu0 0
    %3904 = vmatmul.mubr.bf16.gmra.mrb[0].mxu0 %v3866
    %v3905 = vpop.f32.mrb[0].mxu0
    %v3906 = vadd.f32 0.0, %v3905
    %v3907 = vpop.f32.mrb[0].mxu0
    %v3908 = vpop.f32.mrb[0].mxu0
    %v3909 = vpop.f32.mrb[0].mxu0
    %3910 = vdwg.mxu0
    %3911 = vrot.lane.b32.xlu0 %v416, 72
    %v3912 = vpop.permute.xlu0 %3911
    %v3914 = vsel %vm920, %v3668, 0
    %v3917 = vsel %vm924, %v3912, 0
    %3919 = vmatprep.subr.bf16.mxu0 0
    %3920 = vmatpush1.bf16.msra.mxu0 %v3917
    %3921 = vmatprep.subr.bf16.mxu0 0
    %3922 = vmatpush1.bf16.msra.mxu0 0
    %3923 = vmatprep.subr.bf16.mxu0 0
    %3924 = vmatpush1.bf16.msra.mxu0 0
    %3925 = vmatprep.subr.bf16.mxu0 0
    %3926 = vmatpush1.bf16.msra.mxu0 0
    %3927 = vmatprep.subr.bf16.mxu0 0
    %3928 = vmatpush1.bf16.msra.mxu0 0
    %3929 = vmatprep.subr.bf16.mxu0 0
    %3930 = vmatpush1.bf16.msra.mxu0 0
    %3931 = vmatprep.subr.bf16.mxu0 0
    %3932 = vmatpush1.bf16.msra.mxu0 0
    %3933 = vmatprep.subr.bf16.mxu0 0
    %3934 = vmatpush1.bf16.msra.mxu0 0
    %3935 = vmatprep.subr.bf16.mxu0 0
    %3936 = vmatpush1.bf16.msra.mxu0 0
    %3937 = vmatprep.subr.bf16.mxu0 0
    %3938 = vmatpush1.bf16.msra.mxu0 0
    %3939 = vmatprep.subr.bf16.mxu0 0
    %3940 = vmatpush1.bf16.msra.mxu0 0
    %3941 = vmatprep.subr.bf16.mxu0 0
    %3942 = vmatpush1.bf16.msra.mxu0 0
    %3943 = vmatprep.subr.bf16.mxu0 0
    %3944 = vmatpush1.bf16.msra.mxu0 0
    %3945 = vmatprep.subr.bf16.mxu0 0
    %3946 = vmatpush1.bf16.msra.mxu0 0
    %3947 = vmatprep.subr.bf16.mxu0 0
    %3948 = vmatpush1.bf16.msra.mxu0 0
    %3949 = vmatprep.subr.bf16.mxu0 0
    %3950 = vmatpush1.bf16.msra.mxu0 0
    %3951 = vmatprep.mubr.bf16.mxu0 0
    %3952 = vmatmul.mubr.bf16.gmra.mrb[0].mxu0 %v3914
    %v3953 = vpop.f32.mrb[0].mxu0
    %v3954 = vadd.f32 0.0, %v3953
    %v3955 = vpop.f32.mrb[0].mxu0
    %v3956 = vpop.f32.mrb[0].mxu0
    %v3957 = vpop.f32.mrb[0].mxu0
    %3958 = vdwg.mxu0
    %3959 = vrot.lane.b32.xlu0 %v417, 72
    %v3960 = vpop.permute.xlu0 %3959
    %v3962 = vsel %vm920, %v3669, 0
    %v3965 = vsel %vm924, %v3960, 0
    %3967 = vmatprep.subr.bf16.mxu0 0
    %3968 = vmatpush1.bf16.msra.mxu0 %v3965
    %3969 = vmatprep.subr.bf16.mxu0 0
    %3970 = vmatpush1.bf16.msra.mxu0 0
    %3971 = vmatprep.subr.bf16.mxu0 0
    %3972 = vmatpush1.bf16.msra.mxu0 0
    %3973 = vmatprep.subr.bf16.mxu0 0
    %3974 = vmatpush1.bf16.msra.mxu0 0
    %3975 = vmatprep.subr.bf16.mxu0 0
    %3976 = vmatpush1.bf16.msra.mxu0 0
    %3977 = vmatprep.subr.bf16.mxu0 0
    %3978 = vmatpush1.bf16.msra.mxu0 0
    %3979 = vmatprep.subr.bf16.mxu0 0
    %3980 = vmatpush1.bf16.msra.mxu0 0
    %3981 = vmatprep.subr.bf16.mxu0 0
    %3982 = vmatpush1.bf16.msra.mxu0 0
    %3983 = vmatprep.subr.bf16.mxu0 0
    %3984 = vmatpush1.bf16.msra.mxu0 0
    %3985 = vmatprep.subr.bf16.mxu0 0
    %3986 = vmatpush1.bf16.msra.mxu0 0
    %3987 = vmatprep.subr.bf16.mxu0 0
    %3988 = vmatpush1.bf16.msra.mxu0 0
    %3989 = vmatprep.subr.bf16.mxu0 0
    %3990 = vmatpush1.bf16.msra.mxu0 0
    %3991 = vmatprep.subr.bf16.mxu0 0
    %3992 = vmatpush1.bf16.msra.mxu0 0
    %3993 = vmatprep.subr.bf16.mxu0 0
    %3994 = vmatpush1.bf16.msra.mxu0 0
    %3995 = vmatprep.subr.bf16.mxu0 0
    %3996 = vmatpush1.bf16.msra.mxu0 0
    %3997 = vmatprep.subr.bf16.mxu0 0
    %3998 = vmatpush1.bf16.msra.mxu0 0
    %3999 = vmatprep.mubr.bf16.mxu0 0
    %4000 = vmatmul.mubr.bf16.gmra.mrb[0].mxu0 %v3962
    %v4001 = vpop.f32.mrb[0].mxu0
    %v4002 = vadd.f32 0.0, %v4001
    %v4003 = vpop.f32.mrb[0].mxu0
    %v4004 = vpop.f32.mrb[0].mxu0
    %v4005 = vpop.f32.mrb[0].mxu0
    %4006 = vdwg.mxu0
    %4007 = vrot.lane.b32.xlu0 %v418, 72
    %v4008 = vpop.permute.xlu0 %4007
    %v4010 = vsel %vm920, %v3670, 0
    %v4013 = vsel %vm924, %v4008, 0
    %4015 = vmatprep.subr.bf16.mxu0 0
    %4016 = vmatpush1.bf16.msra.mxu0 %v4013
    %4017 = vmatprep.subr.bf16.mxu0 0
    %4018 = vmatpush1.bf16.msra.mxu0 0
    %4019 = vmatprep.subr.bf16.mxu0 0
    %4020 = vmatpush1.bf16.msra.mxu0 0
    %4021 = vmatprep.subr.bf16.mxu0 0
    %4022 = vmatpush1.bf16.msra.mxu0 0
    %4023 = vmatprep.subr.bf16.mxu0 0
    %4024 = vmatpush1.bf16.msra.mxu0 0
    %4025 = vmatprep.subr.bf16.mxu0 0
    %4026 = vmatpush1.bf16.msra.mxu0 0
    %4027 = vmatprep.subr.bf16.mxu0 0
    %4028 = vmatpush1.bf16.msra.mxu0 0
    %4029 = vmatprep.subr.bf16.mxu0 0
    %4030 = vmatpush1.bf16.msra.mxu0 0
    %4031 = vmatprep.subr.bf16.mxu0 0
    %4032 = vmatpush1.bf16.msra.mxu0 0
    %4033 = vmatprep.subr.bf16.mxu0 0
    %4034 = vmatpush1.bf16.msra.mxu0 0
    %4035 = vmatprep.subr.bf16.mxu0 0
    %4036 = vmatpush1.bf16.msra.mxu0 0
    %4037 = vmatprep.subr.bf16.mxu0 0
    %4038 = vmatpush1.bf16.msra.mxu0 0
    %4039 = vmatprep.subr.bf16.mxu0 0
    %4040 = vmatpush1.bf16.msra.mxu0 0
    %4041 = vmatprep.subr.bf16.mxu0 0
    %4042 = vmatpush1.bf16.msra.mxu0 0
    %4043 = vmatprep.subr.bf16.mxu0 0
    %4044 = vmatpush1.bf16.msra.mxu0 0
    %4045 = vmatprep.subr.bf16.mxu0 0
    %4046 = vmatpush1.bf16.msra.mxu0 0
    %4047 = vmatprep.mubr.bf16.mxu0 0
    %4048 = vmatmul.mubr.bf16.gmra.mrb[0].mxu0 %v4010
    %v4049 = vpop.f32.mrb[0].mxu0
    %v4050 = vadd.f32 0.0, %v4049
    %v4051 = vpop.f32.mrb[0].mxu0
    %v4052 = vpop.f32.mrb[0].mxu0
    %v4053 = vpop.f32.mrb[0].mxu0
    %4054 = vdwg.mxu0
    %4063 = vrot.lane.b32.xlu0 %v1890, 8
    %v4064 = vpop.permute.xlu0 %4063
    %4065 = vrot.lane.b32.xlu0 %v1938, 8
    %v4066 = vpop.permute.xlu0 %4065
    %4067 = vrot.lane.b32.xlu0 %v1986, 8
    %v4068 = vpop.permute.xlu0 %4067
    %4069 = vrot.lane.b32.xlu0 %v2034, 8
    %v4070 = vpop.permute.xlu0 %4069
    %4071 = vrot.lane.b32.xlu0 %v2082, 8
    %v4072 = vpop.permute.xlu0 %4071
    %4073 = vrot.lane.b32.xlu0 %v2130, 8
    %v4074 = vpop.permute.xlu0 %4073
    %4075 = vrot.lane.b32.xlu0 %v2178, 8
    %v4076 = vpop.permute.xlu0 %4075
    %4077 = vrot.lane.b32.xlu0 %v2226, 8
    %v4078 = vpop.permute.xlu0 %4077
    %4095 = vrot.lane.b32.xlu0 %v2802, 16
    %v4096 = vpop.permute.xlu0 %4095
    %4097 = vrot.lane.b32.xlu0 %v2850, 16
    %v4098 = vpop.permute.xlu0 %4097
    %4099 = vrot.lane.b32.xlu0 %v2898, 16
    %v4100 = vpop.permute.xlu0 %4099
    %4101 = vrot.lane.b32.xlu0 %v2946, 16
    %v4102 = vpop.permute.xlu0 %4101
    %4103 = vrot.lane.b32.xlu0 %v2994, 16
    %v4104 = vpop.permute.xlu0 %4103
    %4105 = vrot.lane.b32.xlu0 %v3042, 16
    %v4106 = vpop.permute.xlu0 %4105
    %4107 = vrot.lane.b32.xlu0 %v3090, 16
    %v4108 = vpop.permute.xlu0 %4107
    %4109 = vrot.lane.b32.xlu0 %v3138, 16
    %v4110 = vpop.permute.xlu0 %4109
    %4127 = vrot.lane.b32.xlu0 %v3714, 24
    %v4128 = vpop.permute.xlu0 %4127
    %4129 = vrot.lane.b32.xlu0 %v3762, 24
    %v4130 = vpop.permute.xlu0 %4129
    %4131 = vrot.lane.b32.xlu0 %v3810, 24
    %v4132 = vpop.permute.xlu0 %4131
    %4133 = vrot.lane.b32.xlu0 %v3858, 24
    %v4134 = vpop.permute.xlu0 %4133
    %4135 = vrot.lane.b32.xlu0 %v3906, 24
    %v4136 = vpop.permute.xlu0 %4135
    %4137 = vrot.lane.b32.xlu0 %v3954, 24
    %v4138 = vpop.permute.xlu0 %4137
    %4139 = vrot.lane.b32.xlu0 %v4002, 24
    %v4140 = vpop.permute.xlu0 %4139
    %4141 = vrot.lane.b32.xlu0 %v4050, 24
    %v4142 = vpop.permute.xlu0 %4141
    %v4151 = vsel %vm419, %v963, %v4064
    %v4152 = vsel %vm419, %v1012, %v4066
    %v4153 = vsel %vm419, %v1061, %v4068
    %v4154 = vsel %vm419, %v1110, %v4070
    %v4155 = vsel %vm419, %v1159, %v4072
    %v4156 = vsel %vm419, %v1208, %v4074
    %v4157 = vsel %vm419, %v1257, %v4076
    %v4158 = vsel %vm419, %v1306, %v4078
    %vm4159 = vcmask 130048
    %v4160 = vsel %vm4159, %v4151, %v4096
    %v4161 = vsel %vm4159, %v4152, %v4098
    %v4162 = vsel %vm4159, %v4153, %v4100
    %v4163 = vsel %vm4159, %v4154, %v4102
    %v4164 = vsel %vm4159, %v4155, %v4104
    %v4165 = vsel %vm4159, %v4156, %v4106
    %v4166 = vsel %vm4159, %v4157, %v4108
    %v4167 = vsel %vm4159, %v4158, %v4110
    %vm4168 = vcmask 195584
    %v4169 = vsel %vm4168, %v4160, %v4128
    %v4170 = vsel %vm4168, %v4161, %v4130
    %v4171 = vsel %vm4168, %v4162, %v4132
    %v4172 = vsel %vm4168, %v4163, %v4134
    %v4173 = vsel %vm4168, %v4164, %v4136
    %v4174 = vsel %vm4168, %v4165, %v4138
    %v4175 = vsel %vm4168, %v4166, %v4140
    %v4176 = vsel %vm4168, %v4167, %v4142
    %v4185 = vcombine.low %v4169, %v4170
    %v4186 = vcombine.low %v4171, %v4172
    %v4188 = vunpack.c.l.s4 1983009808
    %v4189 = vunpack.c.0.s8 %v4188
    %v4190 = vlaneseq
    %v4191 = vshrl.u32 %v4190, 7
    %v4192 = vsub.s32 %v4189, %v4191
    %v4193 = vrot.slane %v4185, %v4192
    %v4195 = vunpack.c.l.s4 1983009808
    %v4196 = vunpack.c.0.s8 %v4195
    %v4197 = vlaneseq
    %v4198 = vshrl.u32 %v4197, 7
    %v4199 = vsub.s32 %v4196, %v4198
    %v4200 = vrot.slane %v4186, %v4199
    %v4201 = vcombine.low %v4193, %v4200
    %v4202 = vcombine.low %v4173, %v4174
    %v4203 = vcombine.low %v4175, %v4176
    %v4205 = vunpack.c.l.s4 1983009808
    %v4206 = vunpack.c.0.s8 %v4205
    %v4207 = vlaneseq
    %v4208 = vshrl.u32 %v4207, 7
    %v4209 = vsub.s32 %v4206, %v4208
    %v4210 = vrot.slane %v4202, %v4209
    %v4212 = vunpack.c.l.s4 1983009808
    %v4213 = vunpack.c.0.s8 %v4212
    %v4214 = vlaneseq
    %v4215 = vshrl.u32 %v4214, 7
    %v4216 = vsub.s32 %v4213, %v4215
    %v4217 = vrot.slane %v4203, %v4216
    %v4218 = vcombine.low %v4210, %v4217
    %v4221 = vpack.c.bf16 %v4218, %v4201
    %v4222 = vld [vmem:[%s6] sm:$0xf]
    %v4223 = vld [vmem:[%s6 + $0x4] sm:$0xf]
    %v4224 = vld [vmem:[%s6 + $0x8] sm:$0xf]
    %v4225 = vld [vmem:[%s6 + $0xc] sm:$0xf]
    %v4226 = vld [vmem:[%s7] sm:$0x1]
    %v4228 = vlaneseq
    %v4229 = vshrl.u32 %v4228, 7
    %v4230 = vsub.s32 0, %v4229
    %v4231 = vrot.slane %v4226, %v4230
    %v4237 = vunpack.c.l.b16 %v4222
    %v4238 = vunpack.c.l.b16 %v4223
    %v4239 = vunpack.c.l.b16 %v4224
    %v4240 = vunpack.c.l.b16 %v4225
    %v4241 = vpack.c.b16 %v4238, %v4237
    %v4242 = vpack.c.b16 %v4240, %v4239
    %v4246 = vsel %vm206, %v4221, 0
    %4248 = vmatprep.subr.bf16.mxu0 0
    %4249 = vmatpush1.bf16.msra.mxu0 %v4241
    %4250 = vmatprep.subr.bf16.mxu0 0
    %4251 = vmatpush1.bf16.msra.mxu0 %v4242
    %4252 = vmatprep.subr.bf16.mxu0 0
    %4253 = vmatpush1.bf16.msra.mxu0 0
    %4254 = vmatprep.subr.bf16.mxu0 0
    %4255 = vmatpush1.bf16.msra.mxu0 0
    %4256 = vmatprep.subr.bf16.mxu0 0
    %4257 = vmatpush1.bf16.msra.mxu0 0
    %4258 = vmatprep.subr.bf16.mxu0 0
    %4259 = vmatpush1.bf16.msra.mxu0 0
    %4260 = vmatprep.subr.bf16.mxu0 0
    %4261 = vmatpush1.bf16.msra.mxu0 0
    %4262 = vmatprep.subr.bf16.mxu0 0
    %4263 = vmatpush1.bf16.msra.mxu0 0
    %4264 = vmatprep.subr.bf16.mxu0 0
    %4265 = vmatpush1.bf16.msra.mxu0 0
    %4266 = vmatprep.subr.bf16.mxu0 0
    %4267 = vmatpush1.bf16.msra.mxu0 0
    %4268 = vmatprep.subr.bf16.mxu0 0
    %4269 = vmatpush1.bf16.msra.mxu0 0
    %4270 = vmatprep.subr.bf16.mxu0 0
    %4271 = vmatpush1.bf16.msra.mxu0 0
    %4272 = vmatprep.subr.bf16.mxu0 0
    %4273 = vmatpush1.bf16.msra.mxu0 0
    %4274 = vmatprep.subr.bf16.mxu0 0
    %4275 = vmatpush1.bf16.msra.mxu0 0
    %4276 = vmatprep.subr.bf16.mxu0 0
    %4277 = vmatpush1.bf16.msra.mxu0 0
    %4278 = vmatprep.subr.bf16.mxu0 0
    %4279 = vmatpush1.bf16.msra.mxu0 0
    %4280 = vmatprep.mubr.bf16.mxu0 0
    %4281 = vmatmul.mubr.bf16.gmra.mrb[0].mxu0 %v4246
    %v4282 = vpop.f32.mrb[0].mxu0
    %v4283 = vadd.f32 %v4231, %v4282
    %v4284 = vpop.f32.mrb[0].mxu0
    %v4285 = vpop.f32.mrb[0].mxu0
    %v4286 = vadd.f32 %v4231, %v4285
    %v4287 = vpop.f32.mrb[0].mxu0
    %4288 = vdwg.mxu0
    %v4291 = vcombine.high %v4283, %v4283
    %v4293 = vunpack.c.l.s4 1983009808
    %v4294 = vunpack.c.0.s8 %v4293
    %v4295 = vlaneseq
    %v4296 = vshrl.u32 %v4295, 7
    %v4297 = vsub.s32 %v4294, %v4296
    %v4298 = vrot.slane %v4283, %v4297
    %v4300 = vunpack.c.l.s4 1983009808
    %v4301 = vunpack.c.0.s8 %v4300
    %v4302 = vlaneseq
    %v4303 = vshrl.u32 %v4302, 7
    %v4304 = vsub.s32 %v4301, %v4303
    %v4305 = vrot.slane %v4291, %v4304
    %v4306 = vcombine.high %v4298, %v4298
    %v4307 = vcombine.high %v4305, %v4305
    %v4308 = vcombine.high %v4286, %v4286
    %v4310 = vunpack.c.l.s4 1983009808
    %v4311 = vunpack.c.0.s8 %v4310
    %v4312 = vlaneseq
    %v4313 = vshrl.u32 %v4312, 7
    %v4314 = vsub.s32 %v4311, %v4313
    %v4315 = vrot.slane %v4286, %v4314
    %v4317 = vunpack.c.l.s4 1983009808
    %v4318 = vunpack.c.0.s8 %v4317
    %v4319 = vlaneseq
    %v4320 = vshrl.u32 %v4319, 7
    %v4321 = vsub.s32 %v4318, %v4320
    %v4322 = vrot.slane %v4308, %v4321
    %v4323 = vcombine.high %v4315, %v4315
    %v4324 = vcombine.high %v4322, %v4322
    %v4333 = vadd.f32 %v130, %v4298
    %v4334 = vadd.f32 %v131, %v4306
    %v4335 = vadd.f32 %v132, %v4305
    %v4336 = vadd.f32 %v133, %v4307
    %v4337 = vadd.f32 %v134, %v4315
    %v4338 = vadd.f32 %v135, %v4323
    %v4339 = vadd.f32 %v136, %v4322
    %v4340 = vadd.f32 %v137, %v4324
    %vm4341 = vcmask 254976
    %v4342 = vsel %vm4341, %v4333, 0.0
    %4343 = vadd.xlane.f32.xlu0 %v4342
    %v4344 = vpop.xlane.xlu0 %4343
    %v4345 = vsel %vm4341, %v4334, 0.0
    %4346 = vadd.xlane.f32.xlu0 %v4345
    %v4347 = vpop.xlane.xlu0 %4346
    %v4348 = vsel %vm4341, %v4335, 0.0
    %4349 = vadd.xlane.f32.xlu0 %v4348
    %v4350 = vpop.xlane.xlu0 %4349
    %v4351 = vsel %vm4341, %v4336, 0.0
    %4352 = vadd.xlane.f32.xlu0 %v4351
    %v4353 = vpop.xlane.xlu0 %4352
    %v4354 = vsel %vm4341, %v4337, 0.0
    %4355 = vadd.xlane.f32.xlu0 %v4354
    %v4356 = vpop.xlane.xlu0 %4355
    %v4357 = vsel %vm4341, %v4338, 0.0
    %4358 = vadd.xlane.f32.xlu0 %v4357
    %v4359 = vpop.xlane.xlu0 %4358
    %v4360 = vsel %vm4341, %v4339, 0.0
    %4361 = vadd.xlane.f32.xlu0 %v4360
    %v4362 = vpop.xlane.xlu0 %4361
    %v4363 = vsel %vm4341, %v4340, 0.0
    %4364 = vadd.xlane.f32.xlu0 %v4363
    %v4365 = vpop.xlane.xlu0 %4364
    %v4366 = vrcp.pop 32.0
    %v4367 = vmul.f32 %v4344, %v4366
    %v4368 = vmul.f32 %v4347, %v4366
    %v4369 = vmul.f32 %v4350, %v4366
    %v4370 = vmul.f32 %v4353, %v4366
    %v4371 = vmul.f32 %v4356, %v4366
    %v4372 = vmul.f32 %v4359, %v4366
    %v4373 = vmul.f32 %v4362, %v4366
    %v4374 = vmul.f32 %v4365, %v4366
    %v4375 = vsub.f32 %v4333, %v4367
    %v4376 = vsub.f32 %v4334, %v4368
    %v4377 = vsub.f32 %v4335, %v4369
    %v4378 = vsub.f32 %v4336, %v4370
    %v4379 = vsub.f32 %v4337, %v4371
    %v4380 = vsub.f32 %v4338, %v4372
    %v4381 = vsub.f32 %v4339, %v4373
    %v4382 = vsub.f32 %v4340, %v4374
    %v4383 = vmul.f32 %v4375, %v4375
    %v4384 = vmul.f32 %v4376, %v4376
    %v4385 = vmul.f32 %v4377, %v4377
    %v4386 = vmul.f32 %v4378, %v4378
    %v4387 = vmul.f32 %v4379, %v4379
    %v4388 = vmul.f32 %v4380, %v4380
    %v4389 = vmul.f32 %v4381, %v4381
    %v4390 = vmul.f32 %v4382, %v4382
    %v4391 = vsel %vm4341, %v4383, 0.0
    %4392 = vadd.xlane.f32.xlu0 %v4391
    %v4393 = vpop.xlane.xlu0 %4392
    %v4394 = vsel %vm4341, %v4384, 0.0
    %4395 = vadd.xlane.f32.xlu0 %v4394
    %v4396 = vpop.xlane.xlu0 %4395
    %v4397 = vsel %vm4341, %v4385, 0.0
    %4398 = vadd.xlane.f32.xlu0 %v4397
    %v4399 = vpop.xlane.xlu0 %4398
    %v4400 = vsel %vm4341, %v4386, 0.0
    %4401 = vadd.xlane.f32.xlu0 %v4400
    %v4402 = vpop.xlane.xlu0 %4401
    %v4403 = vsel %vm4341, %v4387, 0.0
    %4404 = vadd.xlane.f32.xlu0 %v4403
    %v4405 = vpop.xlane.xlu0 %4404
    %v4406 = vsel %vm4341, %v4388, 0.0
    %4407 = vadd.xlane.f32.xlu0 %v4406
    %v4408 = vpop.xlane.xlu0 %4407
    %v4409 = vsel %vm4341, %v4389, 0.0
    %4410 = vadd.xlane.f32.xlu0 %v4409
    %v4411 = vpop.xlane.xlu0 %4410
    %v4412 = vsel %vm4341, %v4390, 0.0
    %4413 = vadd.xlane.f32.xlu0 %v4412
    %v4414 = vpop.xlane.xlu0 %4413
    %v4415 = vmul.f32 %v4393, %v4366
    %v4416 = vmul.f32 %v4396, %v4366
    %v4417 = vmul.f32 %v4399, %v4366
    %v4418 = vmul.f32 %v4402, %v4366
    %v4419 = vmul.f32 %v4405, %v4366
    %v4420 = vmul.f32 %v4408, %v4366
    %v4421 = vmul.f32 %v4411, %v4366
    %v4422 = vmul.f32 %v4414, %v4366
    %v4423 = vadd.f32 %v4415, 1e-05
    %v4424 = vadd.f32 %v4416, 1e-05
    %v4425 = vadd.f32 %v4417, 1e-05
    %v4426 = vadd.f32 %v4418, 1e-05
    %v4427 = vadd.f32 %v4419, 1e-05
    %v4428 = vadd.f32 %v4420, 1e-05
    %v4429 = vadd.f32 %v4421, 1e-05
    %v4430 = vadd.f32 %v4422, 1e-05
    %v4431 = vrsqrt.pop %v4423
    %v4432 = vrsqrt.pop %v4424
    %v4433 = vrsqrt.pop %v4425
    %v4434 = vrsqrt.pop %v4426
    %v4435 = vrsqrt.pop %v4427
    %v4436 = vrsqrt.pop %v4428
    %v4437 = vrsqrt.pop %v4429
    %v4438 = vrsqrt.pop %v4430
    %v4439 = vmul.f32 %v4375, %v4431
    %v4440 = vmul.f32 %v4376, %v4432
    %v4441 = vmul.f32 %v4377, %v4433
    %v4442 = vmul.f32 %v4378, %v4434
    %v4443 = vmul.f32 %v4379, %v4435
    %v4444 = vmul.f32 %v4380, %v4436
    %v4445 = vmul.f32 %v4381, %v4437
    %v4446 = vmul.f32 %v4382, %v4438
    %v4447 = vld [vmem:[%s14] sm:$0x1]
    %v4449 = vlaneseq
    %v4450 = vshrl.u32 %v4449, 7
    %v4451 = vsub.s32 0, %v4450
    %v4452 = vrot.slane %v4447, %v4451
    %v4454 = vmul.f32 %v4439, %v4452
    %v4455 = vmul.f32 %v4440, %v4452
    %v4456 = vmul.f32 %v4441, %v4452
    %v4457 = vmul.f32 %v4442, %v4452
    %v4458 = vmul.f32 %v4443, %v4452
    %v4459 = vmul.f32 %v4444, %v4452
    %v4460 = vmul.f32 %v4445, %v4452
    %v4461 = vmul.f32 %v4446, %v4452
    %v4462 = vld [vmem:[%s15] sm:$0x1]
    %v4464 = vlaneseq
    %v4465 = vshrl.u32 %v4464, 7
    %v4466 = vsub.s32 0, %v4465
    %v4467 = vrot.slane %v4462, %v4466
    %v4469 = vadd.f32 %v4454, %v4467
    %v4470 = vadd.f32 %v4455, %v4467
    %v4471 = vadd.f32 %v4456, %v4467
    %v4472 = vadd.f32 %v4457, %v4467
    %v4473 = vadd.f32 %v4458, %v4467
    %v4474 = vadd.f32 %v4459, %v4467
    %v4475 = vadd.f32 %v4460, %v4467
    %v4476 = vadd.f32 %v4461, %v4467
    %v4485 = vcombine.low %v4469, %v4470
    %v4486 = vcombine.low %v4471, %v4472
    %v4488 = vunpack.c.l.s4 1983009808
    %v4489 = vunpack.c.0.s8 %v4488
    %v4490 = vlaneseq
    %v4491 = vshrl.u32 %v4490, 7
    %v4492 = vsub.s32 %v4489, %v4491
    %v4493 = vrot.slane %v4485, %v4492
    %v4495 = vunpack.c.l.s4 1983009808
    %v4496 = vunpack.c.0.s8 %v4495
    %v4497 = vlaneseq
    %v4498 = vshrl.u32 %v4497, 7
    %v4499 = vsub.s32 %v4496, %v4498
    %v4500 = vrot.slane %v4486, %v4499
    %v4501 = vcombine.low %v4493, %v4500
    %v4502 = vcombine.low %v4473, %v4474
    %v4503 = vcombine.low %v4475, %v4476
    %v4505 = vunpack.c.l.s4 1983009808
    %v4506 = vunpack.c.0.s8 %v4505
    %v4507 = vlaneseq
    %v4508 = vshrl.u32 %v4507, 7
    %v4509 = vsub.s32 %v4506, %v4508
    %v4510 = vrot.slane %v4502, %v4509
    %v4512 = vunpack.c.l.s4 1983009808
    %v4513 = vunpack.c.0.s8 %v4512
    %v4514 = vlaneseq
    %v4515 = vshrl.u32 %v4514, 7
    %v4516 = vsub.s32 %v4513, %v4515
    %v4517 = vrot.slane %v4503, %v4516
    %v4518 = vcombine.low %v4510, %v4517
    %v4521 = vpack.c.bf16 %v4518, %v4501
    %v4522 = vld [vmem:[%s8] sm:$0xf]
    %v4523 = vld [vmem:[%s8 + $0x4] sm:$0xf]
    %v4524 = vld [vmem:[%s8 + $0x8] sm:$0xf]
    %v4525 = vld [vmem:[%s8 + $0xc] sm:$0xf]
    %v4526 = vld [vmem:[%s9] sm:$0x1]
    %v4528 = vlaneseq
    %v4529 = vshrl.u32 %v4528, 7
    %v4530 = vsub.s32 0, %v4529
    %v4531 = vrot.slane %v4526, %v4530
    %v4537 = vunpack.c.l.b16 %v4522
    %v4538 = vunpack.c.l.b16 %v4523
    %v4539 = vunpack.c.l.b16 %v4524
    %v4540 = vunpack.c.l.b16 %v4525
    %v4541 = vpack.c.b16 %v4538, %v4537
    %v4542 = vpack.c.b16 %v4540, %v4539
    %v4546 = vsel %vm206, %v4521, 0
    %4548 = vmatprep.subr.bf16.mxu0 0
    %4549 = vmatpush1.bf16.msra.mxu0 %v4541
    %4550 = vmatprep.subr.bf16.mxu0 0
    %4551 = vmatpush1.bf16.msra.mxu0 %v4542
    %4552 = vmatprep.subr.bf16.mxu0 0
    %4553 = vmatpush1.bf16.msra.mxu0 0
    %4554 = vmatprep.subr.bf16.mxu0 0
    %4555 = vmatpush1.bf16.msra.mxu0 0
    %4556 = vmatprep.subr.bf16.mxu0 0
    %4557 = vmatpush1.bf16.msra.mxu0 0
    %4558 = vmatprep.subr.bf16.mxu0 0
    %4559 = vmatpush1.bf16.msra.mxu0 0
    %4560 = vmatprep.subr.bf16.mxu0 0
    %4561 = vmatpush1.bf16.msra.mxu0 0
    %4562 = vmatprep.subr.bf16.mxu0 0
    %4563 = vmatpush1.bf16.msra.mxu0 0
    %4564 = vmatprep.subr.bf16.mxu0 0
    %4565 = vmatpush1.bf16.msra.mxu0 0
    %4566 = vmatprep.subr.bf16.mxu0 0
    %4567 = vmatpush1.bf16.msra.mxu0 0
    %4568 = vmatprep.subr.bf16.mxu0 0
    %4569 = vmatpush1.bf16.msra.mxu0 0
    %4570 = vmatprep.subr.bf16.mxu0 0
    %4571 = vmatpush1.bf16.msra.mxu0 0
    %4572 = vmatprep.subr.bf16.mxu0 0
    %4573 = vmatpush1.bf16.msra.mxu0 0
    %4574 = vmatprep.subr.bf16.mxu0 0
    %4575 = vmatpush1.bf16.msra.mxu0 0
    %4576 = vmatprep.subr.bf16.mxu0 0
    %4577 = vmatpush1.bf16.msra.mxu0 0
    %4578 = vmatprep.subr.bf16.mxu0 0
    %4579 = vmatpush1.bf16.msra.mxu0 0
    %4580 = vmatprep.mubr.bf16.mxu0 0
    %4581 = vmatmul.mubr.bf16.gmra.mrb[0].mxu0 %v4546
    %v4582 = vpop.f32.mrb[0].mxu0
    %v4583 = vadd.f32 %v4531, %v4582
    %v4584 = vpop.f32.mrb[0].mxu0
    %v4585 = vpop.f32.mrb[0].mxu0
    %v4586 = vadd.f32 %v4531, %v4585
    %v4587 = vpop.f32.mrb[0].mxu0
    %4588 = vdwg.mxu0
    %v4589 = vld [vmem:[%s10] sm:$0xf]
    %v4590 = vld [vmem:[%s10 + $0x4] sm:$0xf]
    %v4591 = vld [vmem:[%s10 + $0x8] sm:$0xf]
    %v4592 = vld [vmem:[%s10 + $0xc] sm:$0xf]
    %v4593 = vld [vmem:[%s11] sm:$0x1]
    %v4595 = vlaneseq
    %v4596 = vshrl.u32 %v4595, 7
    %v4597 = vsub.s32 0, %v4596
    %v4598 = vrot.slane %v4593, %v4597
    %v4604 = vunpack.c.l.b16 %v4589
    %v4605 = vunpack.c.l.b16 %v4590
    %v4606 = vunpack.c.l.b16 %v4591
    %v4607 = vunpack.c.l.b16 %v4592
    %v4608 = vpack.c.b16 %v4605, %v4604
    %v4609 = vpack.c.b16 %v4607, %v4606
    %4612 = vmatprep.subr.bf16.mxu0 0
    %4613 = vmatpush1.bf16.msra.mxu0 %v4608
    %4614 = vmatprep.subr.bf16.mxu0 0
    %4615 = vmatpush1.bf16.msra.mxu0 %v4609
    %4616 = vmatprep.subr.bf16.mxu0 0
    %4617 = vmatpush1.bf16.msra.mxu0 0
    %4618 = vmatprep.subr.bf16.mxu0 0
    %4619 = vmatpush1.bf16.msra.mxu0 0
    %4620 = vmatprep.subr.bf16.mxu0 0
    %4621 = vmatpush1.bf16.msra.mxu0 0
    %4622 = vmatprep.subr.bf16.mxu0 0
    %4623 = vmatpush1.bf16.msra.mxu0 0
    %4624 = vmatprep.subr.bf16.mxu0 0
    %4625 = vmatpush1.bf16.msra.mxu0 0
    %4626 = vmatprep.subr.bf16.mxu0 0
    %4627 = vmatpush1.bf16.msra.mxu0 0
    %4628 = vmatprep.subr.bf16.mxu0 0
    %4629 = vmatpush1.bf16.msra.mxu0 0
    %4630 = vmatprep.subr.bf16.mxu0 0
    %4631 = vmatpush1.bf16.msra.mxu0 0
    %4632 = vmatprep.subr.bf16.mxu0 0
    %4633 = vmatpush1.bf16.msra.mxu0 0
    %4634 = vmatprep.subr.bf16.mxu0 0
    %4635 = vmatpush1.bf16.msra.mxu0 0
    %4636 = vmatprep.subr.bf16.mxu0 0
    %4637 = vmatpush1.bf16.msra.mxu0 0
    %4638 = vmatprep.subr.bf16.mxu0 0
    %4639 = vmatpush1.bf16.msra.mxu0 0
    %4640 = vmatprep.subr.bf16.mxu0 0
    %4641 = vmatpush1.bf16.msra.mxu0 0
    %4642 = vmatprep.subr.bf16.mxu0 0
    %4643 = vmatpush1.bf16.msra.mxu0 0
    %4644 = vmatprep.mubr.bf16.mxu0 0
    %4645 = vmatmul.mubr.bf16.gmra.mrb[0].mxu0 %v208
    %v4646 = vpop.f32.mrb[0].mxu0
    %v4647 = vadd.f32 %v4598, %v4646
    %v4648 = vpop.f32.mrb[0].mxu0
    %v4649 = vpop.f32.mrb[0].mxu0
    %v4650 = vadd.f32 %v4598, %v4649
    %v4651 = vpop.f32.mrb[0].mxu0
    %4652 = vdwg.mxu0
    %v4655 = vcombine.high %v4583, %v4583
    %v4657 = vunpack.c.l.s4 1983009808
    %v4658 = vunpack.c.0.s8 %v4657
    %v4659 = vlaneseq
    %v4660 = vshrl.u32 %v4659, 7
    %v4661 = vsub.s32 %v4658, %v4660
    %v4662 = vrot.slane %v4583, %v4661
    %v4664 = vunpack.c.l.s4 1983009808
    %v4665 = vunpack.c.0.s8 %v4664
    %v4666 = vlaneseq
    %v4667 = vshrl.u32 %v4666, 7
    %v4668 = vsub.s32 %v4665, %v4667
    %v4669 = vrot.slane %v4655, %v4668
    %v4670 = vcombine.high %v4662, %v4662
    %v4671 = vcombine.high %v4669, %v4669
    %v4672 = vcombine.high %v4586, %v4586
    %v4674 = vunpack.c.l.s4 1983009808
    %v4675 = vunpack.c.0.s8 %v4674
    %v4676 = vlaneseq
    %v4677 = vshrl.u32 %v4676, 7
    %v4678 = vsub.s32 %v4675, %v4677
    %v4679 = vrot.slane %v4586, %v4678
    %v4681 = vunpack.c.l.s4 1983009808
    %v4682 = vunpack.c.0.s8 %v4681
    %v4683 = vlaneseq
    %v4684 = vshrl.u32 %v4683, 7
    %v4685 = vsub.s32 %v4682, %v4684
    %v4686 = vrot.slane %v4672, %v4685
    %v4687 = vcombine.high %v4679, %v4679
    %v4688 = vcombine.high %v4686, %v4686
    %v4699 = vcombine.high %v4647, %v4647
    %v4701 = vunpack.c.l.s4 1983009808
    %v4702 = vunpack.c.0.s8 %v4701
    %v4703 = vlaneseq
    %v4704 = vshrl.u32 %v4703, 7
    %v4705 = vsub.s32 %v4702, %v4704
    %v4706 = vrot.slane %v4647, %v4705
    %v4708 = vunpack.c.l.s4 1983009808
    %v4709 = vunpack.c.0.s8 %v4708
    %v4710 = vlaneseq
    %v4711 = vshrl.u32 %v4710, 7
    %v4712 = vsub.s32 %v4709, %v4711
    %v4713 = vrot.slane %v4699, %v4712
    %v4714 = vcombine.high %v4706, %v4706
    %v4715 = vcombine.high %v4713, %v4713
    %v4716 = vcombine.high %v4650, %v4650
    %v4718 = vunpack.c.l.s4 1983009808
    %v4719 = vunpack.c.0.s8 %v4718
    %v4720 = vlaneseq
    %v4721 = vshrl.u32 %v4720, 7
    %v4722 = vsub.s32 %v4719, %v4721
    %v4723 = vrot.slane %v4650, %v4722
    %v4725 = vunpack.c.l.s4 1983009808
    %v4726 = vunpack.c.0.s8 %v4725
    %v4727 = vlaneseq
    %v4728 = vshrl.u32 %v4727, 7
    %v4729 = vsub.s32 %v4726, %v4728
    %v4730 = vrot.slane %v4716, %v4729
    %v4731 = vcombine.high %v4723, %v4723
    %v4732 = vcombine.high %v4730, %v4730
    %v4741 = vpack.c.bf16 %v4662, %v4662
    %v4742 = vpack.c.bf16 %v4670, %v4670
    %v4743 = vpack.c.bf16 %v4669, %v4669
    %v4744 = vpack.c.bf16 %v4671, %v4671
    %v4745 = vpack.c.bf16 %v4679, %v4679
    %v4746 = vpack.c.bf16 %v4687, %v4687
    %v4747 = vpack.c.bf16 %v4686, %v4686
    %v4748 = vpack.c.bf16 %v4688, %v4688
    %v4749 = vpack.c.bf16 %v4706, %v4706
    %v4750 = vpack.c.bf16 %v4714, %v4714
    %v4751 = vpack.c.bf16 %v4713, %v4713
    %v4752 = vpack.c.bf16 %v4715, %v4715
    %v4753 = vpack.c.bf16 %v4723, %v4723
    %v4754 = vpack.c.bf16 %v4731, %v4731
    %v4755 = vpack.c.bf16 %v4730, %v4730
    %v4756 = vpack.c.bf16 %v4732, %v4732
    %v4758 = vsel %vm419, %v4741, 0
    %v4761 = vsel %vm419, %v4749, 0
    %4763 = vmatprep.subr.bf16.mxu0 0
    %4764 = vmatpush1.bf16.xpose.msra.mxu0 %v4761
    %4765 = vmatprep.subr.bf16.mxu0 0
    %4766 = vmatpush1.bf16.xpose.msra.mxu0 0
    %4767 = vmatprep.subr.bf16.mxu0 0
    %4768 = vmatpush1.bf16.xpose.msra.mxu0 0
    %4769 = vmatprep.subr.bf16.mxu0 0
    %4770 = vmatpush1.bf16.xpose.msra.mxu0 0
    %4771 = vmatprep.subr.bf16.mxu0 0
    %4772 = vmatpush1.bf16.xpose.msra.mxu0 0
    %4773 = vmatprep.subr.bf16.mxu0 0
    %4774 = vmatpush1.bf16.xpose.msra.mxu0 0
    %4775 = vmatprep.subr.bf16.mxu0 0
    %4776 = vmatpush1.bf16.xpose.msra.mxu0 0
    %4777 = vmatprep.subr.bf16.mxu0 0
    %4778 = vmatpush1.bf16.xpose.msra.mxu0 0
    %4779 = vmatprep.subr.bf16.mxu0 0
    %4780 = vmatpush1.bf16.xpose.msra.mxu0 0
    %4781 = vmatprep.subr.bf16.mxu0 0
    %4782 = vmatpush1.bf16.xpose.msra.mxu0 0
    %4783 = vmatprep.subr.bf16.mxu0 0
    %4784 = vmatpush1.bf16.xpose.msra.mxu0 0
    %4785 = vmatprep.subr.bf16.mxu0 0
    %4786 = vmatpush1.bf16.xpose.msra.mxu0 0
    %4787 = vmatprep.subr.bf16.mxu0 0
    %4788 = vmatpush1.bf16.xpose.msra.mxu0 0
    %4789 = vmatprep.subr.bf16.mxu0 0
    %4790 = vmatpush1.bf16.xpose.msra.mxu0 0
    %4791 = vmatprep.subr.bf16.mxu0 0
    %4792 = vmatpush1.bf16.xpose.msra.mxu0 0
    %4793 = vmatprep.subr.bf16.mxu0 0
    %4794 = vmatpush1.bf16.xpose.msra.mxu0 0
    %4795 = vmatprep.mubr.bf16.mxu0 0
    %4796 = vmatmul.mubr.bf16.gmra.mrb[0].mxu0 %v4758
    %v4797 = vpop.f32.mrb[0].mxu0
    %v4798 = vadd.f32 0.0, %v4797
    %v4799 = vpop.f32.mrb[0].mxu0
    %v4800 = vpop.f32.mrb[0].mxu0
    %v4801 = vpop.f32.mrb[0].mxu0
    %4802 = vdwg.mxu0
    %v4804 = vsel %vm419, %v4742, 0
    %v4807 = vsel %vm419, %v4750, 0
    %4809 = vmatprep.subr.bf16.mxu0 0
    %4810 = vmatpush1.bf16.xpose.msra.mxu0 %v4807
    %4811 = vmatprep.subr.bf16.mxu0 0
    %4812 = vmatpush1.bf16.xpose.msra.mxu0 0
    %4813 = vmatprep.subr.bf16.mxu0 0
    %4814 = vmatpush1.bf16.xpose.msra.mxu0 0
    %4815 = vmatprep.subr.bf16.mxu0 0
    %4816 = vmatpush1.bf16.xpose.msra.mxu0 0
    %4817 = vmatprep.subr.bf16.mxu0 0
    %4818 = vmatpush1.bf16.xpose.msra.mxu0 0
    %4819 = vmatprep.subr.bf16.mxu0 0
    %4820 = vmatpush1.bf16.xpose.msra.mxu0 0
    %4821 = vmatprep.subr.bf16.mxu0 0
    %4822 = vmatpush1.bf16.xpose.msra.mxu0 0
    %4823 = vmatprep.subr.bf16.mxu0 0
    %4824 = vmatpush1.bf16.xpose.msra.mxu0 0
    %4825 = vmatprep.subr.bf16.mxu0 0
    %4826 = vmatpush1.bf16.xpose.msra.mxu0 0
    %4827 = vmatprep.subr.bf16.mxu0 0
    %4828 = vmatpush1.bf16.xpose.msra.mxu0 0
    %4829 = vmatprep.subr.bf16.mxu0 0
    %4830 = vmatpush1.bf16.xpose.msra.mxu0 0
    %4831 = vmatprep.subr.bf16.mxu0 0
    %4832 = vmatpush1.bf16.xpose.msra.mxu0 0
    %4833 = vmatprep.subr.bf16.mxu0 0
    %4834 = vmatpush1.bf16.xpose.msra.mxu0 0
    %4835 = vmatprep.subr.bf16.mxu0 0
    %4836 = vmatpush1.bf16.xpose.msra.mxu0 0
    %4837 = vmatprep.subr.bf16.mxu0 0
    %4838 = vmatpush1.bf16.xpose.msra.mxu0 0
    %4839 = vmatprep.subr.bf16.mxu0 0
    %4840 = vmatpush1.bf16.xpose.msra.mxu0 0
    %4841 = vmatprep.mubr.bf16.mxu0 0
    %4842 = vmatmul.mubr.bf16.gmra.mrb[0].mxu0 %v4804
    %v4843 = vpop.f32.mrb[0].mxu0
    %v4844 = vadd.f32 0.0, %v4843
    %v4845 = vpop.f32.mrb[0].mxu0
    %v4846 = vpop.f32.mrb[0].mxu0
    %v4847 = vpop.f32.mrb[0].mxu0
    %4848 = vdwg.mxu0
    %v4850 = vsel %vm419, %v4743, 0
    %v4853 = vsel %vm419, %v4751, 0
    %4855 = vmatprep.subr.bf16.mxu0 0
    %4856 = vmatpush1.bf16.xpose.msra.mxu0 %v4853
    %4857 = vmatprep.subr.bf16.mxu0 0
    %4858 = vmatpush1.bf16.xpose.msra.mxu0 0
    %4859 = vmatprep.subr.bf16.mxu0 0
    %4860 = vmatpush1.bf16.xpose.msra.mxu0 0
    %4861 = vmatprep.subr.bf16.mxu0 0
    %4862 = vmatpush1.bf16.xpose.msra.mxu0 0
    %4863 = vmatprep.subr.bf16.mxu0 0
    %4864 = vmatpush1.bf16.xpose.msra.mxu0 0
    %4865 = vmatprep.subr.bf16.mxu0 0
    %4866 = vmatpush1.bf16.xpose.msra.mxu0 0
    %4867 = vmatprep.subr.bf16.mxu0 0
    %4868 = vmatpush1.bf16.xpose.msra.mxu0 0
    %4869 = vmatprep.subr.bf16.mxu0 0
    %4870 = vmatpush1.bf16.xpose.msra.mxu0 0
    %4871 = vmatprep.subr.bf16.mxu0 0
    %4872 = vmatpush1.bf16.xpose.msra.mxu0 0
    %4873 = vmatprep.subr.bf16.mxu0 0
    %4874 = vmatpush1.bf16.xpose.msra.mxu0 0
    %4875 = vmatprep.subr.bf16.mxu0 0
    %4876 = vmatpush1.bf16.xpose.msra.mxu0 0
    %4877 = vmatprep.subr.bf16.mxu0 0
    %4878 = vmatpush1.bf16.xpose.msra.mxu0 0
    %4879 = vmatprep.subr.bf16.mxu0 0
    %4880 = vmatpush1.bf16.xpose.msra.mxu0 0
    %4881 = vmatprep.subr.bf16.mxu0 0
    %4882 = vmatpush1.bf16.xpose.msra.mxu0 0
    %4883 = vmatprep.subr.bf16.mxu0 0
    %4884 = vmatpush1.bf16.xpose.msra.mxu0 0
    %4885 = vmatprep.subr.bf16.mxu0 0
    %4886 = vmatpush1.bf16.xpose.msra.mxu0 0
    %4887 = vmatprep.mubr.bf16.mxu0 0
    %4888 = vmatmul.mubr.bf16.gmra.mrb[0].mxu0 %v4850
    %v4889 = vpop.f32.mrb[0].mxu0
    %v4890 = vadd.f32 0.0, %v4889
    %v4891 = vpop.f32.mrb[0].mxu0
    %v4892 = vpop.f32.mrb[0].mxu0
    %v4893 = vpop.f32.mrb[0].mxu0
    %4894 = vdwg.mxu0
    %v4896 = vsel %vm419, %v4744, 0
    %v4899 = vsel %vm419, %v4752, 0
    %4901 = vmatprep.subr.bf16.mxu0 0
    %4902 = vmatpush1.bf16.xpose.msra.mxu0 %v4899
    %4903 = vmatprep.subr.bf16.mxu0 0
    %4904 = vmatpush1.bf16.xpose.msra.mxu0 0
    %4905 = vmatprep.subr.bf16.mxu0 0
    %4906 = vmatpush1.bf16.xpose.msra.mxu0 0
    %4907 = vmatprep.subr.bf16.mxu0 0
    %4908 = vmatpush1.bf16.xpose.msra.mxu0 0
    %4909 = vmatprep.subr.bf16.mxu0 0
    %4910 = vmatpush1.bf16.xpose.msra.mxu0 0
    %4911 = vmatprep.subr.bf16.mxu0 0
    %4912 = vmatpush1.bf16.xpose.msra.mxu0 0
    %4913 = vmatprep.subr.bf16.mxu0 0
    %4914 = vmatpush1.bf16.xpose.msra.mxu0 0
    %4915 = vmatprep.subr.bf16.mxu0 0
    %4916 = vmatpush1.bf16.xpose.msra.mxu0 0
    %4917 = vmatprep.subr.bf16.mxu0 0
    %4918 = vmatpush1.bf16.xpose.msra.mxu0 0
    %4919 = vmatprep.subr.bf16.mxu0 0
    %4920 = vmatpush1.bf16.xpose.msra.mxu0 0
    %4921 = vmatprep.subr.bf16.mxu0 0
    %4922 = vmatpush1.bf16.xpose.msra.mxu0 0
    %4923 = vmatprep.subr.bf16.mxu0 0
    %4924 = vmatpush1.bf16.xpose.msra.mxu0 0
    %4925 = vmatprep.subr.bf16.mxu0 0
    %4926 = vmatpush1.bf16.xpose.msra.mxu0 0
    %4927 = vmatprep.subr.bf16.mxu0 0
    %4928 = vmatpush1.bf16.xpose.msra.mxu0 0
    %4929 = vmatprep.subr.bf16.mxu0 0
    %4930 = vmatpush1.bf16.xpose.msra.mxu0 0
    %4931 = vmatprep.subr.bf16.mxu0 0
    %4932 = vmatpush1.bf16.xpose.msra.mxu0 0
    %4933 = vmatprep.mubr.bf16.mxu0 0
    %4934 = vmatmul.mubr.bf16.gmra.mrb[0].mxu0 %v4896
    %v4935 = vpop.f32.mrb[0].mxu0
    %v4936 = vadd.f32 0.0, %v4935
    %v4937 = vpop.f32.mrb[0].mxu0
    %v4938 = vpop.f32.mrb[0].mxu0
    %v4939 = vpop.f32.mrb[0].mxu0
    %4940 = vdwg.mxu0
    %v4942 = vsel %vm419, %v4745, 0
    %v4945 = vsel %vm419, %v4753, 0
    %4947 = vmatprep.subr.bf16.mxu0 0
    %4948 = vmatpush1.bf16.xpose.msra.mxu0 %v4945
    %4949 = vmatprep.subr.bf16.mxu0 0
    %4950 = vmatpush1.bf16.xpose.msra.mxu0 0
    %4951 = vmatprep.subr.bf16.mxu0 0
    %4952 = vmatpush1.bf16.xpose.msra.mxu0 0
    %4953 = vmatprep.subr.bf16.mxu0 0
    %4954 = vmatpush1.bf16.xpose.msra.mxu0 0
    %4955 = vmatprep.subr.bf16.mxu0 0
    %4956 = vmatpush1.bf16.xpose.msra.mxu0 0
    %4957 = vmatprep.subr.bf16.mxu0 0
    %4958 = vmatpush1.bf16.xpose.msra.mxu0 0
    %4959 = vmatprep.subr.bf16.mxu0 0
    %4960 = vmatpush1.bf16.xpose.msra.mxu0 0
    %4961 = vmatprep.subr.bf16.mxu0 0
    %4962 = vmatpush1.bf16.xpose.msra.mxu0 0
    %4963 = vmatprep.subr.bf16.mxu0 0
    %4964 = vmatpush1.bf16.xpose.msra.mxu0 0
    %4965 = vmatprep.subr.bf16.mxu0 0
    %4966 = vmatpush1.bf16.xpose.msra.mxu0 0
    %4967 = vmatprep.subr.bf16.mxu0 0
    %4968 = vmatpush1.bf16.xpose.msra.mxu0 0
    %4969 = vmatprep.subr.bf16.mxu0 0
    %4970 = vmatpush1.bf16.xpose.msra.mxu0 0
    %4971 = vmatprep.subr.bf16.mxu0 0
    %4972 = vmatpush1.bf16.xpose.msra.mxu0 0
    %4973 = vmatprep.subr.bf16.mxu0 0
    %4974 = vmatpush1.bf16.xpose.msra.mxu0 0
    %4975 = vmatprep.subr.bf16.mxu0 0
    %4976 = vmatpush1.bf16.xpose.msra.mxu0 0
    %4977 = vmatprep.subr.bf16.mxu0 0
    %4978 = vmatpush1.bf16.xpose.msra.mxu0 0
    %4979 = vmatprep.mubr.bf16.mxu0 0
    %4980 = vmatmul.mubr.bf16.gmra.mrb[0].mxu0 %v4942
    %v4981 = vpop.f32.mrb[0].mxu0
    %v4982 = vadd.f32 0.0, %v4981
    %v4983 = vpop.f32.mrb[0].mxu0
    %v4984 = vpop.f32.mrb[0].mxu0
    %v4985 = vpop.f32.mrb[0].mxu0
    %4986 = vdwg.mxu0
    %v4988 = vsel %vm419, %v4746, 0
    %v4991 = vsel %vm419, %v4754, 0
    %4993 = vmatprep.subr.bf16.mxu0 0
    %4994 = vmatpush1.bf16.xpose.msra.mxu0 %v4991
    %4995 = vmatprep.subr.bf16.mxu0 0
    %4996 = vmatpush1.bf16.xpose.msra.mxu0 0
    %4997 = vmatprep.subr.bf16.mxu0 0
    %4998 = vmatpush1.bf16.xpose.msra.mxu0 0
    %4999 = vmatprep.subr.bf16.mxu0 0
    %5000 = vmatpush1.bf16.xpose.msra.mxu0 0
    %5001 = vmatprep.subr.bf16.mxu0 0
    %5002 = vmatpush1.bf16.xpose.msra.mxu0 0
    %5003 = vmatprep.subr.bf16.mxu0 0
    %5004 = vmatpush1.bf16.xpose.msra.mxu0 0
    %5005 = vmatprep.subr.bf16.mxu0 0
    %5006 = vmatpush1.bf16.xpose.msra.mxu0 0
    %5007 = vmatprep.subr.bf16.mxu0 0
    %5008 = vmatpush1.bf16.xpose.msra.mxu0 0
    %5009 = vmatprep.subr.bf16.mxu0 0
    %5010 = vmatpush1.bf16.xpose.msra.mxu0 0
    %5011 = vmatprep.subr.bf16.mxu0 0
    %5012 = vmatpush1.bf16.xpose.msra.mxu0 0
    %5013 = vmatprep.subr.bf16.mxu0 0
    %5014 = vmatpush1.bf16.xpose.msra.mxu0 0
    %5015 = vmatprep.subr.bf16.mxu0 0
    %5016 = vmatpush1.bf16.xpose.msra.mxu0 0
    %5017 = vmatprep.subr.bf16.mxu0 0
    %5018 = vmatpush1.bf16.xpose.msra.mxu0 0
    %5019 = vmatprep.subr.bf16.mxu0 0
    %5020 = vmatpush1.bf16.xpose.msra.mxu0 0
    %5021 = vmatprep.subr.bf16.mxu0 0
    %5022 = vmatpush1.bf16.xpose.msra.mxu0 0
    %5023 = vmatprep.subr.bf16.mxu0 0
    %5024 = vmatpush1.bf16.xpose.msra.mxu0 0
    %5025 = vmatprep.mubr.bf16.mxu0 0
    %5026 = vmatmul.mubr.bf16.gmra.mrb[0].mxu0 %v4988
    %v5027 = vpop.f32.mrb[0].mxu0
    %v5028 = vadd.f32 0.0, %v5027
    %v5029 = vpop.f32.mrb[0].mxu0
    %v5030 = vpop.f32.mrb[0].mxu0
    %v5031 = vpop.f32.mrb[0].mxu0
    %5032 = vdwg.mxu0
    %v5034 = vsel %vm419, %v4747, 0
    %v5037 = vsel %vm419, %v4755, 0
    %5039 = vmatprep.subr.bf16.mxu0 0
    %5040 = vmatpush1.bf16.xpose.msra.mxu0 %v5037
    %5041 = vmatprep.subr.bf16.mxu0 0
    %5042 = vmatpush1.bf16.xpose.msra.mxu0 0
    %5043 = vmatprep.subr.bf16.mxu0 0
    %5044 = vmatpush1.bf16.xpose.msra.mxu0 0
    %5045 = vmatprep.subr.bf16.mxu0 0
    %5046 = vmatpush1.bf16.xpose.msra.mxu0 0
    %5047 = vmatprep.subr.bf16.mxu0 0
    %5048 = vmatpush1.bf16.xpose.msra.mxu0 0
    %5049 = vmatprep.subr.bf16.mxu0 0
    %5050 = vmatpush1.bf16.xpose.msra.mxu0 0
    %5051 = vmatprep.subr.bf16.mxu0 0
    %5052 = vmatpush1.bf16.xpose.msra.mxu0 0
    %5053 = vmatprep.subr.bf16.mxu0 0
    %5054 = vmatpush1.bf16.xpose.msra.mxu0 0
    %5055 = vmatprep.subr.bf16.mxu0 0
    %5056 = vmatpush1.bf16.xpose.msra.mxu0 0
    %5057 = vmatprep.subr.bf16.mxu0 0
    %5058 = vmatpush1.bf16.xpose.msra.mxu0 0
    %5059 = vmatprep.subr.bf16.mxu0 0
    %5060 = vmatpush1.bf16.xpose.msra.mxu0 0
    %5061 = vmatprep.subr.bf16.mxu0 0
    %5062 = vmatpush1.bf16.xpose.msra.mxu0 0
    %5063 = vmatprep.subr.bf16.mxu0 0
    %5064 = vmatpush1.bf16.xpose.msra.mxu0 0
    %5065 = vmatprep.subr.bf16.mxu0 0
    %5066 = vmatpush1.bf16.xpose.msra.mxu0 0
    %5067 = vmatprep.subr.bf16.mxu0 0
    %5068 = vmatpush1.bf16.xpose.msra.mxu0 0
    %5069 = vmatprep.subr.bf16.mxu0 0
    %5070 = vmatpush1.bf16.xpose.msra.mxu0 0
    %5071 = vmatprep.mubr.bf16.mxu0 0
    %5072 = vmatmul.mubr.bf16.gmra.mrb[0].mxu0 %v5034
    %v5073 = vpop.f32.mrb[0].mxu0
    %v5074 = vadd.f32 0.0, %v5073
    %v5075 = vpop.f32.mrb[0].mxu0
    %v5076 = vpop.f32.mrb[0].mxu0
    %v5077 = vpop.f32.mrb[0].mxu0
    %5078 = vdwg.mxu0
    %v5080 = vsel %vm419, %v4748, 0
    %v5083 = vsel %vm419, %v4756, 0
    %5085 = vmatprep.subr.bf16.mxu0 0
    %5086 = vmatpush1.bf16.xpose.msra.mxu0 %v5083
    %5087 = vmatprep.subr.bf16.mxu0 0
    %5088 = vmatpush1.bf16.xpose.msra.mxu0 0
    %5089 = vmatprep.subr.bf16.mxu0 0
    %5090 = vmatpush1.bf16.xpose.msra.mxu0 0
    %5091 = vmatprep.subr.bf16.mxu0 0
    %5092 = vmatpush1.bf16.xpose.msra.mxu0 0
    %5093 = vmatprep.subr.bf16.mxu0 0
    %5094 = vmatpush1.bf16.xpose.msra.mxu0 0
    %5095 = vmatprep.subr.bf16.mxu0 0
    %5096 = vmatpush1.bf16.xpose.msra.mxu0 0
    %5097 = vmatprep.subr.bf16.mxu0 0
    %5098 = vmatpush1.bf16.xpose.msra.mxu0 0
    %5099 = vmatprep.subr.bf16.mxu0 0
    %5100 = vmatpush1.bf16.xpose.msra.mxu0 0
    %5101 = vmatprep.subr.bf16.mxu0 0
    %5102 = vmatpush1.bf16.xpose.msra.mxu0 0
    %5103 = vmatprep.subr.bf16.mxu0 0
    %5104 = vmatpush1.bf16.xpose.msra.mxu0 0
    %5105 = vmatprep.subr.bf16.mxu0 0
    %5106 = vmatpush1.bf16.xpose.msra.mxu0 0
    %5107 = vmatprep.subr.bf16.mxu0 0
    %5108 = vmatpush1.bf16.xpose.msra.mxu0 0
    %5109 = vmatprep.subr.bf16.mxu0 0
    %5110 = vmatpush1.bf16.xpose.msra.mxu0 0
    %5111 = vmatprep.subr.bf16.mxu0 0
    %5112 = vmatpush1.bf16.xpose.msra.mxu0 0
    %5113 = vmatprep.subr.bf16.mxu0 0
    %5114 = vmatpush1.bf16.xpose.msra.mxu0 0
    %5115 = vmatprep.subr.bf16.mxu0 0
    %5116 = vmatpush1.bf16.xpose.msra.mxu0 0
    %5117 = vmatprep.mubr.bf16.mxu0 0
    %5118 = vmatmul.mubr.bf16.gmra.mrb[0].mxu0 %v5080
    %v5119 = vpop.f32.mrb[0].mxu0
    %v5120 = vadd.f32 0.0, %v5119
    %v5121 = vpop.f32.mrb[0].mxu0
    %v5122 = vpop.f32.mrb[0].mxu0
    %v5123 = vpop.f32.mrb[0].mxu0
    %5124 = vdwg.mxu0
    %v5125 = vmul.f32 %v4798, 0.35355338
    %v5126 = vmul.f32 %v4844, 0.35355338
    %v5127 = vmul.f32 %v4890, 0.35355338
    %v5128 = vmul.f32 %v4936, 0.35355338
    %v5129 = vmul.f32 %v4982, 0.35355338
    %v5130 = vmul.f32 %v5028, 0.35355338
    %v5131 = vmul.f32 %v5074, 0.35355338
    %v5132 = vmul.f32 %v5120, 0.35355338
    %v5133 = vsel %vm796, %v5125, -inf
    %5134 = vmax.xlane.f32.xlu0 %v5133
    %v5135 = vpop.xlane.xlu0 %5134
    %v5136 = vsel %vm796, %v5126, -inf
    %5137 = vmax.xlane.f32.xlu0 %v5136
    %v5138 = vpop.xlane.xlu0 %5137
    %v5139 = vsel %vm796, %v5127, -inf
    %5140 = vmax.xlane.f32.xlu0 %v5139
    %v5141 = vpop.xlane.xlu0 %5140
    %v5142 = vsel %vm796, %v5128, -inf
    %5143 = vmax.xlane.f32.xlu0 %v5142
    %v5144 = vpop.xlane.xlu0 %5143
    %v5145 = vsel %vm796, %v5129, -inf
    %5146 = vmax.xlane.f32.xlu0 %v5145
    %v5147 = vpop.xlane.xlu0 %5146
    %v5148 = vsel %vm796, %v5130, -inf
    %5149 = vmax.xlane.f32.xlu0 %v5148
    %v5150 = vpop.xlane.xlu0 %5149
    %v5151 = vsel %vm796, %v5131, -inf
    %5152 = vmax.xlane.f32.xlu0 %v5151
    %v5153 = vpop.xlane.xlu0 %5152
    %v5154 = vsel %vm796, %v5132, -inf
    %5155 = vmax.xlane.f32.xlu0 %v5154
    %v5156 = vpop.xlane.xlu0 %5155
    %v5157 = vsub.f32 %v5125, %v5135
    %v5158 = vsub.f32 %v5126, %v5138
    %v5159 = vsub.f32 %v5127, %v5141
    %v5160 = vsub.f32 %v5128, %v5144
    %v5161 = vsub.f32 %v5129, %v5147
    %v5162 = vsub.f32 %v5130, %v5150
    %v5163 = vsub.f32 %v5131, %v5153
    %v5164 = vsub.f32 %v5132, %v5156
    %v5165 = vmul.f32 %v5157, 1.442695
    %v5166 = vpow.pop %v5165
    %v5167 = vmul.f32 %v5158, 1.442695
    %v5168 = vpow.pop %v5167
    %v5169 = vmul.f32 %v5159, 1.442695
    %v5170 = vpow.pop %v5169
    %v5171 = vmul.f32 %v5160, 1.442695
    %v5172 = vpow.pop %v5171
    %v5173 = vmul.f32 %v5161, 1.442695
    %v5174 = vpow.pop %v5173
    %v5175 = vmul.f32 %v5162, 1.442695
    %v5176 = vpow.pop %v5175
    %v5177 = vmul.f32 %v5163, 1.442695
    %v5178 = vpow.pop %v5177
    %v5179 = vmul.f32 %v5164, 1.442695
    %v5180 = vpow.pop %v5179
    %v5181 = vsel %vm796, %v5166, 0.0
    %5182 = vadd.xlane.f32.xlu0 %v5181
    %v5183 = vpop.xlane.xlu0 %5182
    %v5184 = vsel %vm796, %v5168, 0.0
    %5185 = vadd.xlane.f32.xlu0 %v5184
    %v5186 = vpop.xlane.xlu0 %5185
    %v5187 = vsel %vm796, %v5170, 0.0
    %5188 = vadd.xlane.f32.xlu0 %v5187
    %v5189 = vpop.xlane.xlu0 %5188
    %v5190 = vsel %vm796, %v5172, 0.0
    %5191 = vadd.xlane.f32.xlu0 %v5190
    %v5192 = vpop.xlane.xlu0 %5191
    %v5193 = vsel %vm796, %v5174, 0.0
    %5194 = vadd.xlane.f32.xlu0 %v5193
    %v5195 = vpop.xlane.xlu0 %5194
    %v5196 = vsel %vm796, %v5176, 0.0
    %5197 = vadd.xlane.f32.xlu0 %v5196
    %v5198 = vpop.xlane.xlu0 %5197
    %v5199 = vsel %vm796, %v5178, 0.0
    %5200 = vadd.xlane.f32.xlu0 %v5199
    %v5201 = vpop.xlane.xlu0 %5200
    %v5202 = vsel %vm796, %v5180, 0.0
    %5203 = vadd.xlane.f32.xlu0 %v5202
    %v5204 = vpop.xlane.xlu0 %5203
    %v5205 = vrcp.pop %v5183
    %v5206 = vrcp.pop %v5186
    %v5207 = vrcp.pop %v5189
    %v5208 = vrcp.pop %v5192
    %v5209 = vrcp.pop %v5195
    %v5210 = vrcp.pop %v5198
    %v5211 = vrcp.pop %v5201
    %v5212 = vrcp.pop %v5204
    %v5213 = vmul.f32 %v5183, %v5205
    %v5214 = vmul.f32 %v5186, %v5206
    %v5215 = vmul.f32 %v5189, %v5207
    %v5216 = vmul.f32 %v5192, %v5208
    %v5217 = vmul.f32 %v5195, %v5209
    %v5218 = vmul.f32 %v5198, %v5210
    %v5219 = vmul.f32 %v5201, %v5211
    %v5220 = vmul.f32 %v5204, %v5212
    %v5221 = vsub.f32 2.0, %v5213
    %v5222 = vsub.f32 2.0, %v5214
    %v5223 = vsub.f32 2.0, %v5215
    %v5224 = vsub.f32 2.0, %v5216
    %v5225 = vsub.f32 2.0, %v5217
    %v5226 = vsub.f32 2.0, %v5218
    %v5227 = vsub.f32 2.0, %v5219
    %v5228 = vsub.f32 2.0, %v5220
    %v5229 = vmul.f32 %v5205, %v5221
    %v5230 = vmul.f32 %v5206, %v5222
    %v5231 = vmul.f32 %v5207, %v5223
    %v5232 = vmul.f32 %v5208, %v5224
    %v5233 = vmul.f32 %v5209, %v5225
    %v5234 = vmul.f32 %v5210, %v5226
    %v5235 = vmul.f32 %v5211, %v5227
    %v5236 = vmul.f32 %v5212, %v5228
    %v5237 = vmul.f32 %v5166, %v5229
    %v5238 = vmul.f32 %v5168, %v5230
    %v5239 = vmul.f32 %v5170, %v5231
    %v5240 = vmul.f32 %v5172, %v5232
    %v5241 = vmul.f32 %v5174, %v5233
    %v5242 = vmul.f32 %v5176, %v5234
    %v5243 = vmul.f32 %v5178, %v5235
    %v5244 = vmul.f32 %v5180, %v5236
    %v5245 = vpack.c.bf16 %v5237, %v5237
    %v5246 = vpack.c.bf16 %v5238, %v5238
    %v5247 = vpack.c.bf16 %v5239, %v5239
    %v5248 = vpack.c.bf16 %v5240, %v5240
    %v5249 = vpack.c.bf16 %v5241, %v5241
    %v5250 = vpack.c.bf16 %v5242, %v5242
    %v5251 = vpack.c.bf16 %v5243, %v5243
    %v5252 = vpack.c.bf16 %v5244, %v5244
    %5254 = vrot.lane.b32.xlu0 %v4749, 96
    %v5255 = vpop.permute.xlu0 %5254
    %v5257 = vsel %vm920, %v5245, 0
    %v5260 = vsel %vm924, %v5255, 0
    %5262 = vmatprep.subr.bf16.mxu0 0
    %5263 = vmatpush1.bf16.msra.mxu0 %v5260
    %5264 = vmatprep.subr.bf16.mxu0 0
    %5265 = vmatpush1.bf16.msra.mxu0 0
    %5266 = vmatprep.subr.bf16.mxu0 0
    %5267 = vmatpush1.bf16.msra.mxu0 0
    %5268 = vmatprep.subr.bf16.mxu0 0
    %5269 = vmatpush1.bf16.msra.mxu0 0
    %5270 = vmatprep.subr.bf16.mxu0 0
    %5271 = vmatpush1.bf16.msra.mxu0 0
    %5272 = vmatprep.subr.bf16.mxu0 0
    %5273 = vmatpush1.bf16.msra.mxu0 0
    %5274 = vmatprep.subr.bf16.mxu0 0
    %5275 = vmatpush1.bf16.msra.mxu0 0
    %5276 = vmatprep.subr.bf16.mxu0 0
    %5277 = vmatpush1.bf16.msra.mxu0 0
    %5278 = vmatprep.subr.bf16.mxu0 0
    %5279 = vmatpush1.bf16.msra.mxu0 0
    %5280 = vmatprep.subr.bf16.mxu0 0
    %5281 = vmatpush1.bf16.msra.mxu0 0
    %5282 = vmatprep.subr.bf16.mxu0 0
    %5283 = vmatpush1.bf16.msra.mxu0 0
    %5284 = vmatprep.subr.bf16.mxu0 0
    %5285 = vmatpush1.bf16.msra.mxu0 0
    %5286 = vmatprep.subr.bf16.mxu0 0
    %5287 = vmatpush1.bf16.msra.mxu0 0
    %5288 = vmatprep.subr.bf16.mxu0 0
    %5289 = vmatpush1.bf16.msra.mxu0 0
    %5290 = vmatprep.subr.bf16.mxu0 0
    %5291 = vmatpush1.bf16.msra.mxu0 0
    %5292 = vmatprep.subr.bf16.mxu0 0
    %5293 = vmatpush1.bf16.msra.mxu0 0
    %5294 = vmatprep.mubr.bf16.mxu0 0
    %5295 = vmatmul.mubr.bf16.gmra.mrb[0].mxu0 %v5257
    %v5296 = vpop.f32.mrb[0].mxu0
    %v5297 = vadd.f32 0.0, %v5296
    %v5298 = vpop.f32.mrb[0].mxu0
    %v5299 = vpop.f32.mrb[0].mxu0
    %v5300 = vpop.f32.mrb[0].mxu0
    %5301 = vdwg.mxu0
    %5303 = vrot.lane.b32.xlu0 %v4750, 96
    %v5304 = vpop.permute.xlu0 %5303
    %v5306 = vsel %vm920, %v5246, 0
    %v5309 = vsel %vm924, %v5304, 0
    %5311 = vmatprep.subr.bf16.mxu0 0
    %5312 = vmatpush1.bf16.msra.mxu0 %v5309
    %5313 = vmatprep.subr.bf16.mxu0 0
    %5314 = vmatpush1.bf16.msra.mxu0 0
    %5315 = vmatprep.subr.bf16.mxu0 0
    %5316 = vmatpush1.bf16.msra.mxu0 0
    %5317 = vmatprep.subr.bf16.mxu0 0
    %5318 = vmatpush1.bf16.msra.mxu0 0
    %5319 = vmatprep.subr.bf16.mxu0 0
    %5320 = vmatpush1.bf16.msra.mxu0 0
    %5321 = vmatprep.subr.bf16.mxu0 0
    %5322 = vmatpush1.bf16.msra.mxu0 0
    %5323 = vmatprep.subr.bf16.mxu0 0
    %5324 = vmatpush1.bf16.msra.mxu0 0
    %5325 = vmatprep.subr.bf16.mxu0 0
    %5326 = vmatpush1.bf16.msra.mxu0 0
    %5327 = vmatprep.subr.bf16.mxu0 0
    %5328 = vmatpush1.bf16.msra.mxu0 0
    %5329 = vmatprep.subr.bf16.mxu0 0
    %5330 = vmatpush1.bf16.msra.mxu0 0
    %5331 = vmatprep.subr.bf16.mxu0 0
    %5332 = vmatpush1.bf16.msra.mxu0 0
    %5333 = vmatprep.subr.bf16.mxu0 0
    %5334 = vmatpush1.bf16.msra.mxu0 0
    %5335 = vmatprep.subr.bf16.mxu0 0
    %5336 = vmatpush1.bf16.msra.mxu0 0
    %5337 = vmatprep.subr.bf16.mxu0 0
    %5338 = vmatpush1.bf16.msra.mxu0 0
    %5339 = vmatprep.subr.bf16.mxu0 0
    %5340 = vmatpush1.bf16.msra.mxu0 0
    %5341 = vmatprep.subr.bf16.mxu0 0
    %5342 = vmatpush1.bf16.msra.mxu0 0
    %5343 = vmatprep.mubr.bf16.mxu0 0
    %5344 = vmatmul.mubr.bf16.gmra.mrb[0].mxu0 %v5306
    %v5345 = vpop.f32.mrb[0].mxu0
    %v5346 = vadd.f32 0.0, %v5345
    %v5347 = vpop.f32.mrb[0].mxu0
    %v5348 = vpop.f32.mrb[0].mxu0
    %v5349 = vpop.f32.mrb[0].mxu0
    %5350 = vdwg.mxu0
    %5352 = vrot.lane.b32.xlu0 %v4751, 96
    %v5353 = vpop.permute.xlu0 %5352
    %v5355 = vsel %vm920, %v5247, 0
    %v5358 = vsel %vm924, %v5353, 0
    %5360 = vmatprep.subr.bf16.mxu0 0
    %5361 = vmatpush1.bf16.msra.mxu0 %v5358
    %5362 = vmatprep.subr.bf16.mxu0 0
    %5363 = vmatpush1.bf16.msra.mxu0 0
    %5364 = vmatprep.subr.bf16.mxu0 0
    %5365 = vmatpush1.bf16.msra.mxu0 0
    %5366 = vmatprep.subr.bf16.mxu0 0
    %5367 = vmatpush1.bf16.msra.mxu0 0
    %5368 = vmatprep.subr.bf16.mxu0 0
    %5369 = vmatpush1.bf16.msra.mxu0 0
    %5370 = vmatprep.subr.bf16.mxu0 0
    %5371 = vmatpush1.bf16.msra.mxu0 0
    %5372 = vmatprep.subr.bf16.mxu0 0
    %5373 = vmatpush1.bf16.msra.mxu0 0
    %5374 = vmatprep.subr.bf16.mxu0 0
    %5375 = vmatpush1.bf16.msra.mxu0 0
    %5376 = vmatprep.subr.bf16.mxu0 0
    %5377 = vmatpush1.bf16.msra.mxu0 0
    %5378 = vmatprep.subr.bf16.mxu0 0
    %5379 = vmatpush1.bf16.msra.mxu0 0
    %5380 = vmatprep.subr.bf16.mxu0 0
    %5381 = vmatpush1.bf16.msra.mxu0 0
    %5382 = vmatprep.subr.bf16.mxu0 0
    %5383 = vmatpush1.bf16.msra.mxu0 0
    %5384 = vmatprep.subr.bf16.mxu0 0
    %5385 = vmatpush1.bf16.msra.mxu0 0
    %5386 = vmatprep.subr.bf16.mxu0 0
    %5387 = vmatpush1.bf16.msra.mxu0 0
    %5388 = vmatprep.subr.bf16.mxu0 0
    %5389 = vmatpush1.bf16.msra.mxu0 0
    %5390 = vmatprep.subr.bf16.mxu0 0
    %5391 = vmatpush1.bf16.msra.mxu0 0
    %5392 = vmatprep.mubr.bf16.mxu0 0
    %5393 = vmatmul.mubr.bf16.gmra.mrb[0].mxu0 %v5355
    %v5394 = vpop.f32.mrb[0].mxu0
    %v5395 = vadd.f32 0.0, %v5394
    %v5396 = vpop.f32.mrb[0].mxu0
    %v5397 = vpop.f32.mrb[0].mxu0
    %v5398 = vpop.f32.mrb[0].mxu0
    %5399 = vdwg.mxu0
    %5401 = vrot.lane.b32.xlu0 %v4752, 96
    %v5402 = vpop.permute.xlu0 %5401
    %v5404 = vsel %vm920, %v5248, 0
    %v5407 = vsel %vm924, %v5402, 0
    %5409 = vmatprep.subr.bf16.mxu0 0
    %5410 = vmatpush1.bf16.msra.mxu0 %v5407
    %5411 = vmatprep.subr.bf16.mxu0 0
    %5412 = vmatpush1.bf16.msra.mxu0 0
    %5413 = vmatprep.subr.bf16.mxu0 0
    %5414 = vmatpush1.bf16.msra.mxu0 0
    %5415 = vmatprep.subr.bf16.mxu0 0
    %5416 = vmatpush1.bf16.msra.mxu0 0
    %5417 = vmatprep.subr.bf16.mxu0 0
    %5418 = vmatpush1.bf16.msra.mxu0 0
    %5419 = vmatprep.subr.bf16.mxu0 0
    %5420 = vmatpush1.bf16.msra.mxu0 0
    %5421 = vmatprep.subr.bf16.mxu0 0
    %5422 = vmatpush1.bf16.msra.mxu0 0
    %5423 = vmatprep.subr.bf16.mxu0 0
    %5424 = vmatpush1.bf16.msra.mxu0 0
    %5425 = vmatprep.subr.bf16.mxu0 0
    %5426 = vmatpush1.bf16.msra.mxu0 0
    %5427 = vmatprep.subr.bf16.mxu0 0
    %5428 = vmatpush1.bf16.msra.mxu0 0
    %5429 = vmatprep.subr.bf16.mxu0 0
    %5430 = vmatpush1.bf16.msra.mxu0 0
    %5431 = vmatprep.subr.bf16.mxu0 0
    %5432 = vmatpush1.bf16.msra.mxu0 0
    %5433 = vmatprep.subr.bf16.mxu0 0
    %5434 = vmatpush1.bf16.msra.mxu0 0
    %5435 = vmatprep.subr.bf16.mxu0 0
    %5436 = vmatpush1.bf16.msra.mxu0 0
    %5437 = vmatprep.subr.bf16.mxu0 0
    %5438 = vmatpush1.bf16.msra.mxu0 0
    %5439 = vmatprep.subr.bf16.mxu0 0
    %5440 = vmatpush1.bf16.msra.mxu0 0
    %5441 = vmatprep.mubr.bf16.mxu0 0
    %5442 = vmatmul.mubr.bf16.gmra.mrb[0].mxu0 %v5404
    %v5443 = vpop.f32.mrb[0].mxu0
    %v5444 = vadd.f32 0.0, %v5443
    %v5445 = vpop.f32.mrb[0].mxu0
    %v5446 = vpop.f32.mrb[0].mxu0
    %v5447 = vpop.f32.mrb[0].mxu0
    %5448 = vdwg.mxu0
    %5450 = vrot.lane.b32.xlu0 %v4753, 96
    %v5451 = vpop.permute.xlu0 %5450
    %v5453 = vsel %vm920, %v5249, 0
    %v5456 = vsel %vm924, %v5451, 0
    %5458 = vmatprep.subr.bf16.mxu0 0
    %5459 = vmatpush1.bf16.msra.mxu0 %v5456
    %5460 = vmatprep.subr.bf16.mxu0 0
    %5461 = vmatpush1.bf16.msra.mxu0 0
    %5462 = vmatprep.subr.bf16.mxu0 0
    %5463 = vmatpush1.bf16.msra.mxu0 0
    %5464 = vmatprep.subr.bf16.mxu0 0
    %5465 = vmatpush1.bf16.msra.mxu0 0
    %5466 = vmatprep.subr.bf16.mxu0 0
    %5467 = vmatpush1.bf16.msra.mxu0 0
    %5468 = vmatprep.subr.bf16.mxu0 0
    %5469 = vmatpush1.bf16.msra.mxu0 0
    %5470 = vmatprep.subr.bf16.mxu0 0
    %5471 = vmatpush1.bf16.msra.mxu0 0
    %5472 = vmatprep.subr.bf16.mxu0 0
    %5473 = vmatpush1.bf16.msra.mxu0 0
    %5474 = vmatprep.subr.bf16.mxu0 0
    %5475 = vmatpush1.bf16.msra.mxu0 0
    %5476 = vmatprep.subr.bf16.mxu0 0
    %5477 = vmatpush1.bf16.msra.mxu0 0
    %5478 = vmatprep.subr.bf16.mxu0 0
    %5479 = vmatpush1.bf16.msra.mxu0 0
    %5480 = vmatprep.subr.bf16.mxu0 0
    %5481 = vmatpush1.bf16.msra.mxu0 0
    %5482 = vmatprep.subr.bf16.mxu0 0
    %5483 = vmatpush1.bf16.msra.mxu0 0
    %5484 = vmatprep.subr.bf16.mxu0 0
    %5485 = vmatpush1.bf16.msra.mxu0 0
    %5486 = vmatprep.subr.bf16.mxu0 0
    %5487 = vmatpush1.bf16.msra.mxu0 0
    %5488 = vmatprep.subr.bf16.mxu0 0
    %5489 = vmatpush1.bf16.msra.mxu0 0
    %5490 = vmatprep.mubr.bf16.mxu0 0
    %5491 = vmatmul.mubr.bf16.gmra.mrb[0].mxu0 %v5453
    %v5492 = vpop.f32.mrb[0].mxu0
    %v5493 = vadd.f32 0.0, %v5492
    %v5494 = vpop.f32.mrb[0].mxu0
    %v5495 = vpop.f32.mrb[0].mxu0
    %v5496 = vpop.f32.mrb[0].mxu0
    %5497 = vdwg.mxu0
    %5499 = vrot.lane.b32.xlu0 %v4754, 96
    %v5500 = vpop.permute.xlu0 %5499
    %v5502 = vsel %vm920, %v5250, 0
    %v5505 = vsel %vm924, %v5500, 0
    %5507 = vmatprep.subr.bf16.mxu0 0
    %5508 = vmatpush1.bf16.msra.mxu0 %v5505
    %5509 = vmatprep.subr.bf16.mxu0 0
    %5510 = vmatpush1.bf16.msra.mxu0 0
    %5511 = vmatprep.subr.bf16.mxu0 0
    %5512 = vmatpush1.bf16.msra.mxu0 0
    %5513 = vmatprep.subr.bf16.mxu0 0
    %5514 = vmatpush1.bf16.msra.mxu0 0
    %5515 = vmatprep.subr.bf16.mxu0 0
    %5516 = vmatpush1.bf16.msra.mxu0 0
    %5517 = vmatprep.subr.bf16.mxu0 0
    %5518 = vmatpush1.bf16.msra.mxu0 0
    %5519 = vmatprep.subr.bf16.mxu0 0
    %5520 = vmatpush1.bf16.msra.mxu0 0
    %5521 = vmatprep.subr.bf16.mxu0 0
    %5522 = vmatpush1.bf16.msra.mxu0 0
    %5523 = vmatprep.subr.bf16.mxu0 0
    %5524 = vmatpush1.bf16.msra.mxu0 0
    %5525 = vmatprep.subr.bf16.mxu0 0
    %5526 = vmatpush1.bf16.msra.mxu0 0
    %5527 = vmatprep.subr.bf16.mxu0 0
    %5528 = vmatpush1.bf16.msra.mxu0 0
    %5529 = vmatprep.subr.bf16.mxu0 0
    %5530 = vmatpush1.bf16.msra.mxu0 0
    %5531 = vmatprep.subr.bf16.mxu0 0
    %5532 = vmatpush1.bf16.msra.mxu0 0
    %5533 = vmatprep.subr.bf16.mxu0 0
    %5534 = vmatpush1.bf16.msra.mxu0 0
    %5535 = vmatprep.subr.bf16.mxu0 0
    %5536 = vmatpush1.bf16.msra.mxu0 0
    %5537 = vmatprep.subr.bf16.mxu0 0
    %5538 = vmatpush1.bf16.msra.mxu0 0
    %5539 = vmatprep.mubr.bf16.mxu0 0
    %5540 = vmatmul.mubr.bf16.gmra.mrb[0].mxu0 %v5502
    %v5541 = vpop.f32.mrb[0].mxu0
    %v5542 = vadd.f32 0.0, %v5541
    %v5543 = vpop.f32.mrb[0].mxu0
    %v5544 = vpop.f32.mrb[0].mxu0
    %v5545 = vpop.f32.mrb[0].mxu0
    %5546 = vdwg.mxu0
    %5548 = vrot.lane.b32.xlu0 %v4755, 96
    %v5549 = vpop.permute.xlu0 %5548
    %v5551 = vsel %vm920, %v5251, 0
    %v5554 = vsel %vm924, %v5549, 0
    %5556 = vmatprep.subr.bf16.mxu0 0
    %5557 = vmatpush1.bf16.msra.mxu0 %v5554
    %5558 = vmatprep.subr.bf16.mxu0 0
    %5559 = vmatpush1.bf16.msra.mxu0 0
    %5560 = vmatprep.subr.bf16.mxu0 0
    %5561 = vmatpush1.bf16.msra.mxu0 0
    %5562 = vmatprep.subr.bf16.mxu0 0
    %5563 = vmatpush1.bf16.msra.mxu0 0
    %5564 = vmatprep.subr.bf16.mxu0 0
    %5565 = vmatpush1.bf16.msra.mxu0 0
    %5566 = vmatprep.subr.bf16.mxu0 0
    %5567 = vmatpush1.bf16.msra.mxu0 0
    %5568 = vmatprep.subr.bf16.mxu0 0
    %5569 = vmatpush1.bf16.msra.mxu0 0
    %5570 = vmatprep.subr.bf16.mxu0 0
    %5571 = vmatpush1.bf16.msra.mxu0 0
    %5572 = vmatprep.subr.bf16.mxu0 0
    %5573 = vmatpush1.bf16.msra.mxu0 0
    %5574 = vmatprep.subr.bf16.mxu0 0
    %5575 = vmatpush1.bf16.msra.mxu0 0
    %5576 = vmatprep.subr.bf16.mxu0 0
    %5577 = vmatpush1.bf16.msra.mxu0 0
    %5578 = vmatprep.subr.bf16.mxu0 0
    %5579 = vmatpush1.bf16.msra.mxu0 0
    %5580 = vmatprep.subr.bf16.mxu0 0
    %5581 = vmatpush1.bf16.msra.mxu0 0
    %5582 = vmatprep.subr.bf16.mxu0 0
    %5583 = vmatpush1.bf16.msra.mxu0 0
    %5584 = vmatprep.subr.bf16.mxu0 0
    %5585 = vmatpush1.bf16.msra.mxu0 0
    %5586 = vmatprep.subr.bf16.mxu0 0
    %5587 = vmatpush1.bf16.msra.mxu0 0
    %5588 = vmatprep.mubr.bf16.mxu0 0
    %5589 = vmatmul.mubr.bf16.gmra.mrb[0].mxu0 %v5551
    %v5590 = vpop.f32.mrb[0].mxu0
    %v5591 = vadd.f32 0.0, %v5590
    %v5592 = vpop.f32.mrb[0].mxu0
    %v5593 = vpop.f32.mrb[0].mxu0
    %v5594 = vpop.f32.mrb[0].mxu0
    %5595 = vdwg.mxu0
    %5597 = vrot.lane.b32.xlu0 %v4756, 96
    %v5598 = vpop.permute.xlu0 %5597
    %v5600 = vsel %vm920, %v5252, 0
    %v5603 = vsel %vm924, %v5598, 0
    %5605 = vmatprep.subr.bf16.mxu0 0
    %5606 = vmatpush1.bf16.msra.mxu0 %v5603
    %5607 = vmatprep.subr.bf16.mxu0 0
    %5608 = vmatpush1.bf16.msra.mxu0 0
    %5609 = vmatprep.subr.bf16.mxu0 0
    %5610 = vmatpush1.bf16.msra.mxu0 0
    %5611 = vmatprep.subr.bf16.mxu0 0
    %5612 = vmatpush1.bf16.msra.mxu0 0
    %5613 = vmatprep.subr.bf16.mxu0 0
    %5614 = vmatpush1.bf16.msra.mxu0 0
    %5615 = vmatprep.subr.bf16.mxu0 0
    %5616 = vmatpush1.bf16.msra.mxu0 0
    %5617 = vmatprep.subr.bf16.mxu0 0
    %5618 = vmatpush1.bf16.msra.mxu0 0
    %5619 = vmatprep.subr.bf16.mxu0 0
    %5620 = vmatpush1.bf16.msra.mxu0 0
    %5621 = vmatprep.subr.bf16.mxu0 0
    %5622 = vmatpush1.bf16.msra.mxu0 0
    %5623 = vmatprep.subr.bf16.mxu0 0
    %5624 = vmatpush1.bf16.msra.mxu0 0
    %5625 = vmatprep.subr.bf16.mxu0 0
    %5626 = vmatpush1.bf16.msra.mxu0 0
    %5627 = vmatprep.subr.bf16.mxu0 0
    %5628 = vmatpush1.bf16.msra.mxu0 0
    %5629 = vmatprep.subr.bf16.mxu0 0
    %5630 = vmatpush1.bf16.msra.mxu0 0
    %5631 = vmatprep.subr.bf16.mxu0 0
    %5632 = vmatpush1.bf16.msra.mxu0 0
    %5633 = vmatprep.subr.bf16.mxu0 0
    %5634 = vmatpush1.bf16.msra.mxu0 0
    %5635 = vmatprep.subr.bf16.mxu0 0
    %5636 = vmatpush1.bf16.msra.mxu0 0
    %5637 = vmatprep.mubr.bf16.mxu0 0
    %5638 = vmatmul.mubr.bf16.gmra.mrb[0].mxu0 %v5600
    %v5639 = vpop.f32.mrb[0].mxu0
    %v5640 = vadd.f32 0.0, %v5639
    %v5641 = vpop.f32.mrb[0].mxu0
    %v5642 = vpop.f32.mrb[0].mxu0
    %v5643 = vpop.f32.mrb[0].mxu0
    %5644 = vdwg.mxu0
    %5646 = vrot.lane.b32.xlu0 %v4741, 120
    %v5647 = vpop.permute.xlu0 %5646
    %5648 = vrot.lane.b32.xlu0 %v4749, 120
    %v5649 = vpop.permute.xlu0 %5648
    %v5651 = vsel %vm419, %v5647, 0
    %v5654 = vsel %vm419, %v5649, 0
    %5656 = vmatprep.subr.bf16.mxu0 0
    %5657 = vmatpush1.bf16.xpose.msra.mxu0 %v5654
    %5658 = vmatprep.subr.bf16.mxu0 0
    %5659 = vmatpush1.bf16.xpose.msra.mxu0 0
    %5660 = vmatprep.subr.bf16.mxu0 0
    %5661 = vmatpush1.bf16.xpose.msra.mxu0 0
    %5662 = vmatprep.subr.bf16.mxu0 0
    %5663 = vmatpush1.bf16.xpose.msra.mxu0 0
    %5664 = vmatprep.subr.bf16.mxu0 0
    %5665 = vmatpush1.bf16.xpose.msra.mxu0 0
    %5666 = vmatprep.subr.bf16.mxu0 0
    %5667 = vmatpush1.bf16.xpose.msra.mxu0 0
    %5668 = vmatprep.subr.bf16.mxu0 0
    %5669 = vmatpush1.bf16.xpose.msra.mxu0 0
    %5670 = vmatprep.subr.bf16.mxu0 0
    %5671 = vmatpush1.bf16.xpose.msra.mxu0 0
    %5672 = vmatprep.subr.bf16.mxu0 0
    %5673 = vmatpush1.bf16.xpose.msra.mxu0 0
    %5674 = vmatprep.subr.bf16.mxu0 0
    %5675 = vmatpush1.bf16.xpose.msra.mxu0 0
    %5676 = vmatprep.subr.bf16.mxu0 0
    %5677 = vmatpush1.bf16.xpose.msra.mxu0 0
    %5678 = vmatprep.subr.bf16.mxu0 0
    %5679 = vmatpush1.bf16.xpose.msra.mxu0 0
    %5680 = vmatprep.subr.bf16.mxu0 0
    %5681 = vmatpush1.bf16.xpose.msra.mxu0 0
    %5682 = vmatprep.subr.bf16.mxu0 0
    %5683 = vmatpush1.bf16.xpose.msra.mxu0 0
    %5684 = vmatprep.subr.bf16.mxu0 0
    %5685 = vmatpush1.bf16.xpose.msra.mxu0 0
    %5686 = vmatprep.subr.bf16.mxu0 0
    %5687 = vmatpush1.bf16.xpose.msra.mxu0 0
    %5688 = vmatprep.mubr.bf16.mxu0 0
    %5689 = vmatmul.mubr.bf16.gmra.mrb[0].mxu0 %v5651
    %v5690 = vpop.f32.mrb[0].mxu0
    %v5691 = vadd.f32 0.0, %v5690
    %v5692 = vpop.f32.mrb[0].mxu0
    %v5693 = vpop.f32.mrb[0].mxu0
    %v5694 = vpop.f32.mrb[0].mxu0
    %5695 = vdwg.mxu0
    %5697 = vrot.lane.b32.xlu0 %v4742, 120
    %v5698 = vpop.permute.xlu0 %5697
    %5699 = vrot.lane.b32.xlu0 %v4750, 120
    %v5700 = vpop.permute.xlu0 %5699
    %v5702 = vsel %vm419, %v5698, 0
    %v5705 = vsel %vm419, %v5700, 0
    %5707 = vmatprep.subr.bf16.mxu0 0
    %5708 = vmatpush1.bf16.xpose.msra.mxu0 %v5705
    %5709 = vmatprep.subr.bf16.mxu0 0
    %5710 = vmatpush1.bf16.xpose.msra.mxu0 0
    %5711 = vmatprep.subr.bf16.mxu0 0
    %5712 = vmatpush1.bf16.xpose.msra.mxu0 0
    %5713 = vmatprep.subr.bf16.mxu0 0
    %5714 = vmatpush1.bf16.xpose.msra.mxu0 0
    %5715 = vmatprep.subr.bf16.mxu0 0
    %5716 = vmatpush1.bf16.xpose.msra.mxu0 0
    %5717 = vmatprep.subr.bf16.mxu0 0
    %5718 = vmatpush1.bf16.xpose.msra.mxu0 0
    %5719 = vmatprep.subr.bf16.mxu0 0
    %5720 = vmatpush1.bf16.xpose.msra.mxu0 0
    %5721 = vmatprep.subr.bf16.mxu0 0
    %5722 = vmatpush1.bf16.xpose.msra.mxu0 0
    %5723 = vmatprep.subr.bf16.mxu0 0
    %5724 = vmatpush1.bf16.xpose.msra.mxu0 0
    %5725 = vmatprep.subr.bf16.mxu0 0
    %5726 = vmatpush1.bf16.xpose.msra.mxu0 0
    %5727 = vmatprep.subr.bf16.mxu0 0
    %5728 = vmatpush1.bf16.xpose.msra.mxu0 0
    %5729 = vmatprep.subr.bf16.mxu0 0
    %5730 = vmatpush1.bf16.xpose.msra.mxu0 0
    %5731 = vmatprep.subr.bf16.mxu0 0
    %5732 = vmatpush1.bf16.xpose.msra.mxu0 0
    %5733 = vmatprep.subr.bf16.mxu0 0
    %5734 = vmatpush1.bf16.xpose.msra.mxu0 0
    %5735 = vmatprep.subr.bf16.mxu0 0
    %5736 = vmatpush1.bf16.xpose.msra.mxu0 0
    %5737 = vmatprep.subr.bf16.mxu0 0
    %5738 = vmatpush1.bf16.xpose.msra.mxu0 0
    %5739 = vmatprep.mubr.bf16.mxu0 0
    %5740 = vmatmul.mubr.bf16.gmra.mrb[0].mxu0 %v5702
    %v5741 = vpop.f32.mrb[0].mxu0
    %v5742 = vadd.f32 0.0, %v5741
    %v5743 = vpop.f32.mrb[0].mxu0
    %v5744 = vpop.f32.mrb[0].mxu0
    %v5745 = vpop.f32.mrb[0].mxu0
    %5746 = vdwg.mxu0
    %5748 = vrot.lane.b32.xlu0 %v4743, 120
    %v5749 = vpop.permute.xlu0 %5748
    %5750 = vrot.lane.b32.xlu0 %v4751, 120
    %v5751 = vpop.permute.xlu0 %5750
    %v5753 = vsel %vm419, %v5749, 0
    %v5756 = vsel %vm419, %v5751, 0
    %5758 = vmatprep.subr.bf16.mxu0 0
    %5759 = vmatpush1.bf16.xpose.msra.mxu0 %v5756
    %5760 = vmatprep.subr.bf16.mxu0 0
    %5761 = vmatpush1.bf16.xpose.msra.mxu0 0
    %5762 = vmatprep.subr.bf16.mxu0 0
    %5763 = vmatpush1.bf16.xpose.msra.mxu0 0
    %5764 = vmatprep.subr.bf16.mxu0 0
    %5765 = vmatpush1.bf16.xpose.msra.mxu0 0
    %5766 = vmatprep.subr.bf16.mxu0 0
    %5767 = vmatpush1.bf16.xpose.msra.mxu0 0
    %5768 = vmatprep.subr.bf16.mxu0 0
    %5769 = vmatpush1.bf16.xpose.msra.mxu0 0
    %5770 = vmatprep.subr.bf16.mxu0 0
    %5771 = vmatpush1.bf16.xpose.msra.mxu0 0
    %5772 = vmatprep.subr.bf16.mxu0 0
    %5773 = vmatpush1.bf16.xpose.msra.mxu0 0
    %5774 = vmatprep.subr.bf16.mxu0 0
    %5775 = vmatpush1.bf16.xpose.msra.mxu0 0
    %5776 = vmatprep.subr.bf16.mxu0 0
    %5777 = vmatpush1.bf16.xpose.msra.mxu0 0
    %5778 = vmatprep.subr.bf16.mxu0 0
    %5779 = vmatpush1.bf16.xpose.msra.mxu0 0
    %5780 = vmatprep.subr.bf16.mxu0 0
    %5781 = vmatpush1.bf16.xpose.msra.mxu0 0
    %5782 = vmatprep.subr.bf16.mxu0 0
    %5783 = vmatpush1.bf16.xpose.msra.mxu0 0
    %5784 = vmatprep.subr.bf16.mxu0 0
    %5785 = vmatpush1.bf16.xpose.msra.mxu0 0
    %5786 = vmatprep.subr.bf16.mxu0 0
    %5787 = vmatpush1.bf16.xpose.msra.mxu0 0
    %5788 = vmatprep.subr.bf16.mxu0 0
    %5789 = vmatpush1.bf16.xpose.msra.mxu0 0
    %5790 = vmatprep.mubr.bf16.mxu0 0
    %5791 = vmatmul.mubr.bf16.gmra.mrb[0].mxu0 %v5753
    %v5792 = vpop.f32.mrb[0].mxu0
    %v5793 = vadd.f32 0.0, %v5792
    %v5794 = vpop.f32.mrb[0].mxu0
    %v5795 = vpop.f32.mrb[0].mxu0
    %v5796 = vpop.f32.mrb[0].mxu0
    %5797 = vdwg.mxu0
    %5799 = vrot.lane.b32.xlu0 %v4744, 120
    %v5800 = vpop.permute.xlu0 %5799
    %5801 = vrot.lane.b32.xlu0 %v4752, 120
    %v5802 = vpop.permute.xlu0 %5801
    %v5804 = vsel %vm419, %v5800, 0
    %v5807 = vsel %vm419, %v5802, 0
    %5809 = vmatprep.subr.bf16.mxu0 0
    %5810 = vmatpush1.bf16.xpose.msra.mxu0 %v5807
    %5811 = vmatprep.subr.bf16.mxu0 0
    %5812 = vmatpush1.bf16.xpose.msra.mxu0 0
    %5813 = vmatprep.subr.bf16.mxu0 0
    %5814 = vmatpush1.bf16.xpose.msra.mxu0 0
    %5815 = vmatprep.subr.bf16.mxu0 0
    %5816 = vmatpush1.bf16.xpose.msra.mxu0 0
    %5817 = vmatprep.subr.bf16.mxu0 0
    %5818 = vmatpush1.bf16.xpose.msra.mxu0 0
    %5819 = vmatprep.subr.bf16.mxu0 0
    %5820 = vmatpush1.bf16.xpose.msra.mxu0 0
    %5821 = vmatprep.subr.bf16.mxu0 0
    %5822 = vmatpush1.bf16.xpose.msra.mxu0 0
    %5823 = vmatprep.subr.bf16.mxu0 0
    %5824 = vmatpush1.bf16.xpose.msra.mxu0 0
    %5825 = vmatprep.subr.bf16.mxu0 0
    %5826 = vmatpush1.bf16.xpose.msra.mxu0 0
    %5827 = vmatprep.subr.bf16.mxu0 0
    %5828 = vmatpush1.bf16.xpose.msra.mxu0 0
    %5829 = vmatprep.subr.bf16.mxu0 0
    %5830 = vmatpush1.bf16.xpose.msra.mxu0 0
    %5831 = vmatprep.subr.bf16.mxu0 0
    %5832 = vmatpush1.bf16.xpose.msra.mxu0 0
    %5833 = vmatprep.subr.bf16.mxu0 0
    %5834 = vmatpush1.bf16.xpose.msra.mxu0 0
    %5835 = vmatprep.subr.bf16.mxu0 0
    %5836 = vmatpush1.bf16.xpose.msra.mxu0 0
    %5837 = vmatprep.subr.bf16.mxu0 0
    %5838 = vmatpush1.bf16.xpose.msra.mxu0 0
    %5839 = vmatprep.subr.bf16.mxu0 0
    %5840 = vmatpush1.bf16.xpose.msra.mxu0 0
    %5841 = vmatprep.mubr.bf16.mxu0 0
    %5842 = vmatmul.mubr.bf16.gmra.mrb[0].mxu0 %v5804
    %v5843 = vpop.f32.mrb[0].mxu0
    %v5844 = vadd.f32 0.0, %v5843
    %v5845 = vpop.f32.mrb[0].mxu0
    %v5846 = vpop.f32.mrb[0].mxu0
    %v5847 = vpop.f32.mrb[0].mxu0
    %5848 = vdwg.mxu0
    %5850 = vrot.lane.b32.xlu0 %v4745, 120
    %v5851 = vpop.permute.xlu0 %5850
    %5852 = vrot.lane.b32.xlu0 %v4753, 120
    %v5853 = vpop.permute.xlu0 %5852
    %v5855 = vsel %vm419, %v5851, 0
    %v5858 = vsel %vm419, %v5853, 0
    %5860 = vmatprep.subr.bf16.mxu0 0
    %5861 = vmatpush1.bf16.xpose.msra.mxu0 %v5858
    %5862 = vmatprep.subr.bf16.mxu0 0
    %5863 = vmatpush1.bf16.xpose.msra.mxu0 0
    %5864 = vmatprep.subr.bf16.mxu0 0
    %5865 = vmatpush1.bf16.xpose.msra.mxu0 0
    %5866 = vmatprep.subr.bf16.mxu0 0
    %5867 = vmatpush1.bf16.xpose.msra.mxu0 0
    %5868 = vmatprep.subr.bf16.mxu0 0
    %5869 = vmatpush1.bf16.xpose.msra.mxu0 0
    %5870 = vmatprep.subr.bf16.mxu0 0
    %5871 = vmatpush1.bf16.xpose.msra.mxu0 0
    %5872 = vmatprep.subr.bf16.mxu0 0
    %5873 = vmatpush1.bf16.xpose.msra.mxu0 0
    %5874 = vmatprep.subr.bf16.mxu0 0
    %5875 = vmatpush1.bf16.xpose.msra.mxu0 0
    %5876 = vmatprep.subr.bf16.mxu0 0
    %5877 = vmatpush1.bf16.xpose.msra.mxu0 0
    %5878 = vmatprep.subr.bf16.mxu0 0
    %5879 = vmatpush1.bf16.xpose.msra.mxu0 0
    %5880 = vmatprep.subr.bf16.mxu0 0
    %5881 = vmatpush1.bf16.xpose.msra.mxu0 0
    %5882 = vmatprep.subr.bf16.mxu0 0
    %5883 = vmatpush1.bf16.xpose.msra.mxu0 0
    %5884 = vmatprep.subr.bf16.mxu0 0
    %5885 = vmatpush1.bf16.xpose.msra.mxu0 0
    %5886 = vmatprep.subr.bf16.mxu0 0
    %5887 = vmatpush1.bf16.xpose.msra.mxu0 0
    %5888 = vmatprep.subr.bf16.mxu0 0
    %5889 = vmatpush1.bf16.xpose.msra.mxu0 0
    %5890 = vmatprep.subr.bf16.mxu0 0
    %5891 = vmatpush1.bf16.xpose.msra.mxu0 0
    %5892 = vmatprep.mubr.bf16.mxu0 0
    %5893 = vmatmul.mubr.bf16.gmra.mrb[0].mxu0 %v5855
    %v5894 = vpop.f32.mrb[0].mxu0
    %v5895 = vadd.f32 0.0, %v5894
    %v5896 = vpop.f32.mrb[0].mxu0
    %v5897 = vpop.f32.mrb[0].mxu0
    %v5898 = vpop.f32.mrb[0].mxu0
    %5899 = vdwg.mxu0
    %5901 = vrot.lane.b32.xlu0 %v4746, 120
    %v5902 = vpop.permute.xlu0 %5901
    %5903 = vrot.lane.b32.xlu0 %v4754, 120
    %v5904 = vpop.permute.xlu0 %5903
    %v5906 = vsel %vm419, %v5902, 0
    %v5909 = vsel %vm419, %v5904, 0
    %5911 = vmatprep.subr.bf16.mxu0 0
    %5912 = vmatpush1.bf16.xpose.msra.mxu0 %v5909
    %5913 = vmatprep.subr.bf16.mxu0 0
    %5914 = vmatpush1.bf16.xpose.msra.mxu0 0
    %5915 = vmatprep.subr.bf16.mxu0 0
    %5916 = vmatpush1.bf16.xpose.msra.mxu0 0
    %5917 = vmatprep.subr.bf16.mxu0 0
    %5918 = vmatpush1.bf16.xpose.msra.mxu0 0
    %5919 = vmatprep.subr.bf16.mxu0 0
    %5920 = vmatpush1.bf16.xpose.msra.mxu0 0
    %5921 = vmatprep.subr.bf16.mxu0 0
    %5922 = vmatpush1.bf16.xpose.msra.mxu0 0
    %5923 = vmatprep.subr.bf16.mxu0 0
    %5924 = vmatpush1.bf16.xpose.msra.mxu0 0
    %5925 = vmatprep.subr.bf16.mxu0 0
    %5926 = vmatpush1.bf16.xpose.msra.mxu0 0
    %5927 = vmatprep.subr.bf16.mxu0 0
    %5928 = vmatpush1.bf16.xpose.msra.mxu0 0
    %5929 = vmatprep.subr.bf16.mxu0 0
    %5930 = vmatpush1.bf16.xpose.msra.mxu0 0
    %5931 = vmatprep.subr.bf16.mxu0 0
    %5932 = vmatpush1.bf16.xpose.msra.mxu0 0
    %5933 = vmatprep.subr.bf16.mxu0 0
    %5934 = vmatpush1.bf16.xpose.msra.mxu0 0
    %5935 = vmatprep.subr.bf16.mxu0 0
    %5936 = vmatpush1.bf16.xpose.msra.mxu0 0
    %5937 = vmatprep.subr.bf16.mxu0 0
    %5938 = vmatpush1.bf16.xpose.msra.mxu0 0
    %5939 = vmatprep.subr.bf16.mxu0 0
    %5940 = vmatpush1.bf16.xpose.msra.mxu0 0
    %5941 = vmatprep.subr.bf16.mxu0 0
    %5942 = vmatpush1.bf16.xpose.msra.mxu0 0
    %5943 = vmatprep.mubr.bf16.mxu0 0
    %5944 = vmatmul.mubr.bf16.gmra.mrb[0].mxu0 %v5906
    %v5945 = vpop.f32.mrb[0].mxu0
    %v5946 = vadd.f32 0.0, %v5945
    %v5947 = vpop.f32.mrb[0].mxu0
    %v5948 = vpop.f32.mrb[0].mxu0
    %v5949 = vpop.f32.mrb[0].mxu0
    %5950 = vdwg.mxu0
    %5952 = vrot.lane.b32.xlu0 %v4747, 120
    %v5953 = vpop.permute.xlu0 %5952
    %5954 = vrot.lane.b32.xlu0 %v4755, 120
    %v5955 = vpop.permute.xlu0 %5954
    %v5957 = vsel %vm419, %v5953, 0
    %v5960 = vsel %vm419, %v5955, 0
    %5962 = vmatprep.subr.bf16.mxu0 0
    %5963 = vmatpush1.bf16.xpose.msra.mxu0 %v5960
    %5964 = vmatprep.subr.bf16.mxu0 0
    %5965 = vmatpush1.bf16.xpose.msra.mxu0 0
    %5966 = vmatprep.subr.bf16.mxu0 0
    %5967 = vmatpush1.bf16.xpose.msra.mxu0 0
    %5968 = vmatprep.subr.bf16.mxu0 0
    %5969 = vmatpush1.bf16.xpose.msra.mxu0 0
    %5970 = vmatprep.subr.bf16.mxu0 0
    %5971 = vmatpush1.bf16.xpose.msra.mxu0 0
    %5972 = vmatprep.subr.bf16.mxu0 0
    %5973 = vmatpush1.bf16.xpose.msra.mxu0 0
    %5974 = vmatprep.subr.bf16.mxu0 0
    %5975 = vmatpush1.bf16.xpose.msra.mxu0 0
    %5976 = vmatprep.subr.bf16.mxu0 0
    %5977 = vmatpush1.bf16.xpose.msra.mxu0 0
    %5978 = vmatprep.subr.bf16.mxu0 0
    %5979 = vmatpush1.bf16.xpose.msra.mxu0 0
    %5980 = vmatprep.subr.bf16.mxu0 0
    %5981 = vmatpush1.bf16.xpose.msra.mxu0 0
    %5982 = vmatprep.subr.bf16.mxu0 0
    %5983 = vmatpush1.bf16.xpose.msra.mxu0 0
    %5984 = vmatprep.subr.bf16.mxu0 0
    %5985 = vmatpush1.bf16.xpose.msra.mxu0 0
    %5986 = vmatprep.subr.bf16.mxu0 0
    %5987 = vmatpush1.bf16.xpose.msra.mxu0 0
    %5988 = vmatprep.subr.bf16.mxu0 0
    %5989 = vmatpush1.bf16.xpose.msra.mxu0 0
    %5990 = vmatprep.subr.bf16.mxu0 0
    %5991 = vmatpush1.bf16.xpose.msra.mxu0 0
    %5992 = vmatprep.subr.bf16.mxu0 0
    %5993 = vmatpush1.bf16.xpose.msra.mxu0 0
    %5994 = vmatprep.mubr.bf16.mxu0 0
    %5995 = vmatmul.mubr.bf16.gmra.mrb[0].mxu0 %v5957
    %v5996 = vpop.f32.mrb[0].mxu0
    %v5997 = vadd.f32 0.0, %v5996
    %v5998 = vpop.f32.mrb[0].mxu0
    %v5999 = vpop.f32.mrb[0].mxu0
    %v6000 = vpop.f32.mrb[0].mxu0
    %6001 = vdwg.mxu0
    %6003 = vrot.lane.b32.xlu0 %v4748, 120
    %v6004 = vpop.permute.xlu0 %6003
    %6005 = vrot.lane.b32.xlu0 %v4756, 120
    %v6006 = vpop.permute.xlu0 %6005
    %v6008 = vsel %vm419, %v6004, 0
    %v6011 = vsel %vm419, %v6006, 0
    %6013 = vmatprep.subr.bf16.mxu0 0
    %6014 = vmatpush1.bf16.xpose.msra.mxu0 %v6011
    %6015 = vmatprep.subr.bf16.mxu0 0
    %6016 = vmatpush1.bf16.xpose.msra.mxu0 0
    %6017 = vmatprep.subr.bf16.mxu0 0
    %6018 = vmatpush1.bf16.xpose.msra.mxu0 0
    %6019 = vmatprep.subr.bf16.mxu0 0
    %6020 = vmatpush1.bf16.xpose.msra.mxu0 0
    %6021 = vmatprep.subr.bf16.mxu0 0
    %6022 = vmatpush1.bf16.xpose.msra.mxu0 0
    %6023 = vmatprep.subr.bf16.mxu0 0
    %6024 = vmatpush1.bf16.xpose.msra.mxu0 0
    %6025 = vmatprep.subr.bf16.mxu0 0
    %6026 = vmatpush1.bf16.xpose.msra.mxu0 0
    %6027 = vmatprep.subr.bf16.mxu0 0
    %6028 = vmatpush1.bf16.xpose.msra.mxu0 0
    %6029 = vmatprep.subr.bf16.mxu0 0
    %6030 = vmatpush1.bf16.xpose.msra.mxu0 0
    %6031 = vmatprep.subr.bf16.mxu0 0
    %6032 = vmatpush1.bf16.xpose.msra.mxu0 0
    %6033 = vmatprep.subr.bf16.mxu0 0
    %6034 = vmatpush1.bf16.xpose.msra.mxu0 0
    %6035 = vmatprep.subr.bf16.mxu0 0
    %6036 = vmatpush1.bf16.xpose.msra.mxu0 0
    %6037 = vmatprep.subr.bf16.mxu0 0
    %6038 = vmatpush1.bf16.xpose.msra.mxu0 0
    %6039 = vmatprep.subr.bf16.mxu0 0
    %6040 = vmatpush1.bf16.xpose.msra.mxu0 0
    %6041 = vmatprep.subr.bf16.mxu0 0
    %6042 = vmatpush1.bf16.xpose.msra.mxu0 0
    %6043 = vmatprep.subr.bf16.mxu0 0
    %6044 = vmatpush1.bf16.xpose.msra.mxu0 0
    %6045 = vmatprep.mubr.bf16.mxu0 0
    %6046 = vmatmul.mubr.bf16.gmra.mrb[0].mxu0 %v6008
    %v6047 = vpop.f32.mrb[0].mxu0
    %v6048 = vadd.f32 0.0, %v6047
    %v6049 = vpop.f32.mrb[0].mxu0
    %v6050 = vpop.f32.mrb[0].mxu0
    %v6051 = vpop.f32.mrb[0].mxu0
    %6052 = vdwg.mxu0
    %v6053 = vmul.f32 %v5691, 0.35355338
    %v6054 = vmul.f32 %v5742, 0.35355338
    %v6055 = vmul.f32 %v5793, 0.35355338
    %v6056 = vmul.f32 %v5844, 0.35355338
    %v6057 = vmul.f32 %v5895, 0.35355338
    %v6058 = vmul.f32 %v5946, 0.35355338
    %v6059 = vmul.f32 %v5997, 0.35355338
    %v6060 = vmul.f32 %v6048, 0.35355338
    %v6061 = vsel %vm796, %v6053, -inf
    %6062 = vmax.xlane.f32.xlu0 %v6061
    %v6063 = vpop.xlane.xlu0 %6062
    %v6064 = vsel %vm796, %v6054, -inf
    %6065 = vmax.xlane.f32.xlu0 %v6064
    %v6066 = vpop.xlane.xlu0 %6065
    %v6067 = vsel %vm796, %v6055, -inf
    %6068 = vmax.xlane.f32.xlu0 %v6067
    %v6069 = vpop.xlane.xlu0 %6068
    %v6070 = vsel %vm796, %v6056, -inf
    %6071 = vmax.xlane.f32.xlu0 %v6070
    %v6072 = vpop.xlane.xlu0 %6071
    %v6073 = vsel %vm796, %v6057, -inf
    %6074 = vmax.xlane.f32.xlu0 %v6073
    %v6075 = vpop.xlane.xlu0 %6074
    %v6076 = vsel %vm796, %v6058, -inf
    %6077 = vmax.xlane.f32.xlu0 %v6076
    %v6078 = vpop.xlane.xlu0 %6077
    %v6079 = vsel %vm796, %v6059, -inf
    %6080 = vmax.xlane.f32.xlu0 %v6079
    %v6081 = vpop.xlane.xlu0 %6080
    %v6082 = vsel %vm796, %v6060, -inf
    %6083 = vmax.xlane.f32.xlu0 %v6082
    %v6084 = vpop.xlane.xlu0 %6083
    %v6085 = vsub.f32 %v6053, %v6063
    %v6086 = vsub.f32 %v6054, %v6066
    %v6087 = vsub.f32 %v6055, %v6069
    %v6088 = vsub.f32 %v6056, %v6072
    %v6089 = vsub.f32 %v6057, %v6075
    %v6090 = vsub.f32 %v6058, %v6078
    %v6091 = vsub.f32 %v6059, %v6081
    %v6092 = vsub.f32 %v6060, %v6084
    %v6093 = vmul.f32 %v6085, 1.442695
    %v6094 = vpow.pop %v6093
    %v6095 = vmul.f32 %v6086, 1.442695
    %v6096 = vpow.pop %v6095
    %v6097 = vmul.f32 %v6087, 1.442695
    %v6098 = vpow.pop %v6097
    %v6099 = vmul.f32 %v6088, 1.442695
    %v6100 = vpow.pop %v6099
    %v6101 = vmul.f32 %v6089, 1.442695
    %v6102 = vpow.pop %v6101
    %v6103 = vmul.f32 %v6090, 1.442695
    %v6104 = vpow.pop %v6103
    %v6105 = vmul.f32 %v6091, 1.442695
    %v6106 = vpow.pop %v6105
    %v6107 = vmul.f32 %v6092, 1.442695
    %v6108 = vpow.pop %v6107
    %v6109 = vsel %vm796, %v6094, 0.0
    %6110 = vadd.xlane.f32.xlu0 %v6109
    %v6111 = vpop.xlane.xlu0 %6110
    %v6112 = vsel %vm796, %v6096, 0.0
    %6113 = vadd.xlane.f32.xlu0 %v6112
    %v6114 = vpop.xlane.xlu0 %6113
    %v6115 = vsel %vm796, %v6098, 0.0
    %6116 = vadd.xlane.f32.xlu0 %v6115
    %v6117 = vpop.xlane.xlu0 %6116
    %v6118 = vsel %vm796, %v6100, 0.0
    %6119 = vadd.xlane.f32.xlu0 %v6118
    %v6120 = vpop.xlane.xlu0 %6119
    %v6121 = vsel %vm796, %v6102, 0.0
    %6122 = vadd.xlane.f32.xlu0 %v6121
    %v6123 = vpop.xlane.xlu0 %6122
    %v6124 = vsel %vm796, %v6104, 0.0
    %6125 = vadd.xlane.f32.xlu0 %v6124
    %v6126 = vpop.xlane.xlu0 %6125
    %v6127 = vsel %vm796, %v6106, 0.0
    %6128 = vadd.xlane.f32.xlu0 %v6127
    %v6129 = vpop.xlane.xlu0 %6128
    %v6130 = vsel %vm796, %v6108, 0.0
    %6131 = vadd.xlane.f32.xlu0 %v6130
    %v6132 = vpop.xlane.xlu0 %6131
    %v6133 = vrcp.pop %v6111
    %v6134 = vrcp.pop %v6114
    %v6135 = vrcp.pop %v6117
    %v6136 = vrcp.pop %v6120
    %v6137 = vrcp.pop %v6123
    %v6138 = vrcp.pop %v6126
    %v6139 = vrcp.pop %v6129
    %v6140 = vrcp.pop %v6132
    %v6141 = vmul.f32 %v6111, %v6133
    %v6142 = vmul.f32 %v6114, %v6134
    %v6143 = vmul.f32 %v6117, %v6135
    %v6144 = vmul.f32 %v6120, %v6136
    %v6145 = vmul.f32 %v6123, %v6137
    %v6146 = vmul.f32 %v6126, %v6138
    %v6147 = vmul.f32 %v6129, %v6139
    %v6148 = vmul.f32 %v6132, %v6140
    %v6149 = vsub.f32 2.0, %v6141
    %v6150 = vsub.f32 2.0, %v6142
    %v6151 = vsub.f32 2.0, %v6143
    %v6152 = vsub.f32 2.0, %v6144
    %v6153 = vsub.f32 2.0, %v6145
    %v6154 = vsub.f32 2.0, %v6146
    %v6155 = vsub.f32 2.0, %v6147
    %v6156 = vsub.f32 2.0, %v6148
    %v6157 = vmul.f32 %v6133, %v6149
    %v6158 = vmul.f32 %v6134, %v6150
    %v6159 = vmul.f32 %v6135, %v6151
    %v6160 = vmul.f32 %v6136, %v6152
    %v6161 = vmul.f32 %v6137, %v6153
    %v6162 = vmul.f32 %v6138, %v6154
    %v6163 = vmul.f32 %v6139, %v6155
    %v6164 = vmul.f32 %v6140, %v6156
    %v6165 = vmul.f32 %v6094, %v6157
    %v6166 = vmul.f32 %v6096, %v6158
    %v6167 = vmul.f32 %v6098, %v6159
    %v6168 = vmul.f32 %v6100, %v6160
    %v6169 = vmul.f32 %v6102, %v6161
    %v6170 = vmul.f32 %v6104, %v6162
    %v6171 = vmul.f32 %v6106, %v6163
    %v6172 = vmul.f32 %v6108, %v6164
    %v6173 = vpack.c.bf16 %v6165, %v6165
    %v6174 = vpack.c.bf16 %v6166, %v6166
    %v6175 = vpack.c.bf16 %v6167, %v6167
    %v6176 = vpack.c.bf16 %v6168, %v6168
    %v6177 = vpack.c.bf16 %v6169, %v6169
    %v6178 = vpack.c.bf16 %v6170, %v6170
    %v6179 = vpack.c.bf16 %v6171, %v6171
    %v6180 = vpack.c.bf16 %v6172, %v6172
    %6181 = vrot.lane.b32.xlu0 %v4749, 88
    %v6182 = vpop.permute.xlu0 %6181
    %v6184 = vsel %vm920, %v6173, 0
    %v6187 = vsel %vm924, %v6182, 0
    %6189 = vmatprep.subr.bf16.mxu0 0
    %6190 = vmatpush1.bf16.msra.mxu0 %v6187
    %6191 = vmatprep.subr.bf16.mxu0 0
    %6192 = vmatpush1.bf16.msra.mxu0 0
    %6193 = vmatprep.subr.bf16.mxu0 0
    %6194 = vmatpush1.bf16.msra.mxu0 0
    %6195 = vmatprep.subr.bf16.mxu0 0
    %6196 = vmatpush1.bf16.msra.mxu0 0
    %6197 = vmatprep.subr.bf16.mxu0 0
    %6198 = vmatpush1.bf16.msra.mxu0 0
    %6199 = vmatprep.subr.bf16.mxu0 0
    %6200 = vmatpush1.bf16.msra.mxu0 0
    %6201 = vmatprep.subr.bf16.mxu0 0
    %6202 = vmatpush1.bf16.msra.mxu0 0
    %6203 = vmatprep.subr.bf16.mxu0 0
    %6204 = vmatpush1.bf16.msra.mxu0 0
    %6205 = vmatprep.subr.bf16.mxu0 0
    %6206 = vmatpush1.bf16.msra.mxu0 0
    %6207 = vmatprep.subr.bf16.mxu0 0
    %6208 = vmatpush1.bf16.msra.mxu0 0
    %6209 = vmatprep.subr.bf16.mxu0 0
    %6210 = vmatpush1.bf16.msra.mxu0 0
    %6211 = vmatprep.subr.bf16.mxu0 0
    %6212 = vmatpush1.bf16.msra.mxu0 0
    %6213 = vmatprep.subr.bf16.mxu0 0
    %6214 = vmatpush1.bf16.msra.mxu0 0
    %6215 = vmatprep.subr.bf16.mxu0 0
    %6216 = vmatpush1.bf16.msra.mxu0 0
    %6217 = vmatprep.subr.bf16.mxu0 0
    %6218 = vmatpush1.bf16.msra.mxu0 0
    %6219 = vmatprep.subr.bf16.mxu0 0
    %6220 = vmatpush1.bf16.msra.mxu0 0
    %6221 = vmatprep.mubr.bf16.mxu0 0
    %6222 = vmatmul.mubr.bf16.gmra.mrb[0].mxu0 %v6184
    %v6223 = vpop.f32.mrb[0].mxu0
    %v6224 = vadd.f32 0.0, %v6223
    %v6225 = vpop.f32.mrb[0].mxu0
    %v6226 = vpop.f32.mrb[0].mxu0
    %v6227 = vpop.f32.mrb[0].mxu0
    %6228 = vdwg.mxu0
    %6229 = vrot.lane.b32.xlu0 %v4750, 88
    %v6230 = vpop.permute.xlu0 %6229
    %v6232 = vsel %vm920, %v6174, 0
    %v6235 = vsel %vm924, %v6230, 0
    %6237 = vmatprep.subr.bf16.mxu0 0
    %6238 = vmatpush1.bf16.msra.mxu0 %v6235
    %6239 = vmatprep.subr.bf16.mxu0 0
    %6240 = vmatpush1.bf16.msra.mxu0 0
    %6241 = vmatprep.subr.bf16.mxu0 0
    %6242 = vmatpush1.bf16.msra.mxu0 0
    %6243 = vmatprep.subr.bf16.mxu0 0
    %6244 = vmatpush1.bf16.msra.mxu0 0
    %6245 = vmatprep.subr.bf16.mxu0 0
    %6246 = vmatpush1.bf16.msra.mxu0 0
    %6247 = vmatprep.subr.bf16.mxu0 0
    %6248 = vmatpush1.bf16.msra.mxu0 0
    %6249 = vmatprep.subr.bf16.mxu0 0
    %6250 = vmatpush1.bf16.msra.mxu0 0
    %6251 = vmatprep.subr.bf16.mxu0 0
    %6252 = vmatpush1.bf16.msra.mxu0 0
    %6253 = vmatprep.subr.bf16.mxu0 0
    %6254 = vmatpush1.bf16.msra.mxu0 0
    %6255 = vmatprep.subr.bf16.mxu0 0
    %6256 = vmatpush1.bf16.msra.mxu0 0
    %6257 = vmatprep.subr.bf16.mxu0 0
    %6258 = vmatpush1.bf16.msra.mxu0 0
    %6259 = vmatprep.subr.bf16.mxu0 0
    %6260 = vmatpush1.bf16.msra.mxu0 0
    %6261 = vmatprep.subr.bf16.mxu0 0
    %6262 = vmatpush1.bf16.msra.mxu0 0
    %6263 = vmatprep.subr.bf16.mxu0 0
    %6264 = vmatpush1.bf16.msra.mxu0 0
    %6265 = vmatprep.subr.bf16.mxu0 0
    %6266 = vmatpush1.bf16.msra.mxu0 0
    %6267 = vmatprep.subr.bf16.mxu0 0
    %6268 = vmatpush1.bf16.msra.mxu0 0
    %6269 = vmatprep.mubr.bf16.mxu0 0
    %6270 = vmatmul.mubr.bf16.gmra.mrb[0].mxu0 %v6232
    %v6271 = vpop.f32.mrb[0].mxu0
    %v6272 = vadd.f32 0.0, %v6271
    %v6273 = vpop.f32.mrb[0].mxu0
    %v6274 = vpop.f32.mrb[0].mxu0
    %v6275 = vpop.f32.mrb[0].mxu0
    %6276 = vdwg.mxu0
    %6277 = vrot.lane.b32.xlu0 %v4751, 88
    %v6278 = vpop.permute.xlu0 %6277
    %v6280 = vsel %vm920, %v6175, 0
    %v6283 = vsel %vm924, %v6278, 0
    %6285 = vmatprep.subr.bf16.mxu0 0
    %6286 = vmatpush1.bf16.msra.mxu0 %v6283
    %6287 = vmatprep.subr.bf16.mxu0 0
    %6288 = vmatpush1.bf16.msra.mxu0 0
    %6289 = vmatprep.subr.bf16.mxu0 0
    %6290 = vmatpush1.bf16.msra.mxu0 0
    %6291 = vmatprep.subr.bf16.mxu0 0
    %6292 = vmatpush1.bf16.msra.mxu0 0
    %6293 = vmatprep.subr.bf16.mxu0 0
    %6294 = vmatpush1.bf16.msra.mxu0 0
    %6295 = vmatprep.subr.bf16.mxu0 0
    %6296 = vmatpush1.bf16.msra.mxu0 0
    %6297 = vmatprep.subr.bf16.mxu0 0
    %6298 = vmatpush1.bf16.msra.mxu0 0
    %6299 = vmatprep.subr.bf16.mxu0 0
    %6300 = vmatpush1.bf16.msra.mxu0 0
    %6301 = vmatprep.subr.bf16.mxu0 0
    %6302 = vmatpush1.bf16.msra.mxu0 0
    %6303 = vmatprep.subr.bf16.mxu0 0
    %6304 = vmatpush1.bf16.msra.mxu0 0
    %6305 = vmatprep.subr.bf16.mxu0 0
    %6306 = vmatpush1.bf16.msra.mxu0 0
    %6307 = vmatprep.subr.bf16.mxu0 0
    %6308 = vmatpush1.bf16.msra.mxu0 0
    %6309 = vmatprep.subr.bf16.mxu0 0
    %6310 = vmatpush1.bf16.msra.mxu0 0
    %6311 = vmatprep.subr.bf16.mxu0 0
    %6312 = vmatpush1.bf16.msra.mxu0 0
    %6313 = vmatprep.subr.bf16.mxu0 0
    %6314 = vmatpush1.bf16.msra.mxu0 0
    %6315 = vmatprep.subr.bf16.mxu0 0
    %6316 = vmatpush1.bf16.msra.mxu0 0
    %6317 = vmatprep.mubr.bf16.mxu0 0
    %6318 = vmatmul.mubr.bf16.gmra.mrb[0].mxu0 %v6280
    %v6319 = vpop.f32.mrb[0].mxu0
    %v6320 = vadd.f32 0.0, %v6319
    %v6321 = vpop.f32.mrb[0].mxu0
    %v6322 = vpop.f32.mrb[0].mxu0
    %v6323 = vpop.f32.mrb[0].mxu0
    %6324 = vdwg.mxu0
    %6325 = vrot.lane.b32.xlu0 %v4752, 88
    %v6326 = vpop.permute.xlu0 %6325
    %v6328 = vsel %vm920, %v6176, 0
    %v6331 = vsel %vm924, %v6326, 0
    %6333 = vmatprep.subr.bf16.mxu0 0
    %6334 = vmatpush1.bf16.msra.mxu0 %v6331
    %6335 = vmatprep.subr.bf16.mxu0 0
    %6336 = vmatpush1.bf16.msra.mxu0 0
    %6337 = vmatprep.subr.bf16.mxu0 0
    %6338 = vmatpush1.bf16.msra.mxu0 0
    %6339 = vmatprep.subr.bf16.mxu0 0
    %6340 = vmatpush1.bf16.msra.mxu0 0
    %6341 = vmatprep.subr.bf16.mxu0 0
    %6342 = vmatpush1.bf16.msra.mxu0 0
    %6343 = vmatprep.subr.bf16.mxu0 0
    %6344 = vmatpush1.bf16.msra.mxu0 0
    %6345 = vmatprep.subr.bf16.mxu0 0
    %6346 = vmatpush1.bf16.msra.mxu0 0
    %6347 = vmatprep.subr.bf16.mxu0 0
    %6348 = vmatpush1.bf16.msra.mxu0 0
    %6349 = vmatprep.subr.bf16.mxu0 0
    %6350 = vmatpush1.bf16.msra.mxu0 0
    %6351 = vmatprep.subr.bf16.mxu0 0
    %6352 = vmatpush1.bf16.msra.mxu0 0
    %6353 = vmatprep.subr.bf16.mxu0 0
    %6354 = vmatpush1.bf16.msra.mxu0 0
    %6355 = vmatprep.subr.bf16.mxu0 0
    %6356 = vmatpush1.bf16.msra.mxu0 0
    %6357 = vmatprep.subr.bf16.mxu0 0
    %6358 = vmatpush1.bf16.msra.mxu0 0
    %6359 = vmatprep.subr.bf16.mxu0 0
    %6360 = vmatpush1.bf16.msra.mxu0 0
    %6361 = vmatprep.subr.bf16.mxu0 0
    %6362 = vmatpush1.bf16.msra.mxu0 0
    %6363 = vmatprep.subr.bf16.mxu0 0
    %6364 = vmatpush1.bf16.msra.mxu0 0
    %6365 = vmatprep.mubr.bf16.mxu0 0
    %6366 = vmatmul.mubr.bf16.gmra.mrb[0].mxu0 %v6328
    %v6367 = vpop.f32.mrb[0].mxu0
    %v6368 = vadd.f32 0.0, %v6367
    %v6369 = vpop.f32.mrb[0].mxu0
    %v6370 = vpop.f32.mrb[0].mxu0
    %v6371 = vpop.f32.mrb[0].mxu0
    %6372 = vdwg.mxu0
    %6373 = vrot.lane.b32.xlu0 %v4753, 88
    %v6374 = vpop.permute.xlu0 %6373
    %v6376 = vsel %vm920, %v6177, 0
    %v6379 = vsel %vm924, %v6374, 0
    %6381 = vmatprep.subr.bf16.mxu0 0
    %6382 = vmatpush1.bf16.msra.mxu0 %v6379
    %6383 = vmatprep.subr.bf16.mxu0 0
    %6384 = vmatpush1.bf16.msra.mxu0 0
    %6385 = vmatprep.subr.bf16.mxu0 0
    %6386 = vmatpush1.bf16.msra.mxu0 0
    %6387 = vmatprep.subr.bf16.mxu0 0
    %6388 = vmatpush1.bf16.msra.mxu0 0
    %6389 = vmatprep.subr.bf16.mxu0 0
    %6390 = vmatpush1.bf16.msra.mxu0 0
    %6391 = vmatprep.subr.bf16.mxu0 0
    %6392 = vmatpush1.bf16.msra.mxu0 0
    %6393 = vmatprep.subr.bf16.mxu0 0
    %6394 = vmatpush1.bf16.msra.mxu0 0
    %6395 = vmatprep.subr.bf16.mxu0 0
    %6396 = vmatpush1.bf16.msra.mxu0 0
    %6397 = vmatprep.subr.bf16.mxu0 0
    %6398 = vmatpush1.bf16.msra.mxu0 0
    %6399 = vmatprep.subr.bf16.mxu0 0
    %6400 = vmatpush1.bf16.msra.mxu0 0
    %6401 = vmatprep.subr.bf16.mxu0 0
    %6402 = vmatpush1.bf16.msra.mxu0 0
    %6403 = vmatprep.subr.bf16.mxu0 0
    %6404 = vmatpush1.bf16.msra.mxu0 0
    %6405 = vmatprep.subr.bf16.mxu0 0
    %6406 = vmatpush1.bf16.msra.mxu0 0
    %6407 = vmatprep.subr.bf16.mxu0 0
    %6408 = vmatpush1.bf16.msra.mxu0 0
    %6409 = vmatprep.subr.bf16.mxu0 0
    %6410 = vmatpush1.bf16.msra.mxu0 0
    %6411 = vmatprep.subr.bf16.mxu0 0
    %6412 = vmatpush1.bf16.msra.mxu0 0
    %6413 = vmatprep.mubr.bf16.mxu0 0
    %6414 = vmatmul.mubr.bf16.gmra.mrb[0].mxu0 %v6376
    %v6415 = vpop.f32.mrb[0].mxu0
    %v6416 = vadd.f32 0.0, %v6415
    %v6417 = vpop.f32.mrb[0].mxu0
    %v6418 = vpop.f32.mrb[0].mxu0
    %v6419 = vpop.f32.mrb[0].mxu0
    %6420 = vdwg.mxu0
    %6421 = vrot.lane.b32.xlu0 %v4754, 88
    %v6422 = vpop.permute.xlu0 %6421
    %v6424 = vsel %vm920, %v6178, 0
    %v6427 = vsel %vm924, %v6422, 0
    %6429 = vmatprep.subr.bf16.mxu0 0
    %6430 = vmatpush1.bf16.msra.mxu0 %v6427
    %6431 = vmatprep.subr.bf16.mxu0 0
    %6432 = vmatpush1.bf16.msra.mxu0 0
    %6433 = vmatprep.subr.bf16.mxu0 0
    %6434 = vmatpush1.bf16.msra.mxu0 0
    %6435 = vmatprep.subr.bf16.mxu0 0
    %6436 = vmatpush1.bf16.msra.mxu0 0
    %6437 = vmatprep.subr.bf16.mxu0 0
    %6438 = vmatpush1.bf16.msra.mxu0 0
    %6439 = vmatprep.subr.bf16.mxu0 0
    %6440 = vmatpush1.bf16.msra.mxu0 0
    %6441 = vmatprep.subr.bf16.mxu0 0
    %6442 = vmatpush1.bf16.msra.mxu0 0
    %6443 = vmatprep.subr.bf16.mxu0 0
    %6444 = vmatpush1.bf16.msra.mxu0 0
    %6445 = vmatprep.subr.bf16.mxu0 0
    %6446 = vmatpush1.bf16.msra.mxu0 0
    %6447 = vmatprep.subr.bf16.mxu0 0
    %6448 = vmatpush1.bf16.msra.mxu0 0
    %6449 = vmatprep.subr.bf16.mxu0 0
    %6450 = vmatpush1.bf16.msra.mxu0 0
    %6451 = vmatprep.subr.bf16.mxu0 0
    %6452 = vmatpush1.bf16.msra.mxu0 0
    %6453 = vmatprep.subr.bf16.mxu0 0
    %6454 = vmatpush1.bf16.msra.mxu0 0
    %6455 = vmatprep.subr.bf16.mxu0 0
    %6456 = vmatpush1.bf16.msra.mxu0 0
    %6457 = vmatprep.subr.bf16.mxu0 0
    %6458 = vmatpush1.bf16.msra.mxu0 0
    %6459 = vmatprep.subr.bf16.mxu0 0
    %6460 = vmatpush1.bf16.msra.mxu0 0
    %6461 = vmatprep.mubr.bf16.mxu0 0
    %6462 = vmatmul.mubr.bf16.gmra.mrb[0].mxu0 %v6424
    %v6463 = vpop.f32.mrb[0].mxu0
    %v6464 = vadd.f32 0.0, %v6463
    %v6465 = vpop.f32.mrb[0].mxu0
    %v6466 = vpop.f32.mrb[0].mxu0
    %v6467 = vpop.f32.mrb[0].mxu0
    %6468 = vdwg.mxu0
    %6469 = vrot.lane.b32.xlu0 %v4755, 88
    %v6470 = vpop.permute.xlu0 %6469
    %v6472 = vsel %vm920, %v6179, 0
    %v6475 = vsel %vm924, %v6470, 0
    %6477 = vmatprep.subr.bf16.mxu0 0
    %6478 = vmatpush1.bf16.msra.mxu0 %v6475
    %6479 = vmatprep.subr.bf16.mxu0 0
    %6480 = vmatpush1.bf16.msra.mxu0 0
    %6481 = vmatprep.subr.bf16.mxu0 0
    %6482 = vmatpush1.bf16.msra.mxu0 0
    %6483 = vmatprep.subr.bf16.mxu0 0
    %6484 = vmatpush1.bf16.msra.mxu0 0
    %6485 = vmatprep.subr.bf16.mxu0 0
    %6486 = vmatpush1.bf16.msra.mxu0 0
    %6487 = vmatprep.subr.bf16.mxu0 0
    %6488 = vmatpush1.bf16.msra.mxu0 0
    %6489 = vmatprep.subr.bf16.mxu0 0
    %6490 = vmatpush1.bf16.msra.mxu0 0
    %6491 = vmatprep.subr.bf16.mxu0 0
    %6492 = vmatpush1.bf16.msra.mxu0 0
    %6493 = vmatprep.subr.bf16.mxu0 0
    %6494 = vmatpush1.bf16.msra.mxu0 0
    %6495 = vmatprep.subr.bf16.mxu0 0
    %6496 = vmatpush1.bf16.msra.mxu0 0
    %6497 = vmatprep.subr.bf16.mxu0 0
    %6498 = vmatpush1.bf16.msra.mxu0 0
    %6499 = vmatprep.subr.bf16.mxu0 0
    %6500 = vmatpush1.bf16.msra.mxu0 0
    %6501 = vmatprep.subr.bf16.mxu0 0
    %6502 = vmatpush1.bf16.msra.mxu0 0
    %6503 = vmatprep.subr.bf16.mxu0 0
    %6504 = vmatpush1.bf16.msra.mxu0 0
    %6505 = vmatprep.subr.bf16.mxu0 0
    %6506 = vmatpush1.bf16.msra.mxu0 0
    %6507 = vmatprep.subr.bf16.mxu0 0
    %6508 = vmatpush1.bf16.msra.mxu0 0
    %6509 = vmatprep.mubr.bf16.mxu0 0
    %6510 = vmatmul.mubr.bf16.gmra.mrb[0].mxu0 %v6472
    %v6511 = vpop.f32.mrb[0].mxu0
    %v6512 = vadd.f32 0.0, %v6511
    %v6513 = vpop.f32.mrb[0].mxu0
    %v6514 = vpop.f32.mrb[0].mxu0
    %v6515 = vpop.f32.mrb[0].mxu0
    %6516 = vdwg.mxu0
    %6517 = vrot.lane.b32.xlu0 %v4756, 88
    %v6518 = vpop.permute.xlu0 %6517
    %v6520 = vsel %vm920, %v6180, 0
    %v6523 = vsel %vm924, %v6518, 0
    %6525 = vmatprep.subr.bf16.mxu0 0
    %6526 = vmatpush1.bf16.msra.mxu0 %v6523
    %6527 = vmatprep.subr.bf16.mxu0 0
    %6528 = vmatpush1.bf16.msra.mxu0 0
    %6529 = vmatprep.subr.bf16.mxu0 0
    %6530 = vmatpush1.bf16.msra.mxu0 0
    %6531 = vmatprep.subr.bf16.mxu0 0
    %6532 = vmatpush1.bf16.msra.mxu0 0
    %6533 = vmatprep.subr.bf16.mxu0 0
    %6534 = vmatpush1.bf16.msra.mxu0 0
    %6535 = vmatprep.subr.bf16.mxu0 0
    %6536 = vmatpush1.bf16.msra.mxu0 0
    %6537 = vmatprep.subr.bf16.mxu0 0
    %6538 = vmatpush1.bf16.msra.mxu0 0
    %6539 = vmatprep.subr.bf16.mxu0 0
    %6540 = vmatpush1.bf16.msra.mxu0 0
    %6541 = vmatprep.subr.bf16.mxu0 0
    %6542 = vmatpush1.bf16.msra.mxu0 0
    %6543 = vmatprep.subr.bf16.mxu0 0
    %6544 = vmatpush1.bf16.msra.mxu0 0
    %6545 = vmatprep.subr.bf16.mxu0 0
    %6546 = vmatpush1.bf16.msra.mxu0 0
    %6547 = vmatprep.subr.bf16.mxu0 0
    %6548 = vmatpush1.bf16.msra.mxu0 0
    %6549 = vmatprep.subr.bf16.mxu0 0
    %6550 = vmatpush1.bf16.msra.mxu0 0
    %6551 = vmatprep.subr.bf16.mxu0 0
    %6552 = vmatpush1.bf16.msra.mxu0 0
    %6553 = vmatprep.subr.bf16.mxu0 0
    %6554 = vmatpush1.bf16.msra.mxu0 0
    %6555 = vmatprep.subr.bf16.mxu0 0
    %6556 = vmatpush1.bf16.msra.mxu0 0
    %6557 = vmatprep.mubr.bf16.mxu0 0
    %6558 = vmatmul.mubr.bf16.gmra.mrb[0].mxu0 %v6520
    %v6559 = vpop.f32.mrb[0].mxu0
    %v6560 = vadd.f32 0.0, %v6559
    %v6561 = vpop.f32.mrb[0].mxu0
    %v6562 = vpop.f32.mrb[0].mxu0
    %v6563 = vpop.f32.mrb[0].mxu0
    %6564 = vdwg.mxu0
    %6565 = vrot.lane.b32.xlu0 %v4741, 112
    %v6566 = vpop.permute.xlu0 %6565
    %6567 = vrot.lane.b32.xlu0 %v4749, 112
    %v6568 = vpop.permute.xlu0 %6567
    %v6570 = vsel %vm419, %v6566, 0
    %v6573 = vsel %vm419, %v6568, 0
    %6575 = vmatprep.subr.bf16.mxu0 0
    %6576 = vmatpush1.bf16.xpose.msra.mxu0 %v6573
    %6577 = vmatprep.subr.bf16.mxu0 0
    %6578 = vmatpush1.bf16.xpose.msra.mxu0 0
    %6579 = vmatprep.subr.bf16.mxu0 0
    %6580 = vmatpush1.bf16.xpose.msra.mxu0 0
    %6581 = vmatprep.subr.bf16.mxu0 0
    %6582 = vmatpush1.bf16.xpose.msra.mxu0 0
    %6583 = vmatprep.subr.bf16.mxu0 0
    %6584 = vmatpush1.bf16.xpose.msra.mxu0 0
    %6585 = vmatprep.subr.bf16.mxu0 0
    %6586 = vmatpush1.bf16.xpose.msra.mxu0 0
    %6587 = vmatprep.subr.bf16.mxu0 0
    %6588 = vmatpush1.bf16.xpose.msra.mxu0 0
    %6589 = vmatprep.subr.bf16.mxu0 0
    %6590 = vmatpush1.bf16.xpose.msra.mxu0 0
    %6591 = vmatprep.subr.bf16.mxu0 0
    %6592 = vmatpush1.bf16.xpose.msra.mxu0 0
    %6593 = vmatprep.subr.bf16.mxu0 0
    %6594 = vmatpush1.bf16.xpose.msra.mxu0 0
    %6595 = vmatprep.subr.bf16.mxu0 0
    %6596 = vmatpush1.bf16.xpose.msra.mxu0 0
    %6597 = vmatprep.subr.bf16.mxu0 0
    %6598 = vmatpush1.bf16.xpose.msra.mxu0 0
    %6599 = vmatprep.subr.bf16.mxu0 0
    %6600 = vmatpush1.bf16.xpose.msra.mxu0 0
    %6601 = vmatprep.subr.bf16.mxu0 0
    %6602 = vmatpush1.bf16.xpose.msra.mxu0 0
    %6603 = vmatprep.subr.bf16.mxu0 0
    %6604 = vmatpush1.bf16.xpose.msra.mxu0 0
    %6605 = vmatprep.subr.bf16.mxu0 0
    %6606 = vmatpush1.bf16.xpose.msra.mxu0 0
    %6607 = vmatprep.mubr.bf16.mxu0 0
    %6608 = vmatmul.mubr.bf16.gmra.mrb[0].mxu0 %v6570
    %v6609 = vpop.f32.mrb[0].mxu0
    %v6610 = vadd.f32 0.0, %v6609
    %v6611 = vpop.f32.mrb[0].mxu0
    %v6612 = vpop.f32.mrb[0].mxu0
    %v6613 = vpop.f32.mrb[0].mxu0
    %6614 = vdwg.mxu0
    %6615 = vrot.lane.b32.xlu0 %v4742, 112
    %v6616 = vpop.permute.xlu0 %6615
    %6617 = vrot.lane.b32.xlu0 %v4750, 112
    %v6618 = vpop.permute.xlu0 %6617
    %v6620 = vsel %vm419, %v6616, 0
    %v6623 = vsel %vm419, %v6618, 0
    %6625 = vmatprep.subr.bf16.mxu0 0
    %6626 = vmatpush1.bf16.xpose.msra.mxu0 %v6623
    %6627 = vmatprep.subr.bf16.mxu0 0
    %6628 = vmatpush1.bf16.xpose.msra.mxu0 0
    %6629 = vmatprep.subr.bf16.mxu0 0
    %6630 = vmatpush1.bf16.xpose.msra.mxu0 0
    %6631 = vmatprep.subr.bf16.mxu0 0
    %6632 = vmatpush1.bf16.xpose.msra.mxu0 0
    %6633 = vmatprep.subr.bf16.mxu0 0
    %6634 = vmatpush1.bf16.xpose.msra.mxu0 0
    %6635 = vmatprep.subr.bf16.mxu0 0
    %6636 = vmatpush1.bf16.xpose.msra.mxu0 0
    %6637 = vmatprep.subr.bf16.mxu0 0
    %6638 = vmatpush1.bf16.xpose.msra.mxu0 0
    %6639 = vmatprep.subr.bf16.mxu0 0
    %6640 = vmatpush1.bf16.xpose.msra.mxu0 0
    %6641 = vmatprep.subr.bf16.mxu0 0
    %6642 = vmatpush1.bf16.xpose.msra.mxu0 0
    %6643 = vmatprep.subr.bf16.mxu0 0
    %6644 = vmatpush1.bf16.xpose.msra.mxu0 0
    %6645 = vmatprep.subr.bf16.mxu0 0
    %6646 = vmatpush1.bf16.xpose.msra.mxu0 0
    %6647 = vmatprep.subr.bf16.mxu0 0
    %6648 = vmatpush1.bf16.xpose.msra.mxu0 0
    %6649 = vmatprep.subr.bf16.mxu0 0
    %6650 = vmatpush1.bf16.xpose.msra.mxu0 0
    %6651 = vmatprep.subr.bf16.mxu0 0
    %6652 = vmatpush1.bf16.xpose.msra.mxu0 0
    %6653 = vmatprep.subr.bf16.mxu0 0
    %6654 = vmatpush1.bf16.xpose.msra.mxu0 0
    %6655 = vmatprep.subr.bf16.mxu0 0
    %6656 = vmatpush1.bf16.xpose.msra.mxu0 0
    %6657 = vmatprep.mubr.bf16.mxu0 0
    %6658 = vmatmul.mubr.bf16.gmra.mrb[0].mxu0 %v6620
    %v6659 = vpop.f32.mrb[0].mxu0
    %v6660 = vadd.f32 0.0, %v6659
    %v6661 = vpop.f32.mrb[0].mxu0
    %v6662 = vpop.f32.mrb[0].mxu0
    %v6663 = vpop.f32.mrb[0].mxu0
    %6664 = vdwg.mxu0
    %6665 = vrot.lane.b32.xlu0 %v4743, 112
    %v6666 = vpop.permute.xlu0 %6665
    %6667 = vrot.lane.b32.xlu0 %v4751, 112
    %v6668 = vpop.permute.xlu0 %6667
    %v6670 = vsel %vm419, %v6666, 0
    %v6673 = vsel %vm419, %v6668, 0
    %6675 = vmatprep.subr.bf16.mxu0 0
    %6676 = vmatpush1.bf16.xpose.msra.mxu0 %v6673
    %6677 = vmatprep.subr.bf16.mxu0 0
    %6678 = vmatpush1.bf16.xpose.msra.mxu0 0
    %6679 = vmatprep.subr.bf16.mxu0 0
    %6680 = vmatpush1.bf16.xpose.msra.mxu0 0
    %6681 = vmatprep.subr.bf16.mxu0 0
    %6682 = vmatpush1.bf16.xpose.msra.mxu0 0
    %6683 = vmatprep.subr.bf16.mxu0 0
    %6684 = vmatpush1.bf16.xpose.msra.mxu0 0
    %6685 = vmatprep.subr.bf16.mxu0 0
    %6686 = vmatpush1.bf16.xpose.msra.mxu0 0
    %6687 = vmatprep.subr.bf16.mxu0 0
    %6688 = vmatpush1.bf16.xpose.msra.mxu0 0
    %6689 = vmatprep.subr.bf16.mxu0 0
    %6690 = vmatpush1.bf16.xpose.msra.mxu0 0
    %6691 = vmatprep.subr.bf16.mxu0 0
    %6692 = vmatpush1.bf16.xpose.msra.mxu0 0
    %6693 = vmatprep.subr.bf16.mxu0 0
    %6694 = vmatpush1.bf16.xpose.msra.mxu0 0
    %6695 = vmatprep.subr.bf16.mxu0 0
    %6696 = vmatpush1.bf16.xpose.msra.mxu0 0
    %6697 = vmatprep.subr.bf16.mxu0 0
    %6698 = vmatpush1.bf16.xpose.msra.mxu0 0
    %6699 = vmatprep.subr.bf16.mxu0 0
    %6700 = vmatpush1.bf16.xpose.msra.mxu0 0
    %6701 = vmatprep.subr.bf16.mxu0 0
    %6702 = vmatpush1.bf16.xpose.msra.mxu0 0
    %6703 = vmatprep.subr.bf16.mxu0 0
    %6704 = vmatpush1.bf16.xpose.msra.mxu0 0
    %6705 = vmatprep.subr.bf16.mxu0 0
    %6706 = vmatpush1.bf16.xpose.msra.mxu0 0
    %6707 = vmatprep.mubr.bf16.mxu0 0
    %6708 = vmatmul.mubr.bf16.gmra.mrb[0].mxu0 %v6670
    %v6709 = vpop.f32.mrb[0].mxu0
    %v6710 = vadd.f32 0.0, %v6709
    %v6711 = vpop.f32.mrb[0].mxu0
    %v6712 = vpop.f32.mrb[0].mxu0
    %v6713 = vpop.f32.mrb[0].mxu0
    %6714 = vdwg.mxu0
    %6715 = vrot.lane.b32.xlu0 %v4744, 112
    %v6716 = vpop.permute.xlu0 %6715
    %6717 = vrot.lane.b32.xlu0 %v4752, 112
    %v6718 = vpop.permute.xlu0 %6717
    %v6720 = vsel %vm419, %v6716, 0
    %v6723 = vsel %vm419, %v6718, 0
    %6725 = vmatprep.subr.bf16.mxu0 0
    %6726 = vmatpush1.bf16.xpose.msra.mxu0 %v6723
    %6727 = vmatprep.subr.bf16.mxu0 0
    %6728 = vmatpush1.bf16.xpose.msra.mxu0 0
    %6729 = vmatprep.subr.bf16.mxu0 0
    %6730 = vmatpush1.bf16.xpose.msra.mxu0 0
    %6731 = vmatprep.subr.bf16.mxu0 0
    %6732 = vmatpush1.bf16.xpose.msra.mxu0 0
    %6733 = vmatprep.subr.bf16.mxu0 0
    %6734 = vmatpush1.bf16.xpose.msra.mxu0 0
    %6735 = vmatprep.subr.bf16.mxu0 0
    %6736 = vmatpush1.bf16.xpose.msra.mxu0 0
    %6737 = vmatprep.subr.bf16.mxu0 0
    %6738 = vmatpush1.bf16.xpose.msra.mxu0 0
    %6739 = vmatprep.subr.bf16.mxu0 0
    %6740 = vmatpush1.bf16.xpose.msra.mxu0 0
    %6741 = vmatprep.subr.bf16.mxu0 0
    %6742 = vmatpush1.bf16.xpose.msra.mxu0 0
    %6743 = vmatprep.subr.bf16.mxu0 0
    %6744 = vmatpush1.bf16.xpose.msra.mxu0 0
    %6745 = vmatprep.subr.bf16.mxu0 0
    %6746 = vmatpush1.bf16.xpose.msra.mxu0 0
    %6747 = vmatprep.subr.bf16.mxu0 0
    %6748 = vmatpush1.bf16.xpose.msra.mxu0 0
    %6749 = vmatprep.subr.bf16.mxu0 0
    %6750 = vmatpush1.bf16.xpose.msra.mxu0 0
    %6751 = vmatprep.subr.bf16.mxu0 0
    %6752 = vmatpush1.bf16.xpose.msra.mxu0 0
    %6753 = vmatprep.subr.bf16.mxu0 0
    %6754 = vmatpush1.bf16.xpose.msra.mxu0 0
    %6755 = vmatprep.subr.bf16.mxu0 0
    %6756 = vmatpush1.bf16.xpose.msra.mxu0 0
    %6757 = vmatprep.mubr.bf16.mxu0 0
    %6758 = vmatmul.mubr.bf16.gmra.mrb[0].mxu0 %v6720
    %v6759 = vpop.f32.mrb[0].mxu0
    %v6760 = vadd.f32 0.0, %v6759
    %v6761 = vpop.f32.mrb[0].mxu0
    %v6762 = vpop.f32.mrb[0].mxu0
    %v6763 = vpop.f32.mrb[0].mxu0
    %6764 = vdwg.mxu0
    %6765 = vrot.lane.b32.xlu0 %v4745, 112
    %v6766 = vpop.permute.xlu0 %6765
    %6767 = vrot.lane.b32.xlu0 %v4753, 112
    %v6768 = vpop.permute.xlu0 %6767
    %v6770 = vsel %vm419, %v6766, 0
    %v6773 = vsel %vm419, %v6768, 0
    %6775 = vmatprep.subr.bf16.mxu0 0
    %6776 = vmatpush1.bf16.xpose.msra.mxu0 %v6773
    %6777 = vmatprep.subr.bf16.mxu0 0
    %6778 = vmatpush1.bf16.xpose.msra.mxu0 0
    %6779 = vmatprep.subr.bf16.mxu0 0
    %6780 = vmatpush1.bf16.xpose.msra.mxu0 0
    %6781 = vmatprep.subr.bf16.mxu0 0
    %6782 = vmatpush1.bf16.xpose.msra.mxu0 0
    %6783 = vmatprep.subr.bf16.mxu0 0
    %6784 = vmatpush1.bf16.xpose.msra.mxu0 0
    %6785 = vmatprep.subr.bf16.mxu0 0
    %6786 = vmatpush1.bf16.xpose.msra.mxu0 0
    %6787 = vmatprep.subr.bf16.mxu0 0
    %6788 = vmatpush1.bf16.xpose.msra.mxu0 0
    %6789 = vmatprep.subr.bf16.mxu0 0
    %6790 = vmatpush1.bf16.xpose.msra.mxu0 0
    %6791 = vmatprep.subr.bf16.mxu0 0
    %6792 = vmatpush1.bf16.xpose.msra.mxu0 0
    %6793 = vmatprep.subr.bf16.mxu0 0
    %6794 = vmatpush1.bf16.xpose.msra.mxu0 0
    %6795 = vmatprep.subr.bf16.mxu0 0
    %6796 = vmatpush1.bf16.xpose.msra.mxu0 0
    %6797 = vmatprep.subr.bf16.mxu0 0
    %6798 = vmatpush1.bf16.xpose.msra.mxu0 0
    %6799 = vmatprep.subr.bf16.mxu0 0
    %6800 = vmatpush1.bf16.xpose.msra.mxu0 0
    %6801 = vmatprep.subr.bf16.mxu0 0
    %6802 = vmatpush1.bf16.xpose.msra.mxu0 0
    %6803 = vmatprep.subr.bf16.mxu0 0
    %6804 = vmatpush1.bf16.xpose.msra.mxu0 0
    %6805 = vmatprep.subr.bf16.mxu0 0
    %6806 = vmatpush1.bf16.xpose.msra.mxu0 0
    %6807 = vmatprep.mubr.bf16.mxu0 0
    %6808 = vmatmul.mubr.bf16.gmra.mrb[0].mxu0 %v6770
    %v6809 = vpop.f32.mrb[0].mxu0
    %v6810 = vadd.f32 0.0, %v6809
    %v6811 = vpop.f32.mrb[0].mxu0
    %v6812 = vpop.f32.mrb[0].mxu0
    %v6813 = vpop.f32.mrb[0].mxu0
    %6814 = vdwg.mxu0
    %6815 = vrot.lane.b32.xlu0 %v4746, 112
    %v6816 = vpop.permute.xlu0 %6815
    %6817 = vrot.lane.b32.xlu0 %v4754, 112
    %v6818 = vpop.permute.xlu0 %6817
    %v6820 = vsel %vm419, %v6816, 0
    %v6823 = vsel %vm419, %v6818, 0
    %6825 = vmatprep.subr.bf16.mxu0 0
    %6826 = vmatpush1.bf16.xpose.msra.mxu0 %v6823
    %6827 = vmatprep.subr.bf16.mxu0 0
    %6828 = vmatpush1.bf16.xpose.msra.mxu0 0
    %6829 = vmatprep.subr.bf16.mxu0 0
    %6830 = vmatpush1.bf16.xpose.msra.mxu0 0
    %6831 = vmatprep.subr.bf16.mxu0 0
    %6832 = vmatpush1.bf16.xpose.msra.mxu0 0
    %6833 = vmatprep.subr.bf16.mxu0 0
    %6834 = vmatpush1.bf16.xpose.msra.mxu0 0
    %6835 = vmatprep.subr.bf16.mxu0 0
    %6836 = vmatpush1.bf16.xpose.msra.mxu0 0
    %6837 = vmatprep.subr.bf16.mxu0 0
    %6838 = vmatpush1.bf16.xpose.msra.mxu0 0
    %6839 = vmatprep.subr.bf16.mxu0 0
    %6840 = vmatpush1.bf16.xpose.msra.mxu0 0
    %6841 = vmatprep.subr.bf16.mxu0 0
    %6842 = vmatpush1.bf16.xpose.msra.mxu0 0
    %6843 = vmatprep.subr.bf16.mxu0 0
    %6844 = vmatpush1.bf16.xpose.msra.mxu0 0
    %6845 = vmatprep.subr.bf16.mxu0 0
    %6846 = vmatpush1.bf16.xpose.msra.mxu0 0
    %6847 = vmatprep.subr.bf16.mxu0 0
    %6848 = vmatpush1.bf16.xpose.msra.mxu0 0
    %6849 = vmatprep.subr.bf16.mxu0 0
    %6850 = vmatpush1.bf16.xpose.msra.mxu0 0
    %6851 = vmatprep.subr.bf16.mxu0 0
    %6852 = vmatpush1.bf16.xpose.msra.mxu0 0
    %6853 = vmatprep.subr.bf16.mxu0 0
    %6854 = vmatpush1.bf16.xpose.msra.mxu0 0
    %6855 = vmatprep.subr.bf16.mxu0 0
    %6856 = vmatpush1.bf16.xpose.msra.mxu0 0
    %6857 = vmatprep.mubr.bf16.mxu0 0
    %6858 = vmatmul.mubr.bf16.gmra.mrb[0].mxu0 %v6820
    %v6859 = vpop.f32.mrb[0].mxu0
    %v6860 = vadd.f32 0.0, %v6859
    %v6861 = vpop.f32.mrb[0].mxu0
    %v6862 = vpop.f32.mrb[0].mxu0
    %v6863 = vpop.f32.mrb[0].mxu0
    %6864 = vdwg.mxu0
    %6865 = vrot.lane.b32.xlu0 %v4747, 112
    %v6866 = vpop.permute.xlu0 %6865
    %6867 = vrot.lane.b32.xlu0 %v4755, 112
    %v6868 = vpop.permute.xlu0 %6867
    %v6870 = vsel %vm419, %v6866, 0
    %v6873 = vsel %vm419, %v6868, 0
    %6875 = vmatprep.subr.bf16.mxu0 0
    %6876 = vmatpush1.bf16.xpose.msra.mxu0 %v6873
    %6877 = vmatprep.subr.bf16.mxu0 0
    %6878 = vmatpush1.bf16.xpose.msra.mxu0 0
    %6879 = vmatprep.subr.bf16.mxu0 0
    %6880 = vmatpush1.bf16.xpose.msra.mxu0 0
    %6881 = vmatprep.subr.bf16.mxu0 0
    %6882 = vmatpush1.bf16.xpose.msra.mxu0 0
    %6883 = vmatprep.subr.bf16.mxu0 0
    %6884 = vmatpush1.bf16.xpose.msra.mxu0 0
    %6885 = vmatprep.subr.bf16.mxu0 0
    %6886 = vmatpush1.bf16.xpose.msra.mxu0 0
    %6887 = vmatprep.subr.bf16.mxu0 0
    %6888 = vmatpush1.bf16.xpose.msra.mxu0 0
    %6889 = vmatprep.subr.bf16.mxu0 0
    %6890 = vmatpush1.bf16.xpose.msra.mxu0 0
    %6891 = vmatprep.subr.bf16.mxu0 0
    %6892 = vmatpush1.bf16.xpose.msra.mxu0 0
    %6893 = vmatprep.subr.bf16.mxu0 0
    %6894 = vmatpush1.bf16.xpose.msra.mxu0 0
    %6895 = vmatprep.subr.bf16.mxu0 0
    %6896 = vmatpush1.bf16.xpose.msra.mxu0 0
    %6897 = vmatprep.subr.bf16.mxu0 0
    %6898 = vmatpush1.bf16.xpose.msra.mxu0 0
    %6899 = vmatprep.subr.bf16.mxu0 0
    %6900 = vmatpush1.bf16.xpose.msra.mxu0 0
    %6901 = vmatprep.subr.bf16.mxu0 0
    %6902 = vmatpush1.bf16.xpose.msra.mxu0 0
    %6903 = vmatprep.subr.bf16.mxu0 0
    %6904 = vmatpush1.bf16.xpose.msra.mxu0 0
    %6905 = vmatprep.subr.bf16.mxu0 0
    %6906 = vmatpush1.bf16.xpose.msra.mxu0 0
    %6907 = vmatprep.mubr.bf16.mxu0 0
    %6908 = vmatmul.mubr.bf16.gmra.mrb[0].mxu0 %v6870
    %v6909 = vpop.f32.mrb[0].mxu0
    %v6910 = vadd.f32 0.0, %v6909
    %v6911 = vpop.f32.mrb[0].mxu0
    %v6912 = vpop.f32.mrb[0].mxu0
    %v6913 = vpop.f32.mrb[0].mxu0
    %6914 = vdwg.mxu0
    %6915 = vrot.lane.b32.xlu0 %v4748, 112
    %v6916 = vpop.permute.xlu0 %6915
    %6917 = vrot.lane.b32.xlu0 %v4756, 112
    %v6918 = vpop.permute.xlu0 %6917
    %v6920 = vsel %vm419, %v6916, 0
    %v6923 = vsel %vm419, %v6918, 0
    %6925 = vmatprep.subr.bf16.mxu0 0
    %6926 = vmatpush1.bf16.xpose.msra.mxu0 %v6923
    %6927 = vmatprep.subr.bf16.mxu0 0
    %6928 = vmatpush1.bf16.xpose.msra.mxu0 0
    %6929 = vmatprep.subr.bf16.mxu0 0
    %6930 = vmatpush1.bf16.xpose.msra.mxu0 0
    %6931 = vmatprep.subr.bf16.mxu0 0
    %6932 = vmatpush1.bf16.xpose.msra.mxu0 0
    %6933 = vmatprep.subr.bf16.mxu0 0
    %6934 = vmatpush1.bf16.xpose.msra.mxu0 0
    %6935 = vmatprep.subr.bf16.mxu0 0
    %6936 = vmatpush1.bf16.xpose.msra.mxu0 0
    %6937 = vmatprep.subr.bf16.mxu0 0
    %6938 = vmatpush1.bf16.xpose.msra.mxu0 0
    %6939 = vmatprep.subr.bf16.mxu0 0
    %6940 = vmatpush1.bf16.xpose.msra.mxu0 0
    %6941 = vmatprep.subr.bf16.mxu0 0
    %6942 = vmatpush1.bf16.xpose.msra.mxu0 0
    %6943 = vmatprep.subr.bf16.mxu0 0
    %6944 = vmatpush1.bf16.xpose.msra.mxu0 0
    %6945 = vmatprep.subr.bf16.mxu0 0
    %6946 = vmatpush1.bf16.xpose.msra.mxu0 0
    %6947 = vmatprep.subr.bf16.mxu0 0
    %6948 = vmatpush1.bf16.xpose.msra.mxu0 0
    %6949 = vmatprep.subr.bf16.mxu0 0
    %6950 = vmatpush1.bf16.xpose.msra.mxu0 0
    %6951 = vmatprep.subr.bf16.mxu0 0
    %6952 = vmatpush1.bf16.xpose.msra.mxu0 0
    %6953 = vmatprep.subr.bf16.mxu0 0
    %6954 = vmatpush1.bf16.xpose.msra.mxu0 0
    %6955 = vmatprep.subr.bf16.mxu0 0
    %6956 = vmatpush1.bf16.xpose.msra.mxu0 0
    %6957 = vmatprep.mubr.bf16.mxu0 0
    %6958 = vmatmul.mubr.bf16.gmra.mrb[0].mxu0 %v6920
    %v6959 = vpop.f32.mrb[0].mxu0
    %v6960 = vadd.f32 0.0, %v6959
    %v6961 = vpop.f32.mrb[0].mxu0
    %v6962 = vpop.f32.mrb[0].mxu0
    %v6963 = vpop.f32.mrb[0].mxu0
    %6964 = vdwg.mxu0
    %v6965 = vmul.f32 %v6610, 0.35355338
    %v6966 = vmul.f32 %v6660, 0.35355338
    %v6967 = vmul.f32 %v6710, 0.35355338
    %v6968 = vmul.f32 %v6760, 0.35355338
    %v6969 = vmul.f32 %v6810, 0.35355338
    %v6970 = vmul.f32 %v6860, 0.35355338
    %v6971 = vmul.f32 %v6910, 0.35355338
    %v6972 = vmul.f32 %v6960, 0.35355338
    %v6973 = vsel %vm796, %v6965, -inf
    %6974 = vmax.xlane.f32.xlu0 %v6973
    %v6975 = vpop.xlane.xlu0 %6974
    %v6976 = vsel %vm796, %v6966, -inf
    %6977 = vmax.xlane.f32.xlu0 %v6976
    %v6978 = vpop.xlane.xlu0 %6977
    %v6979 = vsel %vm796, %v6967, -inf
    %6980 = vmax.xlane.f32.xlu0 %v6979
    %v6981 = vpop.xlane.xlu0 %6980
    %v6982 = vsel %vm796, %v6968, -inf
    %6983 = vmax.xlane.f32.xlu0 %v6982
    %v6984 = vpop.xlane.xlu0 %6983
    %v6985 = vsel %vm796, %v6969, -inf
    %6986 = vmax.xlane.f32.xlu0 %v6985
    %v6987 = vpop.xlane.xlu0 %6986
    %v6988 = vsel %vm796, %v6970, -inf
    %6989 = vmax.xlane.f32.xlu0 %v6988
    %v6990 = vpop.xlane.xlu0 %6989
    %v6991 = vsel %vm796, %v6971, -inf
    %6992 = vmax.xlane.f32.xlu0 %v6991
    %v6993 = vpop.xlane.xlu0 %6992
    %v6994 = vsel %vm796, %v6972, -inf
    %6995 = vmax.xlane.f32.xlu0 %v6994
    %v6996 = vpop.xlane.xlu0 %6995
    %v6997 = vsub.f32 %v6965, %v6975
    %v6998 = vsub.f32 %v6966, %v6978
    %v6999 = vsub.f32 %v6967, %v6981
    %v7000 = vsub.f32 %v6968, %v6984
    %v7001 = vsub.f32 %v6969, %v6987
    %v7002 = vsub.f32 %v6970, %v6990
    %v7003 = vsub.f32 %v6971, %v6993
    %v7004 = vsub.f32 %v6972, %v6996
    %v7005 = vmul.f32 %v6997, 1.442695
    %v7006 = vpow.pop %v7005
    %v7007 = vmul.f32 %v6998, 1.442695
    %v7008 = vpow.pop %v7007
    %v7009 = vmul.f32 %v6999, 1.442695
    %v7010 = vpow.pop %v7009
    %v7011 = vmul.f32 %v7000, 1.442695
    %v7012 = vpow.pop %v7011
    %v7013 = vmul.f32 %v7001, 1.442695
    %v7014 = vpow.pop %v7013
    %v7015 = vmul.f32 %v7002, 1.442695
    %v7016 = vpow.pop %v7015
    %v7017 = vmul.f32 %v7003, 1.442695
    %v7018 = vpow.pop %v7017
    %v7019 = vmul.f32 %v7004, 1.442695
    %v7020 = vpow.pop %v7019
    %v7021 = vsel %vm796, %v7006, 0.0
    %7022 = vadd.xlane.f32.xlu0 %v7021
    %v7023 = vpop.xlane.xlu0 %7022
    %v7024 = vsel %vm796, %v7008, 0.0
    %7025 = vadd.xlane.f32.xlu0 %v7024
    %v7026 = vpop.xlane.xlu0 %7025
    %v7027 = vsel %vm796, %v7010, 0.0
    %7028 = vadd.xlane.f32.xlu0 %v7027
    %v7029 = vpop.xlane.xlu0 %7028
    %v7030 = vsel %vm796, %v7012, 0.0
    %7031 = vadd.xlane.f32.xlu0 %v7030
    %v7032 = vpop.xlane.xlu0 %7031
    %v7033 = vsel %vm796, %v7014, 0.0
    %7034 = vadd.xlane.f32.xlu0 %v7033
    %v7035 = vpop.xlane.xlu0 %7034
    %v7036 = vsel %vm796, %v7016, 0.0
    %7037 = vadd.xlane.f32.xlu0 %v7036
    %v7038 = vpop.xlane.xlu0 %7037
    %v7039 = vsel %vm796, %v7018, 0.0
    %7040 = vadd.xlane.f32.xlu0 %v7039
    %v7041 = vpop.xlane.xlu0 %7040
    %v7042 = vsel %vm796, %v7020, 0.0
    %7043 = vadd.xlane.f32.xlu0 %v7042
    %v7044 = vpop.xlane.xlu0 %7043
    %v7045 = vrcp.pop %v7023
    %v7046 = vrcp.pop %v7026
    %v7047 = vrcp.pop %v7029
    %v7048 = vrcp.pop %v7032
    %v7049 = vrcp.pop %v7035
    %v7050 = vrcp.pop %v7038
    %v7051 = vrcp.pop %v7041
    %v7052 = vrcp.pop %v7044
    %v7053 = vmul.f32 %v7023, %v7045
    %v7054 = vmul.f32 %v7026, %v7046
    %v7055 = vmul.f32 %v7029, %v7047
    %v7056 = vmul.f32 %v7032, %v7048
    %v7057 = vmul.f32 %v7035, %v7049
    %v7058 = vmul.f32 %v7038, %v7050
    %v7059 = vmul.f32 %v7041, %v7051
    %v7060 = vmul.f32 %v7044, %v7052
    %v7061 = vsub.f32 2.0, %v7053
    %v7062 = vsub.f32 2.0, %v7054
    %v7063 = vsub.f32 2.0, %v7055
    %v7064 = vsub.f32 2.0, %v7056
    %v7065 = vsub.f32 2.0, %v7057
    %v7066 = vsub.f32 2.0, %v7058
    %v7067 = vsub.f32 2.0, %v7059
    %v7068 = vsub.f32 2.0, %v7060
    %v7069 = vmul.f32 %v7045, %v7061
    %v7070 = vmul.f32 %v7046, %v7062
    %v7071 = vmul.f32 %v7047, %v7063
    %v7072 = vmul.f32 %v7048, %v7064
    %v7073 = vmul.f32 %v7049, %v7065
    %v7074 = vmul.f32 %v7050, %v7066
    %v7075 = vmul.f32 %v7051, %v7067
    %v7076 = vmul.f32 %v7052, %v7068
    %v7077 = vmul.f32 %v7006, %v7069
    %v7078 = vmul.f32 %v7008, %v7070
    %v7079 = vmul.f32 %v7010, %v7071
    %v7080 = vmul.f32 %v7012, %v7072
    %v7081 = vmul.f32 %v7014, %v7073
    %v7082 = vmul.f32 %v7016, %v7074
    %v7083 = vmul.f32 %v7018, %v7075
    %v7084 = vmul.f32 %v7020, %v7076
    %v7085 = vpack.c.bf16 %v7077, %v7077
    %v7086 = vpack.c.bf16 %v7078, %v7078
    %v7087 = vpack.c.bf16 %v7079, %v7079
    %v7088 = vpack.c.bf16 %v7080, %v7080
    %v7089 = vpack.c.bf16 %v7081, %v7081
    %v7090 = vpack.c.bf16 %v7082, %v7082
    %v7091 = vpack.c.bf16 %v7083, %v7083
    %v7092 = vpack.c.bf16 %v7084, %v7084
    %7093 = vrot.lane.b32.xlu0 %v4749, 80
    %v7094 = vpop.permute.xlu0 %7093
    %v7096 = vsel %vm920, %v7085, 0
    %v7099 = vsel %vm924, %v7094, 0
    %7101 = vmatprep.subr.bf16.mxu0 0
    %7102 = vmatpush1.bf16.msra.mxu0 %v7099
    %7103 = vmatprep.subr.bf16.mxu0 0
    %7104 = vmatpush1.bf16.msra.mxu0 0
    %7105 = vmatprep.subr.bf16.mxu0 0
    %7106 = vmatpush1.bf16.msra.mxu0 0
    %7107 = vmatprep.subr.bf16.mxu0 0
    %7108 = vmatpush1.bf16.msra.mxu0 0
    %7109 = vmatprep.subr.bf16.mxu0 0
    %7110 = vmatpush1.bf16.msra.mxu0 0
    %7111 = vmatprep.subr.bf16.mxu0 0
    %7112 = vmatpush1.bf16.msra.mxu0 0
    %7113 = vmatprep.subr.bf16.mxu0 0
    %7114 = vmatpush1.bf16.msra.mxu0 0
    %7115 = vmatprep.subr.bf16.mxu0 0
    %7116 = vmatpush1.bf16.msra.mxu0 0
    %7117 = vmatprep.subr.bf16.mxu0 0
    %7118 = vmatpush1.bf16.msra.mxu0 0
    %7119 = vmatprep.subr.bf16.mxu0 0
    %7120 = vmatpush1.bf16.msra.mxu0 0
    %7121 = vmatprep.subr.bf16.mxu0 0
    %7122 = vmatpush1.bf16.msra.mxu0 0
    %7123 = vmatprep.subr.bf16.mxu0 0
    %7124 = vmatpush1.bf16.msra.mxu0 0
    %7125 = vmatprep.subr.bf16.mxu0 0
    %7126 = vmatpush1.bf16.msra.mxu0 0
    %7127 = vmatprep.subr.bf16.mxu0 0
    %7128 = vmatpush1.bf16.msra.mxu0 0
    %7129 = vmatprep.subr.bf16.mxu0 0
    %7130 = vmatpush1.bf16.msra.mxu0 0
    %7131 = vmatprep.subr.bf16.mxu0 0
    %7132 = vmatpush1.bf16.msra.mxu0 0
    %7133 = vmatprep.mubr.bf16.mxu0 0
    %7134 = vmatmul.mubr.bf16.gmra.mrb[0].mxu0 %v7096
    %v7135 = vpop.f32.mrb[0].mxu0
    %v7136 = vadd.f32 0.0, %v7135
    %v7137 = vpop.f32.mrb[0].mxu0
    %v7138 = vpop.f32.mrb[0].mxu0
    %v7139 = vpop.f32.mrb[0].mxu0
    %7140 = vdwg.mxu0
    %7141 = vrot.lane.b32.xlu0 %v4750, 80
    %v7142 = vpop.permute.xlu0 %7141
    %v7144 = vsel %vm920, %v7086, 0
    %v7147 = vsel %vm924, %v7142, 0
    %7149 = vmatprep.subr.bf16.mxu0 0
    %7150 = vmatpush1.bf16.msra.mxu0 %v7147
    %7151 = vmatprep.subr.bf16.mxu0 0
    %7152 = vmatpush1.bf16.msra.mxu0 0
    %7153 = vmatprep.subr.bf16.mxu0 0
    %7154 = vmatpush1.bf16.msra.mxu0 0
    %7155 = vmatprep.subr.bf16.mxu0 0
    %7156 = vmatpush1.bf16.msra.mxu0 0
    %7157 = vmatprep.subr.bf16.mxu0 0
    %7158 = vmatpush1.bf16.msra.mxu0 0
    %7159 = vmatprep.subr.bf16.mxu0 0
    %7160 = vmatpush1.bf16.msra.mxu0 0
    %7161 = vmatprep.subr.bf16.mxu0 0
    %7162 = vmatpush1.bf16.msra.mxu0 0
    %7163 = vmatprep.subr.bf16.mxu0 0
    %7164 = vmatpush1.bf16.msra.mxu0 0
    %7165 = vmatprep.subr.bf16.mxu0 0
    %7166 = vmatpush1.bf16.msra.mxu0 0
    %7167 = vmatprep.subr.bf16.mxu0 0
    %7168 = vmatpush1.bf16.msra.mxu0 0
    %7169 = vmatprep.subr.bf16.mxu0 0
    %7170 = vmatpush1.bf16.msra.mxu0 0
    %7171 = vmatprep.subr.bf16.mxu0 0
    %7172 = vmatpush1.bf16.msra.mxu0 0
    %7173 = vmatprep.subr.bf16.mxu0 0
    %7174 = vmatpush1.bf16.msra.mxu0 0
    %7175 = vmatprep.subr.bf16.mxu0 0
    %7176 = vmatpush1.bf16.msra.mxu0 0
    %7177 = vmatprep.subr.bf16.mxu0 0
    %7178 = vmatpush1.bf16.msra.mxu0 0
    %7179 = vmatprep.subr.bf16.mxu0 0
    %7180 = vmatpush1.bf16.msra.mxu0 0
    %7181 = vmatprep.mubr.bf16.mxu0 0
    %7182 = vmatmul.mubr.bf16.gmra.mrb[0].mxu0 %v7144
    %v7183 = vpop.f32.mrb[0].mxu0
    %v7184 = vadd.f32 0.0, %v7183
    %v7185 = vpop.f32.mrb[0].mxu0
    %v7186 = vpop.f32.mrb[0].mxu0
    %v7187 = vpop.f32.mrb[0].mxu0
    %7188 = vdwg.mxu0
    %7189 = vrot.lane.b32.xlu0 %v4751, 80
    %v7190 = vpop.permute.xlu0 %7189
    %v7192 = vsel %vm920, %v7087, 0
    %v7195 = vsel %vm924, %v7190, 0
    %7197 = vmatprep.subr.bf16.mxu0 0
    %7198 = vmatpush1.bf16.msra.mxu0 %v7195
    %7199 = vmatprep.subr.bf16.mxu0 0
    %7200 = vmatpush1.bf16.msra.mxu0 0
    %7201 = vmatprep.subr.bf16.mxu0 0
    %7202 = vmatpush1.bf16.msra.mxu0 0
    %7203 = vmatprep.subr.bf16.mxu0 0
    %7204 = vmatpush1.bf16.msra.mxu0 0
    %7205 = vmatprep.subr.bf16.mxu0 0
    %7206 = vmatpush1.bf16.msra.mxu0 0
    %7207 = vmatprep.subr.bf16.mxu0 0
    %7208 = vmatpush1.bf16.msra.mxu0 0
    %7209 = vmatprep.subr.bf16.mxu0 0
    %7210 = vmatpush1.bf16.msra.mxu0 0
    %7211 = vmatprep.subr.bf16.mxu0 0
    %7212 = vmatpush1.bf16.msra.mxu0 0
    %7213 = vmatprep.subr.bf16.mxu0 0
    %7214 = vmatpush1.bf16.msra.mxu0 0
    %7215 = vmatprep.subr.bf16.mxu0 0
    %7216 = vmatpush1.bf16.msra.mxu0 0
    %7217 = vmatprep.subr.bf16.mxu0 0
    %7218 = vmatpush1.bf16.msra.mxu0 0
    %7219 = vmatprep.subr.bf16.mxu0 0
    %7220 = vmatpush1.bf16.msra.mxu0 0
    %7221 = vmatprep.subr.bf16.mxu0 0
    %7222 = vmatpush1.bf16.msra.mxu0 0
    %7223 = vmatprep.subr.bf16.mxu0 0
    %7224 = vmatpush1.bf16.msra.mxu0 0
    %7225 = vmatprep.subr.bf16.mxu0 0
    %7226 = vmatpush1.bf16.msra.mxu0 0
    %7227 = vmatprep.subr.bf16.mxu0 0
    %7228 = vmatpush1.bf16.msra.mxu0 0
    %7229 = vmatprep.mubr.bf16.mxu0 0
    %7230 = vmatmul.mubr.bf16.gmra.mrb[0].mxu0 %v7192
    %v7231 = vpop.f32.mrb[0].mxu0
    %v7232 = vadd.f32 0.0, %v7231
    %v7233 = vpop.f32.mrb[0].mxu0
    %v7234 = vpop.f32.mrb[0].mxu0
    %v7235 = vpop.f32.mrb[0].mxu0
    %7236 = vdwg.mxu0
    %7237 = vrot.lane.b32.xlu0 %v4752, 80
    %v7238 = vpop.permute.xlu0 %7237
    %v7240 = vsel %vm920, %v7088, 0
    %v7243 = vsel %vm924, %v7238, 0
    %7245 = vmatprep.subr.bf16.mxu0 0
    %7246 = vmatpush1.bf16.msra.mxu0 %v7243
    %7247 = vmatprep.subr.bf16.mxu0 0
    %7248 = vmatpush1.bf16.msra.mxu0 0
    %7249 = vmatprep.subr.bf16.mxu0 0
    %7250 = vmatpush1.bf16.msra.mxu0 0
    %7251 = vmatprep.subr.bf16.mxu0 0
    %7252 = vmatpush1.bf16.msra.mxu0 0
    %7253 = vmatprep.subr.bf16.mxu0 0
    %7254 = vmatpush1.bf16.msra.mxu0 0
    %7255 = vmatprep.subr.bf16.mxu0 0
    %7256 = vmatpush1.bf16.msra.mxu0 0
    %7257 = vmatprep.subr.bf16.mxu0 0
    %7258 = vmatpush1.bf16.msra.mxu0 0
    %7259 = vmatprep.subr.bf16.mxu0 0
    %7260 = vmatpush1.bf16.msra.mxu0 0
    %7261 = vmatprep.subr.bf16.mxu0 0
    %7262 = vmatpush1.bf16.msra.mxu0 0
    %7263 = vmatprep.subr.bf16.mxu0 0
    %7264 = vmatpush1.bf16.msra.mxu0 0
    %7265 = vmatprep.subr.bf16.mxu0 0
    %7266 = vmatpush1.bf16.msra.mxu0 0
    %7267 = vmatprep.subr.bf16.mxu0 0
    %7268 = vmatpush1.bf16.msra.mxu0 0
    %7269 = vmatprep.subr.bf16.mxu0 0
    %7270 = vmatpush1.bf16.msra.mxu0 0
    %7271 = vmatprep.subr.bf16.mxu0 0
    %7272 = vmatpush1.bf16.msra.mxu0 0
    %7273 = vmatprep.subr.bf16.mxu0 0
    %7274 = vmatpush1.bf16.msra.mxu0 0
    %7275 = vmatprep.subr.bf16.mxu0 0
    %7276 = vmatpush1.bf16.msra.mxu0 0
    %7277 = vmatprep.mubr.bf16.mxu0 0
    %7278 = vmatmul.mubr.bf16.gmra.mrb[0].mxu0 %v7240
    %v7279 = vpop.f32.mrb[0].mxu0
    %v7280 = vadd.f32 0.0, %v7279
    %v7281 = vpop.f32.mrb[0].mxu0
    %v7282 = vpop.f32.mrb[0].mxu0
    %v7283 = vpop.f32.mrb[0].mxu0
    %7284 = vdwg.mxu0
    %7285 = vrot.lane.b32.xlu0 %v4753, 80
    %v7286 = vpop.permute.xlu0 %7285
    %v7288 = vsel %vm920, %v7089, 0
    %v7291 = vsel %vm924, %v7286, 0
    %7293 = vmatprep.subr.bf16.mxu0 0
    %7294 = vmatpush1.bf16.msra.mxu0 %v7291
    %7295 = vmatprep.subr.bf16.mxu0 0
    %7296 = vmatpush1.bf16.msra.mxu0 0
    %7297 = vmatprep.subr.bf16.mxu0 0
    %7298 = vmatpush1.bf16.msra.mxu0 0
    %7299 = vmatprep.subr.bf16.mxu0 0
    %7300 = vmatpush1.bf16.msra.mxu0 0
    %7301 = vmatprep.subr.bf16.mxu0 0
    %7302 = vmatpush1.bf16.msra.mxu0 0
    %7303 = vmatprep.subr.bf16.mxu0 0
    %7304 = vmatpush1.bf16.msra.mxu0 0
    %7305 = vmatprep.subr.bf16.mxu0 0
    %7306 = vmatpush1.bf16.msra.mxu0 0
    %7307 = vmatprep.subr.bf16.mxu0 0
    %7308 = vmatpush1.bf16.msra.mxu0 0
    %7309 = vmatprep.subr.bf16.mxu0 0
    %7310 = vmatpush1.bf16.msra.mxu0 0
    %7311 = vmatprep.subr.bf16.mxu0 0
    %7312 = vmatpush1.bf16.msra.mxu0 0
    %7313 = vmatprep.subr.bf16.mxu0 0
    %7314 = vmatpush1.bf16.msra.mxu0 0
    %7315 = vmatprep.subr.bf16.mxu0 0
    %7316 = vmatpush1.bf16.msra.mxu0 0
    %7317 = vmatprep.subr.bf16.mxu0 0
    %7318 = vmatpush1.bf16.msra.mxu0 0
    %7319 = vmatprep.subr.bf16.mxu0 0
    %7320 = vmatpush1.bf16.msra.mxu0 0
    %7321 = vmatprep.subr.bf16.mxu0 0
    %7322 = vmatpush1.bf16.msra.mxu0 0
    %7323 = vmatprep.subr.bf16.mxu0 0
    %7324 = vmatpush1.bf16.msra.mxu0 0
    %7325 = vmatprep.mubr.bf16.mxu0 0
    %7326 = vmatmul.mubr.bf16.gmra.mrb[0].mxu0 %v7288
    %v7327 = vpop.f32.mrb[0].mxu0
    %v7328 = vadd.f32 0.0, %v7327
    %v7329 = vpop.f32.mrb[0].mxu0
    %v7330 = vpop.f32.mrb[0].mxu0
    %v7331 = vpop.f32.mrb[0].mxu0
    %7332 = vdwg.mxu0
    %7333 = vrot.lane.b32.xlu0 %v4754, 80
    %v7334 = vpop.permute.xlu0 %7333
    %v7336 = vsel %vm920, %v7090, 0
    %v7339 = vsel %vm924, %v7334, 0
    %7341 = vmatprep.subr.bf16.mxu0 0
    %7342 = vmatpush1.bf16.msra.mxu0 %v7339
    %7343 = vmatprep.subr.bf16.mxu0 0
    %7344 = vmatpush1.bf16.msra.mxu0 0
    %7345 = vmatprep.subr.bf16.mxu0 0
    %7346 = vmatpush1.bf16.msra.mxu0 0
    %7347 = vmatprep.subr.bf16.mxu0 0
    %7348 = vmatpush1.bf16.msra.mxu0 0
    %7349 = vmatprep.subr.bf16.mxu0 0
    %7350 = vmatpush1.bf16.msra.mxu0 0
    %7351 = vmatprep.subr.bf16.mxu0 0
    %7352 = vmatpush1.bf16.msra.mxu0 0
    %7353 = vmatprep.subr.bf16.mxu0 0
    %7354 = vmatpush1.bf16.msra.mxu0 0
    %7355 = vmatprep.subr.bf16.mxu0 0
    %7356 = vmatpush1.bf16.msra.mxu0 0
    %7357 = vmatprep.subr.bf16.mxu0 0
    %7358 = vmatpush1.bf16.msra.mxu0 0
    %7359 = vmatprep.subr.bf16.mxu0 0
    %7360 = vmatpush1.bf16.msra.mxu0 0
    %7361 = vmatprep.subr.bf16.mxu0 0
    %7362 = vmatpush1.bf16.msra.mxu0 0
    %7363 = vmatprep.subr.bf16.mxu0 0
    %7364 = vmatpush1.bf16.msra.mxu0 0
    %7365 = vmatprep.subr.bf16.mxu0 0
    %7366 = vmatpush1.bf16.msra.mxu0 0
    %7367 = vmatprep.subr.bf16.mxu0 0
    %7368 = vmatpush1.bf16.msra.mxu0 0
    %7369 = vmatprep.subr.bf16.mxu0 0
    %7370 = vmatpush1.bf16.msra.mxu0 0
    %7371 = vmatprep.subr.bf16.mxu0 0
    %7372 = vmatpush1.bf16.msra.mxu0 0
    %7373 = vmatprep.mubr.bf16.mxu0 0
    %7374 = vmatmul.mubr.bf16.gmra.mrb[0].mxu0 %v7336
    %v7375 = vpop.f32.mrb[0].mxu0
    %v7376 = vadd.f32 0.0, %v7375
    %v7377 = vpop.f32.mrb[0].mxu0
    %v7378 = vpop.f32.mrb[0].mxu0
    %v7379 = vpop.f32.mrb[0].mxu0
    %7380 = vdwg.mxu0
    %7381 = vrot.lane.b32.xlu0 %v4755, 80
    %v7382 = vpop.permute.xlu0 %7381
    %v7384 = vsel %vm920, %v7091, 0
    %v7387 = vsel %vm924, %v7382, 0
    %7389 = vmatprep.subr.bf16.mxu0 0
    %7390 = vmatpush1.bf16.msra.mxu0 %v7387
    %7391 = vmatprep.subr.bf16.mxu0 0
    %7392 = vmatpush1.bf16.msra.mxu0 0
    %7393 = vmatprep.subr.bf16.mxu0 0
    %7394 = vmatpush1.bf16.msra.mxu0 0
    %7395 = vmatprep.subr.bf16.mxu0 0
    %7396 = vmatpush1.bf16.msra.mxu0 0
    %7397 = vmatprep.subr.bf16.mxu0 0
    %7398 = vmatpush1.bf16.msra.mxu0 0
    %7399 = vmatprep.subr.bf16.mxu0 0
    %7400 = vmatpush1.bf16.msra.mxu0 0
    %7401 = vmatprep.subr.bf16.mxu0 0
    %7402 = vmatpush1.bf16.msra.mxu0 0
    %7403 = vmatprep.subr.bf16.mxu0 0
    %7404 = vmatpush1.bf16.msra.mxu0 0
    %7405 = vmatprep.subr.bf16.mxu0 0
    %7406 = vmatpush1.bf16.msra.mxu0 0
    %7407 = vmatprep.subr.bf16.mxu0 0
    %7408 = vmatpush1.bf16.msra.mxu0 0
    %7409 = vmatprep.subr.bf16.mxu0 0
    %7410 = vmatpush1.bf16.msra.mxu0 0
    %7411 = vmatprep.subr.bf16.mxu0 0
    %7412 = vmatpush1.bf16.msra.mxu0 0
    %7413 = vmatprep.subr.bf16.mxu0 0
    %7414 = vmatpush1.bf16.msra.mxu0 0
    %7415 = vmatprep.subr.bf16.mxu0 0
    %7416 = vmatpush1.bf16.msra.mxu0 0
    %7417 = vmatprep.subr.bf16.mxu0 0
    %7418 = vmatpush1.bf16.msra.mxu0 0
    %7419 = vmatprep.subr.bf16.mxu0 0
    %7420 = vmatpush1.bf16.msra.mxu0 0
    %7421 = vmatprep.mubr.bf16.mxu0 0
    %7422 = vmatmul.mubr.bf16.gmra.mrb[0].mxu0 %v7384
    %v7423 = vpop.f32.mrb[0].mxu0
    %v7424 = vadd.f32 0.0, %v7423
    %v7425 = vpop.f32.mrb[0].mxu0
    %v7426 = vpop.f32.mrb[0].mxu0
    %v7427 = vpop.f32.mrb[0].mxu0
    %7428 = vdwg.mxu0
    %7429 = vrot.lane.b32.xlu0 %v4756, 80
    %v7430 = vpop.permute.xlu0 %7429
    %v7432 = vsel %vm920, %v7092, 0
    %v7435 = vsel %vm924, %v7430, 0
    %7437 = vmatprep.subr.bf16.mxu0 0
    %7438 = vmatpush1.bf16.msra.mxu0 %v7435
    %7439 = vmatprep.subr.bf16.mxu0 0
    %7440 = vmatpush1.bf16.msra.mxu0 0
    %7441 = vmatprep.subr.bf16.mxu0 0
    %7442 = vmatpush1.bf16.msra.mxu0 0
    %7443 = vmatprep.subr.bf16.mxu0 0
    %7444 = vmatpush1.bf16.msra.mxu0 0
    %7445 = vmatprep.subr.bf16.mxu0 0
    %7446 = vmatpush1.bf16.msra.mxu0 0
    %7447 = vmatprep.subr.bf16.mxu0 0
    %7448 = vmatpush1.bf16.msra.mxu0 0
    %7449 = vmatprep.subr.bf16.mxu0 0
    %7450 = vmatpush1.bf16.msra.mxu0 0
    %7451 = vmatprep.subr.bf16.mxu0 0
    %7452 = vmatpush1.bf16.msra.mxu0 0
    %7453 = vmatprep.subr.bf16.mxu0 0
    %7454 = vmatpush1.bf16.msra.mxu0 0
    %7455 = vmatprep.subr.bf16.mxu0 0
    %7456 = vmatpush1.bf16.msra.mxu0 0
    %7457 = vmatprep.subr.bf16.mxu0 0
    %7458 = vmatpush1.bf16.msra.mxu0 0
    %7459 = vmatprep.subr.bf16.mxu0 0
    %7460 = vmatpush1.bf16.msra.mxu0 0
    %7461 = vmatprep.subr.bf16.mxu0 0
    %7462 = vmatpush1.bf16.msra.mxu0 0
    %7463 = vmatprep.subr.bf16.mxu0 0
    %7464 = vmatpush1.bf16.msra.mxu0 0
    %7465 = vmatprep.subr.bf16.mxu0 0
    %7466 = vmatpush1.bf16.msra.mxu0 0
    %7467 = vmatprep.subr.bf16.mxu0 0
    %7468 = vmatpush1.bf16.msra.mxu0 0
    %7469 = vmatprep.mubr.bf16.mxu0 0
    %7470 = vmatmul.mubr.bf16.gmra.mrb[0].mxu0 %v7432
    %v7471 = vpop.f32.mrb[0].mxu0
    %v7472 = vadd.f32 0.0, %v7471
    %v7473 = vpop.f32.mrb[0].mxu0
    %v7474 = vpop.f32.mrb[0].mxu0
    %v7475 = vpop.f32.mrb[0].mxu0
    %7476 = vdwg.mxu0
    %7477 = vrot.lane.b32.xlu0 %v4741, 104
    %v7478 = vpop.permute.xlu0 %7477
    %7479 = vrot.lane.b32.xlu0 %v4749, 104
    %v7480 = vpop.permute.xlu0 %7479
    %v7482 = vsel %vm419, %v7478, 0
    %v7485 = vsel %vm419, %v7480, 0
    %7487 = vmatprep.subr.bf16.mxu0 0
    %7488 = vmatpush1.bf16.xpose.msra.mxu0 %v7485
    %7489 = vmatprep.subr.bf16.mxu0 0
    %7490 = vmatpush1.bf16.xpose.msra.mxu0 0
    %7491 = vmatprep.subr.bf16.mxu0 0
    %7492 = vmatpush1.bf16.xpose.msra.mxu0 0
    %7493 = vmatprep.subr.bf16.mxu0 0
    %7494 = vmatpush1.bf16.xpose.msra.mxu0 0
    %7495 = vmatprep.subr.bf16.mxu0 0
    %7496 = vmatpush1.bf16.xpose.msra.mxu0 0
    %7497 = vmatprep.subr.bf16.mxu0 0
    %7498 = vmatpush1.bf16.xpose.msra.mxu0 0
    %7499 = vmatprep.subr.bf16.mxu0 0
    %7500 = vmatpush1.bf16.xpose.msra.mxu0 0
    %7501 = vmatprep.subr.bf16.mxu0 0
    %7502 = vmatpush1.bf16.xpose.msra.mxu0 0
    %7503 = vmatprep.subr.bf16.mxu0 0
    %7504 = vmatpush1.bf16.xpose.msra.mxu0 0
    %7505 = vmatprep.subr.bf16.mxu0 0
    %7506 = vmatpush1.bf16.xpose.msra.mxu0 0
    %7507 = vmatprep.subr.bf16.mxu0 0
    %7508 = vmatpush1.bf16.xpose.msra.mxu0 0
    %7509 = vmatprep.subr.bf16.mxu0 0
    %7510 = vmatpush1.bf16.xpose.msra.mxu0 0
    %7511 = vmatprep.subr.bf16.mxu0 0
    %7512 = vmatpush1.bf16.xpose.msra.mxu0 0
    %7513 = vmatprep.subr.bf16.mxu0 0
    %7514 = vmatpush1.bf16.xpose.msra.mxu0 0
    %7515 = vmatprep.subr.bf16.mxu0 0
    %7516 = vmatpush1.bf16.xpose.msra.mxu0 0
    %7517 = vmatprep.subr.bf16.mxu0 0
    %7518 = vmatpush1.bf16.xpose.msra.mxu0 0
    %7519 = vmatprep.mubr.bf16.mxu0 0
    %7520 = vmatmul.mubr.bf16.gmra.mrb[0].mxu0 %v7482
    %v7521 = vpop.f32.mrb[0].mxu0
    %v7522 = vadd.f32 0.0, %v7521
    %v7523 = vpop.f32.mrb[0].mxu0
    %v7524 = vpop.f32.mrb[0].mxu0
    %v7525 = vpop.f32.mrb[0].mxu0
    %7526 = vdwg.mxu0
    %7527 = vrot.lane.b32.xlu0 %v4742, 104
    %v7528 = vpop.permute.xlu0 %7527
    %7529 = vrot.lane.b32.xlu0 %v4750, 104
    %v7530 = vpop.permute.xlu0 %7529
    %v7532 = vsel %vm419, %v7528, 0
    %v7535 = vsel %vm419, %v7530, 0
    %7537 = vmatprep.subr.bf16.mxu0 0
    %7538 = vmatpush1.bf16.xpose.msra.mxu0 %v7535
    %7539 = vmatprep.subr.bf16.mxu0 0
    %7540 = vmatpush1.bf16.xpose.msra.mxu0 0
    %7541 = vmatprep.subr.bf16.mxu0 0
    %7542 = vmatpush1.bf16.xpose.msra.mxu0 0
    %7543 = vmatprep.subr.bf16.mxu0 0
    %7544 = vmatpush1.bf16.xpose.msra.mxu0 0
    %7545 = vmatprep.subr.bf16.mxu0 0
    %7546 = vmatpush1.bf16.xpose.msra.mxu0 0
    %7547 = vmatprep.subr.bf16.mxu0 0
    %7548 = vmatpush1.bf16.xpose.msra.mxu0 0
    %7549 = vmatprep.subr.bf16.mxu0 0
    %7550 = vmatpush1.bf16.xpose.msra.mxu0 0
    %7551 = vmatprep.subr.bf16.mxu0 0
    %7552 = vmatpush1.bf16.xpose.msra.mxu0 0
    %7553 = vmatprep.subr.bf16.mxu0 0
    %7554 = vmatpush1.bf16.xpose.msra.mxu0 0
    %7555 = vmatprep.subr.bf16.mxu0 0
    %7556 = vmatpush1.bf16.xpose.msra.mxu0 0
    %7557 = vmatprep.subr.bf16.mxu0 0
    %7558 = vmatpush1.bf16.xpose.msra.mxu0 0
    %7559 = vmatprep.subr.bf16.mxu0 0
    %7560 = vmatpush1.bf16.xpose.msra.mxu0 0
    %7561 = vmatprep.subr.bf16.mxu0 0
    %7562 = vmatpush1.bf16.xpose.msra.mxu0 0
    %7563 = vmatprep.subr.bf16.mxu0 0
    %7564 = vmatpush1.bf16.xpose.msra.mxu0 0
    %7565 = vmatprep.subr.bf16.mxu0 0
    %7566 = vmatpush1.bf16.xpose.msra.mxu0 0
    %7567 = vmatprep.subr.bf16.mxu0 0
    %7568 = vmatpush1.bf16.xpose.msra.mxu0 0
    %7569 = vmatprep.mubr.bf16.mxu0 0
    %7570 = vmatmul.mubr.bf16.gmra.mrb[0].mxu0 %v7532
    %v7571 = vpop.f32.mrb[0].mxu0
    %v7572 = vadd.f32 0.0, %v7571
    %v7573 = vpop.f32.mrb[0].mxu0
    %v7574 = vpop.f32.mrb[0].mxu0
    %v7575 = vpop.f32.mrb[0].mxu0
    %7576 = vdwg.mxu0
    %7577 = vrot.lane.b32.xlu0 %v4743, 104
    %v7578 = vpop.permute.xlu0 %7577
    %7579 = vrot.lane.b32.xlu0 %v4751, 104
    %v7580 = vpop.permute.xlu0 %7579
    %v7582 = vsel %vm419, %v7578, 0
    %v7585 = vsel %vm419, %v7580, 0
    %7587 = vmatprep.subr.bf16.mxu0 0
    %7588 = vmatpush1.bf16.xpose.msra.mxu0 %v7585
    %7589 = vmatprep.subr.bf16.mxu0 0
    %7590 = vmatpush1.bf16.xpose.msra.mxu0 0
    %7591 = vmatprep.subr.bf16.mxu0 0
    %7592 = vmatpush1.bf16.xpose.msra.mxu0 0
    %7593 = vmatprep.subr.bf16.mxu0 0
    %7594 = vmatpush1.bf16.xpose.msra.mxu0 0
    %7595 = vmatprep.subr.bf16.mxu0 0
    %7596 = vmatpush1.bf16.xpose.msra.mxu0 0
    %7597 = vmatprep.subr.bf16.mxu0 0
    %7598 = vmatpush1.bf16.xpose.msra.mxu0 0
    %7599 = vmatprep.subr.bf16.mxu0 0
    %7600 = vmatpush1.bf16.xpose.msra.mxu0 0
    %7601 = vmatprep.subr.bf16.mxu0 0
    %7602 = vmatpush1.bf16.xpose.msra.mxu0 0
    %7603 = vmatprep.subr.bf16.mxu0 0
    %7604 = vmatpush1.bf16.xpose.msra.mxu0 0
    %7605 = vmatprep.subr.bf16.mxu0 0
    %7606 = vmatpush1.bf16.xpose.msra.mxu0 0
    %7607 = vmatprep.subr.bf16.mxu0 0
    %7608 = vmatpush1.bf16.xpose.msra.mxu0 0
    %7609 = vmatprep.subr.bf16.mxu0 0
    %7610 = vmatpush1.bf16.xpose.msra.mxu0 0
    %7611 = vmatprep.subr.bf16.mxu0 0
    %7612 = vmatpush1.bf16.xpose.msra.mxu0 0
    %7613 = vmatprep.subr.bf16.mxu0 0
    %7614 = vmatpush1.bf16.xpose.msra.mxu0 0
    %7615 = vmatprep.subr.bf16.mxu0 0
    %7616 = vmatpush1.bf16.xpose.msra.mxu0 0
    %7617 = vmatprep.subr.bf16.mxu0 0
    %7618 = vmatpush1.bf16.xpose.msra.mxu0 0
    %7619 = vmatprep.mubr.bf16.mxu0 0
    %7620 = vmatmul.mubr.bf16.gmra.mrb[0].mxu0 %v7582
    %v7621 = vpop.f32.mrb[0].mxu0
    %v7622 = vadd.f32 0.0, %v7621
    %v7623 = vpop.f32.mrb[0].mxu0
    %v7624 = vpop.f32.mrb[0].mxu0
    %v7625 = vpop.f32.mrb[0].mxu0
    %7626 = vdwg.mxu0
    %7627 = vrot.lane.b32.xlu0 %v4744, 104
    %v7628 = vpop.permute.xlu0 %7627
    %7629 = vrot.lane.b32.xlu0 %v4752, 104
    %v7630 = vpop.permute.xlu0 %7629
    %v7632 = vsel %vm419, %v7628, 0
    %v7635 = vsel %vm419, %v7630, 0
    %7637 = vmatprep.subr.bf16.mxu0 0
    %7638 = vmatpush1.bf16.xpose.msra.mxu0 %v7635
    %7639 = vmatprep.subr.bf16.mxu0 0
    %7640 = vmatpush1.bf16.xpose.msra.mxu0 0
    %7641 = vmatprep.subr.bf16.mxu0 0
    %7642 = vmatpush1.bf16.xpose.msra.mxu0 0
    %7643 = vmatprep.subr.bf16.mxu0 0
    %7644 = vmatpush1.bf16.xpose.msra.mxu0 0
    %7645 = vmatprep.subr.bf16.mxu0 0
    %7646 = vmatpush1.bf16.xpose.msra.mxu0 0
    %7647 = vmatprep.subr.bf16.mxu0 0
    %7648 = vmatpush1.bf16.xpose.msra.mxu0 0
    %7649 = vmatprep.subr.bf16.mxu0 0
    %7650 = vmatpush1.bf16.xpose.msra.mxu0 0
    %7651 = vmatprep.subr.bf16.mxu0 0
    %7652 = vmatpush1.bf16.xpose.msra.mxu0 0
    %7653 = vmatprep.subr.bf16.mxu0 0
    %7654 = vmatpush1.bf16.xpose.msra.mxu0 0
    %7655 = vmatprep.subr.bf16.mxu0 0
    %7656 = vmatpush1.bf16.xpose.msra.mxu0 0
    %7657 = vmatprep.subr.bf16.mxu0 0
    %7658 = vmatpush1.bf16.xpose.msra.mxu0 0
    %7659 = vmatprep.subr.bf16.mxu0 0
    %7660 = vmatpush1.bf16.xpose.msra.mxu0 0
    %7661 = vmatprep.subr.bf16.mxu0 0
    %7662 = vmatpush1.bf16.xpose.msra.mxu0 0
    %7663 = vmatprep.subr.bf16.mxu0 0
    %7664 = vmatpush1.bf16.xpose.msra.mxu0 0
    %7665 = vmatprep.subr.bf16.mxu0 0
    %7666 = vmatpush1.bf16.xpose.msra.mxu0 0
    %7667 = vmatprep.subr.bf16.mxu0 0
    %7668 = vmatpush1.bf16.xpose.msra.mxu0 0
    %7669 = vmatprep.mubr.bf16.mxu0 0
    %7670 = vmatmul.mubr.bf16.gmra.mrb[0].mxu0 %v7632
    %v7671 = vpop.f32.mrb[0].mxu0
    %v7672 = vadd.f32 0.0, %v7671
    %v7673 = vpop.f32.mrb[0].mxu0
    %v7674 = vpop.f32.mrb[0].mxu0
    %v7675 = vpop.f32.mrb[0].mxu0
    %7676 = vdwg.mxu0
    %7677 = vrot.lane.b32.xlu0 %v4745, 104
    %v7678 = vpop.permute.xlu0 %7677
    %7679 = vrot.lane.b32.xlu0 %v4753, 104
    %v7680 = vpop.permute.xlu0 %7679
    %v7682 = vsel %vm419, %v7678, 0
    %v7685 = vsel %vm419, %v7680, 0
    %7687 = vmatprep.subr.bf16.mxu0 0
    %7688 = vmatpush1.bf16.xpose.msra.mxu0 %v7685
    %7689 = vmatprep.subr.bf16.mxu0 0
    %7690 = vmatpush1.bf16.xpose.msra.mxu0 0
    %7691 = vmatprep.subr.bf16.mxu0 0
    %7692 = vmatpush1.bf16.xpose.msra.mxu0 0
    %7693 = vmatprep.subr.bf16.mxu0 0
    %7694 = vmatpush1.bf16.xpose.msra.mxu0 0
    %7695 = vmatprep.subr.bf16.mxu0 0
    %7696 = vmatpush1.bf16.xpose.msra.mxu0 0
    %7697 = vmatprep.subr.bf16.mxu0 0
    %7698 = vmatpush1.bf16.xpose.msra.mxu0 0
    %7699 = vmatprep.subr.bf16.mxu0 0
    %7700 = vmatpush1.bf16.xpose.msra.mxu0 0
    %7701 = vmatprep.subr.bf16.mxu0 0
    %7702 = vmatpush1.bf16.xpose.msra.mxu0 0
    %7703 = vmatprep.subr.bf16.mxu0 0
    %7704 = vmatpush1.bf16.xpose.msra.mxu0 0
    %7705 = vmatprep.subr.bf16.mxu0 0
    %7706 = vmatpush1.bf16.xpose.msra.mxu0 0
    %7707 = vmatprep.subr.bf16.mxu0 0
    %7708 = vmatpush1.bf16.xpose.msra.mxu0 0
    %7709 = vmatprep.subr.bf16.mxu0 0
    %7710 = vmatpush1.bf16.xpose.msra.mxu0 0
    %7711 = vmatprep.subr.bf16.mxu0 0
    %7712 = vmatpush1.bf16.xpose.msra.mxu0 0
    %7713 = vmatprep.subr.bf16.mxu0 0
    %7714 = vmatpush1.bf16.xpose.msra.mxu0 0
    %7715 = vmatprep.subr.bf16.mxu0 0
    %7716 = vmatpush1.bf16.xpose.msra.mxu0 0
    %7717 = vmatprep.subr.bf16.mxu0 0
    %7718 = vmatpush1.bf16.xpose.msra.mxu0 0
    %7719 = vmatprep.mubr.bf16.mxu0 0
    %7720 = vmatmul.mubr.bf16.gmra.mrb[0].mxu0 %v7682
    %v7721 = vpop.f32.mrb[0].mxu0
    %v7722 = vadd.f32 0.0, %v7721
    %v7723 = vpop.f32.mrb[0].mxu0
    %v7724 = vpop.f32.mrb[0].mxu0
    %v7725 = vpop.f32.mrb[0].mxu0
    %7726 = vdwg.mxu0
    %7727 = vrot.lane.b32.xlu0 %v4746, 104
    %v7728 = vpop.permute.xlu0 %7727
    %7729 = vrot.lane.b32.xlu0 %v4754, 104
    %v7730 = vpop.permute.xlu0 %7729
    %v7732 = vsel %vm419, %v7728, 0
    %v7735 = vsel %vm419, %v7730, 0
    %7737 = vmatprep.subr.bf16.mxu0 0
    %7738 = vmatpush1.bf16.xpose.msra.mxu0 %v7735
    %7739 = vmatprep.subr.bf16.mxu0 0
    %7740 = vmatpush1.bf16.xpose.msra.mxu0 0
    %7741 = vmatprep.subr.bf16.mxu0 0
    %7742 = vmatpush1.bf16.xpose.msra.mxu0 0
    %7743 = vmatprep.subr.bf16.mxu0 0
    %7744 = vmatpush1.bf16.xpose.msra.mxu0 0
    %7745 = vmatprep.subr.bf16.mxu0 0
    %7746 = vmatpush1.bf16.xpose.msra.mxu0 0
    %7747 = vmatprep.subr.bf16.mxu0 0
    %7748 = vmatpush1.bf16.xpose.msra.mxu0 0
    %7749 = vmatprep.subr.bf16.mxu0 0
    %7750 = vmatpush1.bf16.xpose.msra.mxu0 0
    %7751 = vmatprep.subr.bf16.mxu0 0
    %7752 = vmatpush1.bf16.xpose.msra.mxu0 0
    %7753 = vmatprep.subr.bf16.mxu0 0
    %7754 = vmatpush1.bf16.xpose.msra.mxu0 0
    %7755 = vmatprep.subr.bf16.mxu0 0
    %7756 = vmatpush1.bf16.xpose.msra.mxu0 0
    %7757 = vmatprep.subr.bf16.mxu0 0
    %7758 = vmatpush1.bf16.xpose.msra.mxu0 0
    %7759 = vmatprep.subr.bf16.mxu0 0
    %7760 = vmatpush1.bf16.xpose.msra.mxu0 0
    %7761 = vmatprep.subr.bf16.mxu0 0
    %7762 = vmatpush1.bf16.xpose.msra.mxu0 0
    %7763 = vmatprep.subr.bf16.mxu0 0
    %7764 = vmatpush1.bf16.xpose.msra.mxu0 0
    %7765 = vmatprep.subr.bf16.mxu0 0
    %7766 = vmatpush1.bf16.xpose.msra.mxu0 0
    %7767 = vmatprep.subr.bf16.mxu0 0
    %7768 = vmatpush1.bf16.xpose.msra.mxu0 0
    %7769 = vmatprep.mubr.bf16.mxu0 0
    %7770 = vmatmul.mubr.bf16.gmra.mrb[0].mxu0 %v7732
    %v7771 = vpop.f32.mrb[0].mxu0
    %v7772 = vadd.f32 0.0, %v7771
    %v7773 = vpop.f32.mrb[0].mxu0
    %v7774 = vpop.f32.mrb[0].mxu0
    %v7775 = vpop.f32.mrb[0].mxu0
    %7776 = vdwg.mxu0
    %7777 = vrot.lane.b32.xlu0 %v4747, 104
    %v7778 = vpop.permute.xlu0 %7777
    %7779 = vrot.lane.b32.xlu0 %v4755, 104
    %v7780 = vpop.permute.xlu0 %7779
    %v7782 = vsel %vm419, %v7778, 0
    %v7785 = vsel %vm419, %v7780, 0
    %7787 = vmatprep.subr.bf16.mxu0 0
    %7788 = vmatpush1.bf16.xpose.msra.mxu0 %v7785
    %7789 = vmatprep.subr.bf16.mxu0 0
    %7790 = vmatpush1.bf16.xpose.msra.mxu0 0
    %7791 = vmatprep.subr.bf16.mxu0 0
    %7792 = vmatpush1.bf16.xpose.msra.mxu0 0
    %7793 = vmatprep.subr.bf16.mxu0 0
    %7794 = vmatpush1.bf16.xpose.msra.mxu0 0
    %7795 = vmatprep.subr.bf16.mxu0 0
    %7796 = vmatpush1.bf16.xpose.msra.mxu0 0
    %7797 = vmatprep.subr.bf16.mxu0 0
    %7798 = vmatpush1.bf16.xpose.msra.mxu0 0
    %7799 = vmatprep.subr.bf16.mxu0 0
    %7800 = vmatpush1.bf16.xpose.msra.mxu0 0
    %7801 = vmatprep.subr.bf16.mxu0 0
    %7802 = vmatpush1.bf16.xpose.msra.mxu0 0
    %7803 = vmatprep.subr.bf16.mxu0 0
    %7804 = vmatpush1.bf16.xpose.msra.mxu0 0
    %7805 = vmatprep.subr.bf16.mxu0 0
    %7806 = vmatpush1.bf16.xpose.msra.mxu0 0
    %7807 = vmatprep.subr.bf16.mxu0 0
    %7808 = vmatpush1.bf16.xpose.msra.mxu0 0
    %7809 = vmatprep.subr.bf16.mxu0 0
    %7810 = vmatpush1.bf16.xpose.msra.mxu0 0
    %7811 = vmatprep.subr.bf16.mxu0 0
    %7812 = vmatpush1.bf16.xpose.msra.mxu0 0
    %7813 = vmatprep.subr.bf16.mxu0 0
    %7814 = vmatpush1.bf16.xpose.msra.mxu0 0
    %7815 = vmatprep.subr.bf16.mxu0 0
    %7816 = vmatpush1.bf16.xpose.msra.mxu0 0
    %7817 = vmatprep.subr.bf16.mxu0 0
    %7818 = vmatpush1.bf16.xpose.msra.mxu0 0
    %7819 = vmatprep.mubr.bf16.mxu0 0
    %7820 = vmatmul.mubr.bf16.gmra.mrb[0].mxu0 %v7782
    %v7821 = vpop.f32.mrb[0].mxu0
    %v7822 = vadd.f32 0.0, %v7821
    %v7823 = vpop.f32.mrb[0].mxu0
    %v7824 = vpop.f32.mrb[0].mxu0
    %v7825 = vpop.f32.mrb[0].mxu0
    %7826 = vdwg.mxu0
    %7827 = vrot.lane.b32.xlu0 %v4748, 104
    %v7828 = vpop.permute.xlu0 %7827
    %7829 = vrot.lane.b32.xlu0 %v4756, 104
    %v7830 = vpop.permute.xlu0 %7829
    %v7832 = vsel %vm419, %v7828, 0
    %v7835 = vsel %vm419, %v7830, 0
    %7837 = vmatprep.subr.bf16.mxu0 0
    %7838 = vmatpush1.bf16.xpose.msra.mxu0 %v7835
    %7839 = vmatprep.subr.bf16.mxu0 0
    %7840 = vmatpush1.bf16.xpose.msra.mxu0 0
    %7841 = vmatprep.subr.bf16.mxu0 0
    %7842 = vmatpush1.bf16.xpose.msra.mxu0 0
    %7843 = vmatprep.subr.bf16.mxu0 0
    %7844 = vmatpush1.bf16.xpose.msra.mxu0 0
    %7845 = vmatprep.subr.bf16.mxu0 0
    %7846 = vmatpush1.bf16.xpose.msra.mxu0 0
    %7847 = vmatprep.subr.bf16.mxu0 0
    %7848 = vmatpush1.bf16.xpose.msra.mxu0 0
    %7849 = vmatprep.subr.bf16.mxu0 0
    %7850 = vmatpush1.bf16.xpose.msra.mxu0 0
    %7851 = vmatprep.subr.bf16.mxu0 0
    %7852 = vmatpush1.bf16.xpose.msra.mxu0 0
    %7853 = vmatprep.subr.bf16.mxu0 0
    %7854 = vmatpush1.bf16.xpose.msra.mxu0 0
    %7855 = vmatprep.subr.bf16.mxu0 0
    %7856 = vmatpush1.bf16.xpose.msra.mxu0 0
    %7857 = vmatprep.subr.bf16.mxu0 0
    %7858 = vmatpush1.bf16.xpose.msra.mxu0 0
    %7859 = vmatprep.subr.bf16.mxu0 0
    %7860 = vmatpush1.bf16.xpose.msra.mxu0 0
    %7861 = vmatprep.subr.bf16.mxu0 0
    %7862 = vmatpush1.bf16.xpose.msra.mxu0 0
    %7863 = vmatprep.subr.bf16.mxu0 0
    %7864 = vmatpush1.bf16.xpose.msra.mxu0 0
    %7865 = vmatprep.subr.bf16.mxu0 0
    %7866 = vmatpush1.bf16.xpose.msra.mxu0 0
    %7867 = vmatprep.subr.bf16.mxu0 0
    %7868 = vmatpush1.bf16.xpose.msra.mxu0 0
    %7869 = vmatprep.mubr.bf16.mxu0 0
    %7870 = vmatmul.mubr.bf16.gmra.mrb[0].mxu0 %v7832
    %v7871 = vpop.f32.mrb[0].mxu0
    %v7872 = vadd.f32 0.0, %v7871
    %v7873 = vpop.f32.mrb[0].mxu0
    %v7874 = vpop.f32.mrb[0].mxu0
    %v7875 = vpop.f32.mrb[0].mxu0
    %7876 = vdwg.mxu0
    %v7877 = vmul.f32 %v7522, 0.35355338
    %v7878 = vmul.f32 %v7572, 0.35355338
    %v7879 = vmul.f32 %v7622, 0.35355338
    %v7880 = vmul.f32 %v7672, 0.35355338
    %v7881 = vmul.f32 %v7722, 0.35355338
    %v7882 = vmul.f32 %v7772, 0.35355338
    %v7883 = vmul.f32 %v7822, 0.35355338
    %v7884 = vmul.f32 %v7872, 0.35355338
    %v7885 = vsel %vm796, %v7877, -inf
    %7886 = vmax.xlane.f32.xlu0 %v7885
    %v7887 = vpop.xlane.xlu0 %7886
    %v7888 = vsel %vm796, %v7878, -inf
    %7889 = vmax.xlane.f32.xlu0 %v7888
    %v7890 = vpop.xlane.xlu0 %7889
    %v7891 = vsel %vm796, %v7879, -inf
    %7892 = vmax.xlane.f32.xlu0 %v7891
    %v7893 = vpop.xlane.xlu0 %7892
    %v7894 = vsel %vm796, %v7880, -inf
    %7895 = vmax.xlane.f32.xlu0 %v7894
    %v7896 = vpop.xlane.xlu0 %7895
    %v7897 = vsel %vm796, %v7881, -inf
    %7898 = vmax.xlane.f32.xlu0 %v7897
    %v7899 = vpop.xlane.xlu0 %7898
    %v7900 = vsel %vm796, %v7882, -inf
    %7901 = vmax.xlane.f32.xlu0 %v7900
    %v7902 = vpop.xlane.xlu0 %7901
    %v7903 = vsel %vm796, %v7883, -inf
    %7904 = vmax.xlane.f32.xlu0 %v7903
    %v7905 = vpop.xlane.xlu0 %7904
    %v7906 = vsel %vm796, %v7884, -inf
    %7907 = vmax.xlane.f32.xlu0 %v7906
    %v7908 = vpop.xlane.xlu0 %7907
    %v7909 = vsub.f32 %v7877, %v7887
    %v7910 = vsub.f32 %v7878, %v7890
    %v7911 = vsub.f32 %v7879, %v7893
    %v7912 = vsub.f32 %v7880, %v7896
    %v7913 = vsub.f32 %v7881, %v7899
    %v7914 = vsub.f32 %v7882, %v7902
    %v7915 = vsub.f32 %v7883, %v7905
    %v7916 = vsub.f32 %v7884, %v7908
    %v7917 = vmul.f32 %v7909, 1.442695
    %v7918 = vpow.pop %v7917
    %v7919 = vmul.f32 %v7910, 1.442695
    %v7920 = vpow.pop %v7919
    %v7921 = vmul.f32 %v7911, 1.442695
    %v7922 = vpow.pop %v7921
    %v7923 = vmul.f32 %v7912, 1.442695
    %v7924 = vpow.pop %v7923
    %v7925 = vmul.f32 %v7913, 1.442695
    %v7926 = vpow.pop %v7925
    %v7927 = vmul.f32 %v7914, 1.442695
    %v7928 = vpow.pop %v7927
    %v7929 = vmul.f32 %v7915, 1.442695
    %v7930 = vpow.pop %v7929
    %v7931 = vmul.f32 %v7916, 1.442695
    %v7932 = vpow.pop %v7931
    %v7933 = vsel %vm796, %v7918, 0.0
    %7934 = vadd.xlane.f32.xlu0 %v7933
    %v7935 = vpop.xlane.xlu0 %7934
    %v7936 = vsel %vm796, %v7920, 0.0
    %7937 = vadd.xlane.f32.xlu0 %v7936
    %v7938 = vpop.xlane.xlu0 %7937
    %v7939 = vsel %vm796, %v7922, 0.0
    %7940 = vadd.xlane.f32.xlu0 %v7939
    %v7941 = vpop.xlane.xlu0 %7940
    %v7942 = vsel %vm796, %v7924, 0.0
    %7943 = vadd.xlane.f32.xlu0 %v7942
    %v7944 = vpop.xlane.xlu0 %7943
    %v7945 = vsel %vm796, %v7926, 0.0
    %7946 = vadd.xlane.f32.xlu0 %v7945
    %v7947 = vpop.xlane.xlu0 %7946
    %v7948 = vsel %vm796, %v7928, 0.0
    %7949 = vadd.xlane.f32.xlu0 %v7948
    %v7950 = vpop.xlane.xlu0 %7949
    %v7951 = vsel %vm796, %v7930, 0.0
    %7952 = vadd.xlane.f32.xlu0 %v7951
    %v7953 = vpop.xlane.xlu0 %7952
    %v7954 = vsel %vm796, %v7932, 0.0
    %7955 = vadd.xlane.f32.xlu0 %v7954
    %v7956 = vpop.xlane.xlu0 %7955
    %v7957 = vrcp.pop %v7935
    %v7958 = vrcp.pop %v7938
    %v7959 = vrcp.pop %v7941
    %v7960 = vrcp.pop %v7944
    %v7961 = vrcp.pop %v7947
    %v7962 = vrcp.pop %v7950
    %v7963 = vrcp.pop %v7953
    %v7964 = vrcp.pop %v7956
    %v7965 = vmul.f32 %v7935, %v7957
    %v7966 = vmul.f32 %v7938, %v7958
    %v7967 = vmul.f32 %v7941, %v7959
    %v7968 = vmul.f32 %v7944, %v7960
    %v7969 = vmul.f32 %v7947, %v7961
    %v7970 = vmul.f32 %v7950, %v7962
    %v7971 = vmul.f32 %v7953, %v7963
    %v7972 = vmul.f32 %v7956, %v7964
    %v7973 = vsub.f32 2.0, %v7965
    %v7974 = vsub.f32 2.0, %v7966
    %v7975 = vsub.f32 2.0, %v7967
    %v7976 = vsub.f32 2.0, %v7968
    %v7977 = vsub.f32 2.0, %v7969
    %v7978 = vsub.f32 2.0, %v7970
    %v7979 = vsub.f32 2.0, %v7971
    %v7980 = vsub.f32 2.0, %v7972
    %v7981 = vmul.f32 %v7957, %v7973
    %v7982 = vmul.f32 %v7958, %v7974
    %v7983 = vmul.f32 %v7959, %v7975
    %v7984 = vmul.f32 %v7960, %v7976
    %v7985 = vmul.f32 %v7961, %v7977
    %v7986 = vmul.f32 %v7962, %v7978
    %v7987 = vmul.f32 %v7963, %v7979
    %v7988 = vmul.f32 %v7964, %v7980
    %v7989 = vmul.f32 %v7918, %v7981
    %v7990 = vmul.f32 %v7920, %v7982
    %v7991 = vmul.f32 %v7922, %v7983
    %v7992 = vmul.f32 %v7924, %v7984
    %v7993 = vmul.f32 %v7926, %v7985
    %v7994 = vmul.f32 %v7928, %v7986
    %v7995 = vmul.f32 %v7930, %v7987
    %v7996 = vmul.f32 %v7932, %v7988
    %v7997 = vpack.c.bf16 %v7989, %v7989
    %v7998 = vpack.c.bf16 %v7990, %v7990
    %v7999 = vpack.c.bf16 %v7991, %v7991
    %v8000 = vpack.c.bf16 %v7992, %v7992
    %v8001 = vpack.c.bf16 %v7993, %v7993
    %v8002 = vpack.c.bf16 %v7994, %v7994
    %v8003 = vpack.c.bf16 %v7995, %v7995
    %v8004 = vpack.c.bf16 %v7996, %v7996
    %8005 = vrot.lane.b32.xlu0 %v4749, 72
    %v8006 = vpop.permute.xlu0 %8005
    %v8008 = vsel %vm920, %v7997, 0
    %v8011 = vsel %vm924, %v8006, 0
    %8013 = vmatprep.subr.bf16.mxu0 0
    %8014 = vmatpush1.bf16.msra.mxu0 %v8011
    %8015 = vmatprep.subr.bf16.mxu0 0
    %8016 = vmatpush1.bf16.msra.mxu0 0
    %8017 = vmatprep.subr.bf16.mxu0 0
    %8018 = vmatpush1.bf16.msra.mxu0 0
    %8019 = vmatprep.subr.bf16.mxu0 0
    %8020 = vmatpush1.bf16.msra.mxu0 0
    %8021 = vmatprep.subr.bf16.mxu0 0
    %8022 = vmatpush1.bf16.msra.mxu0 0
    %8023 = vmatprep.subr.bf16.mxu0 0
    %8024 = vmatpush1.bf16.msra.mxu0 0
    %8025 = vmatprep.subr.bf16.mxu0 0
    %8026 = vmatpush1.bf16.msra.mxu0 0
    %8027 = vmatprep.subr.bf16.mxu0 0
    %8028 = vmatpush1.bf16.msra.mxu0 0
    %8029 = vmatprep.subr.bf16.mxu0 0
    %8030 = vmatpush1.bf16.msra.mxu0 0
    %8031 = vmatprep.subr.bf16.mxu0 0
    %8032 = vmatpush1.bf16.msra.mxu0 0
    %8033 = vmatprep.subr.bf16.mxu0 0
    %8034 = vmatpush1.bf16.msra.mxu0 0
    %8035 = vmatprep.subr.bf16.mxu0 0
    %8036 = vmatpush1.bf16.msra.mxu0 0
    %8037 = vmatprep.subr.bf16.mxu0 0
    %8038 = vmatpush1.bf16.msra.mxu0 0
    %8039 = vmatprep.subr.bf16.mxu0 0
    %8040 = vmatpush1.bf16.msra.mxu0 0
    %8041 = vmatprep.subr.bf16.mxu0 0
    %8042 = vmatpush1.bf16.msra.mxu0 0
    %8043 = vmatprep.subr.bf16.mxu0 0
    %8044 = vmatpush1.bf16.msra.mxu0 0
    %8045 = vmatprep.mubr.bf16.mxu0 0
    %8046 = vmatmul.mubr.bf16.gmra.mrb[0].mxu0 %v8008
    %v8047 = vpop.f32.mrb[0].mxu0
    %v8048 = vadd.f32 0.0, %v8047
    %v8049 = vpop.f32.mrb[0].mxu0
    %v8050 = vpop.f32.mrb[0].mxu0
    %v8051 = vpop.f32.mrb[0].mxu0
    %8052 = vdwg.mxu0
    %8053 = vrot.lane.b32.xlu0 %v4750, 72
    %v8054 = vpop.permute.xlu0 %8053
    %v8056 = vsel %vm920, %v7998, 0
    %v8059 = vsel %vm924, %v8054, 0
    %8061 = vmatprep.subr.bf16.mxu0 0
    %8062 = vmatpush1.bf16.msra.mxu0 %v8059
    %8063 = vmatprep.subr.bf16.mxu0 0
    %8064 = vmatpush1.bf16.msra.mxu0 0
    %8065 = vmatprep.subr.bf16.mxu0 0
    %8066 = vmatpush1.bf16.msra.mxu0 0
    %8067 = vmatprep.subr.bf16.mxu0 0
    %8068 = vmatpush1.bf16.msra.mxu0 0
    %8069 = vmatprep.subr.bf16.mxu0 0
    %8070 = vmatpush1.bf16.msra.mxu0 0
    %8071 = vmatprep.subr.bf16.mxu0 0
    %8072 = vmatpush1.bf16.msra.mxu0 0
    %8073 = vmatprep.subr.bf16.mxu0 0
    %8074 = vmatpush1.bf16.msra.mxu0 0
    %8075 = vmatprep.subr.bf16.mxu0 0
    %8076 = vmatpush1.bf16.msra.mxu0 0
    %8077 = vmatprep.subr.bf16.mxu0 0
    %8078 = vmatpush1.bf16.msra.mxu0 0
    %8079 = vmatprep.subr.bf16.mxu0 0
    %8080 = vmatpush1.bf16.msra.mxu0 0
    %8081 = vmatprep.subr.bf16.mxu0 0
    %8082 = vmatpush1.bf16.msra.mxu0 0
    %8083 = vmatprep.subr.bf16.mxu0 0
    %8084 = vmatpush1.bf16.msra.mxu0 0
    %8085 = vmatprep.subr.bf16.mxu0 0
    %8086 = vmatpush1.bf16.msra.mxu0 0
    %8087 = vmatprep.subr.bf16.mxu0 0
    %8088 = vmatpush1.bf16.msra.mxu0 0
    %8089 = vmatprep.subr.bf16.mxu0 0
    %8090 = vmatpush1.bf16.msra.mxu0 0
    %8091 = vmatprep.subr.bf16.mxu0 0
    %8092 = vmatpush1.bf16.msra.mxu0 0
    %8093 = vmatprep.mubr.bf16.mxu0 0
    %8094 = vmatmul.mubr.bf16.gmra.mrb[0].mxu0 %v8056
    %v8095 = vpop.f32.mrb[0].mxu0
    %v8096 = vadd.f32 0.0, %v8095
    %v8097 = vpop.f32.mrb[0].mxu0
    %v8098 = vpop.f32.mrb[0].mxu0
    %v8099 = vpop.f32.mrb[0].mxu0
    %8100 = vdwg.mxu0
    %8101 = vrot.lane.b32.xlu0 %v4751, 72
    %v8102 = vpop.permute.xlu0 %8101
    %v8104 = vsel %vm920, %v7999, 0
    %v8107 = vsel %vm924, %v8102, 0
    %8109 = vmatprep.subr.bf16.mxu0 0
    %8110 = vmatpush1.bf16.msra.mxu0 %v8107
    %8111 = vmatprep.subr.bf16.mxu0 0
    %8112 = vmatpush1.bf16.msra.mxu0 0
    %8113 = vmatprep.subr.bf16.mxu0 0
    %8114 = vmatpush1.bf16.msra.mxu0 0
    %8115 = vmatprep.subr.bf16.mxu0 0
    %8116 = vmatpush1.bf16.msra.mxu0 0
    %8117 = vmatprep.subr.bf16.mxu0 0
    %8118 = vmatpush1.bf16.msra.mxu0 0
    %8119 = vmatprep.subr.bf16.mxu0 0
    %8120 = vmatpush1.bf16.msra.mxu0 0
    %8121 = vmatprep.subr.bf16.mxu0 0
    %8122 = vmatpush1.bf16.msra.mxu0 0
    %8123 = vmatprep.subr.bf16.mxu0 0
    %8124 = vmatpush1.bf16.msra.mxu0 0
    %8125 = vmatprep.subr.bf16.mxu0 0
    %8126 = vmatpush1.bf16.msra.mxu0 0
    %8127 = vmatprep.subr.bf16.mxu0 0
    %8128 = vmatpush1.bf16.msra.mxu0 0
    %8129 = vmatprep.subr.bf16.mxu0 0
    %8130 = vmatpush1.bf16.msra.mxu0 0
    %8131 = vmatprep.subr.bf16.mxu0 0
    %8132 = vmatpush1.bf16.msra.mxu0 0
    %8133 = vmatprep.subr.bf16.mxu0 0
    %8134 = vmatpush1.bf16.msra.mxu0 0
    %8135 = vmatprep.subr.bf16.mxu0 0
    %8136 = vmatpush1.bf16.msra.mxu0 0
    %8137 = vmatprep.subr.bf16.mxu0 0
    %8138 = vmatpush1.bf16.msra.mxu0 0
    %8139 = vmatprep.subr.bf16.mxu0 0
    %8140 = vmatpush1.bf16.msra.mxu0 0
    %8141 = vmatprep.mubr.bf16.mxu0 0
    %8142 = vmatmul.mubr.bf16.gmra.mrb[0].mxu0 %v8104
    %v8143 = vpop.f32.mrb[0].mxu0
    %v8144 = vadd.f32 0.0, %v8143
    %v8145 = vpop.f32.mrb[0].mxu0
    %v8146 = vpop.f32.mrb[0].mxu0
    %v8147 = vpop.f32.mrb[0].mxu0
    %8148 = vdwg.mxu0
    %8149 = vrot.lane.b32.xlu0 %v4752, 72
    %v8150 = vpop.permute.xlu0 %8149
    %v8152 = vsel %vm920, %v8000, 0
    %v8155 = vsel %vm924, %v8150, 0
    %8157 = vmatprep.subr.bf16.mxu0 0
    %8158 = vmatpush1.bf16.msra.mxu0 %v8155
    %8159 = vmatprep.subr.bf16.mxu0 0
    %8160 = vmatpush1.bf16.msra.mxu0 0
    %8161 = vmatprep.subr.bf16.mxu0 0
    %8162 = vmatpush1.bf16.msra.mxu0 0
    %8163 = vmatprep.subr.bf16.mxu0 0
    %8164 = vmatpush1.bf16.msra.mxu0 0
    %8165 = vmatprep.subr.bf16.mxu0 0
    %8166 = vmatpush1.bf16.msra.mxu0 0
    %8167 = vmatprep.subr.bf16.mxu0 0
    %8168 = vmatpush1.bf16.msra.mxu0 0
    %8169 = vmatprep.subr.bf16.mxu0 0
    %8170 = vmatpush1.bf16.msra.mxu0 0
    %8171 = vmatprep.subr.bf16.mxu0 0
    %8172 = vmatpush1.bf16.msra.mxu0 0
    %8173 = vmatprep.subr.bf16.mxu0 0
    %8174 = vmatpush1.bf16.msra.mxu0 0
    %8175 = vmatprep.subr.bf16.mxu0 0
    %8176 = vmatpush1.bf16.msra.mxu0 0
    %8177 = vmatprep.subr.bf16.mxu0 0
    %8178 = vmatpush1.bf16.msra.mxu0 0
    %8179 = vmatprep.subr.bf16.mxu0 0
    %8180 = vmatpush1.bf16.msra.mxu0 0
    %8181 = vmatprep.subr.bf16.mxu0 0
    %8182 = vmatpush1.bf16.msra.mxu0 0
    %8183 = vmatprep.subr.bf16.mxu0 0
    %8184 = vmatpush1.bf16.msra.mxu0 0
    %8185 = vmatprep.subr.bf16.mxu0 0
    %8186 = vmatpush1.bf16.msra.mxu0 0
    %8187 = vmatprep.subr.bf16.mxu0 0
    %8188 = vmatpush1.bf16.msra.mxu0 0
    %8189 = vmatprep.mubr.bf16.mxu0 0
    %8190 = vmatmul.mubr.bf16.gmra.mrb[0].mxu0 %v8152
    %v8191 = vpop.f32.mrb[0].mxu0
    %v8192 = vadd.f32 0.0, %v8191
    %v8193 = vpop.f32.mrb[0].mxu0
    %v8194 = vpop.f32.mrb[0].mxu0
    %v8195 = vpop.f32.mrb[0].mxu0
    %8196 = vdwg.mxu0
    %8197 = vrot.lane.b32.xlu0 %v4753, 72
    %v8198 = vpop.permute.xlu0 %8197
    %v8200 = vsel %vm920, %v8001, 0
    %v8203 = vsel %vm924, %v8198, 0
    %8205 = vmatprep.subr.bf16.mxu0 0
    %8206 = vmatpush1.bf16.msra.mxu0 %v8203
    %8207 = vmatprep.subr.bf16.mxu0 0
    %8208 = vmatpush1.bf16.msra.mxu0 0
    %8209 = vmatprep.subr.bf16.mxu0 0
    %8210 = vmatpush1.bf16.msra.mxu0 0
    %8211 = vmatprep.subr.bf16.mxu0 0
    %8212 = vmatpush1.bf16.msra.mxu0 0
    %8213 = vmatprep.subr.bf16.mxu0 0
    %8214 = vmatpush1.bf16.msra.mxu0 0
    %8215 = vmatprep.subr.bf16.mxu0 0
    %8216 = vmatpush1.bf16.msra.mxu0 0
    %8217 = vmatprep.subr.bf16.mxu0 0
    %8218 = vmatpush1.bf16.msra.mxu0 0
    %8219 = vmatprep.subr.bf16.mxu0 0
    %8220 = vmatpush1.bf16.msra.mxu0 0
    %8221 = vmatprep.subr.bf16.mxu0 0
    %8222 = vmatpush1.bf16.msra.mxu0 0
    %8223 = vmatprep.subr.bf16.mxu0 0
    %8224 = vmatpush1.bf16.msra.mxu0 0
    %8225 = vmatprep.subr.bf16.mxu0 0
    %8226 = vmatpush1.bf16.msra.mxu0 0
    %8227 = vmatprep.subr.bf16.mxu0 0
    %8228 = vmatpush1.bf16.msra.mxu0 0
    %8229 = vmatprep.subr.bf16.mxu0 0
    %8230 = vmatpush1.bf16.msra.mxu0 0
    %8231 = vmatprep.subr.bf16.mxu0 0
    %8232 = vmatpush1.bf16.msra.mxu0 0
    %8233 = vmatprep.subr.bf16.mxu0 0
    %8234 = vmatpush1.bf16.msra.mxu0 0
    %8235 = vmatprep.subr.bf16.mxu0 0
    %8236 = vmatpush1.bf16.msra.mxu0 0
    %8237 = vmatprep.mubr.bf16.mxu0 0
    %8238 = vmatmul.mubr.bf16.gmra.mrb[0].mxu0 %v8200
    %v8239 = vpop.f32.mrb[0].mxu0
    %v8240 = vadd.f32 0.0, %v8239
    %v8241 = vpop.f32.mrb[0].mxu0
    %v8242 = vpop.f32.mrb[0].mxu0
    %v8243 = vpop.f32.mrb[0].mxu0
    %8244 = vdwg.mxu0
    %8245 = vrot.lane.b32.xlu0 %v4754, 72
    %v8246 = vpop.permute.xlu0 %8245
    %v8248 = vsel %vm920, %v8002, 0
    %v8251 = vsel %vm924, %v8246, 0
    %8253 = vmatprep.subr.bf16.mxu0 0
    %8254 = vmatpush1.bf16.msra.mxu0 %v8251
    %8255 = vmatprep.subr.bf16.mxu0 0
    %8256 = vmatpush1.bf16.msra.mxu0 0
    %8257 = vmatprep.subr.bf16.mxu0 0
    %8258 = vmatpush1.bf16.msra.mxu0 0
    %8259 = vmatprep.subr.bf16.mxu0 0
    %8260 = vmatpush1.bf16.msra.mxu0 0
    %8261 = vmatprep.subr.bf16.mxu0 0
    %8262 = vmatpush1.bf16.msra.mxu0 0
    %8263 = vmatprep.subr.bf16.mxu0 0
    %8264 = vmatpush1.bf16.msra.mxu0 0
    %8265 = vmatprep.subr.bf16.mxu0 0
    %8266 = vmatpush1.bf16.msra.mxu0 0
    %8267 = vmatprep.subr.bf16.mxu0 0
    %8268 = vmatpush1.bf16.msra.mxu0 0
    %8269 = vmatprep.subr.bf16.mxu0 0
    %8270 = vmatpush1.bf16.msra.mxu0 0
    %8271 = vmatprep.subr.bf16.mxu0 0
    %8272 = vmatpush1.bf16.msra.mxu0 0
    %8273 = vmatprep.subr.bf16.mxu0 0
    %8274 = vmatpush1.bf16.msra.mxu0 0
    %8275 = vmatprep.subr.bf16.mxu0 0
    %8276 = vmatpush1.bf16.msra.mxu0 0
    %8277 = vmatprep.subr.bf16.mxu0 0
    %8278 = vmatpush1.bf16.msra.mxu0 0
    %8279 = vmatprep.subr.bf16.mxu0 0
    %8280 = vmatpush1.bf16.msra.mxu0 0
    %8281 = vmatprep.subr.bf16.mxu0 0
    %8282 = vmatpush1.bf16.msra.mxu0 0
    %8283 = vmatprep.subr.bf16.mxu0 0
    %8284 = vmatpush1.bf16.msra.mxu0 0
    %8285 = vmatprep.mubr.bf16.mxu0 0
    %8286 = vmatmul.mubr.bf16.gmra.mrb[0].mxu0 %v8248
    %v8287 = vpop.f32.mrb[0].mxu0
    %v8288 = vadd.f32 0.0, %v8287
    %v8289 = vpop.f32.mrb[0].mxu0
    %v8290 = vpop.f32.mrb[0].mxu0
    %v8291 = vpop.f32.mrb[0].mxu0
    %8292 = vdwg.mxu0
    %8293 = vrot.lane.b32.xlu0 %v4755, 72
    %v8294 = vpop.permute.xlu0 %8293
    %v8296 = vsel %vm920, %v8003, 0
    %v8299 = vsel %vm924, %v8294, 0
    %8301 = vmatprep.subr.bf16.mxu0 0
    %8302 = vmatpush1.bf16.msra.mxu0 %v8299
    %8303 = vmatprep.subr.bf16.mxu0 0
    %8304 = vmatpush1.bf16.msra.mxu0 0
    %8305 = vmatprep.subr.bf16.mxu0 0
    %8306 = vmatpush1.bf16.msra.mxu0 0
    %8307 = vmatprep.subr.bf16.mxu0 0
    %8308 = vmatpush1.bf16.msra.mxu0 0
    %8309 = vmatprep.subr.bf16.mxu0 0
    %8310 = vmatpush1.bf16.msra.mxu0 0
    %8311 = vmatprep.subr.bf16.mxu0 0
    %8312 = vmatpush1.bf16.msra.mxu0 0
    %8313 = vmatprep.subr.bf16.mxu0 0
    %8314 = vmatpush1.bf16.msra.mxu0 0
    %8315 = vmatprep.subr.bf16.mxu0 0
    %8316 = vmatpush1.bf16.msra.mxu0 0
    %8317 = vmatprep.subr.bf16.mxu0 0
    %8318 = vmatpush1.bf16.msra.mxu0 0
    %8319 = vmatprep.subr.bf16.mxu0 0
    %8320 = vmatpush1.bf16.msra.mxu0 0
    %8321 = vmatprep.subr.bf16.mxu0 0
    %8322 = vmatpush1.bf16.msra.mxu0 0
    %8323 = vmatprep.subr.bf16.mxu0 0
    %8324 = vmatpush1.bf16.msra.mxu0 0
    %8325 = vmatprep.subr.bf16.mxu0 0
    %8326 = vmatpush1.bf16.msra.mxu0 0
    %8327 = vmatprep.subr.bf16.mxu0 0
    %8328 = vmatpush1.bf16.msra.mxu0 0
    %8329 = vmatprep.subr.bf16.mxu0 0
    %8330 = vmatpush1.bf16.msra.mxu0 0
    %8331 = vmatprep.subr.bf16.mxu0 0
    %8332 = vmatpush1.bf16.msra.mxu0 0
    %8333 = vmatprep.mubr.bf16.mxu0 0
    %8334 = vmatmul.mubr.bf16.gmra.mrb[0].mxu0 %v8296
    %v8335 = vpop.f32.mrb[0].mxu0
    %v8336 = vadd.f32 0.0, %v8335
    %v8337 = vpop.f32.mrb[0].mxu0
    %v8338 = vpop.f32.mrb[0].mxu0
    %v8339 = vpop.f32.mrb[0].mxu0
    %8340 = vdwg.mxu0
    %8341 = vrot.lane.b32.xlu0 %v4756, 72
    %v8342 = vpop.permute.xlu0 %8341
    %v8344 = vsel %vm920, %v8004, 0
    %v8347 = vsel %vm924, %v8342, 0
    %8349 = vmatprep.subr.bf16.mxu0 0
    %8350 = vmatpush1.bf16.msra.mxu0 %v8347
    %8351 = vmatprep.subr.bf16.mxu0 0
    %8352 = vmatpush1.bf16.msra.mxu0 0
    %8353 = vmatprep.subr.bf16.mxu0 0
    %8354 = vmatpush1.bf16.msra.mxu0 0
    %8355 = vmatprep.subr.bf16.mxu0 0
    %8356 = vmatpush1.bf16.msra.mxu0 0
    %8357 = vmatprep.subr.bf16.mxu0 0
    %8358 = vmatpush1.bf16.msra.mxu0 0
    %8359 = vmatprep.subr.bf16.mxu0 0
    %8360 = vmatpush1.bf16.msra.mxu0 0
    %8361 = vmatprep.subr.bf16.mxu0 0
    %8362 = vmatpush1.bf16.msra.mxu0 0
    %8363 = vmatprep.subr.bf16.mxu0 0
    %8364 = vmatpush1.bf16.msra.mxu0 0
    %8365 = vmatprep.subr.bf16.mxu0 0
    %8366 = vmatpush1.bf16.msra.mxu0 0
    %8367 = vmatprep.subr.bf16.mxu0 0
    %8368 = vmatpush1.bf16.msra.mxu0 0
    %8369 = vmatprep.subr.bf16.mxu0 0
    %8370 = vmatpush1.bf16.msra.mxu0 0
    %8371 = vmatprep.subr.bf16.mxu0 0
    %8372 = vmatpush1.bf16.msra.mxu0 0
    %8373 = vmatprep.subr.bf16.mxu0 0
    %8374 = vmatpush1.bf16.msra.mxu0 0
    %8375 = vmatprep.subr.bf16.mxu0 0
    %8376 = vmatpush1.bf16.msra.mxu0 0
    %8377 = vmatprep.subr.bf16.mxu0 0
    %8378 = vmatpush1.bf16.msra.mxu0 0
    %8379 = vmatprep.subr.bf16.mxu0 0
    %8380 = vmatpush1.bf16.msra.mxu0 0
    %8381 = vmatprep.mubr.bf16.mxu0 0
    %8382 = vmatmul.mubr.bf16.gmra.mrb[0].mxu0 %v8344
    %v8383 = vpop.f32.mrb[0].mxu0
    %v8384 = vadd.f32 0.0, %v8383
    %v8385 = vpop.f32.mrb[0].mxu0
    %v8386 = vpop.f32.mrb[0].mxu0
    %v8387 = vpop.f32.mrb[0].mxu0
    %8388 = vdwg.mxu0
    %8397 = vrot.lane.b32.xlu0 %v6224, 8
    %v8398 = vpop.permute.xlu0 %8397
    %8399 = vrot.lane.b32.xlu0 %v6272, 8
    %v8400 = vpop.permute.xlu0 %8399
    %8401 = vrot.lane.b32.xlu0 %v6320, 8
    %v8402 = vpop.permute.xlu0 %8401
    %8403 = vrot.lane.b32.xlu0 %v6368, 8
    %v8404 = vpop.permute.xlu0 %8403
    %8405 = vrot.lane.b32.xlu0 %v6416, 8
    %v8406 = vpop.permute.xlu0 %8405
    %8407 = vrot.lane.b32.xlu0 %v6464, 8
    %v8408 = vpop.permute.xlu0 %8407
    %8409 = vrot.lane.b32.xlu0 %v6512, 8
    %v8410 = vpop.permute.xlu0 %8409
    %8411 = vrot.lane.b32.xlu0 %v6560, 8
    %v8412 = vpop.permute.xlu0 %8411
    %8429 = vrot.lane.b32.xlu0 %v7136, 16
    %v8430 = vpop.permute.xlu0 %8429
    %8431 = vrot.lane.b32.xlu0 %v7184, 16
    %v8432 = vpop.permute.xlu0 %8431
    %8433 = vrot.lane.b32.xlu0 %v7232, 16
    %v8434 = vpop.permute.xlu0 %8433
    %8435 = vrot.lane.b32.xlu0 %v7280, 16
    %v8436 = vpop.permute.xlu0 %8435
    %8437 = vrot.lane.b32.xlu0 %v7328, 16
    %v8438 = vpop.permute.xlu0 %8437
    %8439 = vrot.lane.b32.xlu0 %v7376, 16
    %v8440 = vpop.permute.xlu0 %8439
    %8441 = vrot.lane.b32.xlu0 %v7424, 16
    %v8442 = vpop.permute.xlu0 %8441
    %8443 = vrot.lane.b32.xlu0 %v7472, 16
    %v8444 = vpop.permute.xlu0 %8443
    %8461 = vrot.lane.b32.xlu0 %v8048, 24
    %v8462 = vpop.permute.xlu0 %8461
    %8463 = vrot.lane.b32.xlu0 %v8096, 24
    %v8464 = vpop.permute.xlu0 %8463
    %8465 = vrot.lane.b32.xlu0 %v8144, 24
    %v8466 = vpop.permute.xlu0 %8465
    %8467 = vrot.lane.b32.xlu0 %v8192, 24
    %v8468 = vpop.permute.xlu0 %8467
    %8469 = vrot.lane.b32.xlu0 %v8240, 24
    %v8470 = vpop.permute.xlu0 %8469
    %8471 = vrot.lane.b32.xlu0 %v8288, 24
    %v8472 = vpop.permute.xlu0 %8471
    %8473 = vrot.lane.b32.xlu0 %v8336, 24
    %v8474 = vpop.permute.xlu0 %8473
    %8475 = vrot.lane.b32.xlu0 %v8384, 24
    %v8476 = vpop.permute.xlu0 %8475
    %v8485 = vsel %vm419, %v5297, %v8398
    %v8486 = vsel %vm419, %v5346, %v8400
    %v8487 = vsel %vm419, %v5395, %v8402
    %v8488 = vsel %vm419, %v5444, %v8404
    %v8489 = vsel %vm419, %v5493, %v8406
    %v8490 = vsel %vm419, %v5542, %v8408
    %v8491 = vsel %vm419, %v5591, %v8410
    %v8492 = vsel %vm419, %v5640, %v8412
    %v8493 = vsel %vm4159, %v8485, %v8430
    %v8494 = vsel %vm4159, %v8486, %v8432
    %v8495 = vsel %vm4159, %v8487, %v8434
    %v8496 = vsel %vm4159, %v8488, %v8436
    %v8497 = vsel %vm4159, %v8489, %v8438
    %v8498 = vsel %vm4159, %v8490, %v8440
    %v8499 = vsel %vm4159, %v8491, %v8442
    %v8500 = vsel %vm4159, %v8492, %v8444
    %v8501 = vsel %vm4168, %v8493, %v8462
    %v8502 = vsel %vm4168, %v8494, %v8464
    %v8503 = vsel %vm4168, %v8495, %v8466
    %v8504 = vsel %vm4168, %v8496, %v8468
    %v8505 = vsel %vm4168, %v8497, %v8470
    %v8506 = vsel %vm4168, %v8498, %v8472
    %v8507 = vsel %vm4168, %v8499, %v8474
    %v8508 = vsel %vm4168, %v8500, %v8476
    %v8517 = vcombine.low %v8501, %v8502
    %v8518 = vcombine.low %v8503, %v8504
    %v8520 = vunpack.c.l.s4 1983009808
    %v8521 = vunpack.c.0.s8 %v8520
    %v8522 = vlaneseq
    %v8523 = vshrl.u32 %v8522, 7
    %v8524 = vsub.s32 %v8521, %v8523
    %v8525 = vrot.slane %v8517, %v8524
    %v8527 = vunpack.c.l.s4 1983009808
    %v8528 = vunpack.c.0.s8 %v8527
    %v8529 = vlaneseq
    %v8530 = vshrl.u32 %v8529, 7
    %v8531 = vsub.s32 %v8528, %v8530
    %v8532 = vrot.slane %v8518, %v8531
    %v8533 = vcombine.low %v8525, %v8532
    %v8534 = vcombine.low %v8505, %v8506
    %v8535 = vcombine.low %v8507, %v8508
    %v8537 = vunpack.c.l.s4 1983009808
    %v8538 = vunpack.c.0.s8 %v8537
    %v8539 = vlaneseq
    %v8540 = vshrl.u32 %v8539, 7
    %v8541 = vsub.s32 %v8538, %v8540
    %v8542 = vrot.slane %v8534, %v8541
    %v8544 = vunpack.c.l.s4 1983009808
    %v8545 = vunpack.c.0.s8 %v8544
    %v8546 = vlaneseq
    %v8547 = vshrl.u32 %v8546, 7
    %v8548 = vsub.s32 %v8545, %v8547
    %v8549 = vrot.slane %v8535, %v8548
    %v8550 = vcombine.low %v8542, %v8549
    %v8553 = vpack.c.bf16 %v8550, %v8533
    %v8554 = vld [vmem:[%s12] sm:$0xf]
    %v8555 = vld [vmem:[%s12 + $0x4] sm:$0xf]
    %v8556 = vld [vmem:[%s12 + $0x8] sm:$0xf]
    %v8557 = vld [vmem:[%s12 + $0xc] sm:$0xf]
    %v8558 = vld [vmem:[%s13] sm:$0x1]
    %v8560 = vlaneseq
    %v8561 = vshrl.u32 %v8560, 7
    %v8562 = vsub.s32 0, %v8561
    %v8563 = vrot.slane %v8558, %v8562
    %v8569 = vunpack.c.l.b16 %v8554
    %v8570 = vunpack.c.l.b16 %v8555
    %v8571 = vunpack.c.l.b16 %v8556
    %v8572 = vunpack.c.l.b16 %v8557
    %v8573 = vpack.c.b16 %v8570, %v8569
    %v8574 = vpack.c.b16 %v8572, %v8571
    %v8578 = vsel %vm206, %v8553, 0
    %8580 = vmatprep.subr.bf16.mxu0 0
    %8581 = vmatpush1.bf16.msra.mxu0 %v8573
    %8582 = vmatprep.subr.bf16.mxu0 0
    %8583 = vmatpush1.bf16.msra.mxu0 %v8574
    %8584 = vmatprep.subr.bf16.mxu0 0
    %8585 = vmatpush1.bf16.msra.mxu0 0
    %8586 = vmatprep.subr.bf16.mxu0 0
    %8587 = vmatpush1.bf16.msra.mxu0 0
    %8588 = vmatprep.subr.bf16.mxu0 0
    %8589 = vmatpush1.bf16.msra.mxu0 0
    %8590 = vmatprep.subr.bf16.mxu0 0
    %8591 = vmatpush1.bf16.msra.mxu0 0
    %8592 = vmatprep.subr.bf16.mxu0 0
    %8593 = vmatpush1.bf16.msra.mxu0 0
    %8594 = vmatprep.subr.bf16.mxu0 0
    %8595 = vmatpush1.bf16.msra.mxu0 0
    %8596 = vmatprep.subr.bf16.mxu0 0
    %8597 = vmatpush1.bf16.msra.mxu0 0
    %8598 = vmatprep.subr.bf16.mxu0 0
    %8599 = vmatpush1.bf16.msra.mxu0 0
    %8600 = vmatprep.subr.bf16.mxu0 0
    %8601 = vmatpush1.bf16.msra.mxu0 0
    %8602 = vmatprep.subr.bf16.mxu0 0
    %8603 = vmatpush1.bf16.msra.mxu0 0
    %8604 = vmatprep.subr.bf16.mxu0 0
    %8605 = vmatpush1.bf16.msra.mxu0 0
    %8606 = vmatprep.subr.bf16.mxu0 0
    %8607 = vmatpush1.bf16.msra.mxu0 0
    %8608 = vmatprep.subr.bf16.mxu0 0
    %8609 = vmatpush1.bf16.msra.mxu0 0
    %8610 = vmatprep.subr.bf16.mxu0 0
    %8611 = vmatpush1.bf16.msra.mxu0 0
    %8612 = vmatprep.mubr.bf16.mxu0 0
    %8613 = vmatmul.mubr.bf16.gmra.mrb[0].mxu0 %v8578
    %v8614 = vpop.f32.mrb[0].mxu0
    %v8615 = vadd.f32 %v8563, %v8614
    %v8616 = vpop.f32.mrb[0].mxu0
    %v8617 = vpop.f32.mrb[0].mxu0
    %v8618 = vadd.f32 %v8563, %v8617
    %v8619 = vpop.f32.mrb[0].mxu0
    %8620 = vdwg.mxu0
    %v8623 = vcombine.high %v8615, %v8615
    %v8625 = vunpack.c.l.s4 1983009808
    %v8626 = vunpack.c.0.s8 %v8625
    %v8627 = vlaneseq
    %v8628 = vshrl.u32 %v8627, 7
    %v8629 = vsub.s32 %v8626, %v8628
    %v8630 = vrot.slane %v8615, %v8629
    %v8632 = vunpack.c.l.s4 1983009808
    %v8633 = vunpack.c.0.s8 %v8632
    %v8634 = vlaneseq
    %v8635 = vshrl.u32 %v8634, 7
    %v8636 = vsub.s32 %v8633, %v8635
    %v8637 = vrot.slane %v8623, %v8636
    %v8638 = vcombine.high %v8630, %v8630
    %v8639 = vcombine.high %v8637, %v8637
    %v8640 = vcombine.high %v8618, %v8618
    %v8642 = vunpack.c.l.s4 1983009808
    %v8643 = vunpack.c.0.s8 %v8642
    %v8644 = vlaneseq
    %v8645 = vshrl.u32 %v8644, 7
    %v8646 = vsub.s32 %v8643, %v8645
    %v8647 = vrot.slane %v8618, %v8646
    %v8649 = vunpack.c.l.s4 1983009808
    %v8650 = vunpack.c.0.s8 %v8649
    %v8651 = vlaneseq
    %v8652 = vshrl.u32 %v8651, 7
    %v8653 = vsub.s32 %v8650, %v8652
    %v8654 = vrot.slane %v8640, %v8653
    %v8655 = vcombine.high %v8647, %v8647
    %v8656 = vcombine.high %v8654, %v8654
    %v8665 = vadd.f32 %v4469, %v8630
    %v8666 = vadd.f32 %v4470, %v8638
    %v8667 = vadd.f32 %v4471, %v8637
    %v8668 = vadd.f32 %v4472, %v8639
    %v8669 = vadd.f32 %v4473, %v8647
    %v8670 = vadd.f32 %v4474, %v8655
    %v8671 = vadd.f32 %v4475, %v8654
    %v8672 = vadd.f32 %v4476, %v8656
    %v8673 = vsel %vm4341, %v8665, 0.0
    %8674 = vadd.xlane.f32.xlu0 %v8673
    %v8675 = vpop.xlane.xlu0 %8674
    %v8676 = vsel %vm4341, %v8666, 0.0
    %8677 = vadd.xlane.f32.xlu0 %v8676
    %v8678 = vpop.xlane.xlu0 %8677
    %v8679 = vsel %vm4341, %v8667, 0.0
    %8680 = vadd.xlane.f32.xlu0 %v8679
    %v8681 = vpop.xlane.xlu0 %8680
    %v8682 = vsel %vm4341, %v8668, 0.0
    %8683 = vadd.xlane.f32.xlu0 %v8682
    %v8684 = vpop.xlane.xlu0 %8683
    %v8685 = vsel %vm4341, %v8669, 0.0
    %8686 = vadd.xlane.f32.xlu0 %v8685
    %v8687 = vpop.xlane.xlu0 %8686
    %v8688 = vsel %vm4341, %v8670, 0.0
    %8689 = vadd.xlane.f32.xlu0 %v8688
    %v8690 = vpop.xlane.xlu0 %8689
    %v8691 = vsel %vm4341, %v8671, 0.0
    %8692 = vadd.xlane.f32.xlu0 %v8691
    %v8693 = vpop.xlane.xlu0 %8692
    %v8694 = vsel %vm4341, %v8672, 0.0
    %8695 = vadd.xlane.f32.xlu0 %v8694
    %v8696 = vpop.xlane.xlu0 %8695
    %v8697 = vmul.f32 %v8675, %v4366
    %v8698 = vmul.f32 %v8678, %v4366
    %v8699 = vmul.f32 %v8681, %v4366
    %v8700 = vmul.f32 %v8684, %v4366
    %v8701 = vmul.f32 %v8687, %v4366
    %v8702 = vmul.f32 %v8690, %v4366
    %v8703 = vmul.f32 %v8693, %v4366
    %v8704 = vmul.f32 %v8696, %v4366
    %v8705 = vsub.f32 %v8665, %v8697
    %v8706 = vsub.f32 %v8666, %v8698
    %v8707 = vsub.f32 %v8667, %v8699
    %v8708 = vsub.f32 %v8668, %v8700
    %v8709 = vsub.f32 %v8669, %v8701
    %v8710 = vsub.f32 %v8670, %v8702
    %v8711 = vsub.f32 %v8671, %v8703
    %v8712 = vsub.f32 %v8672, %v8704
    %v8713 = vmul.f32 %v8705, %v8705
    %v8714 = vmul.f32 %v8706, %v8706
    %v8715 = vmul.f32 %v8707, %v8707
    %v8716 = vmul.f32 %v8708, %v8708
    %v8717 = vmul.f32 %v8709, %v8709
    %v8718 = vmul.f32 %v8710, %v8710
    %v8719 = vmul.f32 %v8711, %v8711
    %v8720 = vmul.f32 %v8712, %v8712
    %v8721 = vsel %vm4341, %v8713, 0.0
    %8722 = vadd.xlane.f32.xlu0 %v8721
    %v8723 = vpop.xlane.xlu0 %8722
    %v8724 = vsel %vm4341, %v8714, 0.0
    %8725 = vadd.xlane.f32.xlu0 %v8724
    %v8726 = vpop.xlane.xlu0 %8725
    %v8727 = vsel %vm4341, %v8715, 0.0
    %8728 = vadd.xlane.f32.xlu0 %v8727
    %v8729 = vpop.xlane.xlu0 %8728
    %v8730 = vsel %vm4341, %v8716, 0.0
    %8731 = vadd.xlane.f32.xlu0 %v8730
    %v8732 = vpop.xlane.xlu0 %8731
    %v8733 = vsel %vm4341, %v8717, 0.0
    %8734 = vadd.xlane.f32.xlu0 %v8733
    %v8735 = vpop.xlane.xlu0 %8734
    %v8736 = vsel %vm4341, %v8718, 0.0
    %8737 = vadd.xlane.f32.xlu0 %v8736
    %v8738 = vpop.xlane.xlu0 %8737
    %v8739 = vsel %vm4341, %v8719, 0.0
    %8740 = vadd.xlane.f32.xlu0 %v8739
    %v8741 = vpop.xlane.xlu0 %8740
    %v8742 = vsel %vm4341, %v8720, 0.0
    %8743 = vadd.xlane.f32.xlu0 %v8742
    %v8744 = vpop.xlane.xlu0 %8743
    %v8745 = vmul.f32 %v8723, %v4366
    %v8746 = vmul.f32 %v8726, %v4366
    %v8747 = vmul.f32 %v8729, %v4366
    %v8748 = vmul.f32 %v8732, %v4366
    %v8749 = vmul.f32 %v8735, %v4366
    %v8750 = vmul.f32 %v8738, %v4366
    %v8751 = vmul.f32 %v8741, %v4366
    %v8752 = vmul.f32 %v8744, %v4366
    %v8753 = vadd.f32 %v8745, 1e-05
    %v8754 = vadd.f32 %v8746, 1e-05
    %v8755 = vadd.f32 %v8747, 1e-05
    %v8756 = vadd.f32 %v8748, 1e-05
    %v8757 = vadd.f32 %v8749, 1e-05
    %v8758 = vadd.f32 %v8750, 1e-05
    %v8759 = vadd.f32 %v8751, 1e-05
    %v8760 = vadd.f32 %v8752, 1e-05
    %v8761 = vrsqrt.pop %v8753
    %v8762 = vrsqrt.pop %v8754
    %v8763 = vrsqrt.pop %v8755
    %v8764 = vrsqrt.pop %v8756
    %v8765 = vrsqrt.pop %v8757
    %v8766 = vrsqrt.pop %v8758
    %v8767 = vrsqrt.pop %v8759
    %v8768 = vrsqrt.pop %v8760
    %v8769 = vmul.f32 %v8705, %v8761
    %v8770 = vmul.f32 %v8706, %v8762
    %v8771 = vmul.f32 %v8707, %v8763
    %v8772 = vmul.f32 %v8708, %v8764
    %v8773 = vmul.f32 %v8709, %v8765
    %v8774 = vmul.f32 %v8710, %v8766
    %v8775 = vmul.f32 %v8711, %v8767
    %v8776 = vmul.f32 %v8712, %v8768
    %s8777 = scalar_lea.vmem %s14, 1
    %v8778 = vld [vmem:[%s8777] sm:$0x1]
    %v8780 = vlaneseq
    %v8781 = vshrl.u32 %v8780, 7
    %v8782 = vsub.s32 0, %v8781
    %v8783 = vrot.slane %v8778, %v8782
    %v8785 = vmul.f32 %v8769, %v8783
    %v8786 = vmul.f32 %v8770, %v8783
    %v8787 = vmul.f32 %v8771, %v8783
    %v8788 = vmul.f32 %v8772, %v8783
    %v8789 = vmul.f32 %v8773, %v8783
    %v8790 = vmul.f32 %v8774, %v8783
    %v8791 = vmul.f32 %v8775, %v8783
    %v8792 = vmul.f32 %v8776, %v8783
    %s8793 = scalar_lea.vmem %s15, 1
    %v8794 = vld [vmem:[%s8793] sm:$0x1]
    %v8796 = vlaneseq
    %v8797 = vshrl.u32 %v8796, 7
    %v8798 = vsub.s32 0, %v8797
    %v8799 = vrot.slane %v8794, %v8798
    %v8801 = vadd.f32 %v8785, %v8799
    %v8802 = vadd.f32 %v8786, %v8799
    %v8803 = vadd.f32 %v8787, %v8799
    %v8804 = vadd.f32 %v8788, %v8799
    %v8805 = vadd.f32 %v8789, %v8799
    %v8806 = vadd.f32 %v8790, %v8799
    %v8807 = vadd.f32 %v8791, %v8799
    %v8808 = vadd.f32 %v8792, %v8799
    %v8817 = vcombine.low %v8801, %v8802
    %v8818 = vcombine.low %v8803, %v8804
    %v8820 = vunpack.c.l.s4 1983009808
    %v8821 = vunpack.c.0.s8 %v8820
    %v8822 = vlaneseq
    %v8823 = vshrl.u32 %v8822, 7
    %v8824 = vsub.s32 %v8821, %v8823
    %v8825 = vrot.slane %v8817, %v8824
    %v8827 = vunpack.c.l.s4 1983009808
    %v8828 = vunpack.c.0.s8 %v8827
    %v8829 = vlaneseq
    %v8830 = vshrl.u32 %v8829, 7
    %v8831 = vsub.s32 %v8828, %v8830
    %v8832 = vrot.slane %v8818, %v8831
    %v8833 = vcombine.low %v8825, %v8832
    %v8834 = vcombine.low %v8805, %v8806
    %v8835 = vcombine.low %v8807, %v8808
    %v8837 = vunpack.c.l.s4 1983009808
    %v8838 = vunpack.c.0.s8 %v8837
    %v8839 = vlaneseq
    %v8840 = vshrl.u32 %v8839, 7
    %v8841 = vsub.s32 %v8838, %v8840
    %v8842 = vrot.slane %v8834, %v8841
    %v8844 = vunpack.c.l.s4 1983009808
    %v8845 = vunpack.c.0.s8 %v8844
    %v8846 = vlaneseq
    %v8847 = vshrl.u32 %v8846, 7
    %v8848 = vsub.s32 %v8845, %v8847
    %v8849 = vrot.slane %v8835, %v8848
    %v8850 = vcombine.low %v8842, %v8849
    %v8853 = vpack.c.bf16 %v8850, %v8833
    %v8854 = vld [vmem:[%s16] sm:$0xf]
    %v8855 = vld [vmem:[%s16 + $0x4] sm:$0xf]
    %v8856 = vld [vmem:[%s16 + $0x8] sm:$0xf]
    %v8857 = vld [vmem:[%s16 + $0xc] sm:$0xf]
    %v8858 = vld [vmem:[%s17] sm:$0x1]
    %v8860 = vlaneseq
    %v8861 = vshrl.u32 %v8860, 7
    %v8862 = vsub.s32 0, %v8861
    %v8863 = vrot.slane %v8858, %v8862
    %v8869 = vunpack.c.l.b16 %v8854
    %v8870 = vunpack.c.l.b16 %v8855
    %v8871 = vunpack.c.l.b16 %v8856
    %v8872 = vunpack.c.l.b16 %v8857
    %v8873 = vpack.c.b16 %v8870, %v8869
    %v8874 = vpack.c.b16 %v8872, %v8871
    %v8878 = vsel %vm206, %v8853, 0
    %8880 = vmatprep.subr.bf16.mxu0 0
    %8881 = vmatpush1.bf16.msra.mxu0 %v8873
    %8882 = vmatprep.subr.bf16.mxu0 0
    %8883 = vmatpush1.bf16.msra.mxu0 %v8874
    %8884 = vmatprep.subr.bf16.mxu0 0
    %8885 = vmatpush1.bf16.msra.mxu0 0
    %8886 = vmatprep.subr.bf16.mxu0 0
    %8887 = vmatpush1.bf16.msra.mxu0 0
    %8888 = vmatprep.subr.bf16.mxu0 0
    %8889 = vmatpush1.bf16.msra.mxu0 0
    %8890 = vmatprep.subr.bf16.mxu0 0
    %8891 = vmatpush1.bf16.msra.mxu0 0
    %8892 = vmatprep.subr.bf16.mxu0 0
    %8893 = vmatpush1.bf16.msra.mxu0 0
    %8894 = vmatprep.subr.bf16.mxu0 0
    %8895 = vmatpush1.bf16.msra.mxu0 0
    %8896 = vmatprep.subr.bf16.mxu0 0
    %8897 = vmatpush1.bf16.msra.mxu0 0
    %8898 = vmatprep.subr.bf16.mxu0 0
    %8899 = vmatpush1.bf16.msra.mxu0 0
    %8900 = vmatprep.subr.bf16.mxu0 0
    %8901 = vmatpush1.bf16.msra.mxu0 0
    %8902 = vmatprep.subr.bf16.mxu0 0
    %8903 = vmatpush1.bf16.msra.mxu0 0
    %8904 = vmatprep.subr.bf16.mxu0 0
    %8905 = vmatpush1.bf16.msra.mxu0 0
    %8906 = vmatprep.subr.bf16.mxu0 0
    %8907 = vmatpush1.bf16.msra.mxu0 0
    %8908 = vmatprep.subr.bf16.mxu0 0
    %8909 = vmatpush1.bf16.msra.mxu0 0
    %8910 = vmatprep.subr.bf16.mxu0 0
    %8911 = vmatpush1.bf16.msra.mxu0 0
    %8912 = vmatprep.mubr.bf16.mxu0 0
    %8913 = vmatmul.mubr.bf16.gmra.mrb[0].mxu0 %v8878
    %v8914 = vpop.f32.mrb[0].mxu0
    %v8915 = vadd.f32 %v8863, %v8914
    %v8916 = vpop.f32.mrb[0].mxu0
    %v8917 = vpop.f32.mrb[0].mxu0
    %v8918 = vadd.f32 %v8863, %v8917
    %v8919 = vpop.f32.mrb[0].mxu0
    %8920 = vdwg.mxu0
    %v8921 = vmax.f32 %v8915, 0.0
    %v8922 = vmax.f32 %v8918, 0.0
    %v8923 = vpack.c.bf16 %v8922, %v8921
    %v8924 = vld [vmem:[%s18] sm:$0xf]
    %v8925 = vld [vmem:[%s18 + $0x4] sm:$0xf]
    %v8926 = vld [vmem:[%s18 + $0x8] sm:$0xf]
    %v8927 = vld [vmem:[%s18 + $0xc] sm:$0xf]
    %v8928 = vld [vmem:[%s18 + $0x10] sm:$0xf]
    %v8929 = vld [vmem:[%s18 + $0x14] sm:$0xf]
    %v8930 = vld [vmem:[%s18 + $0x18] sm:$0xf]
    %v8931 = vld [vmem:[%s18 + $0x1c] sm:$0xf]
    %v8932 = vld [vmem:[%s19] sm:$0x1]
    %v8934 = vlaneseq
    %v8935 = vshrl.u32 %v8934, 7
    %v8936 = vsub.s32 0, %v8935
    %v8937 = vrot.slane %v8932, %v8936
    %v8947 = vunpack.c.l.b16 %v8924
    %v8948 = vunpack.c.l.b16 %v8925
    %v8949 = vunpack.c.l.b16 %v8926
    %v8950 = vunpack.c.l.b16 %v8927
    %v8951 = vunpack.c.l.b16 %v8928
    %v8952 = vunpack.c.l.b16 %v8929
    %v8953 = vunpack.c.l.b16 %v8930
    %v8954 = vunpack.c.l.b16 %v8931
    %v8955 = vpack.c.b16 %v8948, %v8947
    %v8956 = vpack.c.b16 %v8950, %v8949
    %v8957 = vpack.c.b16 %v8952, %v8951
    %v8958 = vpack.c.b16 %v8954, %v8953
    %vm8963 = vcmask 523264
    %v8965 = vsel %vm8963, %v8923, 0
    %8967 = vmatprep.subr.bf16.mxu0 0
    %8968 = vmatpush1.bf16.msra.mxu0 %v8955
    %8969 = vmatprep.subr.bf16.mxu0 0
    %8970 = vmatpush1.bf16.msra.mxu0 %v8956
    %8971 = vmatprep.subr.bf16.mxu0 0
    %8972 = vmatpush1.bf16.msra.mxu0 %v8957
    %8973 = vmatprep.subr.bf16.mxu0 0
    %8974 = vmatpush1.bf16.msra.mxu0 %v8958
    %8975 = vmatprep.subr.bf16.mxu0 0
    %8976 = vmatpush1.bf16.msra.mxu0 0
    %8977 = vmatprep.subr.bf16.mxu0 0
    %8978 = vmatpush1.bf16.msra.mxu0 0
    %8979 = vmatprep.subr.bf16.mxu0 0
    %8980 = vmatpush1.bf16.msra.mxu0 0
    %8981 = vmatprep.subr.bf16.mxu0 0
    %8982 = vmatpush1.bf16.msra.mxu0 0
    %8983 = vmatprep.subr.bf16.mxu0 0
    %8984 = vmatpush1.bf16.msra.mxu0 0
    %8985 = vmatprep.subr.bf16.mxu0 0
    %8986 = vmatpush1.bf16.msra.mxu0 0
    %8987 = vmatprep.subr.bf16.mxu0 0
    %8988 = vmatpush1.bf16.msra.mxu0 0
    %8989 = vmatprep.subr.bf16.mxu0 0
    %8990 = vmatpush1.bf16.msra.mxu0 0
    %8991 = vmatprep.subr.bf16.mxu0 0
    %8992 = vmatpush1.bf16.msra.mxu0 0
    %8993 = vmatprep.subr.bf16.mxu0 0
    %8994 = vmatpush1.bf16.msra.mxu0 0
    %8995 = vmatprep.subr.bf16.mxu0 0
    %8996 = vmatpush1.bf16.msra.mxu0 0
    %8997 = vmatprep.subr.bf16.mxu0 0
    %8998 = vmatpush1.bf16.msra.mxu0 0
    %8999 = vmatprep.mubr.bf16.mxu0 0
    %9000 = vmatmul.mubr.bf16.gmra.mrb[0].mxu0 %v8965
    %v9001 = vpop.f32.mrb[0].mxu0
    %v9002 = vadd.f32 %v8937, %v9001
    %v9003 = vpop.f32.mrb[0].mxu0
    %v9004 = vpop.f32.mrb[0].mxu0
    %v9005 = vadd.f32 %v8937, %v9004
    %v9006 = vpop.f32.mrb[0].mxu0
    %9007 = vdwg.mxu0
    %v9010 = vcombine.high %v9002, %v9002
    %v9012 = vunpack.c.l.s4 1983009808
    %v9013 = vunpack.c.0.s8 %v9012
    %v9014 = vlaneseq
    %v9015 = vshrl.u32 %v9014, 7
    %v9016 = vsub.s32 %v9013, %v9015
    %v9017 = vrot.slane %v9002, %v9016
    %v9019 = vunpack.c.l.s4 1983009808
    %v9020 = vunpack.c.0.s8 %v9019
    %v9021 = vlaneseq
    %v9022 = vshrl.u32 %v9021, 7
    %v9023 = vsub.s32 %v9020, %v9022
    %v9024 = vrot.slane %v9010, %v9023
    %v9025 = vcombine.high %v9017, %v9017
    %v9026 = vcombine.high %v9024, %v9024
    %v9027 = vcombine.high %v9005, %v9005
    %v9029 = vunpack.c.l.s4 1983009808
    %v9030 = vunpack.c.0.s8 %v9029
    %v9031 = vlaneseq
    %v9032 = vshrl.u32 %v9031, 7
    %v9033 = vsub.s32 %v9030, %v9032
    %v9034 = vrot.slane %v9005, %v9033
    %v9036 = vunpack.c.l.s4 1983009808
    %v9037 = vunpack.c.0.s8 %v9036
    %v9038 = vlaneseq
    %v9039 = vshrl.u32 %v9038, 7
    %v9040 = vsub.s32 %v9037, %v9039
    %v9041 = vrot.slane %v9027, %v9040
    %v9042 = vcombine.high %v9034, %v9034
    %v9043 = vcombine.high %v9041, %v9041
    %v9052 = vadd.f32 %v8801, %v9017
    %v9053 = vadd.f32 %v8802, %v9025
    %v9054 = vadd.f32 %v8803, %v9024
    %v9055 = vadd.f32 %v8804, %v9026
    %v9056 = vadd.f32 %v8805, %v9034
    %v9057 = vadd.f32 %v8806, %v9042
    %v9058 = vadd.f32 %v8807, %v9041
    %v9059 = vadd.f32 %v8808, %v9043
    %v9060 = vsel %vm4341, %v9052, 0.0
    %9061 = vadd.xlane.f32.xlu0 %v9060
    %v9062 = vpop.xlane.xlu0 %9061
    %v9063 = vsel %vm4341, %v9053, 0.0
    %9064 = vadd.xlane.f32.xlu0 %v9063
    %v9065 = vpop.xlane.xlu0 %9064
    %v9066 = vsel %vm4341, %v9054, 0.0
    %9067 = vadd.xlane.f32.xlu0 %v9066
    %v9068 = vpop.xlane.xlu0 %9067
    %v9069 = vsel %vm4341, %v9055, 0.0
    %9070 = vadd.xlane.f32.xlu0 %v9069
    %v9071 = vpop.xlane.xlu0 %9070
    %v9072 = vsel %vm4341, %v9056, 0.0
    %9073 = vadd.xlane.f32.xlu0 %v9072
    %v9074 = vpop.xlane.xlu0 %9073
    %v9075 = vsel %vm4341, %v9057, 0.0
    %9076 = vadd.xlane.f32.xlu0 %v9075
    %v9077 = vpop.xlane.xlu0 %9076
    %v9078 = vsel %vm4341, %v9058, 0.0
    %9079 = vadd.xlane.f32.xlu0 %v9078
    %v9080 = vpop.xlane.xlu0 %9079
    %v9081 = vsel %vm4341, %v9059, 0.0
    %9082 = vadd.xlane.f32.xlu0 %v9081
    %v9083 = vpop.xlane.xlu0 %9082
    %v9084 = vmul.f32 %v9062, %v4366
    %v9085 = vmul.f32 %v9065, %v4366
    %v9086 = vmul.f32 %v9068, %v4366
    %v9087 = vmul.f32 %v9071, %v4366
    %v9088 = vmul.f32 %v9074, %v4366
    %v9089 = vmul.f32 %v9077, %v4366
    %v9090 = vmul.f32 %v9080, %v4366
    %v9091 = vmul.f32 %v9083, %v4366
    %v9092 = vsub.f32 %v9052, %v9084
    %v9093 = vsub.f32 %v9053, %v9085
    %v9094 = vsub.f32 %v9054, %v9086
    %v9095 = vsub.f32 %v9055, %v9087
    %v9096 = vsub.f32 %v9056, %v9088
    %v9097 = vsub.f32 %v9057, %v9089
    %v9098 = vsub.f32 %v9058, %v9090
    %v9099 = vsub.f32 %v9059, %v9091
    %v9100 = vmul.f32 %v9092, %v9092
    %v9101 = vmul.f32 %v9093, %v9093
    %v9102 = vmul.f32 %v9094, %v9094
    %v9103 = vmul.f32 %v9095, %v9095
    %v9104 = vmul.f32 %v9096, %v9096
    %v9105 = vmul.f32 %v9097, %v9097
    %v9106 = vmul.f32 %v9098, %v9098
    %v9107 = vmul.f32 %v9099, %v9099
    %v9108 = vsel %vm4341, %v9100, 0.0
    %9109 = vadd.xlane.f32.xlu0 %v9108
    %v9110 = vpop.xlane.xlu0 %9109
    %v9111 = vsel %vm4341, %v9101, 0.0
    %9112 = vadd.xlane.f32.xlu0 %v9111
    %v9113 = vpop.xlane.xlu0 %9112
    %v9114 = vsel %vm4341, %v9102, 0.0
    %9115 = vadd.xlane.f32.xlu0 %v9114
    %v9116 = vpop.xlane.xlu0 %9115
    %v9117 = vsel %vm4341, %v9103, 0.0
    %9118 = vadd.xlane.f32.xlu0 %v9117
    %v9119 = vpop.xlane.xlu0 %9118
    %v9120 = vsel %vm4341, %v9104, 0.0
    %9121 = vadd.xlane.f32.xlu0 %v9120
    %v9122 = vpop.xlane.xlu0 %9121
    %v9123 = vsel %vm4341, %v9105, 0.0
    %9124 = vadd.xlane.f32.xlu0 %v9123
    %v9125 = vpop.xlane.xlu0 %9124
    %v9126 = vsel %vm4341, %v9106, 0.0
    %9127 = vadd.xlane.f32.xlu0 %v9126
    %v9128 = vpop.xlane.xlu0 %9127
    %v9129 = vsel %vm4341, %v9107, 0.0
    %9130 = vadd.xlane.f32.xlu0 %v9129
    %v9131 = vpop.xlane.xlu0 %9130
    %v9132 = vmul.f32 %v9110, %v4366
    %v9133 = vmul.f32 %v9113, %v4366
    %v9134 = vmul.f32 %v9116, %v4366
    %v9135 = vmul.f32 %v9119, %v4366
    %v9136 = vmul.f32 %v9122, %v4366
    %v9137 = vmul.f32 %v9125, %v4366
    %v9138 = vmul.f32 %v9128, %v4366
    %v9139 = vmul.f32 %v9131, %v4366
    %v9140 = vadd.f32 %v9132, 1e-05
    %v9141 = vadd.f32 %v9133, 1e-05
    %v9142 = vadd.f32 %v9134, 1e-05
    %v9143 = vadd.f32 %v9135, 1e-05
    %v9144 = vadd.f32 %v9136, 1e-05
    %v9145 = vadd.f32 %v9137, 1e-05
    %v9146 = vadd.f32 %v9138, 1e-05
    %v9147 = vadd.f32 %v9139, 1e-05
    %v9148 = vrsqrt.pop %v9140
    %v9149 = vrsqrt.pop %v9141
    %v9150 = vrsqrt.pop %v9142
    %v9151 = vrsqrt.pop %v9143
    %v9152 = vrsqrt.pop %v9144
    %v9153 = vrsqrt.pop %v9145
    %v9154 = vrsqrt.pop %v9146
    %v9155 = vrsqrt.pop %v9147
    %v9156 = vmul.f32 %v9092, %v9148
    %v9157 = vmul.f32 %v9093, %v9149
    %v9158 = vmul.f32 %v9094, %v9150
    %v9159 = vmul.f32 %v9095, %v9151
    %v9160 = vmul.f32 %v9096, %v9152
    %v9161 = vmul.f32 %v9097, %v9153
    %v9162 = vmul.f32 %v9098, %v9154
    %v9163 = vmul.f32 %v9099, %v9155
    %s9164 = scalar_lea.vmem %s14, 2
    %v9165 = vld [vmem:[%s9164] sm:$0x1]
    %v9167 = vlaneseq
    %v9168 = vshrl.u32 %v9167, 7
    %v9169 = vsub.s32 0, %v9168
    %v9170 = vrot.slane %v9165, %v9169
    %v9172 = vmul.f32 %v9156, %v9170
    %v9173 = vmul.f32 %v9157, %v9170
    %v9174 = vmul.f32 %v9158, %v9170
    %v9175 = vmul.f32 %v9159, %v9170
    %v9176 = vmul.f32 %v9160, %v9170
    %v9177 = vmul.f32 %v9161, %v9170
    %v9178 = vmul.f32 %v9162, %v9170
    %v9179 = vmul.f32 %v9163, %v9170
    %s9180 = scalar_lea.vmem %s15, 2
    %v9181 = vld [vmem:[%s9180] sm:$0x1]
    %v9183 = vlaneseq
    %v9184 = vshrl.u32 %v9183, 7
    %v9185 = vsub.s32 0, %v9184
    %v9186 = vrot.slane %v9181, %v9185
    %v9188 = vadd.f32 %v9172, %v9186
    %v9189 = vadd.f32 %v9173, %v9186
    %v9190 = vadd.f32 %v9174, %v9186
    %v9191 = vadd.f32 %v9175, %v9186
    %v9192 = vadd.f32 %v9176, %v9186
    %v9193 = vadd.f32 %v9177, %v9186
    %v9194 = vadd.f32 %v9178, %v9186
    %v9195 = vadd.f32 %v9179, %v9186
    %v9204 = vcombine.low %v9188, %v9189
    %v9205 = vcombine.low %v9190, %v9191
    %v9207 = vunpack.c.l.s4 1983009808
    %v9208 = vunpack.c.0.s8 %v9207
    %v9209 = vlaneseq
    %v9210 = vshrl.u32 %v9209, 7
    %v9211 = vsub.s32 %v9208, %v9210
    %v9212 = vrot.slane %v9204, %v9211
    %v9214 = vunpack.c.l.s4 1983009808
    %v9215 = vunpack.c.0.s8 %v9214
    %v9216 = vlaneseq
    %v9217 = vshrl.u32 %v9216, 7
    %v9218 = vsub.s32 %v9215, %v9217
    %v9219 = vrot.slane %v9205, %v9218
    %v9220 = vcombine.low %v9212, %v9219
    %v9221 = vcombine.low %v9192, %v9193
    %v9222 = vcombine.low %v9194, %v9195
    %v9224 = vunpack.c.l.s4 1983009808
    %v9225 = vunpack.c.0.s8 %v9224
    %v9226 = vlaneseq
    %v9227 = vshrl.u32 %v9226, 7
    %v9228 = vsub.s32 %v9225, %v9227
    %v9229 = vrot.slane %v9221, %v9228
    %v9231 = vunpack.c.l.s4 1983009808
    %v9232 = vunpack.c.0.s8 %v9231
    %v9233 = vlaneseq
    %v9234 = vshrl.u32 %v9233, 7
    %v9235 = vsub.s32 %v9232, %v9234
    %v9236 = vrot.slane %v9222, %v9235
    %v9237 = vcombine.low %v9229, %v9236
    %v9240 = vpack.c.bf16 %v9237, %v9220
    %v9241 = vld [vmem:[%s20] sm:$0xf]
    %v9242 = vld [vmem:[%s20 + $0x4] sm:$0xf]
    %v9243 = vld [vmem:[%s20 + $0x8] sm:$0xf]
    %v9244 = vld [vmem:[%s20 + $0xc] sm:$0xf]
    %v9245 = vld [vmem:[%s21] sm:$0x1]
    %v9247 = vlaneseq
    %v9248 = vshrl.u32 %v9247, 7
    %v9249 = vsub.s32 0, %v9248
    %v9250 = vrot.slane %v9245, %v9249
    %v9256 = vunpack.c.l.b16 %v9241
    %v9257 = vunpack.c.l.b16 %v9242
    %v9258 = vunpack.c.l.b16 %v9243
    %v9259 = vunpack.c.l.b16 %v9244
    %v9260 = vpack.c.b16 %v9257, %v9256
    %v9261 = vpack.c.b16 %v9259, %v9258
    %v9265 = vsel %vm206, %v9240, 0
    %9267 = vmatprep.subr.bf16.mxu0 0
    %9268 = vmatpush1.bf16.msra.mxu0 %v9260
    %9269 = vmatprep.subr.bf16.mxu0 0
    %9270 = vmatpush1.bf16.msra.mxu0 %v9261
    %9271 = vmatprep.subr.bf16.mxu0 0
    %9272 = vmatpush1.bf16.msra.mxu0 0
    %9273 = vmatprep.subr.bf16.mxu0 0
    %9274 = vmatpush1.bf16.msra.mxu0 0
    %9275 = vmatprep.subr.bf16.mxu0 0
    %9276 = vmatpush1.bf16.msra.mxu0 0
    %9277 = vmatprep.subr.bf16.mxu0 0
    %9278 = vmatpush1.bf16.msra.mxu0 0
    %9279 = vmatprep.subr.bf16.mxu0 0
    %9280 = vmatpush1.bf16.msra.mxu0 0
    %9281 = vmatprep.subr.bf16.mxu0 0
    %9282 = vmatpush1.bf16.msra.mxu0 0
    %9283 = vmatprep.subr.bf16.mxu0 0
    %9284 = vmatpush1.bf16.msra.mxu0 0
    %9285 = vmatprep.subr.bf16.mxu0 0
    %9286 = vmatpush1.bf16.msra.mxu0 0
    %9287 = vmatprep.subr.bf16.mxu0 0
    %9288 = vmatpush1.bf16.msra.mxu0 0
    %9289 = vmatprep.subr.bf16.mxu0 0
    %9290 = vmatpush1.bf16.msra.mxu0 0
    %9291 = vmatprep.subr.bf16.mxu0 0
    %9292 = vmatpush1.bf16.msra.mxu0 0
    %9293 = vmatprep.subr.bf16.mxu0 0
    %9294 = vmatpush1.bf16.msra.mxu0 0
    %9295 = vmatprep.subr.bf16.mxu0 0
    %9296 = vmatpush1.bf16.msra.mxu0 0
    %9297 = vmatprep.subr.bf16.mxu0 0
    %9298 = vmatpush1.bf16.msra.mxu0 0
    %9299 = vmatprep.mubr.bf16.mxu0 0
    %9300 = vmatmul.mubr.bf16.gmra.mrb[0].mxu0 %v9265
    %v9301 = vpop.f32.mrb[0].mxu0
    %v9302 = vadd.f32 %v9250, %v9301
    %v9303 = vpop.f32.mrb[0].mxu0
    %v9304 = vpop.f32.mrb[0].mxu0
    %v9305 = vadd.f32 %v9250, %v9304
    %v9306 = vpop.f32.mrb[0].mxu0
    %9307 = vdwg.mxu0
    %v9308 = vlaneseq
    %v9309 = vand.u32 %v9308, 127
    %vm9310 = vcmp.lt.s32.totalorder %v9309, 20
    %v9311 = vsel %vm9310, %v9302, -1e+30
    %v9312 = vsel %vm9310, %v9305, -1e+30
    %9313 = vmax.xlane.f32.xlu0 %v9311
    %v9314 = vpop.xlane.xlu0 %9313
    %9315 = vmax.xlane.f32.xlu0 %v9312
    %v9316 = vpop.xlane.xlu0 %9315
    %v9317 = vsub.f32 %v9302, %v9314
    %v9318 = vsub.f32 %v9305, %v9316
    %v9319 = vmul.f32 %v9317, 1.442695
    %v9320 = vpow.pop %v9319
    %v9321 = vmul.f32 %v9318, 1.442695
    %v9322 = vpow.pop %v9321
    %v9323 = vsel %vm9310, %v9320, 0.0
    %v9324 = vsel %vm9310, %v9322, 0.0
    %9325 = vadd.xlane.f32.xlu0 %v9323
    %v9326 = vpop.xlane.xlu0 %9325
    %9327 = vadd.xlane.f32.xlu0 %v9324
    %v9328 = vpop.xlane.xlu0 %9327
    %v9329 = vrcp.pop %v9326
    %v9330 = vrcp.pop %v9328
    %v9331 = vmul.f32 %v9326, %v9329
    %v9332 = vmul.f32 %v9328, %v9330
    %v9333 = vsub.f32 2.0, %v9331
    %v9334 = vsub.f32 2.0, %v9332
    %v9335 = vmul.f32 %v9329, %v9333
    %v9336 = vmul.f32 %v9330, %v9334
    %v9337 = vmul.f32 %v9323, %v9335
    %v9338 = vmul.f32 %v9324, %v9336
    %v9341 = vcombine.high %v9337, %v9337
    %v9343 = vunpack.c.l.s4 1983009808
    %v9344 = vunpack.c.0.s8 %v9343
    %v9345 = vlaneseq
    %v9346 = vshrl.u32 %v9345, 7
    %v9347 = vsub.s32 %v9344, %v9346
    %v9348 = vrot.slane %v9337, %v9347
    %v9350 = vunpack.c.l.s4 1983009808
    %v9351 = vunpack.c.0.s8 %v9350
    %v9352 = vlaneseq
    %v9353 = vshrl.u32 %v9352, 7
    %v9354 = vsub.s32 %v9351, %v9353
    %v9355 = vrot.slane %v9341, %v9354
    %v9356 = vcombine.high %v9348, %v9348
    %v9357 = vcombine.high %v9355, %v9355
    %v9358 = vcombine.high %v9338, %v9338
    %v9360 = vunpack.c.l.s4 1983009808
    %v9361 = vunpack.c.0.s8 %v9360
    %v9362 = vlaneseq
    %v9363 = vshrl.u32 %v9362, 7
    %v9364 = vsub.s32 %v9361, %v9363
    %v9365 = vrot.slane %v9338, %v9364
    %v9367 = vunpack.c.l.s4 1983009808
    %v9368 = vunpack.c.0.s8 %v9367
    %v9369 = vlaneseq
    %v9370 = vshrl.u32 %v9369, 7
    %v9371 = vsub.s32 %v9368, %v9370
    %v9372 = vrot.slane %v9358, %v9371
    %v9373 = vcombine.high %v9365, %v9365
    %v9374 = vcombine.high %v9372, %v9372
    %v9376 = vunpack.c.l.s4 1966171168
    %v9377 = vunpack.c.0.s8 %v9376
    %v9378 = vlaneseq
    %v9379 = vshrl.u32 %v9378, 7
    %v9380 = vsub.s32 %v9377, %v9379
    %v9381 = vrot.slane %v9348, %v9380
    %v9382 = vcombine.high %v9381, %v9381
    %9385 = vst [vmem:[#allocation2] sm:$0x1] %v9381
    %9386 = vst [vmem:[#allocation2 + $0x8] sm:$0x1] %v9382
    %v9388 = vunpack.c.l.s4 1966171168
    %v9389 = vunpack.c.0.s8 %v9388
    %v9390 = vlaneseq
    %v9391 = vshrl.u32 %v9390, 7
    %v9392 = vsub.s32 %v9389, %v9391
    %v9393 = vrot.slane %v9356, %v9392
    %v9394 = vcombine.high %v9393, %v9393
    %9397 = vst [vmem:[#allocation2 + $0x1] sm:$0x1] %v9393
    %9398 = vst [vmem:[#allocation2 + $0x9] sm:$0x1] %v9394
    %v9400 = vunpack.c.l.s4 1966171168
    %v9401 = vunpack.c.0.s8 %v9400
    %v9402 = vlaneseq
    %v9403 = vshrl.u32 %v9402, 7
    %v9404 = vsub.s32 %v9401, %v9403
    %v9405 = vrot.slane %v9355, %v9404
    %v9406 = vcombine.high %v9405, %v9405
    %9409 = vst [vmem:[#allocation2 + $0x2] sm:$0x1] %v9405
    %9410 = vst [vmem:[#allocation2 + $0xa] sm:$0x1] %v9406
    %v9412 = vunpack.c.l.s4 1966171168
    %v9413 = vunpack.c.0.s8 %v9412
    %v9414 = vlaneseq
    %v9415 = vshrl.u32 %v9414, 7
    %v9416 = vsub.s32 %v9413, %v9415
    %v9417 = vrot.slane %v9357, %v9416
    %v9418 = vcombine.high %v9417, %v9417
    %9421 = vst [vmem:[#allocation2 + $0x3] sm:$0x1] %v9417
    %9422 = vst [vmem:[#allocation2 + $0xb] sm:$0x1] %v9418
    %v9424 = vunpack.c.l.s4 1966171168
    %v9425 = vunpack.c.0.s8 %v9424
    %v9426 = vlaneseq
    %v9427 = vshrl.u32 %v9426, 7
    %v9428 = vsub.s32 %v9425, %v9427
    %v9429 = vrot.slane %v9365, %v9428
    %v9430 = vcombine.high %v9429, %v9429
    %9433 = vst [vmem:[#allocation2 + $0x4] sm:$0x1] %v9429
    %9434 = vst [vmem:[#allocation2 + $0xc] sm:$0x1] %v9430
    %v9436 = vunpack.c.l.s4 1966171168
    %v9437 = vunpack.c.0.s8 %v9436
    %v9438 = vlaneseq
    %v9439 = vshrl.u32 %v9438, 7
    %v9440 = vsub.s32 %v9437, %v9439
    %v9441 = vrot.slane %v9373, %v9440
    %v9442 = vcombine.high %v9441, %v9441
    %9445 = vst [vmem:[#allocation2 + $0x5] sm:$0x1] %v9441
    %9446 = vst [vmem:[#allocation2 + $0xd] sm:$0x1] %v9442
    %v9448 = vunpack.c.l.s4 1966171168
    %v9449 = vunpack.c.0.s8 %v9448
    %v9450 = vlaneseq
    %v9451 = vshrl.u32 %v9450, 7
    %v9452 = vsub.s32 %v9449, %v9451
    %v9453 = vrot.slane %v9372, %v9452
    %v9454 = vcombine.high %v9453, %v9453
    %9457 = vst [vmem:[#allocation2 + $0x6] sm:$0x1] %v9453
    %9458 = vst [vmem:[#allocation2 + $0xe] sm:$0x1] %v9454
    %v9460 = vunpack.c.l.s4 1966171168
    %v9461 = vunpack.c.0.s8 %v9460
    %v9462 = vlaneseq
    %v9463 = vshrl.u32 %v9462, 7
    %v9464 = vsub.s32 %v9461, %v9463
    %v9465 = vrot.slane %v9374, %v9464
    %v9466 = vcombine.high %v9465, %v9465
    %9469 = vst [vmem:[#allocation2 + $0x7] sm:$0x1] %v9465
    %9470 = vst [vmem:[#allocation2 + $0xf] sm:$0x1] %v9466
    // Predicated region
    $region90: #{vae_forward.3} parent=1 // pred_check
      _
    $region91: #{vae_forward.3} parent=1 // pred_check_branch
      %9472 = sbr.rel (0) target = $region93
    $region92: #{vae_forward.3} parent=1 // pred_region
      %s9474 = ssub.s32 256, 256
      %9475 = vsyncadd [#allocation3], %s9474
      %s9476 = sshll.u32 [#allocation2], 4
      %s9477 = int_to_ptr.vmem [resolvable:$true] %s9476
      %9482 = dma.vmem_to_hbm [thread:$0]  %s9477, 256, %s22, [#allocation3], 128, 128, 8
    $region93: #{vae_forward.3} parent=1 // pred_fallthru
      _
    // Predicated region
    $region94: #{vae_forward.3} parent=1 // pred_check
      _
    $region95: #{vae_forward.3} parent=1 // pred_check_branch
      %9484 = sbr.rel (0) target = $region97
    $region96: #{vae_forward.3} parent=1 // pred_region
      %9485 = dma.done [#allocation3], 256
    $region97: #{vae_forward.3} parent=1 // pred_fallthru
      _
    %9486 = vsyncpa [#allocation3], 1

</llo_original>
